<compile_context>
chip_gen: v7x
topology: tpu7x:2x2x1
jax: 0.10.0
libtpu: 0.0.40
codegen_flags: <defaults>
</compile_context>

<pallas_src>
import numpy as np
import jax
import jax.numpy as jnp
from jax import lax
from jax.experimental import pallas as pl
from jax.experimental.pallas import tpu as pltpu

_LANES = 128          # output lane width (channels zero-padded to this)
_WIN_LANES = 32       # lanes per 2x2 pool-window slot (4 * 32 = 128)
_VMEM_LIMIT = 48 * 1024 * 1024


def _round_up(x, m):
    return (x + m - 1) // m * m


# --------------------------- Pallas kernels ---------------------------------

def _conv_pool_kernel(p_ref, w_ref, b_ref, o_ref):
    """Fused conv (im2col matmul) + 2x2 max-pool + bias + ReLU.

    p_ref: (R, Kp)   R = TB*P batch-flattened pooled pixels; the 4 pool-window
                     patches are stacked window-major along K, zero-padded to Kp.
    w_ref: (Kp, 128) block-diagonal conv weight; window w's channels live in
                     lanes [32*w, 32*w + Cout).
    b_ref: (1, 128)  bias in lanes [0, Cout), zero elsewhere (f32).
    o_ref: (R, 128)  pooled + activated output (lanes >= 32 zeroed), bf16.
    """
    y = jnp.dot(p_ref[...], w_ref[...], preferred_element_type=jnp.float32)
    # max over the 4 pool-window 32-lane slots (XLU rotates; order-independent)
    m = jnp.maximum(y, pltpu.roll(y, 64, axis=1))
    m = jnp.maximum(m, pltpu.roll(m, 32, axis=1))
    # bias + ReLU hoisted out of the pool max (bias constant over the window,
    # ReLU monotone); zero the duplicate window slots so the zero-lane
    # invariant holds for the next stage.
    act = jnp.maximum(m + b_ref[...], 0.0)
    lane = lax.broadcasted_iota(jnp.int32, act.shape, 1)
    o_ref[...] = jnp.where(lane < _WIN_LANES, act, 0.0).astype(o_ref.dtype)


def _mlp_kernel(x_ref, w1_ref, b1_ref, w2_ref, b2_ref, w3_ref, b3_ref, o_ref):
    """fc1 -> ReLU -> fc2 -> ReLU -> fc3, fused. bf16 operands, f32 accumulate."""
    h = jnp.dot(x_ref[...], w1_ref[...], preferred_element_type=jnp.float32) + b1_ref[...]
    h = jnp.maximum(h, 0.0).astype(jnp.bfloat16)
    h = jnp.dot(h, w2_ref[...], preferred_element_type=jnp.float32) + b2_ref[...]
    h = jnp.maximum(h, 0.0).astype(jnp.bfloat16)
    o = jnp.dot(h, w3_ref[...], preferred_element_type=jnp.float32) + b3_ref[...]
    o_ref[...] = o.astype(o_ref.dtype)


# --------------------------- wrappers ----------------------------------------

def _pick_conv_tile(n, p, row_cap=8192):
    """Batch tile TB: divides n, TB*p rows are sublane-legal, prefers >=2 steps."""
    cands = [t for t in range(1, n + 1)
             if n % t == 0 and ((t * p) % 8 == 0 or t == n)]
    small = [t for t in cands if t < n and t * p <= row_cap]
    if small:
        return max(small)
    fits = [t for t in cands if t * p <= row_cap]
    return max(fits) if fits else min(cands)


def _pick_mlp_tile(n, cap=128):
    cands = [t for t in range(1, min(n, cap) + 1)
             if n % t == 0 and (t % 8 == 0 or t == n)]
    small = [t for t in cands if t < n]
    if small:
        return max(small)
    return max(cands) if cands else n


def conv_relu_pool(x_nhwc, w_oihw, b, *, ksize=5):
    """x_nhwc: (N,H,W,C) -> (N, PH, PW, 128) bf16; lanes >= Cout are zero."""
    N, H, W, C = x_nhwc.shape
    Cout = w_oihw.shape[0]
    assert Cout <= _WIN_LANES
    OH, OW = H - ksize + 1, W - ksize + 1
    PH, PW = OH // 2, OW // 2
    P = PH * PW
    K = ksize * ksize * C
    Kp = _round_up(4 * K, _LANES)

    # ---- window-major im2col directly from strided slices (XLA glue) --------
    # column order: (dh, dw) pool-window slot major, then (kh, kw, c).
    cols = []
    for dh in range(2):
        for dw in range(2):
            for kh in range(ksize):
                for kw in range(ksize):
                    cols.append(x_nhwc[:, kh + dh: kh + dh + 2 * PH - 1: 2,
                                          kw + dw: kw + dw + 2 * PW - 1: 2, :])
    g = jnp.concatenate(cols, axis=-1)                               # (N,PH,PW,4K)
    g = jnp.pad(g, ((0, 0), (0, 0), (0, 0), (0, Kp - 4 * K)))
    g = g.astype(jnp.bfloat16).reshape(N * P, Kp)

    # ---- block-diagonal, 32-lane-per-window weight; bias in lanes [0,Cout) ----
    w2d = jnp.transpose(w_oihw, (2, 3, 1, 0)).reshape(K, Cout)       # (K, Cout)
    w32 = jnp.pad(w2d, ((0, 0), (0, _WIN_LANES - Cout)))             # (K, 32)
    wblk = (jnp.eye(4, dtype=w32.dtype)[:, None, :, None]
            * w32[None, :, None, :]).reshape(4 * K, _LANES)          # (4K, 128)
    wblk = jnp.pad(wblk, ((0, Kp - 4 * K), (0, 0))).astype(jnp.bfloat16)
    bpad = jnp.pad(b.reshape(1, -1), ((0, 0), (0, _LANES - Cout)))   # (1,128) f32

    TB = _pick_conv_tile(N, P)
    R = TB * P
    out = pl.pallas_call(
        _conv_pool_kernel,
        out_shape=jax.ShapeDtypeStruct((N * P, _LANES), jnp.bfloat16),
        grid_spec=pltpu.PrefetchScalarGridSpec(
            num_scalar_prefetch=0,
            grid=(N // TB,),
            in_specs=[
                pl.BlockSpec((R, Kp), lambda i: (i, 0)),           # batch-flattened patches
                pl.BlockSpec((Kp, _LANES), lambda i: (0, 0)),      # resident weight
                pl.BlockSpec((1, _LANES), lambda i: (0, 0)),       # resident bias
            ],
            out_specs=pl.BlockSpec((R, _LANES), lambda i: (i, 0)),
        ),
        compiler_params=pltpu.CompilerParams(
            dimension_semantics=("parallel",),
            vmem_limit_bytes=_VMEM_LIMIT),
    )(g, wblk, bpad)
    return out.reshape(N, PH, PW, _LANES)


def net_forward(x_nchw, params):
    (cw1, cb1, cw2, cb2, fw1, fb1, fw2, fb2, fw3, fb3) = params
    N = x_nchw.shape[0]
    CP = _LANES
    C1, C2 = cw1.shape[0], cw2.shape[0]                       # 6, 16
    D1, D2, D3 = fw1.shape[1], fw2.shape[1], fw3.shape[1]     # 120, 84, 10

    x = jnp.transpose(x_nchw, (0, 2, 3, 1))                   # NHWC (N,32,32,3)
    o1 = conv_relu_pool(x, cw1, cb1)                          # (N,14,14,128) bf16
    y1 = o1[..., :C1]                                         # (N,14,14,6)
    o2 = conv_relu_pool(y1, cw2, cb2)                         # (N,5,5,128) bf16
    flat = o2.reshape(N, 25 * CP)                             # free reshape, no transpose

    # fc1: bake the NCHW flatten permutation + 128-lane channel padding into W.
    w1r = jnp.transpose(fw1.reshape(C2, 5, 5, D1), (1, 2, 0, 3))    # (h,w,c,out)
    w1p = jnp.pad(w1r, ((0, 0), (0, 0), (0, CP - C2), (0, 0))).reshape(25 * CP, D1)
    w1p = jnp.pad(w1p, ((0, 0), (0, CP - D1))).astype(jnp.bfloat16)  # (3200,128)
    b1p = jnp.pad(fb1.reshape(1, -1), ((0, 0), (0, CP - D1)))        # f32
    w2p = jnp.pad(fw2, ((0, CP - D1), (0, CP - D2))).astype(jnp.bfloat16)
    b2p = jnp.pad(fb2.reshape(1, -1), ((0, 0), (0, CP - D2)))
    w3p = jnp.pad(fw3, ((0, CP - D2), (0, CP - D3))).astype(jnp.bfloat16)
    b3p = jnp.pad(fb3.reshape(1, -1), ((0, 0), (0, CP - D3)))

    TBm = _pick_mlp_tile(N)
    out = pl.pallas_call(
        _mlp_kernel,
        out_shape=jax.ShapeDtypeStruct((N, CP), jnp.float32),
        grid_spec=pltpu.PrefetchScalarGridSpec(
            num_scalar_prefetch=0,
            grid=(N // TBm,),
            in_specs=[
                pl.BlockSpec((TBm, 25 * CP), lambda i: (i, 0)),
                pl.BlockSpec((25 * CP, CP), lambda i: (0, 0)),
                pl.BlockSpec((1, CP), lambda i: (0, 0)),
                pl.BlockSpec((CP, CP), lambda i: (0, 0)),
                pl.BlockSpec((1, CP), lambda i: (0, 0)),
                pl.BlockSpec((CP, CP), lambda i: (0, 0)),
                pl.BlockSpec((1, CP), lambda i: (0, 0)),
            ],
            out_specs=pl.BlockSpec((TBm, CP), lambda i: (i, 0)),
        ),
        compiler_params=pltpu.CompilerParams(
            dimension_semantics=("parallel",),
            vmem_limit_bytes=_VMEM_LIMIT),
    )(flat, w1p, b1p, w2p, b2p, w3p, b3p)
    return out[:, :D3]                                        # (N, 10)


# --------------------------- params & reference ------------------------------

def init_params(key):
    def u(k, shape, fan_in):
        bound = 1.0 / np.sqrt(fan_in)
        return jax.random.uniform(k, shape, jnp.float32, -bound, bound)
    ks = jax.random.split(key, 10)
    cw1 = u(ks[0], (6, 3, 5, 5), 3 * 25)
    cb1 = u(ks[1], (6,), 3 * 25)
    cw2 = u(ks[2], (16, 6, 5, 5), 6 * 25)
    cb2 = u(ks[3], (16,), 6 * 25)
    fw1 = u(ks[4], (400, 120), 400)   # stored (in, out); applied as x @ W
    fb1 = u(ks[5], (120,), 400)
    fw2 = u(ks[6], (120, 84), 120)
    fb2 = u(ks[7], (84,), 120)
    fw3 = u(ks[8], (84, 10), 84)
    fb3 = u(ks[9], (10,), 84)
    return (cw1, cb1, cw2, cb2, fw1, fb1, fw2, fb2, fw3, fb3)


def reference_forward(x_nchw, params):
    (cw1, cb1, cw2, cb2, fw1, fb1, fw2, fb2, fw3, fb3) = params

    def conv(x, w, b):
        y = lax.conv_general_dilated(x, w, (1, 1), 'VALID',
                                     dimension_numbers=('NCHW', 'OIHW', 'NCHW'))
        return jnp.maximum(y + b[None, :, None, None], 0.0)

    def pool(x):
        return lax.reduce_window(x, -jnp.inf, lax.max,
                                 (1, 1, 2, 2), (1, 1, 2, 2), 'VALID')

    y = pool(conv(x_nchw, cw1, cb1))
    y = pool(conv(y, cw2, cb2))
    y = y.reshape(y.shape[0], -1)
    y = jnp.maximum(y @ fw1 + fb1, 0.0)
    y = jnp.maximum(y @ fw2 + fb2, 0.0)
    return y @ fw3 + fb3


# --------------------------- main --------------------------------------------

if __name__ == "__main__":
    key = jax.random.PRNGKey(0)
    pkey, xkey = jax.random.split(key)
    params = init_params(pkey)
    x = jax.random.normal(xkey, (8, 3, 32, 32), jnp.float32)   # NCHW like PyTorch

    fwd = jax.jit(net_forward)
    out = jax.block_until_ready(fwd(x, params))
    assert out.shape == (8, 10)

    ref = reference_forward(x, params)
    # tolerance covers bf16 operands (f32 accumulation everywhere)
    np.testing.assert_allclose(np.asarray(out), np.asarray(ref),
                               rtol=5e-2, atol=5e-2)
    print("KERNEL_OK")
</pallas_src>

<mosaic_0001>
module attributes {stable_mosaic.version = 11 : i64} {
  func.func @_conv_pool_kernel(%arg0: i32, %arg1: memref<784x384xbf16, #tpu.memory_space<vmem>>, %arg2: memref<384x128xbf16, #tpu.memory_space<vmem>>, %arg3: memref<1x128xf32, #tpu.memory_space<vmem>>, %arg4: memref<784x128xbf16, #tpu.memory_space<vmem>>) attributes {dimension_semantics = [#tpu.dimension_semantics<parallel>], iteration_bounds = array<i64: 2>, scalar_prefetch = 0 : i64, scratch_operands = 0 : i64, tpu.core_type = #tpu.core_type<tc>, window_params = [{transform_indices = @transform_0, window_bounds = array<i64: 784, 384>}, {pipeline_mode = #tpu.pipeline_mode<synchronous>, transform_indices = @transform_1, window_bounds = array<i64: 384, 128>}, {pipeline_mode = #tpu.pipeline_mode<synchronous>, transform_indices = @transform_2, window_bounds = array<i64: 1, 128>}, {transform_indices = @transform_3, window_bounds = array<i64: 784, 128>}]} {
    %c0 = arith.constant 0 : index
    %c0_0 = arith.constant 0 : index
    %0 = vector.load %arg1[%c0, %c0_0] : memref<784x384xbf16, #tpu.memory_space<vmem>>, vector<784x384xbf16>
    %c0_1 = arith.constant 0 : index
    %c0_2 = arith.constant 0 : index
    %1 = vector.load %arg2[%c0_1, %c0_2] : memref<384x128xbf16, #tpu.memory_space<vmem>>, vector<384x128xbf16>
    %cst = arith.constant dense<0.000000e+00> : vector<784x128xf32>
    %2 = tpu.matmul %0, %1, %cst {dimension_numbers = #tpu.dot_dimension_numbers<[1], [0], [0], [1], [0, 0, 1, 1], [], []>} : vector<784x384xbf16>, vector<384x128xbf16>, vector<784x128xf32> -> vector<784x128xf32>
    %c64_i32 = arith.constant 64 : i32
    %3 = tpu.dynamic_rotate %2 by %c64_i32 dim 1 : vector<784x128xf32>, i32 -> vector<784x128xf32>
    %4 = arith.maximumf %2, %3 : vector<784x128xf32>
    %c32_i32 = arith.constant 32 : i32
    %5 = tpu.dynamic_rotate %4 by %c32_i32 dim 1 : vector<784x128xf32>, i32 -> vector<784x128xf32>
    %6 = arith.maximumf %4, %5 : vector<784x128xf32>
    %c0_3 = arith.constant 0 : index
    %c0_4 = arith.constant 0 : index
    %7 = vector.load %arg3[%c0_3, %c0_4] : memref<1x128xf32, #tpu.memory_space<vmem>>, vector<1x128xf32>
    %8 = vector.broadcast %7 : vector<1x128xf32> to vector<784x128xf32>
    %9 = arith.addf %6, %8 : vector<784x128xf32>
    %cst_5 = arith.constant 0.000000e+00 : f32
    %10 = vector.broadcast %cst_5 : f32 to vector<784x128xf32>
    %11 = arith.maximumf %9, %10 : vector<784x128xf32>
    %12 = tpu.iota {dimensions = array<i32: 1>} : vector<784x128xi32>
    %c32_i32_6 = arith.constant 32 : i32
    %13 = vector.broadcast %c32_i32_6 : i32 to vector<784x128xi32>
    %14 = arith.cmpi slt, %12, %13 : vector<784x128xi32>
    %cst_7 = arith.constant 0.000000e+00 : f32
    %15 = vector.broadcast %cst_7 : f32 to vector<784x128xf32>
    %16 = arith.select %14, %11, %15 : vector<784x128xi1>, vector<784x128xf32>
    %17 = arith.truncf %16 : vector<784x128xf32> to vector<784x128xbf16>
    %c0_8 = arith.constant 0 : index
    %c0_9 = arith.constant 0 : index
    %18 = vector.load %arg4[%c0_8, %c0_9] : memref<784x128xbf16, #tpu.memory_space<vmem>>, vector<784x128xbf16>
    tpu.vector_store %arg4[%c0_8, %c0_9], %17 {strides = array<i32>} : memref<784x128xbf16, #tpu.memory_space<vmem>>, vector<784x128xbf16>,
    return
  }
  func.func @transform_0(%arg0: i32) -> (i32, i32) {
    %c0_i32 = arith.constant 0 : i32
    %c0_i32_0 = arith.constant 0 : i32
    return %arg0, %c0_i32 : i32, i32
  }
  func.func @transform_1(%arg0: i32) -> (i32, i32) {
    %c0_i32 = arith.constant 0 : i32
    %c0_i32_0 = arith.constant 0 : i32
    %c0_i32_1 = arith.constant 0 : i32
    return %c0_i32, %c0_i32_0 : i32, i32
  }
  func.func @transform_2(%arg0: i32) -> (i32, i32) {
    %c0_i32 = arith.constant 0 : i32
    %c0_i32_0 = arith.constant 0 : i32
    %c0_i32_1 = arith.constant 0 : i32
    return %c0_i32, %c0_i32_0 : i32, i32
  }
  func.func @transform_3(%arg0: i32) -> (i32, i32) {
    %c0_i32 = arith.constant 0 : i32
    %c0_i32_0 = arith.constant 0 : i32
    return %arg0, %c0_i32 : i32, i32
  }
}

module attributes {stable_mosaic.version = 11 : i64} {
  func.func @_conv_pool_kernel(%arg0: i32, %arg1: memref<200x640xbf16, #tpu.memory_space<vmem>>, %arg2: memref<640x128xbf16, #tpu.memory_space<vmem>>, %arg3: memref<1x128xf32, #tpu.memory_space<vmem>>, %arg4: memref<200x128xbf16, #tpu.memory_space<vmem>>) attributes {dimension_semantics = [#tpu.dimension_semantics<parallel>], iteration_bounds = array<i64: 1>, scalar_prefetch = 0 : i64, scratch_operands = 0 : i64, tpu.core_type = #tpu.core_type<tc>, window_params = [{transform_indices = @transform_0, window_bounds = array<i64: 200, 640>}, {pipeline_mode = #tpu.pipeline_mode<synchronous>, transform_indices = @transform_1, window_bounds = array<i64: 640, 128>}, {pipeline_mode = #tpu.pipeline_mode<synchronous>, transform_indices = @transform_2, window_bounds = array<i64: 1, 128>}, {transform_indices = @transform_3, window_bounds = array<i64: 200, 128>}]} {
    %c0 = arith.constant 0 : index
    %c0_0 = arith.constant 0 : index
    %0 = vector.load %arg1[%c0, %c0_0] : memref<200x640xbf16, #tpu.memory_space<vmem>>, vector<200x640xbf16>
    %c0_1 = arith.constant 0 : index
    %c0_2 = arith.constant 0 : index
    %1 = vector.load %arg2[%c0_1, %c0_2] : memref<640x128xbf16, #tpu.memory_space<vmem>>, vector<640x128xbf16>
    %cst = arith.constant dense<0.000000e+00> : vector<200x128xf32>
    %2 = tpu.matmul %0, %1, %cst {dimension_numbers = #tpu.dot_dimension_numbers<[1], [0], [0], [1], [0, 0, 1, 1], [], []>} : vector<200x640xbf16>, vector<640x128xbf16>, vector<200x128xf32> -> vector<200x128xf32>
    %c64_i32 = arith.constant 64 : i32
    %3 = tpu.dynamic_rotate %2 by %c64_i32 dim 1 : vector<200x128xf32>, i32 -> vector<200x128xf32>
    %4 = arith.maximumf %2, %3 : vector<200x128xf32>
    %c32_i32 = arith.constant 32 : i32
    %5 = tpu.dynamic_rotate %4 by %c32_i32 dim 1 : vector<200x128xf32>, i32 -> vector<200x128xf32>
    %6 = arith.maximumf %4, %5 : vector<200x128xf32>
    %c0_3 = arith.constant 0 : index
    %c0_4 = arith.constant 0 : index
    %7 = vector.load %arg3[%c0_3, %c0_4] : memref<1x128xf32, #tpu.memory_space<vmem>>, vector<1x128xf32>
    %8 = vector.broadcast %7 : vector<1x128xf32> to vector<200x128xf32>
    %9 = arith.addf %6, %8 : vector<200x128xf32>
    %cst_5 = arith.constant 0.000000e+00 : f32
    %10 = vector.broadcast %cst_5 : f32 to vector<200x128xf32>
    %11 = arith.maximumf %9, %10 : vector<200x128xf32>
    %12 = tpu.iota {dimensions = array<i32: 1>} : vector<200x128xi32>
    %c32_i32_6 = arith.constant 32 : i32
    %13 = vector.broadcast %c32_i32_6 : i32 to vector<200x128xi32>
    %14 = arith.cmpi slt, %12, %13 : vector<200x128xi32>
    %cst_7 = arith.constant 0.000000e+00 : f32
    %15 = vector.broadcast %cst_7 : f32 to vector<200x128xf32>
    %16 = arith.select %14, %11, %15 : vector<200x128xi1>, vector<200x128xf32>
    %17 = arith.truncf %16 : vector<200x128xf32> to vector<200x128xbf16>
    %c0_8 = arith.constant 0 : index
    %c0_9 = arith.constant 0 : index
    %18 = vector.load %arg4[%c0_8, %c0_9] : memref<200x128xbf16, #tpu.memory_space<vmem>>, vector<200x128xbf16>
    tpu.vector_store %arg4[%c0_8, %c0_9], %17 {strides = array<i32>} : memref<200x128xbf16, #tpu.memory_space<vmem>>, vector<200x128xbf16>,
    return
  }
  func.func @transform_0(%arg0: i32) -> (i32, i32) {
    %c0_i32 = arith.constant 0 : i32
    %c0_i32_0 = arith.constant 0 : i32
    return %arg0, %c0_i32 : i32, i32
  }
  func.func @transform_1(%arg0: i32) -> (i32, i32) {
    %c0_i32 = arith.constant 0 : i32
    %c0_i32_0 = arith.constant 0 : i32
    %c0_i32_1 = arith.constant 0 : i32
    return %c0_i32, %c0_i32_0 : i32, i32
  }
  func.func @transform_2(%arg0: i32) -> (i32, i32) {
    %c0_i32 = arith.constant 0 : i32
    %c0_i32_0 = arith.constant 0 : i32
    %c0_i32_1 = arith.constant 0 : i32
    return %c0_i32, %c0_i32_0 : i32, i32
  }
  func.func @transform_3(%arg0: i32) -> (i32, i32) {
    %c0_i32 = arith.constant 0 : i32
    %c0_i32_0 = arith.constant 0 : i32
    return %arg0, %c0_i32 : i32, i32
  }
}

module attributes {stable_mosaic.version = 11 : i64} {
  func.func @_mlp_kernel(%arg0: i32, %arg1: memref<8x3200xbf16, #tpu.memory_space<vmem>>, %arg2: memref<3200x128xbf16, #tpu.memory_space<vmem>>, %arg3: memref<1x128xf32, #tpu.memory_space<vmem>>, %arg4: memref<128x128xbf16, #tpu.memory_space<vmem>>, %arg5: memref<1x128xf32, #tpu.memory_space<vmem>>, %arg6: memref<128x128xbf16, #tpu.memory_space<vmem>>, %arg7: memref<1x128xf32, #tpu.memory_space<vmem>>, %arg8: memref<8x128xf32, #tpu.memory_space<vmem>>) attributes {dimension_semantics = [#tpu.dimension_semantics<parallel>], iteration_bounds = array<i64: 1>, scalar_prefetch = 0 : i64, scratch_operands = 0 : i64, tpu.core_type = #tpu.core_type<tc>, window_params = [{transform_indices = @transform_0, window_bounds = array<i64: 8, 3200>}, {pipeline_mode = #tpu.pipeline_mode<synchronous>, transform_indices = @transform_1, window_bounds = array<i64: 3200, 128>}, {pipeline_mode = #tpu.pipeline_mode<synchronous>, transform_indices = @transform_2, window_bounds = array<i64: 1, 128>}, {pipeline_mode = #tpu.pipeline_mode<synchronous>, transform_indices = @transform_3, window_bounds = array<i64: 128, 128>}, {pipeline_mode = #tpu.pipeline_mode<synchronous>, transform_indices = @transform_4, window_bounds = array<i64: 1, 128>}, {pipeline_mode = #tpu.pipeline_mode<synchronous>, transform_indices = @transform_5, window_bounds = array<i64: 128, 128>}, {pipeline_mode = #tpu.pipeline_mode<synchronous>, transform_indices = @transform_6, window_bounds = array<i64: 1, 128>}, {transform_indices = @transform_7, window_bounds = array<i64: 8, 128>}]} {
    %c0 = arith.constant 0 : index
    %c0_0 = arith.constant 0 : index
    %0 = vector.load %arg1[%c0, %c0_0] : memref<8x3200xbf16, #tpu.memory_space<vmem>>, vector<8x3200xbf16>
    %c0_1 = arith.constant 0 : index
    %c0_2 = arith.constant 0 : index
    %1 = vector.load %arg2[%c0_1, %c0_2] : memref<3200x128xbf16, #tpu.memory_space<vmem>>, vector<3200x128xbf16>
    %cst = arith.constant dense<0.000000e+00> : vector<8x128xf32>
    %2 = tpu.matmul %0, %1, %cst {dimension_numbers = #tpu.dot_dimension_numbers<[1], [0], [0], [1], [0, 0, 1, 1], [], []>} : vector<8x3200xbf16>, vector<3200x128xbf16>, vector<8x128xf32> -> vector<8x128xf32>
    %c0_3 = arith.constant 0 : index
    %c0_4 = arith.constant 0 : index
    %3 = vector.load %arg3[%c0_3, %c0_4] : memref<1x128xf32, #tpu.memory_space<vmem>>, vector<1x128xf32>
    %4 = vector.broadcast %3 : vector<1x128xf32> to vector<8x128xf32>
    %5 = arith.addf %2, %4 : vector<8x128xf32>
    %cst_5 = arith.constant 0.000000e+00 : f32
    %6 = vector.broadcast %cst_5 : f32 to vector<8x128xf32>
    %7 = arith.maximumf %5, %6 : vector<8x128xf32>
    %8 = arith.truncf %7 : vector<8x128xf32> to vector<8x128xbf16>
    %c0_6 = arith.constant 0 : index
    %c0_7 = arith.constant 0 : index
    %9 = vector.load %arg4[%c0_6, %c0_7] : memref<128x128xbf16, #tpu.memory_space<vmem>>, vector<128x128xbf16>
    %cst_8 = arith.constant dense<0.000000e+00> : vector<8x128xf32>
    %10 = tpu.matmul %8, %9, %cst_8 {dimension_numbers = #tpu.dot_dimension_numbers<[1], [0], [0], [1], [0, 0, 1, 1], [], []>} : vector<8x128xbf16>, vector<128x128xbf16>, vector<8x128xf32> -> vector<8x128xf32>
    %c0_9 = arith.constant 0 : index
    %c0_10 = arith.constant 0 : index
    %11 = vector.load %arg5[%c0_9, %c0_10] : memref<1x128xf32, #tpu.memory_space<vmem>>, vector<1x128xf32>
    %12 = vector.broadcast %11 : vector<1x128xf32> to vector<8x128xf32>
    %13 = arith.addf %10, %12 : vector<8x128xf32>
    %cst_11 = arith.constant 0.000000e+00 : f32
    %14 = vector.broadcast %cst_11 : f32 to vector<8x128xf32>
    %15 = arith.maximumf %13, %14 : vector<8x128xf32>
    %16 = arith.truncf %15 : vector<8x128xf32> to vector<8x128xbf16>
    %c0_12 = arith.constant 0 : index
    %c0_13 = arith.constant 0 : index
    %17 = vector.load %arg6[%c0_12, %c0_13] : memref<128x128xbf16, #tpu.memory_space<vmem>>, vector<128x128xbf16>
    %cst_14 = arith.constant dense<0.000000e+00> : vector<8x128xf32>
    %18 = tpu.matmul %16, %17, %cst_14 {dimension_numbers = #tpu.dot_dimension_numbers<[1], [0], [0], [1], [0, 0, 1, 1], [], []>} : vector<8x128xbf16>, vector<128x128xbf16>, vector<8x128xf32> -> vector<8x128xf32>
    %c0_15 = arith.constant 0 : index
    %c0_16 = arith.constant 0 : index
    %19 = vector.load %arg7[%c0_15, %c0_16] : memref<1x128xf32, #tpu.memory_space<vmem>>, vector<1x128xf32>
    %20 = vector.broadcast %19 : vector<1x128xf32> to vector<8x128xf32>
    %21 = arith.addf %18, %20 : vector<8x128xf32>
    %c0_17 = arith.constant 0 : index
    %c0_18 = arith.constant 0 : index
    %22 = vector.load %arg8[%c0_17, %c0_18] : memref<8x128xf32, #tpu.memory_space<vmem>>, vector<8x128xf32>
    tpu.vector_store %arg8[%c0_17, %c0_18], %21 {strides = array<i32>} : memref<8x128xf32, #tpu.memory_space<vmem>>, vector<8x128xf32>,
    return
  }
  func.func @transform_0(%arg0: i32) -> (i32, i32) {
    %c0_i32 = arith.constant 0 : i32
    %c0_i32_0 = arith.constant 0 : i32
    return %arg0, %c0_i32 : i32, i32
  }
  func.func @transform_1(%arg0: i32) -> (i32, i32) {
    %c0_i32 = arith.constant 0 : i32
    %c0_i32_0 = arith.constant 0 : i32
    %c0_i32_1 = arith.constant 0 : i32
    return %c0_i32, %c0_i32_0 : i32, i32
  }
  func.func @transform_2(%arg0: i32) -> (i32, i32) {
    %c0_i32 = arith.constant 0 : i32
    %c0_i32_0 = arith.constant 0 : i32
    %c0_i32_1 = arith.constant 0 : i32
    return %c0_i32, %c0_i32_0 : i32, i32
  }
  func.func @transform_3(%arg0: i32) -> (i32, i32) {
    %c0_i32 = arith.constant 0 : i32
    %c0_i32_0 = arith.constant 0 : i32
    %c0_i32_1 = arith.constant 0 : i32
    return %c0_i32, %c0_i32_0 : i32, i32
  }
  func.func @transform_4(%arg0: i32) -> (i32, i32) {
    %c0_i32 = arith.constant 0 : i32
    %c0_i32_0 = arith.constant 0 : i32
    %c0_i32_1 = arith.constant 0 : i32
    return %c0_i32, %c0_i32_0 : i32, i32
  }
  func.func @transform_5(%arg0: i32) -> (i32, i32) {
    %c0_i32 = arith.constant 0 : i32
    %c0_i32_0 = arith.constant 0 : i32
    %c0_i32_1 = arith.constant 0 : i32
    return %c0_i32, %c0_i32_0 : i32, i32
  }
  func.func @transform_6(%arg0: i32) -> (i32, i32) {
    %c0_i32 = arith.constant 0 : i32
    %c0_i32_0 = arith.constant 0 : i32
    %c0_i32_1 = arith.constant 0 : i32
    return %c0_i32, %c0_i32_0 : i32, i32
  }
  func.func @transform_7(%arg0: i32) -> (i32, i32) {
    %c0_i32 = arith.constant 0 : i32
    %c0_i32_0 = arith.constant 0 : i32
    return %arg0, %c0_i32 : i32, i32
  }
}

</mosaic_0001>

<llo_original>
// kernel: net_forward.3
$region0: #{net_forward.3}
  #allocation0 [shape = 'u32[]', space=smem, size = 0x4, offset = 0x4, fixed_abs, tag = 'smem constant byte address 0x4 - core index']
  #allocation1 [shape = 'u32[144,128]{1,0:T(1,128)}', space=vmem, size = 0x12000, scoped, tag = 'internal scratch']
  %s0 = inlined_call_operand.vmem [shape: bf16[1568,384], index: 0, kind: input, shape index: {}]
  %s1 = inlined_call_operand.vmem [shape: bf16[384,128], index: 1, kind: input, shape index: {}]
  %s2 = inlined_call_operand.vmem [shape: f32[1,128], index: 2, kind: input, shape index: {}]
  %s3 = inlined_call_operand.vmem [shape: bf16[1568,128], index: 3, kind: output, shape index: {}]
  %s4 = sld [smem:[#allocation0]]
  $region45: #{net_forward.3} parent=0
    _
  %s6 = ssub.s32 1, %s4
  %s7 = scalar_select 0, %s6, %s4
  loop: start=0, step=1, limit=4
  $region2: #{net_forward.3} parent=0 // loop_pre_header
    _
  $region3: #{net_forward.3} parent=0 // loop_header
    %s9 = sphi 0, %s13
    %p10 = scmp.ge.s32.totalorder %s9, 4
    %s19 = sphi 0, %s21
    %s22 = sphi 0, %s19
    %s23 = sphi 0, %s22
    %s39 = sphi 0, %s23
    %s43 = sphi 0, %s43
    %s45 = sphi 0, %s43
    %s46 = sphi 0, %s45
    %s60 = sphi 0, %s46
    %s64 = sphi 0, %s64
    %s66 = sphi 0, %s64
    %s67 = sphi 0, %s66
    %s81 = sphi 0, %s67
    %s87 = sphi 0, %s89
    %s90 = sphi 0, %s87
    %s91 = sphi 0, %s90
    %s107 = sphi 0, %s91
  $region4: #{net_forward.3} parent=0 // loop_header_branch
    %12 = sbr.rel (%p10) target = $region8
  $region5: #{net_forward.3} parent=0 // loop_body
    %s14 = ssub.s32 %s9, 1
    %s15 = ssub.s32 %s9, 2
    %s16 = sadd.s32 %s9, 1
    %s17 = ssub.s32 %s9, %s16
    %p18 = scmp.eq.s32.totalorder %s17, 0
    %s20 = sadd.s32 %s19, 1
    %s21 = scalar_select %p18, %s19, %s20
    %p24 = pneg %p18
    %p25 = scmp.eq.s32.totalorder %s9, 1
    %p26 = por %p24, %p25
    %p27 = scmp.ne.s32.totalorder %s19, %s22
    %p28 = scmp.eq.s32.totalorder %s9, 0
    %p29 = por %p27, %p28
    %p30 = scmp.ne.s32.totalorder %s19, %s22
    %p31 = scmp.eq.s32.totalorder %s14, 1
    %p32 = por %p30, %p31
    %p33 = scmp.ne.s32.totalorder %s22, %s23
    %p34 = scmp.eq.s32.totalorder %s14, 0
    %p35 = por %p33, %p34
    %p36 = scmp.ne.s32.totalorder %s22, %s23
    %p37 = scmp.eq.s32.totalorder %s15, 1
    %p38 = por %p36, %p37
    %p40 = scmp.ne.s32.totalorder %s23, %s39
    %p41 = scmp.eq.s32.totalorder %s15, 0
    %p42 = por %p40, %p41
    %s44 = sadd.s32 %s43, 1
    %p47 = scmp.eq.s32.totalorder %s9, 1
    %p48 = scmp.ne.s32.totalorder %s43, %s45
    %p49 = scmp.eq.s32.totalorder %s9, 0
    %p50 = por %p48, %p49
    %p51 = scmp.ne.s32.totalorder %s43, %s45
    %p52 = scmp.eq.s32.totalorder %s14, 1
    %p53 = por %p51, %p52
    %p54 = scmp.ne.s32.totalorder %s45, %s46
    %p55 = scmp.eq.s32.totalorder %s14, 0
    %p56 = por %p54, %p55
    %p57 = scmp.ne.s32.totalorder %s45, %s46
    %p58 = scmp.eq.s32.totalorder %s15, 1
    %p59 = por %p57, %p58
    %p61 = scmp.ne.s32.totalorder %s46, %s60
    %p62 = scmp.eq.s32.totalorder %s15, 0
    %p63 = por %p61, %p62
    %s65 = sadd.s32 %s64, 1
    %p68 = scmp.eq.s32.totalorder %s9, 1
    %p69 = scmp.ne.s32.totalorder %s64, %s66
    %p70 = scmp.eq.s32.totalorder %s9, 0
    %p71 = por %p69, %p70
    %p72 = scmp.ne.s32.totalorder %s64, %s66
    %p73 = scmp.eq.s32.totalorder %s14, 1
    %p74 = por %p72, %p73
    %p75 = scmp.ne.s32.totalorder %s66, %s67
    %p76 = scmp.eq.s32.totalorder %s14, 0
    %p77 = por %p75, %p76
    %p78 = scmp.ne.s32.totalorder %s66, %s67
    %p79 = scmp.eq.s32.totalorder %s15, 1
    %p80 = por %p78, %p79
    %p82 = scmp.ne.s32.totalorder %s67, %s81
    %p83 = scmp.eq.s32.totalorder %s15, 0
    %p84 = por %p82, %p83
    %s85 = ssub.s32 %s9, %s16
    %p86 = scmp.eq.s32.totalorder %s85, 0
    %s88 = sadd.s32 %s87, 1
    %s89 = scalar_select %p86, %s87, %s88
    %p92 = pneg %p86
    %p93 = scmp.eq.s32.totalorder %s9, 1
    %p94 = por %p92, %p93
    %p95 = scmp.ne.s32.totalorder %s87, %s90
    %p96 = scmp.eq.s32.totalorder %s9, 0
    %p97 = por %p95, %p96
    %p98 = scmp.ne.s32.totalorder %s87, %s90
    %p99 = scmp.eq.s32.totalorder %s14, 1
    %p100 = por %p98, %p99
    %p101 = scmp.ne.s32.totalorder %s90, %s91
    %p102 = scmp.eq.s32.totalorder %s14, 0
    %p103 = por %p101, %p102
    %p104 = scmp.ne.s32.totalorder %s90, %s91
    %p105 = scmp.eq.s32.totalorder %s15, 1
    %p106 = por %p104, %p105
    %p108 = scmp.ne.s32.totalorder %s91, %s107
    %p109 = scmp.eq.s32.totalorder %s15, 0
    %p110 = por %p108, %p109
    %p111 = scmp.le.s32.totalorder 1, %s9
    %p112 = scmp.lt.s32.totalorder %s9, 3
    %p113 = pnand %p111, %p112
    %p114 = pneg %p113
    // Predicated region
    $region9: #{net_forward.3} parent=5 // pred_check
      _
    $region10: #{net_forward.3} parent=5 // pred_check_branch
      %116 = sbr.rel (%p113) target = $region12
    $region11: #{net_forward.3} parent=5 // pred_region
      %s117 = ssub.s32 %s9, 1
      // Predicated region
      $region13: #{net_forward.3} parent=11 // pred_check
        %p118 = pneg %p56
      $region14: #{net_forward.3} parent=11 // pred_check_branch
        %120 = sbr.rel (%p118) target = $region16
      $region15: #{net_forward.3} parent=11 // pred_region
        _
      $region16: #{net_forward.3} parent=11 // pred_fallthru
        _
      // Predicated region
      $region17: #{net_forward.3} parent=11 // pred_check
        %p121 = pneg %p77
      $region18: #{net_forward.3} parent=11 // pred_check_branch
        %123 = sbr.rel (%p121) target = $region20
      $region19: #{net_forward.3} parent=11 // pred_region
        _
      $region20: #{net_forward.3} parent=11 // pred_fallthru
        _
    $region12: #{net_forward.3} parent=5 // pred_fallthru
      _
    %p124 = scmp.lt.s32.totalorder %s9, 2
    // Predicated region
    $region21: #{net_forward.3} parent=5 // pred_check
      %p125 = pneg %p124
    $region22: #{net_forward.3} parent=5 // pred_check_branch
      %127 = sbr.rel (%p125) target = $region24
    $region23: #{net_forward.3} parent=5 // pred_region
      // Predicated region
      $region25: #{net_forward.3} parent=23 // pred_check
        %p128 = pneg %p29
      $region26: #{net_forward.3} parent=23 // pred_check_branch
        %130 = sbr.rel (%p128) target = $region28
      $region27: #{net_forward.3} parent=23 // pred_region
        %s131 = smul.u32 98, %s9
        %p132 = scmp.lt.s32.totalorder %s131, 195
        %s133 = scalar_select %p132, %s131, 195
        %s134 = smul.addr %s133, 3
        %s135 = smul.addr %s134, 4
        %s136 = scalar_lea.vmem %s0, %s135
        %s137 = smul.u32 98, %s9
      $region28: #{net_forward.3} parent=23 // pred_fallthru
        _
    $region24: #{net_forward.3} parent=5 // pred_fallthru
      _
    %p138 = scmp.le.s32.totalorder 1, %s9
    %p139 = scmp.lt.s32.totalorder %s9, 3
    %p140 = pnand %p138, %p139
    %p141 = pneg %p140
    // Predicated region
    $region29: #{net_forward.3} parent=5 // pred_check
      _
    $region30: #{net_forward.3} parent=5 // pred_check_branch
      %143 = sbr.rel (%p140) target = $region32
    $region31: #{net_forward.3} parent=5 // pred_region
      %s144 = ssub.s32 %s9, 1
      %s145 = smul.u32 98, %s14
      %p146 = scmp.lt.s32.totalorder %s145, 195
      %s147 = scalar_select %p146, %s145, 195
      %s148 = smul.addr %s147, 3
      %s149 = smul.addr %s148, 4
      %s150 = scalar_lea.vmem %s0, %s149
      %p151 = pneg %p35
      %p152 = pneg %p32
      %p153 = pneg %p56
      %p154 = pneg %p53
      %p155 = pneg %p77
      %p156 = pneg %p74
      %p157 = pneg %p103
      %p158 = pneg %p100
      %s159 = smul.u32 98, %s14
      %p160 = scmp.lt.s32.totalorder %s159, 195
      %s161 = scalar_select %p160, %s159, 195
      %s162 = smul.addr %s161, 4
      %s163 = scalar_lea.vmem %s3, %s162
      %s164 = smul.u32 98, %s14
      %p165 = scmp.lt.s32.totalorder %s164, 195
      %s166 = scalar_select %p165, %s164, 195
      %s167 = smul.addr %s166, 3
      %s168 = smul.addr %s167, 4
      %s169 = scalar_lea.vmem %s0, %s168
      %s170 = smul.u32 98, %s14
      %s171 = smul.u32 98, %s14
      %p172 = scmp.lt.s32.totalorder %s171, 195
      %s173 = scalar_select %p172, %s171, 195
      %s174 = smul.addr %s173, 4
      %s175 = scalar_lea.vmem %s3, %s174
      %s176 = smul.u32 98, %s14
      %v178 = vld [vmem:[%s169] sm:$0xff]
      %v179 = vld [vmem:[%s169 + $0x8] sm:$0xf]
      %v180 = vld [vmem:[%s169 + $0xc] sm:$0xff]
      %v181 = vld [vmem:[%s169 + $0x14] sm:$0xf]
      %v182 = vld [vmem:[%s169 + $0x18] sm:$0xff]
      %v183 = vld [vmem:[%s169 + $0x20] sm:$0xf]
      %v184 = vld [vmem:[%s169 + $0x24] sm:$0xff]
      %v185 = vld [vmem:[%s169 + $0x2c] sm:$0xf]
      %v186 = vld [vmem:[%s169 + $0x30] sm:$0xff]
      %v187 = vld [vmem:[%s169 + $0x38] sm:$0xf]
      %v188 = vld [vmem:[%s169 + $0x3c] sm:$0xff]
      %v189 = vld [vmem:[%s169 + $0x44] sm:$0xf]
      %v190 = vld [vmem:[%s169 + $0x48] sm:$0xff]
      %v191 = vld [vmem:[%s169 + $0x50] sm:$0xf]
      %v192 = vld [vmem:[%s169 + $0x54] sm:$0xff]
      %v193 = vld [vmem:[%s169 + $0x5c] sm:$0xf]
      %v194 = vld [vmem:[%s169 + $0x60] sm:$0xff]
      %v195 = vld [vmem:[%s169 + $0x68] sm:$0xf]
      %v196 = vld [vmem:[%s169 + $0x6c] sm:$0xff]
      %v197 = vld [vmem:[%s169 + $0x74] sm:$0xf]
      %v198 = vld [vmem:[%s169 + $0x78] sm:$0xff]
      %v199 = vld [vmem:[%s169 + $0x80] sm:$0xf]
      %v200 = vld [vmem:[%s169 + $0x84] sm:$0xff]
      %v201 = vld [vmem:[%s169 + $0x8c] sm:$0xf]
      %v202 = vld [vmem:[%s169 + $0x90] sm:$0xff]
      %v203 = vld [vmem:[%s169 + $0x98] sm:$0xf]
      %v204 = vld [vmem:[%s169 + $0x9c] sm:$0xff]
      %v205 = vld [vmem:[%s169 + $0xa4] sm:$0xf]
      %v206 = vld [vmem:[%s169 + $0xa8] sm:$0xff]
      %v207 = vld [vmem:[%s169 + $0xb0] sm:$0xf]
      %v208 = vld [vmem:[%s169 + $0xb4] sm:$0xff]
      %v209 = vld [vmem:[%s169 + $0xbc] sm:$0xf]
      %v210 = vld [vmem:[%s169 + $0xc0] sm:$0xff]
      %v211 = vld [vmem:[%s169 + $0xc8] sm:$0xf]
      %v212 = vld [vmem:[%s169 + $0xcc] sm:$0xff]
      %v213 = vld [vmem:[%s169 + $0xd4] sm:$0xf]
      %v214 = vld [vmem:[%s169 + $0xd8] sm:$0xff]
      %v215 = vld [vmem:[%s169 + $0xe0] sm:$0xf]
      %v216 = vld [vmem:[%s169 + $0xe4] sm:$0xff]
      %v217 = vld [vmem:[%s169 + $0xec] sm:$0xf]
      %v218 = vld [vmem:[%s169 + $0xf0] sm:$0xff]
      %v219 = vld [vmem:[%s169 + $0xf8] sm:$0xf]
      %v220 = vld [vmem:[%s169 + $0xfc] sm:$0xff]
      %v221 = vld [vmem:[%s169 + $0x104] sm:$0xf]
      %v222 = vld [vmem:[%s169 + $0x108] sm:$0xff]
      %v223 = vld [vmem:[%s169 + $0x110] sm:$0xf]
      %v224 = vld [vmem:[%s169 + $0x114] sm:$0xff]
      %v225 = vld [vmem:[%s169 + $0x11c] sm:$0xf]
      %v226 = vld [vmem:[%s169 + $0x120] sm:$0xff]
      %v227 = vld [vmem:[%s169 + $0x128] sm:$0xf]
      %v228 = vld [vmem:[%s169 + $0x12c] sm:$0xff]
      %v229 = vld [vmem:[%s169 + $0x134] sm:$0xf]
      %v230 = vld [vmem:[%s169 + $0x138] sm:$0xff]
      %v231 = vld [vmem:[%s169 + $0x140] sm:$0xf]
      %v232 = vld [vmem:[%s169 + $0x144] sm:$0xff]
      %v233 = vld [vmem:[%s169 + $0x14c] sm:$0xf]
      %v234 = vld [vmem:[%s169 + $0x150] sm:$0xff]
      %v235 = vld [vmem:[%s169 + $0x158] sm:$0xf]
      %v236 = vld [vmem:[%s169 + $0x15c] sm:$0xff]
      %v237 = vld [vmem:[%s169 + $0x164] sm:$0xf]
      %v238 = vld [vmem:[%s169 + $0x168] sm:$0xff]
      %v239 = vld [vmem:[%s169 + $0x170] sm:$0xf]
      %v240 = vld [vmem:[%s169 + $0x174] sm:$0xff]
      %v241 = vld [vmem:[%s169 + $0x17c] sm:$0xf]
      %v242 = vld [vmem:[%s169 + $0x180] sm:$0xff]
      %v243 = vld [vmem:[%s169 + $0x188] sm:$0xf]
      %v244 = vld [vmem:[%s169 + $0x18c] sm:$0xff]
      %v245 = vld [vmem:[%s169 + $0x194] sm:$0xf]
      %v246 = vld [vmem:[%s169 + $0x198] sm:$0xff]
      %v247 = vld [vmem:[%s169 + $0x1a0] sm:$0xf]
      %v248 = vld [vmem:[%s169 + $0x1a4] sm:$0xff]
      %v249 = vld [vmem:[%s169 + $0x1ac] sm:$0xf]
      %v250 = vld [vmem:[%s169 + $0x1b0] sm:$0xff]
      %v251 = vld [vmem:[%s169 + $0x1b8] sm:$0xf]
      %v252 = vld [vmem:[%s169 + $0x1bc] sm:$0xff]
      %v253 = vld [vmem:[%s169 + $0x1c4] sm:$0xf]
      %v254 = vld [vmem:[%s169 + $0x1c8] sm:$0xff]
      %v255 = vld [vmem:[%s169 + $0x1d0] sm:$0xf]
      %v256 = vld [vmem:[%s169 + $0x1d4] sm:$0xff]
      %v257 = vld [vmem:[%s169 + $0x1dc] sm:$0xf]
      %v258 = vld [vmem:[%s169 + $0x1e0] sm:$0xff]
      %v259 = vld [vmem:[%s169 + $0x1e8] sm:$0xf]
      %v260 = vld [vmem:[%s169 + $0x1ec] sm:$0xff]
      %v261 = vld [vmem:[%s169 + $0x1f4] sm:$0xf]
      %v262 = vld [vmem:[%s169 + $0x1f8] sm:$0xff]
      %v263 = vld [vmem:[%s169 + $0x200] sm:$0xf]
      %v264 = vld [vmem:[%s169 + $0x204] sm:$0xff]
      %v265 = vld [vmem:[%s169 + $0x20c] sm:$0xf]
      %v266 = vld [vmem:[%s169 + $0x210] sm:$0xff]
      %v267 = vld [vmem:[%s169 + $0x218] sm:$0xf]
      %v268 = vld [vmem:[%s169 + $0x21c] sm:$0xff]
      %v269 = vld [vmem:[%s169 + $0x224] sm:$0xf]
      %v270 = vld [vmem:[%s169 + $0x228] sm:$0xff]
      %v271 = vld [vmem:[%s169 + $0x230] sm:$0xf]
      %v272 = vld [vmem:[%s169 + $0x234] sm:$0xff]
      %v273 = vld [vmem:[%s169 + $0x23c] sm:$0xf]
      %v274 = vld [vmem:[%s169 + $0x240] sm:$0xff]
      %v275 = vld [vmem:[%s169 + $0x248] sm:$0xf]
      %v276 = vld [vmem:[%s169 + $0x24c] sm:$0xff]
      %v277 = vld [vmem:[%s169 + $0x254] sm:$0xf]
      %v278 = vld [vmem:[%s169 + $0x258] sm:$0xff]
      %v279 = vld [vmem:[%s169 + $0x260] sm:$0xf]
      %v280 = vld [vmem:[%s169 + $0x264] sm:$0xff]
      %v281 = vld [vmem:[%s169 + $0x26c] sm:$0xf]
      %v282 = vld [vmem:[%s169 + $0x270] sm:$0xff]
      %v283 = vld [vmem:[%s169 + $0x278] sm:$0xf]
      %v284 = vld [vmem:[%s169 + $0x27c] sm:$0xff]
      %v285 = vld [vmem:[%s169 + $0x284] sm:$0xf]
      %v286 = vld [vmem:[%s169 + $0x288] sm:$0xff]
      %v287 = vld [vmem:[%s169 + $0x290] sm:$0xf]
      %v288 = vld [vmem:[%s169 + $0x294] sm:$0xff]
      %v289 = vld [vmem:[%s169 + $0x29c] sm:$0xf]
      %v290 = vld [vmem:[%s169 + $0x2a0] sm:$0xff]
      %v291 = vld [vmem:[%s169 + $0x2a8] sm:$0xf]
      %v292 = vld [vmem:[%s169 + $0x2ac] sm:$0xff]
      %v293 = vld [vmem:[%s169 + $0x2b4] sm:$0xf]
      %v294 = vld [vmem:[%s169 + $0x2b8] sm:$0xff]
      %v295 = vld [vmem:[%s169 + $0x2c0] sm:$0xf]
      %v296 = vld [vmem:[%s169 + $0x2c4] sm:$0xff]
      %v297 = vld [vmem:[%s169 + $0x2cc] sm:$0xf]
      %v298 = vld [vmem:[%s169 + $0x2d0] sm:$0xff]
      %v299 = vld [vmem:[%s169 + $0x2d8] sm:$0xf]
      %v300 = vld [vmem:[%s169 + $0x2dc] sm:$0xff]
      %v301 = vld [vmem:[%s169 + $0x2e4] sm:$0xf]
      %v302 = vld [vmem:[%s169 + $0x2e8] sm:$0xff]
      %v303 = vld [vmem:[%s169 + $0x2f0] sm:$0xf]
      %v304 = vld [vmem:[%s169 + $0x2f4] sm:$0xff]
      %v305 = vld [vmem:[%s169 + $0x2fc] sm:$0xf]
      %v306 = vld [vmem:[%s169 + $0x300] sm:$0xff]
      %v307 = vld [vmem:[%s169 + $0x308] sm:$0xf]
      %v308 = vld [vmem:[%s169 + $0x30c] sm:$0xff]
      %v309 = vld [vmem:[%s169 + $0x314] sm:$0xf]
      %v310 = vld [vmem:[%s169 + $0x318] sm:$0xff]
      %v311 = vld [vmem:[%s169 + $0x320] sm:$0xf]
      %v312 = vld [vmem:[%s169 + $0x324] sm:$0xff]
      %v313 = vld [vmem:[%s169 + $0x32c] sm:$0xf]
      %v314 = vld [vmem:[%s169 + $0x330] sm:$0xff]
      %v315 = vld [vmem:[%s169 + $0x338] sm:$0xf]
      %v316 = vld [vmem:[%s169 + $0x33c] sm:$0xff]
      %v317 = vld [vmem:[%s169 + $0x344] sm:$0xf]
      %v318 = vld [vmem:[%s169 + $0x348] sm:$0xff]
      %v319 = vld [vmem:[%s169 + $0x350] sm:$0xf]
      %v320 = vld [vmem:[%s169 + $0x354] sm:$0xff]
      %v321 = vld [vmem:[%s169 + $0x35c] sm:$0xf]
      %v322 = vld [vmem:[%s169 + $0x360] sm:$0xff]
      %v323 = vld [vmem:[%s169 + $0x368] sm:$0xf]
      %v324 = vld [vmem:[%s169 + $0x36c] sm:$0xff]
      %v325 = vld [vmem:[%s169 + $0x374] sm:$0xf]
      %v326 = vld [vmem:[%s169 + $0x378] sm:$0xff]
      %v327 = vld [vmem:[%s169 + $0x380] sm:$0xf]
      %v328 = vld [vmem:[%s169 + $0x384] sm:$0xff]
      %v329 = vld [vmem:[%s169 + $0x38c] sm:$0xf]
      %v330 = vld [vmem:[%s169 + $0x390] sm:$0xff]
      %v331 = vld [vmem:[%s169 + $0x398] sm:$0xf]
      %v332 = vld [vmem:[%s169 + $0x39c] sm:$0xff]
      %v333 = vld [vmem:[%s169 + $0x3a4] sm:$0xf]
      %v334 = vld [vmem:[%s169 + $0x3a8] sm:$0xff]
      %v335 = vld [vmem:[%s169 + $0x3b0] sm:$0xf]
      %v336 = vld [vmem:[%s169 + $0x3b4] sm:$0xff]
      %v337 = vld [vmem:[%s169 + $0x3bc] sm:$0xf]
      %v338 = vld [vmem:[%s169 + $0x3c0] sm:$0xff]
      %v339 = vld [vmem:[%s169 + $0x3c8] sm:$0xf]
      %v340 = vld [vmem:[%s169 + $0x3cc] sm:$0xff]
      %v341 = vld [vmem:[%s169 + $0x3d4] sm:$0xf]
      %v342 = vld [vmem:[%s169 + $0x3d8] sm:$0xff]
      %v343 = vld [vmem:[%s169 + $0x3e0] sm:$0xf]
      %v344 = vld [vmem:[%s169 + $0x3e4] sm:$0xff]
      %v345 = vld [vmem:[%s169 + $0x3ec] sm:$0xf]
      %v346 = vld [vmem:[%s169 + $0x3f0] sm:$0xff]
      %v347 = vld [vmem:[%s169 + $0x3f8] sm:$0xf]
      %v348 = vld [vmem:[%s169 + $0x3fc] sm:$0xff]
      %v349 = vld [vmem:[%s169 + $0x404] sm:$0xf]
      %v350 = vld [vmem:[%s169 + $0x408] sm:$0xff]
      %v351 = vld [vmem:[%s169 + $0x410] sm:$0xf]
      %v352 = vld [vmem:[%s169 + $0x414] sm:$0xff]
      %v353 = vld [vmem:[%s169 + $0x41c] sm:$0xf]
      %v354 = vld [vmem:[%s169 + $0x420] sm:$0xff]
      %v355 = vld [vmem:[%s169 + $0x428] sm:$0xf]
      %v356 = vld [vmem:[%s169 + $0x42c] sm:$0xff]
      %v357 = vld [vmem:[%s169 + $0x434] sm:$0xf]
      %v358 = vld [vmem:[%s169 + $0x438] sm:$0xff]
      %v359 = vld [vmem:[%s169 + $0x440] sm:$0xf]
      %v360 = vld [vmem:[%s169 + $0x444] sm:$0xff]
      %v361 = vld [vmem:[%s169 + $0x44c] sm:$0xf]
      %v362 = vld [vmem:[%s169 + $0x450] sm:$0xff]
      %v363 = vld [vmem:[%s169 + $0x458] sm:$0xf]
      %v364 = vld [vmem:[%s169 + $0x45c] sm:$0xff]
      %v365 = vld [vmem:[%s169 + $0x464] sm:$0xf]
      %v366 = vld [vmem:[%s169 + $0x468] sm:$0xff]
      %v367 = vld [vmem:[%s169 + $0x470] sm:$0xf]
      %v368 = vld [vmem:[%s169 + $0x474] sm:$0xff]
      %v369 = vld [vmem:[%s169 + $0x47c] sm:$0xf]
      %v370 = vld [vmem:[%s169 + $0x480] sm:$0xff]
      %v371 = vld [vmem:[%s169 + $0x488] sm:$0xf]
      %v372 = vld [vmem:[%s169 + $0x48c] sm:$0xff]
      %v373 = vld [vmem:[%s169 + $0x494] sm:$0xf]
      %v374 = vld [vmem:[%s1] sm:$0xf]
      %v375 = vld [vmem:[%s1 + $0x4] sm:$0xf]
      %v376 = vld [vmem:[%s1 + $0x8] sm:$0xf]
      %v377 = vld [vmem:[%s1 + $0xc] sm:$0xf]
      %v378 = vld [vmem:[%s1 + $0x10] sm:$0xf]
      %v379 = vld [vmem:[%s1 + $0x14] sm:$0xf]
      %v380 = vld [vmem:[%s1 + $0x18] sm:$0xf]
      %v381 = vld [vmem:[%s1 + $0x1c] sm:$0xf]
      %v382 = vld [vmem:[%s1 + $0x20] sm:$0xf]
      %v383 = vld [vmem:[%s1 + $0x24] sm:$0xf]
      %v384 = vld [vmem:[%s1 + $0x28] sm:$0xf]
      %v385 = vld [vmem:[%s1 + $0x2c] sm:$0xf]
      %v386 = vld [vmem:[%s1 + $0x30] sm:$0xf]
      %v387 = vld [vmem:[%s1 + $0x34] sm:$0xf]
      %v388 = vld [vmem:[%s1 + $0x38] sm:$0xf]
      %v389 = vld [vmem:[%s1 + $0x3c] sm:$0xf]
      %v390 = vld [vmem:[%s1 + $0x40] sm:$0xf]
      %v391 = vld [vmem:[%s1 + $0x44] sm:$0xf]
      %v392 = vld [vmem:[%s1 + $0x48] sm:$0xf]
      %v393 = vld [vmem:[%s1 + $0x4c] sm:$0xf]
      %v394 = vld [vmem:[%s1 + $0x50] sm:$0xf]
      %v395 = vld [vmem:[%s1 + $0x54] sm:$0xf]
      %v396 = vld [vmem:[%s1 + $0x58] sm:$0xf]
      %v397 = vld [vmem:[%s1 + $0x5c] sm:$0xf]
      %v398 = vld [vmem:[%s1 + $0x60] sm:$0xf]
      %v399 = vld [vmem:[%s1 + $0x64] sm:$0xf]
      %v400 = vld [vmem:[%s1 + $0x68] sm:$0xf]
      %v401 = vld [vmem:[%s1 + $0x6c] sm:$0xf]
      %v402 = vld [vmem:[%s1 + $0x70] sm:$0xf]
      %v403 = vld [vmem:[%s1 + $0x74] sm:$0xf]
      %v404 = vld [vmem:[%s1 + $0x78] sm:$0xf]
      %v405 = vld [vmem:[%s1 + $0x7c] sm:$0xf]
      %v406 = vld [vmem:[%s1 + $0x80] sm:$0xf]
      %v407 = vld [vmem:[%s1 + $0x84] sm:$0xf]
      %v408 = vld [vmem:[%s1 + $0x88] sm:$0xf]
      %v409 = vld [vmem:[%s1 + $0x8c] sm:$0xf]
      %v410 = vld [vmem:[%s1 + $0x90] sm:$0xf]
      %v411 = vld [vmem:[%s1 + $0x94] sm:$0xf]
      %v412 = vld [vmem:[%s1 + $0x98] sm:$0xf]
      %v413 = vld [vmem:[%s1 + $0x9c] sm:$0xf]
      %v414 = vld [vmem:[%s1 + $0xa0] sm:$0xf]
      %v415 = vld [vmem:[%s1 + $0xa4] sm:$0xf]
      %v416 = vld [vmem:[%s1 + $0xa8] sm:$0xf]
      %v417 = vld [vmem:[%s1 + $0xac] sm:$0xf]
      %v418 = vld [vmem:[%s1 + $0xb0] sm:$0xf]
      %v419 = vld [vmem:[%s1 + $0xb4] sm:$0xf]
      %v420 = vld [vmem:[%s1 + $0xb8] sm:$0xf]
      %v421 = vld [vmem:[%s1 + $0xbc] sm:$0xf]
      %v618 = vunpack.c.l.b16 %v178
      %v619 = vunpack.c.h.b16 %v178
      %v620 = vunpack.c.l.b16 %v179
      %v621 = vunpack.c.l.b16 %v180
      %v622 = vunpack.c.h.b16 %v180
      %v623 = vunpack.c.l.b16 %v181
      %v624 = vunpack.c.l.b16 %v182
      %v625 = vunpack.c.h.b16 %v182
      %v626 = vunpack.c.l.b16 %v183
      %v627 = vunpack.c.l.b16 %v184
      %v628 = vunpack.c.h.b16 %v184
      %v629 = vunpack.c.l.b16 %v185
      %v630 = vunpack.c.l.b16 %v186
      %v631 = vunpack.c.h.b16 %v186
      %v632 = vunpack.c.l.b16 %v187
      %v633 = vunpack.c.l.b16 %v188
      %v634 = vunpack.c.h.b16 %v188
      %v635 = vunpack.c.l.b16 %v189
      %v636 = vunpack.c.l.b16 %v190
      %v637 = vunpack.c.h.b16 %v190
      %v638 = vunpack.c.l.b16 %v191
      %v639 = vunpack.c.l.b16 %v192
      %v640 = vunpack.c.h.b16 %v192
      %v641 = vunpack.c.l.b16 %v193
      %v642 = vunpack.c.l.b16 %v194
      %v643 = vunpack.c.h.b16 %v194
      %v644 = vunpack.c.l.b16 %v195
      %v645 = vunpack.c.l.b16 %v196
      %v646 = vunpack.c.h.b16 %v196
      %v647 = vunpack.c.l.b16 %v197
      %v648 = vunpack.c.l.b16 %v198
      %v649 = vunpack.c.h.b16 %v198
      %v650 = vunpack.c.l.b16 %v199
      %v651 = vunpack.c.l.b16 %v200
      %v652 = vunpack.c.h.b16 %v200
      %v653 = vunpack.c.l.b16 %v201
      %v654 = vunpack.c.l.b16 %v202
      %v655 = vunpack.c.h.b16 %v202
      %v656 = vunpack.c.l.b16 %v203
      %v657 = vunpack.c.l.b16 %v204
      %v658 = vunpack.c.h.b16 %v204
      %v659 = vunpack.c.l.b16 %v205
      %v660 = vunpack.c.l.b16 %v206
      %v661 = vunpack.c.h.b16 %v206
      %v662 = vunpack.c.l.b16 %v207
      %v663 = vunpack.c.l.b16 %v208
      %v664 = vunpack.c.h.b16 %v208
      %v665 = vunpack.c.l.b16 %v209
      %v666 = vunpack.c.l.b16 %v210
      %v667 = vunpack.c.h.b16 %v210
      %v668 = vunpack.c.l.b16 %v211
      %v669 = vunpack.c.l.b16 %v212
      %v670 = vunpack.c.h.b16 %v212
      %v671 = vunpack.c.l.b16 %v213
      %v672 = vunpack.c.l.b16 %v214
      %v673 = vunpack.c.h.b16 %v214
      %v674 = vunpack.c.l.b16 %v215
      %v675 = vunpack.c.l.b16 %v216
      %v676 = vunpack.c.h.b16 %v216
      %v677 = vunpack.c.l.b16 %v217
      %v678 = vunpack.c.l.b16 %v218
      %v679 = vunpack.c.h.b16 %v218
      %v680 = vunpack.c.l.b16 %v219
      %v681 = vunpack.c.l.b16 %v220
      %v682 = vunpack.c.h.b16 %v220
      %v683 = vunpack.c.l.b16 %v221
      %v684 = vunpack.c.l.b16 %v222
      %v685 = vunpack.c.h.b16 %v222
      %v686 = vunpack.c.l.b16 %v223
      %v687 = vunpack.c.l.b16 %v224
      %v688 = vunpack.c.h.b16 %v224
      %v689 = vunpack.c.l.b16 %v225
      %v690 = vunpack.c.l.b16 %v226
      %v691 = vunpack.c.h.b16 %v226
      %v692 = vunpack.c.l.b16 %v227
      %v693 = vunpack.c.l.b16 %v228
      %v694 = vunpack.c.h.b16 %v228
      %v695 = vunpack.c.l.b16 %v229
      %v696 = vunpack.c.l.b16 %v230
      %v697 = vunpack.c.h.b16 %v230
      %v698 = vunpack.c.l.b16 %v231
      %v699 = vunpack.c.l.b16 %v232
      %v700 = vunpack.c.h.b16 %v232
      %v701 = vunpack.c.l.b16 %v233
      %v702 = vunpack.c.l.b16 %v234
      %v703 = vunpack.c.h.b16 %v234
      %v704 = vunpack.c.l.b16 %v235
      %v705 = vunpack.c.l.b16 %v236
      %v706 = vunpack.c.h.b16 %v236
      %v707 = vunpack.c.l.b16 %v237
      %v708 = vunpack.c.l.b16 %v238
      %v709 = vunpack.c.h.b16 %v238
      %v710 = vunpack.c.l.b16 %v239
      %v711 = vunpack.c.l.b16 %v240
      %v712 = vunpack.c.h.b16 %v240
      %v713 = vunpack.c.l.b16 %v241
      %v714 = vunpack.c.l.b16 %v242
      %v715 = vunpack.c.h.b16 %v242
      %v716 = vunpack.c.l.b16 %v243
      %v717 = vunpack.c.l.b16 %v244
      %v718 = vunpack.c.h.b16 %v244
      %v719 = vunpack.c.l.b16 %v245
      %v720 = vunpack.c.l.b16 %v246
      %v721 = vunpack.c.h.b16 %v246
      %v722 = vunpack.c.l.b16 %v247
      %v723 = vunpack.c.l.b16 %v248
      %v724 = vunpack.c.h.b16 %v248
      %v725 = vunpack.c.l.b16 %v249
      %v726 = vunpack.c.l.b16 %v250
      %v727 = vunpack.c.h.b16 %v250
      %v728 = vunpack.c.l.b16 %v251
      %v729 = vunpack.c.l.b16 %v252
      %v730 = vunpack.c.h.b16 %v252
      %v731 = vunpack.c.l.b16 %v253
      %v732 = vunpack.c.l.b16 %v254
      %v733 = vunpack.c.h.b16 %v254
      %v734 = vunpack.c.l.b16 %v255
      %v735 = vunpack.c.l.b16 %v256
      %v736 = vunpack.c.h.b16 %v256
      %v737 = vunpack.c.l.b16 %v257
      %v738 = vunpack.c.l.b16 %v258
      %v739 = vunpack.c.h.b16 %v258
      %v740 = vunpack.c.l.b16 %v259
      %v741 = vunpack.c.l.b16 %v260
      %v742 = vunpack.c.h.b16 %v260
      %v743 = vunpack.c.l.b16 %v261
      %v744 = vunpack.c.l.b16 %v262
      %v745 = vunpack.c.h.b16 %v262
      %v746 = vunpack.c.l.b16 %v263
      %v747 = vunpack.c.l.b16 %v264
      %v748 = vunpack.c.h.b16 %v264
      %v749 = vunpack.c.l.b16 %v265
      %v750 = vunpack.c.l.b16 %v266
      %v751 = vunpack.c.h.b16 %v266
      %v752 = vunpack.c.l.b16 %v267
      %v753 = vunpack.c.l.b16 %v268
      %v754 = vunpack.c.h.b16 %v268
      %v755 = vunpack.c.l.b16 %v269
      %v756 = vunpack.c.l.b16 %v270
      %v757 = vunpack.c.h.b16 %v270
      %v758 = vunpack.c.l.b16 %v271
      %v759 = vunpack.c.l.b16 %v272
      %v760 = vunpack.c.h.b16 %v272
      %v761 = vunpack.c.l.b16 %v273
      %v762 = vunpack.c.l.b16 %v274
      %v763 = vunpack.c.h.b16 %v274
      %v764 = vunpack.c.l.b16 %v275
      %v765 = vunpack.c.l.b16 %v276
      %v766 = vunpack.c.h.b16 %v276
      %v767 = vunpack.c.l.b16 %v277
      %v768 = vunpack.c.l.b16 %v278
      %v769 = vunpack.c.h.b16 %v278
      %v770 = vunpack.c.l.b16 %v279
      %v771 = vunpack.c.l.b16 %v280
      %v772 = vunpack.c.h.b16 %v280
      %v773 = vunpack.c.l.b16 %v281
      %v774 = vunpack.c.l.b16 %v282
      %v775 = vunpack.c.h.b16 %v282
      %v776 = vunpack.c.l.b16 %v283
      %v777 = vunpack.c.l.b16 %v284
      %v778 = vunpack.c.h.b16 %v284
      %v779 = vunpack.c.l.b16 %v285
      %v780 = vunpack.c.l.b16 %v286
      %v781 = vunpack.c.h.b16 %v286
      %v782 = vunpack.c.l.b16 %v287
      %v783 = vunpack.c.l.b16 %v288
      %v784 = vunpack.c.h.b16 %v288
      %v785 = vunpack.c.l.b16 %v289
      %v786 = vunpack.c.l.b16 %v290
      %v787 = vunpack.c.h.b16 %v290
      %v788 = vunpack.c.l.b16 %v291
      %v789 = vunpack.c.l.b16 %v292
      %v790 = vunpack.c.h.b16 %v292
      %v791 = vunpack.c.l.b16 %v293
      %v792 = vunpack.c.l.b16 %v294
      %v793 = vunpack.c.h.b16 %v294
      %v794 = vunpack.c.l.b16 %v295
      %v795 = vunpack.c.l.b16 %v296
      %v796 = vunpack.c.h.b16 %v296
      %v797 = vunpack.c.l.b16 %v297
      %v798 = vunpack.c.l.b16 %v298
      %v799 = vunpack.c.h.b16 %v298
      %v800 = vunpack.c.l.b16 %v299
      %v801 = vunpack.c.l.b16 %v300
      %v802 = vunpack.c.h.b16 %v300
      %v803 = vunpack.c.l.b16 %v301
      %v804 = vunpack.c.l.b16 %v302
      %v805 = vunpack.c.h.b16 %v302
      %v806 = vunpack.c.l.b16 %v303
      %v807 = vunpack.c.l.b16 %v304
      %v808 = vunpack.c.h.b16 %v304
      %v809 = vunpack.c.l.b16 %v305
      %v810 = vunpack.c.l.b16 %v306
      %v811 = vunpack.c.h.b16 %v306
      %v812 = vunpack.c.l.b16 %v307
      %v813 = vunpack.c.l.b16 %v308
      %v814 = vunpack.c.h.b16 %v308
      %v815 = vunpack.c.l.b16 %v309
      %v816 = vunpack.c.l.b16 %v310
      %v817 = vunpack.c.h.b16 %v310
      %v818 = vunpack.c.l.b16 %v311
      %v819 = vunpack.c.l.b16 %v312
      %v820 = vunpack.c.h.b16 %v312
      %v821 = vunpack.c.l.b16 %v313
      %v822 = vunpack.c.l.b16 %v314
      %v823 = vunpack.c.h.b16 %v314
      %v824 = vunpack.c.l.b16 %v315
      %v825 = vunpack.c.l.b16 %v316
      %v826 = vunpack.c.h.b16 %v316
      %v827 = vunpack.c.l.b16 %v317
      %v828 = vunpack.c.l.b16 %v318
      %v829 = vunpack.c.h.b16 %v318
      %v830 = vunpack.c.l.b16 %v319
      %v831 = vunpack.c.l.b16 %v320
      %v832 = vunpack.c.h.b16 %v320
      %v833 = vunpack.c.l.b16 %v321
      %v834 = vunpack.c.l.b16 %v322
      %v835 = vunpack.c.h.b16 %v322
      %v836 = vunpack.c.l.b16 %v323
      %v837 = vunpack.c.l.b16 %v324
      %v838 = vunpack.c.h.b16 %v324
      %v839 = vunpack.c.l.b16 %v325
      %v840 = vunpack.c.l.b16 %v326
      %v841 = vunpack.c.h.b16 %v326
      %v842 = vunpack.c.l.b16 %v327
      %v843 = vunpack.c.l.b16 %v328
      %v844 = vunpack.c.h.b16 %v328
      %v845 = vunpack.c.l.b16 %v329
      %v846 = vunpack.c.l.b16 %v330
      %v847 = vunpack.c.h.b16 %v330
      %v848 = vunpack.c.l.b16 %v331
      %v849 = vunpack.c.l.b16 %v332
      %v850 = vunpack.c.h.b16 %v332
      %v851 = vunpack.c.l.b16 %v333
      %v852 = vunpack.c.l.b16 %v334
      %v853 = vunpack.c.h.b16 %v334
      %v854 = vunpack.c.l.b16 %v335
      %v855 = vunpack.c.l.b16 %v336
      %v856 = vunpack.c.h.b16 %v336
      %v857 = vunpack.c.l.b16 %v337
      %v858 = vunpack.c.l.b16 %v338
      %v859 = vunpack.c.h.b16 %v338
      %v860 = vunpack.c.l.b16 %v339
      %v861 = vunpack.c.l.b16 %v340
      %v862 = vunpack.c.h.b16 %v340
      %v863 = vunpack.c.l.b16 %v341
      %v864 = vunpack.c.l.b16 %v342
      %v865 = vunpack.c.h.b16 %v342
      %v866 = vunpack.c.l.b16 %v343
      %v867 = vunpack.c.l.b16 %v344
      %v868 = vunpack.c.h.b16 %v344
      %v869 = vunpack.c.l.b16 %v345
      %v870 = vunpack.c.l.b16 %v346
      %v871 = vunpack.c.h.b16 %v346
      %v872 = vunpack.c.l.b16 %v347
      %v873 = vunpack.c.l.b16 %v348
      %v874 = vunpack.c.h.b16 %v348
      %v875 = vunpack.c.l.b16 %v349
      %v876 = vunpack.c.l.b16 %v350
      %v877 = vunpack.c.h.b16 %v350
      %v878 = vunpack.c.l.b16 %v351
      %v879 = vunpack.c.l.b16 %v352
      %v880 = vunpack.c.h.b16 %v352
      %v881 = vunpack.c.l.b16 %v353
      %v882 = vunpack.c.l.b16 %v354
      %v883 = vunpack.c.h.b16 %v354
      %v884 = vunpack.c.l.b16 %v355
      %v885 = vunpack.c.l.b16 %v356
      %v886 = vunpack.c.h.b16 %v356
      %v887 = vunpack.c.l.b16 %v357
      %v888 = vunpack.c.l.b16 %v358
      %v889 = vunpack.c.h.b16 %v358
      %v890 = vunpack.c.l.b16 %v359
      %v891 = vunpack.c.l.b16 %v360
      %v892 = vunpack.c.h.b16 %v360
      %v893 = vunpack.c.l.b16 %v361
      %v894 = vunpack.c.l.b16 %v362
      %v895 = vunpack.c.h.b16 %v362
      %v896 = vunpack.c.l.b16 %v363
      %v897 = vunpack.c.l.b16 %v364
      %v898 = vunpack.c.h.b16 %v364
      %v899 = vunpack.c.l.b16 %v365
      %v900 = vunpack.c.l.b16 %v366
      %v901 = vunpack.c.h.b16 %v366
      %v902 = vunpack.c.l.b16 %v367
      %v903 = vunpack.c.l.b16 %v368
      %v904 = vunpack.c.h.b16 %v368
      %v905 = vunpack.c.l.b16 %v369
      %v906 = vunpack.c.l.b16 %v370
      %v907 = vunpack.c.h.b16 %v370
      %v908 = vunpack.c.l.b16 %v371
      %v909 = vunpack.c.l.b16 %v372
      %v910 = vunpack.c.h.b16 %v372
      %v911 = vunpack.c.l.b16 %v373
      %v912 = vpack.c.b16 %v621, %v618
      %v913 = vpack.c.b16 %v622, %v619
      %v914 = vpack.c.b16 %v623, %v620
      %v915 = vpack.c.b16 %v627, %v624
      %v916 = vpack.c.b16 %v628, %v625
      %v917 = vpack.c.b16 %v629, %v626
      %v918 = vpack.c.b16 %v633, %v630
      %v919 = vpack.c.b16 %v634, %v631
      %v920 = vpack.c.b16 %v635, %v632
      %v921 = vpack.c.b16 %v639, %v636
      %v922 = vpack.c.b16 %v640, %v637
      %v923 = vpack.c.b16 %v641, %v638
      %v924 = vpack.c.b16 %v645, %v642
      %v925 = vpack.c.b16 %v646, %v643
      %v926 = vpack.c.b16 %v647, %v644
      %v927 = vpack.c.b16 %v651, %v648
      %v928 = vpack.c.b16 %v652, %v649
      %v929 = vpack.c.b16 %v653, %v650
      %v930 = vpack.c.b16 %v657, %v654
      %v931 = vpack.c.b16 %v658, %v655
      %v932 = vpack.c.b16 %v659, %v656
      %v933 = vpack.c.b16 %v663, %v660
      %v934 = vpack.c.b16 %v664, %v661
      %v935 = vpack.c.b16 %v665, %v662
      %v936 = vpack.c.b16 %v669, %v666
      %v937 = vpack.c.b16 %v670, %v667
      %v938 = vpack.c.b16 %v671, %v668
      %v939 = vpack.c.b16 %v675, %v672
      %v940 = vpack.c.b16 %v676, %v673
      %v941 = vpack.c.b16 %v677, %v674
      %v942 = vpack.c.b16 %v681, %v678
      %v943 = vpack.c.b16 %v682, %v679
      %v944 = vpack.c.b16 %v683, %v680
      %v945 = vpack.c.b16 %v687, %v684
      %v946 = vpack.c.b16 %v688, %v685
      %v947 = vpack.c.b16 %v689, %v686
      %v948 = vpack.c.b16 %v693, %v690
      %v949 = vpack.c.b16 %v694, %v691
      %v950 = vpack.c.b16 %v695, %v692
      %v951 = vpack.c.b16 %v699, %v696
      %v952 = vpack.c.b16 %v700, %v697
      %v953 = vpack.c.b16 %v701, %v698
      %v954 = vpack.c.b16 %v705, %v702
      %v955 = vpack.c.b16 %v706, %v703
      %v956 = vpack.c.b16 %v707, %v704
      %v957 = vpack.c.b16 %v711, %v708
      %v958 = vpack.c.b16 %v712, %v709
      %v959 = vpack.c.b16 %v713, %v710
      %v960 = vpack.c.b16 %v717, %v714
      %v961 = vpack.c.b16 %v718, %v715
      %v962 = vpack.c.b16 %v719, %v716
      %v963 = vpack.c.b16 %v723, %v720
      %v964 = vpack.c.b16 %v724, %v721
      %v965 = vpack.c.b16 %v725, %v722
      %v966 = vpack.c.b16 %v729, %v726
      %v967 = vpack.c.b16 %v730, %v727
      %v968 = vpack.c.b16 %v731, %v728
      %v969 = vpack.c.b16 %v735, %v732
      %v970 = vpack.c.b16 %v736, %v733
      %v971 = vpack.c.b16 %v737, %v734
      %v972 = vpack.c.b16 %v741, %v738
      %v973 = vpack.c.b16 %v742, %v739
      %v974 = vpack.c.b16 %v743, %v740
      %v975 = vpack.c.b16 %v747, %v744
      %v976 = vpack.c.b16 %v748, %v745
      %v977 = vpack.c.b16 %v749, %v746
      %v978 = vpack.c.b16 %v753, %v750
      %v979 = vpack.c.b16 %v754, %v751
      %v980 = vpack.c.b16 %v755, %v752
      %v981 = vpack.c.b16 %v759, %v756
      %v982 = vpack.c.b16 %v760, %v757
      %v983 = vpack.c.b16 %v761, %v758
      %v984 = vpack.c.b16 %v765, %v762
      %v985 = vpack.c.b16 %v766, %v763
      %v986 = vpack.c.b16 %v767, %v764
      %v987 = vpack.c.b16 %v771, %v768
      %v988 = vpack.c.b16 %v772, %v769
      %v989 = vpack.c.b16 %v773, %v770
      %v990 = vpack.c.b16 %v777, %v774
      %v991 = vpack.c.b16 %v778, %v775
      %v992 = vpack.c.b16 %v779, %v776
      %v993 = vpack.c.b16 %v783, %v780
      %v994 = vpack.c.b16 %v784, %v781
      %v995 = vpack.c.b16 %v785, %v782
      %v996 = vpack.c.b16 %v789, %v786
      %v997 = vpack.c.b16 %v790, %v787
      %v998 = vpack.c.b16 %v791, %v788
      %v999 = vpack.c.b16 %v795, %v792
      %v1000 = vpack.c.b16 %v796, %v793
      %v1001 = vpack.c.b16 %v797, %v794
      %v1002 = vpack.c.b16 %v801, %v798
      %v1003 = vpack.c.b16 %v802, %v799
      %v1004 = vpack.c.b16 %v803, %v800
      %v1005 = vpack.c.b16 %v807, %v804
      %v1006 = vpack.c.b16 %v808, %v805
      %v1007 = vpack.c.b16 %v809, %v806
      %v1008 = vpack.c.b16 %v813, %v810
      %v1009 = vpack.c.b16 %v814, %v811
      %v1010 = vpack.c.b16 %v815, %v812
      %v1011 = vpack.c.b16 %v819, %v816
      %v1012 = vpack.c.b16 %v820, %v817
      %v1013 = vpack.c.b16 %v821, %v818
      %v1014 = vpack.c.b16 %v825, %v822
      %v1015 = vpack.c.b16 %v826, %v823
      %v1016 = vpack.c.b16 %v827, %v824
      %v1017 = vpack.c.b16 %v831, %v828
      %v1018 = vpack.c.b16 %v832, %v829
      %v1019 = vpack.c.b16 %v833, %v830
      %v1020 = vpack.c.b16 %v837, %v834
      %v1021 = vpack.c.b16 %v838, %v835
      %v1022 = vpack.c.b16 %v839, %v836
      %v1023 = vpack.c.b16 %v843, %v840
      %v1024 = vpack.c.b16 %v844, %v841
      %v1025 = vpack.c.b16 %v845, %v842
      %v1026 = vpack.c.b16 %v849, %v846
      %v1027 = vpack.c.b16 %v850, %v847
      %v1028 = vpack.c.b16 %v851, %v848
      %v1029 = vpack.c.b16 %v855, %v852
      %v1030 = vpack.c.b16 %v856, %v853
      %v1031 = vpack.c.b16 %v857, %v854
      %v1032 = vpack.c.b16 %v861, %v858
      %v1033 = vpack.c.b16 %v862, %v859
      %v1034 = vpack.c.b16 %v863, %v860
      %v1035 = vpack.c.b16 %v867, %v864
      %v1036 = vpack.c.b16 %v868, %v865
      %v1037 = vpack.c.b16 %v869, %v866
      %v1038 = vpack.c.b16 %v873, %v870
      %v1039 = vpack.c.b16 %v874, %v871
      %v1040 = vpack.c.b16 %v875, %v872
      %v1041 = vpack.c.b16 %v879, %v876
      %v1042 = vpack.c.b16 %v880, %v877
      %v1043 = vpack.c.b16 %v881, %v878
      %v1044 = vpack.c.b16 %v885, %v882
      %v1045 = vpack.c.b16 %v886, %v883
      %v1046 = vpack.c.b16 %v887, %v884
      %v1047 = vpack.c.b16 %v891, %v888
      %v1048 = vpack.c.b16 %v892, %v889
      %v1049 = vpack.c.b16 %v893, %v890
      %v1050 = vpack.c.b16 %v897, %v894
      %v1051 = vpack.c.b16 %v898, %v895
      %v1052 = vpack.c.b16 %v899, %v896
      %v1053 = vpack.c.b16 %v903, %v900
      %v1054 = vpack.c.b16 %v904, %v901
      %v1055 = vpack.c.b16 %v905, %v902
      %v1056 = vpack.c.b16 %v909, %v906
      %v1057 = vpack.c.b16 %v910, %v907
      %v1058 = vpack.c.b16 %v911, %v908
      %v1254 = vunpack.c.l.b16 %v374
      %v1255 = vunpack.c.l.b16 %v375
      %v1256 = vunpack.c.l.b16 %v376
      %v1257 = vunpack.c.l.b16 %v377
      %v1258 = vunpack.c.l.b16 %v378
      %v1259 = vunpack.c.l.b16 %v379
      %v1260 = vunpack.c.l.b16 %v380
      %v1261 = vunpack.c.l.b16 %v381
      %v1262 = vunpack.c.l.b16 %v382
      %v1263 = vunpack.c.l.b16 %v383
      %v1264 = vunpack.c.l.b16 %v384
      %v1265 = vunpack.c.l.b16 %v385
      %v1266 = vunpack.c.l.b16 %v386
      %v1267 = vunpack.c.l.b16 %v387
      %v1268 = vunpack.c.l.b16 %v388
      %v1269 = vunpack.c.l.b16 %v389
      %v1270 = vunpack.c.l.b16 %v390
      %v1271 = vunpack.c.l.b16 %v391
      %v1272 = vunpack.c.l.b16 %v392
      %v1273 = vunpack.c.l.b16 %v393
      %v1274 = vunpack.c.l.b16 %v394
      %v1275 = vunpack.c.l.b16 %v395
      %v1276 = vunpack.c.l.b16 %v396
      %v1277 = vunpack.c.l.b16 %v397
      %v1278 = vunpack.c.l.b16 %v398
      %v1279 = vunpack.c.l.b16 %v399
      %v1280 = vunpack.c.l.b16 %v400
      %v1281 = vunpack.c.l.b16 %v401
      %v1282 = vunpack.c.l.b16 %v402
      %v1283 = vunpack.c.l.b16 %v403
      %v1284 = vunpack.c.l.b16 %v404
      %v1285 = vunpack.c.l.b16 %v405
      %v1286 = vunpack.c.l.b16 %v406
      %v1287 = vunpack.c.l.b16 %v407
      %v1288 = vunpack.c.l.b16 %v408
      %v1289 = vunpack.c.l.b16 %v409
      %v1290 = vunpack.c.l.b16 %v410
      %v1291 = vunpack.c.l.b16 %v411
      %v1292 = vunpack.c.l.b16 %v412
      %v1293 = vunpack.c.l.b16 %v413
      %v1294 = vunpack.c.l.b16 %v414
      %v1295 = vunpack.c.l.b16 %v415
      %v1296 = vunpack.c.l.b16 %v416
      %v1297 = vunpack.c.l.b16 %v417
      %v1298 = vunpack.c.l.b16 %v418
      %v1299 = vunpack.c.l.b16 %v419
      %v1300 = vunpack.c.l.b16 %v420
      %v1301 = vunpack.c.l.b16 %v421
      %v1302 = vpack.c.b16 %v1255, %v1254
      %v1303 = vpack.c.b16 %v1257, %v1256
      %v1304 = vpack.c.b16 %v1259, %v1258
      %v1305 = vpack.c.b16 %v1261, %v1260
      %v1306 = vpack.c.b16 %v1263, %v1262
      %v1307 = vpack.c.b16 %v1265, %v1264
      %v1308 = vpack.c.b16 %v1267, %v1266
      %v1309 = vpack.c.b16 %v1269, %v1268
      %v1310 = vpack.c.b16 %v1271, %v1270
      %v1311 = vpack.c.b16 %v1273, %v1272
      %v1312 = vpack.c.b16 %v1275, %v1274
      %v1313 = vpack.c.b16 %v1277, %v1276
      %v1314 = vpack.c.b16 %v1279, %v1278
      %v1315 = vpack.c.b16 %v1281, %v1280
      %v1316 = vpack.c.b16 %v1283, %v1282
      %v1317 = vpack.c.b16 %v1285, %v1284
      %v1318 = vpack.c.b16 %v1287, %v1286
      %v1319 = vpack.c.b16 %v1289, %v1288
      %v1320 = vpack.c.b16 %v1291, %v1290
      %v1321 = vpack.c.b16 %v1293, %v1292
      %v1322 = vpack.c.b16 %v1295, %v1294
      %v1323 = vpack.c.b16 %v1297, %v1296
      %v1324 = vpack.c.b16 %v1299, %v1298
      %v1325 = vpack.c.b16 %v1301, %v1300
      %1350 = vmatprep.subr.bf16.mxu0 0
      %1351 = vmatpush1.bf16.msra.mxu0 %v1302
      %1352 = vmatprep.subr.bf16.mxu0 0
      %1353 = vmatpush1.bf16.msra.mxu0 %v1303
      %1354 = vmatprep.subr.bf16.mxu0 0
      %1355 = vmatpush1.bf16.msra.mxu0 %v1304
      %1356 = vmatprep.subr.bf16.mxu0 0
      %1357 = vmatpush1.bf16.msra.mxu0 %v1305
      %1358 = vmatprep.subr.bf16.mxu0 0
      %1359 = vmatpush1.bf16.msra.mxu0 %v1306
      %1360 = vmatprep.subr.bf16.mxu0 0
      %1361 = vmatpush1.bf16.msra.mxu0 %v1307
      %1362 = vmatprep.subr.bf16.mxu0 0
      %1363 = vmatpush1.bf16.msra.mxu0 %v1308
      %1364 = vmatprep.subr.bf16.mxu0 0
      %1365 = vmatpush1.bf16.msra.mxu0 %v1309
      %1366 = vmatprep.subr.bf16.mxu0 0
      %1367 = vmatpush1.bf16.msra.mxu0 %v1310
      %1368 = vmatprep.subr.bf16.mxu0 0
      %1369 = vmatpush1.bf16.msra.mxu0 %v1311
      %1370 = vmatprep.subr.bf16.mxu0 0
      %1371 = vmatpush1.bf16.msra.mxu0 %v1312
      %1372 = vmatprep.subr.bf16.mxu0 0
      %1373 = vmatpush1.bf16.msra.mxu0 %v1313
      %1374 = vmatprep.subr.bf16.mxu0 0
      %1375 = vmatpush1.bf16.msra.mxu0 %v1314
      %1376 = vmatprep.subr.bf16.mxu0 0
      %1377 = vmatpush1.bf16.msra.mxu0 %v1315
      %1378 = vmatprep.subr.bf16.mxu0 0
      %1379 = vmatpush1.bf16.msra.mxu0 %v1316
      %1380 = vmatprep.subr.bf16.mxu0 0
      %1381 = vmatpush1.bf16.msra.mxu0 %v1317
      %1382 = vmatprep.mubr.bf16.mxu0 %v913
      %1383 = vmatmul.mubr.bf16.gmra.mrb[0].mxu0 %v912
      %v1384 = vpop.f32.mrb[0].mxu0
      %v1385 = vadd.f32 0.0, %v1384
      %v1386 = vpop.f32.mrb[0].mxu0
      %v1387 = vpop.f32.mrb[0].mxu0
      %v1388 = vadd.f32 0.0, %v1387
      %v1389 = vpop.f32.mrb[0].mxu0
      %1390 = vmatprep.mubr.bf16.mxu0 %v916
      %1391 = vmatmul.mubr.bf16.gmra.mrb[0].mxu0 %v915
      %v1392 = vpop.f32.mrb[0].mxu0
      %v1393 = vadd.f32 0.0, %v1392
      %v1394 = vpop.f32.mrb[0].mxu0
      %v1395 = vpop.f32.mrb[0].mxu0
      %v1396 = vadd.f32 0.0, %v1395
      %v1397 = vpop.f32.mrb[0].mxu0
      %1398 = vmatprep.mubr.bf16.mxu0 %v919
      %1399 = vmatmul.mubr.bf16.gmra.mrb[0].mxu0 %v918
      %v1400 = vpop.f32.mrb[0].mxu0
      %v1401 = vadd.f32 0.0, %v1400
      %v1402 = vpop.f32.mrb[0].mxu0
      %v1403 = vpop.f32.mrb[0].mxu0
      %v1404 = vadd.f32 0.0, %v1403
      %v1405 = vpop.f32.mrb[0].mxu0
      %1406 = vmatprep.mubr.bf16.mxu0 %v922
      %1407 = vmatmul.mubr.bf16.gmra.mrb[0].mxu0 %v921
      %v1408 = vpop.f32.mrb[0].mxu0
      %v1409 = vadd.f32 0.0, %v1408
      %v1410 = vpop.f32.mrb[0].mxu0
      %v1411 = vpop.f32.mrb[0].mxu0
      %v1412 = vadd.f32 0.0, %v1411
      %v1413 = vpop.f32.mrb[0].mxu0
      %1414 = vmatprep.mubr.bf16.mxu0 %v925
      %1415 = vmatmul.mubr.bf16.gmra.mrb[0].mxu0 %v924
      %v1416 = vpop.f32.mrb[0].mxu0
      %v1417 = vadd.f32 0.0, %v1416
      %v1418 = vpop.f32.mrb[0].mxu0
      %v1419 = vpop.f32.mrb[0].mxu0
      %v1420 = vadd.f32 0.0, %v1419
      %v1421 = vpop.f32.mrb[0].mxu0
      %1422 = vmatprep.mubr.bf16.mxu0 %v928
      %1423 = vmatmul.mubr.bf16.gmra.mrb[0].mxu0 %v927
      %v1424 = vpop.f32.mrb[0].mxu0
      %v1425 = vadd.f32 0.0, %v1424
      %v1426 = vpop.f32.mrb[0].mxu0
      %v1427 = vpop.f32.mrb[0].mxu0
      %v1428 = vadd.f32 0.0, %v1427
      %v1429 = vpop.f32.mrb[0].mxu0
      %1430 = vmatprep.mubr.bf16.mxu0 %v931
      %1431 = vmatmul.mubr.bf16.gmra.mrb[0].mxu0 %v930
      %v1432 = vpop.f32.mrb[0].mxu0
      %v1433 = vadd.f32 0.0, %v1432
      %v1434 = vpop.f32.mrb[0].mxu0
      %v1435 = vpop.f32.mrb[0].mxu0
      %v1436 = vadd.f32 0.0, %v1435
      %v1437 = vpop.f32.mrb[0].mxu0
      %1438 = vmatprep.mubr.bf16.mxu0 %v934
      %1439 = vmatmul.mubr.bf16.gmra.mrb[0].mxu0 %v933
      %v1440 = vpop.f32.mrb[0].mxu0
      %v1441 = vadd.f32 0.0, %v1440
      %v1442 = vpop.f32.mrb[0].mxu0
      %v1443 = vpop.f32.mrb[0].mxu0
      %v1444 = vadd.f32 0.0, %v1443
      %v1445 = vpop.f32.mrb[0].mxu0
      %1446 = vmatprep.mubr.bf16.mxu0 %v937
      %1447 = vmatmul.mubr.bf16.gmra.mrb[0].mxu0 %v936
      %v1448 = vpop.f32.mrb[0].mxu0
      %v1449 = vadd.f32 0.0, %v1448
      %v1450 = vpop.f32.mrb[0].mxu0
      %v1451 = vpop.f32.mrb[0].mxu0
      %v1452 = vadd.f32 0.0, %v1451
      %v1453 = vpop.f32.mrb[0].mxu0
      %1454 = vmatprep.mubr.bf16.mxu0 %v940
      %1455 = vmatmul.mubr.bf16.gmra.mrb[0].mxu0 %v939
      %v1456 = vpop.f32.mrb[0].mxu0
      %v1457 = vadd.f32 0.0, %v1456
      %v1458 = vpop.f32.mrb[0].mxu0
      %v1459 = vpop.f32.mrb[0].mxu0
      %v1460 = vadd.f32 0.0, %v1459
      %v1461 = vpop.f32.mrb[0].mxu0
      %1462 = vmatprep.mubr.bf16.mxu0 %v943
      %1463 = vmatmul.mubr.bf16.gmra.mrb[0].mxu0 %v942
      %v1464 = vpop.f32.mrb[0].mxu0
      %v1465 = vadd.f32 0.0, %v1464
      %v1466 = vpop.f32.mrb[0].mxu0
      %v1467 = vpop.f32.mrb[0].mxu0
      %v1468 = vadd.f32 0.0, %v1467
      %v1469 = vpop.f32.mrb[0].mxu0
      %1470 = vmatprep.mubr.bf16.mxu0 %v946
      %1471 = vmatmul.mubr.bf16.gmra.mrb[0].mxu0 %v945
      %v1472 = vpop.f32.mrb[0].mxu0
      %v1473 = vadd.f32 0.0, %v1472
      %v1474 = vpop.f32.mrb[0].mxu0
      %v1475 = vpop.f32.mrb[0].mxu0
      %v1476 = vadd.f32 0.0, %v1475
      %v1477 = vpop.f32.mrb[0].mxu0
      %1478 = vmatprep.mubr.bf16.mxu0 %v949
      %1479 = vmatmul.mubr.bf16.gmra.mrb[0].mxu0 %v948
      %v1480 = vpop.f32.mrb[0].mxu0
      %v1481 = vadd.f32 0.0, %v1480
      %v1482 = vpop.f32.mrb[0].mxu0
      %v1483 = vpop.f32.mrb[0].mxu0
      %v1484 = vadd.f32 0.0, %v1483
      %v1485 = vpop.f32.mrb[0].mxu0
      %1486 = vmatprep.mubr.bf16.mxu0 %v952
      %1487 = vmatmul.mubr.bf16.gmra.mrb[0].mxu0 %v951
      %v1488 = vpop.f32.mrb[0].mxu0
      %v1489 = vadd.f32 0.0, %v1488
      %v1490 = vpop.f32.mrb[0].mxu0
      %v1491 = vpop.f32.mrb[0].mxu0
      %v1492 = vadd.f32 0.0, %v1491
      %v1493 = vpop.f32.mrb[0].mxu0
      %1494 = vmatprep.mubr.bf16.mxu0 %v955
      %1495 = vmatmul.mubr.bf16.gmra.mrb[0].mxu0 %v954
      %v1496 = vpop.f32.mrb[0].mxu0
      %v1497 = vadd.f32 0.0, %v1496
      %v1498 = vpop.f32.mrb[0].mxu0
      %v1499 = vpop.f32.mrb[0].mxu0
      %v1500 = vadd.f32 0.0, %v1499
      %v1501 = vpop.f32.mrb[0].mxu0
      %1502 = vmatprep.mubr.bf16.mxu0 %v958
      %1503 = vmatmul.mubr.bf16.gmra.mrb[0].mxu0 %v957
      %v1504 = vpop.f32.mrb[0].mxu0
      %v1505 = vadd.f32 0.0, %v1504
      %v1506 = vpop.f32.mrb[0].mxu0
      %v1507 = vpop.f32.mrb[0].mxu0
      %v1508 = vadd.f32 0.0, %v1507
      %v1509 = vpop.f32.mrb[0].mxu0
      %1510 = vmatprep.mubr.bf16.mxu0 %v961
      %1511 = vmatmul.mubr.bf16.gmra.mrb[0].mxu0 %v960
      %v1512 = vpop.f32.mrb[0].mxu0
      %v1513 = vadd.f32 0.0, %v1512
      %v1514 = vpop.f32.mrb[0].mxu0
      %v1515 = vpop.f32.mrb[0].mxu0
      %v1516 = vadd.f32 0.0, %v1515
      %v1517 = vpop.f32.mrb[0].mxu0
      %1518 = vmatprep.mubr.bf16.mxu0 %v964
      %1519 = vmatmul.mubr.bf16.gmra.mrb[0].mxu0 %v963
      %v1520 = vpop.f32.mrb[0].mxu0
      %v1521 = vadd.f32 0.0, %v1520
      %v1522 = vpop.f32.mrb[0].mxu0
      %v1523 = vpop.f32.mrb[0].mxu0
      %v1524 = vadd.f32 0.0, %v1523
      %v1525 = vpop.f32.mrb[0].mxu0
      %1526 = vmatprep.mubr.bf16.mxu0 %v967
      %1527 = vmatmul.mubr.bf16.gmra.mrb[0].mxu0 %v966
      %v1528 = vpop.f32.mrb[0].mxu0
      %v1529 = vadd.f32 0.0, %v1528
      %v1530 = vpop.f32.mrb[0].mxu0
      %v1531 = vpop.f32.mrb[0].mxu0
      %v1532 = vadd.f32 0.0, %v1531
      %v1533 = vpop.f32.mrb[0].mxu0
      %1534 = vmatprep.mubr.bf16.mxu0 %v970
      %1535 = vmatmul.mubr.bf16.gmra.mrb[0].mxu0 %v969
      %v1536 = vpop.f32.mrb[0].mxu0
      %v1537 = vadd.f32 0.0, %v1536
      %v1538 = vpop.f32.mrb[0].mxu0
      %v1539 = vpop.f32.mrb[0].mxu0
      %v1540 = vadd.f32 0.0, %v1539
      %v1541 = vpop.f32.mrb[0].mxu0
      %1542 = vmatprep.mubr.bf16.mxu0 %v973
      %1543 = vmatmul.mubr.bf16.gmra.mrb[0].mxu0 %v972
      %v1544 = vpop.f32.mrb[0].mxu0
      %v1545 = vadd.f32 0.0, %v1544
      %v1546 = vpop.f32.mrb[0].mxu0
      %v1547 = vpop.f32.mrb[0].mxu0
      %v1548 = vadd.f32 0.0, %v1547
      %v1549 = vpop.f32.mrb[0].mxu0
      %1550 = vmatprep.mubr.bf16.mxu0 %v976
      %1551 = vmatmul.mubr.bf16.gmra.mrb[0].mxu0 %v975
      %v1552 = vpop.f32.mrb[0].mxu0
      %v1553 = vadd.f32 0.0, %v1552
      %v1554 = vpop.f32.mrb[0].mxu0
      %v1555 = vpop.f32.mrb[0].mxu0
      %v1556 = vadd.f32 0.0, %v1555
      %v1557 = vpop.f32.mrb[0].mxu0
      %1558 = vmatprep.mubr.bf16.mxu0 %v979
      %1559 = vmatmul.mubr.bf16.gmra.mrb[0].mxu0 %v978
      %v1560 = vpop.f32.mrb[0].mxu0
      %v1561 = vadd.f32 0.0, %v1560
      %v1562 = vpop.f32.mrb[0].mxu0
      %v1563 = vpop.f32.mrb[0].mxu0
      %v1564 = vadd.f32 0.0, %v1563
      %v1565 = vpop.f32.mrb[0].mxu0
      %1566 = vmatprep.mubr.bf16.mxu0 %v982
      %1567 = vmatmul.mubr.bf16.gmra.mrb[0].mxu0 %v981
      %v1568 = vpop.f32.mrb[0].mxu0
      %v1569 = vadd.f32 0.0, %v1568
      %v1570 = vpop.f32.mrb[0].mxu0
      %v1571 = vpop.f32.mrb[0].mxu0
      %v1572 = vadd.f32 0.0, %v1571
      %v1573 = vpop.f32.mrb[0].mxu0
      %1574 = vmatprep.mubr.bf16.mxu0 %v985
      %1575 = vmatmul.mubr.bf16.gmra.mrb[0].mxu0 %v984
      %v1576 = vpop.f32.mrb[0].mxu0
      %v1577 = vadd.f32 0.0, %v1576
      %v1578 = vpop.f32.mrb[0].mxu0
      %v1579 = vpop.f32.mrb[0].mxu0
      %v1580 = vadd.f32 0.0, %v1579
      %v1581 = vpop.f32.mrb[0].mxu0
      %1582 = vmatprep.mubr.bf16.mxu0 %v988
      %1583 = vmatmul.mubr.bf16.gmra.mrb[0].mxu0 %v987
      %v1584 = vpop.f32.mrb[0].mxu0
      %v1585 = vadd.f32 0.0, %v1584
      %v1586 = vpop.f32.mrb[0].mxu0
      %v1587 = vpop.f32.mrb[0].mxu0
      %v1588 = vadd.f32 0.0, %v1587
      %v1589 = vpop.f32.mrb[0].mxu0
      %1590 = vmatprep.mubr.bf16.mxu0 %v991
      %1591 = vmatmul.mubr.bf16.gmra.mrb[0].mxu0 %v990
      %v1592 = vpop.f32.mrb[0].mxu0
      %v1593 = vadd.f32 0.0, %v1592
      %v1594 = vpop.f32.mrb[0].mxu0
      %v1595 = vpop.f32.mrb[0].mxu0
      %v1596 = vadd.f32 0.0, %v1595
      %v1597 = vpop.f32.mrb[0].mxu0
      %1598 = vmatprep.mubr.bf16.mxu0 %v994
      %1599 = vmatmul.mubr.bf16.gmra.mrb[0].mxu0 %v993
      %v1600 = vpop.f32.mrb[0].mxu0
      %v1601 = vadd.f32 0.0, %v1600
      %v1602 = vpop.f32.mrb[0].mxu0
      %v1603 = vpop.f32.mrb[0].mxu0
      %v1604 = vadd.f32 0.0, %v1603
      %v1605 = vpop.f32.mrb[0].mxu0
      %1606 = vmatprep.mubr.bf16.mxu0 %v997
      %1607 = vmatmul.mubr.bf16.gmra.mrb[0].mxu0 %v996
      %v1608 = vpop.f32.mrb[0].mxu0
      %v1609 = vadd.f32 0.0, %v1608
      %v1610 = vpop.f32.mrb[0].mxu0
      %v1611 = vpop.f32.mrb[0].mxu0
      %v1612 = vadd.f32 0.0, %v1611
      %v1613 = vpop.f32.mrb[0].mxu0
      %1614 = vmatprep.mubr.bf16.mxu0 %v1000
      %1615 = vmatmul.mubr.bf16.gmra.mrb[0].mxu0 %v999
      %v1616 = vpop.f32.mrb[0].mxu0
      %v1617 = vadd.f32 0.0, %v1616
      %v1618 = vpop.f32.mrb[0].mxu0
      %v1619 = vpop.f32.mrb[0].mxu0
      %v1620 = vadd.f32 0.0, %v1619
      %v1621 = vpop.f32.mrb[0].mxu0
      %1622 = vmatprep.mubr.bf16.mxu0 %v1003
      %1623 = vmatmul.mubr.bf16.gmra.mrb[0].mxu0 %v1002
      %v1624 = vpop.f32.mrb[0].mxu0
      %v1625 = vadd.f32 0.0, %v1624
      %v1626 = vpop.f32.mrb[0].mxu0
      %v1627 = vpop.f32.mrb[0].mxu0
      %v1628 = vadd.f32 0.0, %v1627
      %v1629 = vpop.f32.mrb[0].mxu0
      %1630 = vmatprep.mubr.bf16.mxu0 %v1006
      %1631 = vmatmul.mubr.bf16.gmra.mrb[0].mxu0 %v1005
      %v1632 = vpop.f32.mrb[0].mxu0
      %v1633 = vadd.f32 0.0, %v1632
      %v1634 = vpop.f32.mrb[0].mxu0
      %v1635 = vpop.f32.mrb[0].mxu0
      %v1636 = vadd.f32 0.0, %v1635
      %v1637 = vpop.f32.mrb[0].mxu0
      %1638 = vmatprep.mubr.bf16.mxu0 %v1009
      %1639 = vmatmul.mubr.bf16.gmra.mrb[0].mxu0 %v1008
      %v1640 = vpop.f32.mrb[0].mxu0
      %v1641 = vadd.f32 0.0, %v1640
      %v1642 = vpop.f32.mrb[0].mxu0
      %v1643 = vpop.f32.mrb[0].mxu0
      %v1644 = vadd.f32 0.0, %v1643
      %v1645 = vpop.f32.mrb[0].mxu0
      %1646 = vmatprep.mubr.bf16.mxu0 %v1012
      %1647 = vmatmul.mubr.bf16.gmra.mrb[0].mxu0 %v1011
      %v1648 = vpop.f32.mrb[0].mxu0
      %v1649 = vadd.f32 0.0, %v1648
      %v1650 = vpop.f32.mrb[0].mxu0
      %v1651 = vpop.f32.mrb[0].mxu0
      %v1652 = vadd.f32 0.0, %v1651
      %v1653 = vpop.f32.mrb[0].mxu0
      %1654 = vmatprep.mubr.bf16.mxu0 %v1015
      %1655 = vmatmul.mubr.bf16.gmra.mrb[0].mxu0 %v1014
      %v1656 = vpop.f32.mrb[0].mxu0
      %v1657 = vadd.f32 0.0, %v1656
      %v1658 = vpop.f32.mrb[0].mxu0
      %v1659 = vpop.f32.mrb[0].mxu0
      %v1660 = vadd.f32 0.0, %v1659
      %v1661 = vpop.f32.mrb[0].mxu0
      %1662 = vmatprep.mubr.bf16.mxu0 %v1018
      %1663 = vmatmul.mubr.bf16.gmra.mrb[0].mxu0 %v1017
      %v1664 = vpop.f32.mrb[0].mxu0
      %v1665 = vadd.f32 0.0, %v1664
      %v1666 = vpop.f32.mrb[0].mxu0
      %v1667 = vpop.f32.mrb[0].mxu0
      %v1668 = vadd.f32 0.0, %v1667
      %v1669 = vpop.f32.mrb[0].mxu0
      %1670 = vmatprep.mubr.bf16.mxu0 %v1021
      %1671 = vmatmul.mubr.bf16.gmra.mrb[0].mxu0 %v1020
      %v1672 = vpop.f32.mrb[0].mxu0
      %v1673 = vadd.f32 0.0, %v1672
      %v1674 = vpop.f32.mrb[0].mxu0
      %v1675 = vpop.f32.mrb[0].mxu0
      %v1676 = vadd.f32 0.0, %v1675
      %v1677 = vpop.f32.mrb[0].mxu0
      %1678 = vmatprep.mubr.bf16.mxu0 %v1024
      %1679 = vmatmul.mubr.bf16.gmra.mrb[0].mxu0 %v1023
      %v1680 = vpop.f32.mrb[0].mxu0
      %v1681 = vadd.f32 0.0, %v1680
      %v1682 = vpop.f32.mrb[0].mxu0
      %v1683 = vpop.f32.mrb[0].mxu0
      %v1684 = vadd.f32 0.0, %v1683
      %v1685 = vpop.f32.mrb[0].mxu0
      %1686 = vmatprep.mubr.bf16.mxu0 %v1027
      %1687 = vmatmul.mubr.bf16.gmra.mrb[0].mxu0 %v1026
      %v1688 = vpop.f32.mrb[0].mxu0
      %v1689 = vadd.f32 0.0, %v1688
      %v1690 = vpop.f32.mrb[0].mxu0
      %v1691 = vpop.f32.mrb[0].mxu0
      %v1692 = vadd.f32 0.0, %v1691
      %v1693 = vpop.f32.mrb[0].mxu0
      %1694 = vmatprep.mubr.bf16.mxu0 %v1030
      %1695 = vmatmul.mubr.bf16.gmra.mrb[0].mxu0 %v1029
      %v1696 = vpop.f32.mrb[0].mxu0
      %v1697 = vadd.f32 0.0, %v1696
      %v1698 = vpop.f32.mrb[0].mxu0
      %v1699 = vpop.f32.mrb[0].mxu0
      %v1700 = vadd.f32 0.0, %v1699
      %v1701 = vpop.f32.mrb[0].mxu0
      %1702 = vmatprep.mubr.bf16.mxu0 %v1033
      %1703 = vmatmul.mubr.bf16.gmra.mrb[0].mxu0 %v1032
      %v1704 = vpop.f32.mrb[0].mxu0
      %v1705 = vadd.f32 0.0, %v1704
      %v1706 = vpop.f32.mrb[0].mxu0
      %v1707 = vpop.f32.mrb[0].mxu0
      %v1708 = vadd.f32 0.0, %v1707
      %v1709 = vpop.f32.mrb[0].mxu0
      %1710 = vmatprep.mubr.bf16.mxu0 %v1036
      %1711 = vmatmul.mubr.bf16.gmra.mrb[0].mxu0 %v1035
      %v1712 = vpop.f32.mrb[0].mxu0
      %v1713 = vadd.f32 0.0, %v1712
      %v1714 = vpop.f32.mrb[0].mxu0
      %v1715 = vpop.f32.mrb[0].mxu0
      %v1716 = vadd.f32 0.0, %v1715
      %v1717 = vpop.f32.mrb[0].mxu0
      %1718 = vmatprep.mubr.bf16.mxu0 %v1039
      %1719 = vmatmul.mubr.bf16.gmra.mrb[0].mxu0 %v1038
      %v1720 = vpop.f32.mrb[0].mxu0
      %v1721 = vadd.f32 0.0, %v1720
      %v1722 = vpop.f32.mrb[0].mxu0
      %v1723 = vpop.f32.mrb[0].mxu0
      %v1724 = vadd.f32 0.0, %v1723
      %v1725 = vpop.f32.mrb[0].mxu0
      %1726 = vmatprep.mubr.bf16.mxu0 %v1042
      %1727 = vmatmul.mubr.bf16.gmra.mrb[0].mxu0 %v1041
      %v1728 = vpop.f32.mrb[0].mxu0
      %v1729 = vadd.f32 0.0, %v1728
      %v1730 = vpop.f32.mrb[0].mxu0
      %v1731 = vpop.f32.mrb[0].mxu0
      %v1732 = vadd.f32 0.0, %v1731
      %v1733 = vpop.f32.mrb[0].mxu0
      %1734 = vmatprep.mubr.bf16.mxu0 %v1045
      %1735 = vmatmul.mubr.bf16.gmra.mrb[0].mxu0 %v1044
      %v1736 = vpop.f32.mrb[0].mxu0
      %v1737 = vadd.f32 0.0, %v1736
      %v1738 = vpop.f32.mrb[0].mxu0
      %v1739 = vpop.f32.mrb[0].mxu0
      %v1740 = vadd.f32 0.0, %v1739
      %v1741 = vpop.f32.mrb[0].mxu0
      %1742 = vmatprep.mubr.bf16.mxu0 %v1048
      %1743 = vmatmul.mubr.bf16.gmra.mrb[0].mxu0 %v1047
      %v1744 = vpop.f32.mrb[0].mxu0
      %v1745 = vadd.f32 0.0, %v1744
      %v1746 = vpop.f32.mrb[0].mxu0
      %v1747 = vpop.f32.mrb[0].mxu0
      %v1748 = vadd.f32 0.0, %v1747
      %v1749 = vpop.f32.mrb[0].mxu0
      %1750 = vmatprep.mubr.bf16.mxu0 %v1051
      %1751 = vmatmul.mubr.bf16.gmra.mrb[0].mxu0 %v1050
      %v1752 = vpop.f32.mrb[0].mxu0
      %v1753 = vadd.f32 0.0, %v1752
      %v1754 = vpop.f32.mrb[0].mxu0
      %v1755 = vpop.f32.mrb[0].mxu0
      %v1756 = vadd.f32 0.0, %v1755
      %v1757 = vpop.f32.mrb[0].mxu0
      %1758 = vmatprep.mubr.bf16.mxu0 %v1054
      %1759 = vmatmul.mubr.bf16.gmra.mrb[0].mxu0 %v1053
      %v1760 = vpop.f32.mrb[0].mxu0
      %v1761 = vadd.f32 0.0, %v1760
      %v1762 = vpop.f32.mrb[0].mxu0
      %v1763 = vpop.f32.mrb[0].mxu0
      %v1764 = vadd.f32 0.0, %v1763
      %v1765 = vpop.f32.mrb[0].mxu0
      %1766 = vmatprep.mubr.bf16.mxu0 %v1057
      %1767 = vmatmul.mubr.bf16.gmra.mrb[0].mxu0 %v1056
      %v1768 = vpop.f32.mrb[0].mxu0
      %v1769 = vadd.f32 0.0, %v1768
      %v1770 = vpop.f32.mrb[0].mxu0
      %v1771 = vpop.f32.mrb[0].mxu0
      %v1772 = vadd.f32 0.0, %v1771
      %v1773 = vpop.f32.mrb[0].mxu0
      %1774 = vdwg.mxu0
      %1775 = vmatprep.subr.bf16.mxu0 0
      %1776 = vmatpush1.bf16.msra.mxu0 %v1318
      %1777 = vmatprep.subr.bf16.mxu0 0
      %1778 = vmatpush1.bf16.msra.mxu0 %v1319
      %1779 = vmatprep.subr.bf16.mxu0 0
      %1780 = vmatpush1.bf16.msra.mxu0 %v1320
      %1781 = vmatprep.subr.bf16.mxu0 0
      %1782 = vmatpush1.bf16.msra.mxu0 %v1321
      %1783 = vmatprep.subr.bf16.mxu0 0
      %1784 = vmatpush1.bf16.msra.mxu0 %v1322
      %1785 = vmatprep.subr.bf16.mxu0 0
      %1786 = vmatpush1.bf16.msra.mxu0 %v1323
      %1787 = vmatprep.subr.bf16.mxu0 0
      %1788 = vmatpush1.bf16.msra.mxu0 %v1324
      %1789 = vmatprep.subr.bf16.mxu0 0
      %1790 = vmatpush1.bf16.msra.mxu0 %v1325
      %1791 = vmatprep.subr.bf16.mxu0 0
      %1792 = vmatpush1.bf16.msra.mxu0 0
      %1793 = vmatprep.subr.bf16.mxu0 0
      %1794 = vmatpush1.bf16.msra.mxu0 0
      %1795 = vmatprep.subr.bf16.mxu0 0
      %1796 = vmatpush1.bf16.msra.mxu0 0
      %1797 = vmatprep.subr.bf16.mxu0 0
      %1798 = vmatpush1.bf16.msra.mxu0 0
      %1799 = vmatprep.subr.bf16.mxu0 0
      %1800 = vmatpush1.bf16.msra.mxu0 0
      %1801 = vmatprep.subr.bf16.mxu0 0
      %1802 = vmatpush1.bf16.msra.mxu0 0
      %1803 = vmatprep.subr.bf16.mxu0 0
      %1804 = vmatpush1.bf16.msra.mxu0 0
      %1805 = vmatprep.subr.bf16.mxu0 0
      %1806 = vmatpush1.bf16.msra.mxu0 0
      %1807 = vmatprep.mubr.bf16.mxu0 0
      %1808 = vmatmul.mubr.bf16.gmra.mrb[0].mxu0 %v914
      %v1809 = vpop.f32.mrb[0].mxu0
      %v1810 = vadd.f32 %v1385, %v1809
      %v1811 = vpop.f32.mrb[0].mxu0
      %v1812 = vpop.f32.mrb[0].mxu0
      %v1813 = vadd.f32 %v1388, %v1812
      %v1814 = vpop.f32.mrb[0].mxu0
      %1815 = vmatprep.mubr.bf16.mxu0 0
      %1816 = vmatmul.mubr.bf16.gmra.mrb[0].mxu0 %v917
      %v1817 = vpop.f32.mrb[0].mxu0
      %v1818 = vadd.f32 %v1393, %v1817
      %v1819 = vpop.f32.mrb[0].mxu0
      %v1820 = vpop.f32.mrb[0].mxu0
      %v1821 = vadd.f32 %v1396, %v1820
      %v1822 = vpop.f32.mrb[0].mxu0
      %1823 = vmatprep.mubr.bf16.mxu0 0
      %1824 = vmatmul.mubr.bf16.gmra.mrb[0].mxu0 %v920
      %v1825 = vpop.f32.mrb[0].mxu0
      %v1826 = vadd.f32 %v1401, %v1825
      %v1827 = vpop.f32.mrb[0].mxu0
      %v1828 = vpop.f32.mrb[0].mxu0
      %v1829 = vadd.f32 %v1404, %v1828
      %v1830 = vpop.f32.mrb[0].mxu0
      %1831 = vmatprep.mubr.bf16.mxu0 0
      %1832 = vmatmul.mubr.bf16.gmra.mrb[0].mxu0 %v923
      %v1833 = vpop.f32.mrb[0].mxu0
      %v1834 = vadd.f32 %v1409, %v1833
      %v1835 = vpop.f32.mrb[0].mxu0
      %v1836 = vpop.f32.mrb[0].mxu0
      %v1837 = vadd.f32 %v1412, %v1836
      %v1838 = vpop.f32.mrb[0].mxu0
      %1839 = vmatprep.mubr.bf16.mxu0 0
      %1840 = vmatmul.mubr.bf16.gmra.mrb[0].mxu0 %v926
      %v1841 = vpop.f32.mrb[0].mxu0
      %v1842 = vadd.f32 %v1417, %v1841
      %v1843 = vpop.f32.mrb[0].mxu0
      %v1844 = vpop.f32.mrb[0].mxu0
      %v1845 = vadd.f32 %v1420, %v1844
      %v1846 = vpop.f32.mrb[0].mxu0
      %1847 = vmatprep.mubr.bf16.mxu0 0
      %1848 = vmatmul.mubr.bf16.gmra.mrb[0].mxu0 %v929
      %v1849 = vpop.f32.mrb[0].mxu0
      %v1850 = vadd.f32 %v1425, %v1849
      %v1851 = vpop.f32.mrb[0].mxu0
      %v1852 = vpop.f32.mrb[0].mxu0
      %v1853 = vadd.f32 %v1428, %v1852
      %v1854 = vpop.f32.mrb[0].mxu0
      %1855 = vmatprep.mubr.bf16.mxu0 0
      %1856 = vmatmul.mubr.bf16.gmra.mrb[0].mxu0 %v932
      %v1857 = vpop.f32.mrb[0].mxu0
      %v1858 = vadd.f32 %v1433, %v1857
      %v1859 = vpop.f32.mrb[0].mxu0
      %v1860 = vpop.f32.mrb[0].mxu0
      %v1861 = vadd.f32 %v1436, %v1860
      %v1862 = vpop.f32.mrb[0].mxu0
      %1863 = vmatprep.mubr.bf16.mxu0 0
      %1864 = vmatmul.mubr.bf16.gmra.mrb[0].mxu0 %v935
      %v1865 = vpop.f32.mrb[0].mxu0
      %v1866 = vadd.f32 %v1441, %v1865
      %v1867 = vpop.f32.mrb[0].mxu0
      %v1868 = vpop.f32.mrb[0].mxu0
      %v1869 = vadd.f32 %v1444, %v1868
      %v1870 = vpop.f32.mrb[0].mxu0
      %1871 = vmatprep.mubr.bf16.mxu0 0
      %1872 = vmatmul.mubr.bf16.gmra.mrb[0].mxu0 %v938
      %v1873 = vpop.f32.mrb[0].mxu0
      %v1874 = vadd.f32 %v1449, %v1873
      %v1875 = vpop.f32.mrb[0].mxu0
      %v1876 = vpop.f32.mrb[0].mxu0
      %v1877 = vadd.f32 %v1452, %v1876
      %v1878 = vpop.f32.mrb[0].mxu0
      %1879 = vmatprep.mubr.bf16.mxu0 0
      %1880 = vmatmul.mubr.bf16.gmra.mrb[0].mxu0 %v941
      %v1881 = vpop.f32.mrb[0].mxu0
      %v1882 = vadd.f32 %v1457, %v1881
      %v1883 = vpop.f32.mrb[0].mxu0
      %v1884 = vpop.f32.mrb[0].mxu0
      %v1885 = vadd.f32 %v1460, %v1884
      %v1886 = vpop.f32.mrb[0].mxu0
      %1887 = vmatprep.mubr.bf16.mxu0 0
      %1888 = vmatmul.mubr.bf16.gmra.mrb[0].mxu0 %v944
      %v1889 = vpop.f32.mrb[0].mxu0
      %v1890 = vadd.f32 %v1465, %v1889
      %v1891 = vpop.f32.mrb[0].mxu0
      %v1892 = vpop.f32.mrb[0].mxu0
      %v1893 = vadd.f32 %v1468, %v1892
      %v1894 = vpop.f32.mrb[0].mxu0
      %1895 = vmatprep.mubr.bf16.mxu0 0
      %1896 = vmatmul.mubr.bf16.gmra.mrb[0].mxu0 %v947
      %v1897 = vpop.f32.mrb[0].mxu0
      %v1898 = vadd.f32 %v1473, %v1897
      %v1899 = vpop.f32.mrb[0].mxu0
      %v1900 = vpop.f32.mrb[0].mxu0
      %v1901 = vadd.f32 %v1476, %v1900
      %v1902 = vpop.f32.mrb[0].mxu0
      %1903 = vmatprep.mubr.bf16.mxu0 0
      %1904 = vmatmul.mubr.bf16.gmra.mrb[0].mxu0 %v950
      %v1905 = vpop.f32.mrb[0].mxu0
      %v1906 = vadd.f32 %v1481, %v1905
      %v1907 = vpop.f32.mrb[0].mxu0
      %v1908 = vpop.f32.mrb[0].mxu0
      %v1909 = vadd.f32 %v1484, %v1908
      %v1910 = vpop.f32.mrb[0].mxu0
      %1911 = vmatprep.mubr.bf16.mxu0 0
      %1912 = vmatmul.mubr.bf16.gmra.mrb[0].mxu0 %v953
      %v1913 = vpop.f32.mrb[0].mxu0
      %v1914 = vadd.f32 %v1489, %v1913
      %v1915 = vpop.f32.mrb[0].mxu0
      %v1916 = vpop.f32.mrb[0].mxu0
      %v1917 = vadd.f32 %v1492, %v1916
      %v1918 = vpop.f32.mrb[0].mxu0
      %1919 = vmatprep.mubr.bf16.mxu0 0
      %1920 = vmatmul.mubr.bf16.gmra.mrb[0].mxu0 %v956
      %v1921 = vpop.f32.mrb[0].mxu0
      %v1922 = vadd.f32 %v1497, %v1921
      %v1923 = vpop.f32.mrb[0].mxu0
      %v1924 = vpop.f32.mrb[0].mxu0
      %v1925 = vadd.f32 %v1500, %v1924
      %v1926 = vpop.f32.mrb[0].mxu0
      %1927 = vmatprep.mubr.bf16.mxu0 0
      %1928 = vmatmul.mubr.bf16.gmra.mrb[0].mxu0 %v959
      %v1929 = vpop.f32.mrb[0].mxu0
      %v1930 = vadd.f32 %v1505, %v1929
      %v1931 = vpop.f32.mrb[0].mxu0
      %v1932 = vpop.f32.mrb[0].mxu0
      %v1933 = vadd.f32 %v1508, %v1932
      %v1934 = vpop.f32.mrb[0].mxu0
      %1935 = vmatprep.mubr.bf16.mxu0 0
      %1936 = vmatmul.mubr.bf16.gmra.mrb[0].mxu0 %v962
      %v1937 = vpop.f32.mrb[0].mxu0
      %v1938 = vadd.f32 %v1513, %v1937
      %v1939 = vpop.f32.mrb[0].mxu0
      %v1940 = vpop.f32.mrb[0].mxu0
      %v1941 = vadd.f32 %v1516, %v1940
      %v1942 = vpop.f32.mrb[0].mxu0
      %1943 = vmatprep.mubr.bf16.mxu0 0
      %1944 = vmatmul.mubr.bf16.gmra.mrb[0].mxu0 %v965
      %v1945 = vpop.f32.mrb[0].mxu0
      %v1946 = vadd.f32 %v1521, %v1945
      %v1947 = vpop.f32.mrb[0].mxu0
      %v1948 = vpop.f32.mrb[0].mxu0
      %v1949 = vadd.f32 %v1524, %v1948
      %v1950 = vpop.f32.mrb[0].mxu0
      %1951 = vmatprep.mubr.bf16.mxu0 0
      %1952 = vmatmul.mubr.bf16.gmra.mrb[0].mxu0 %v968
      %v1953 = vpop.f32.mrb[0].mxu0
      %v1954 = vadd.f32 %v1529, %v1953
      %v1955 = vpop.f32.mrb[0].mxu0
      %v1956 = vpop.f32.mrb[0].mxu0
      %v1957 = vadd.f32 %v1532, %v1956
      %v1958 = vpop.f32.mrb[0].mxu0
      %1959 = vmatprep.mubr.bf16.mxu0 0
      %1960 = vmatmul.mubr.bf16.gmra.mrb[0].mxu0 %v971
      %v1961 = vpop.f32.mrb[0].mxu0
      %v1962 = vadd.f32 %v1537, %v1961
      %v1963 = vpop.f32.mrb[0].mxu0
      %v1964 = vpop.f32.mrb[0].mxu0
      %v1965 = vadd.f32 %v1540, %v1964
      %v1966 = vpop.f32.mrb[0].mxu0
      %1967 = vmatprep.mubr.bf16.mxu0 0
      %1968 = vmatmul.mubr.bf16.gmra.mrb[0].mxu0 %v974
      %v1969 = vpop.f32.mrb[0].mxu0
      %v1970 = vadd.f32 %v1545, %v1969
      %v1971 = vpop.f32.mrb[0].mxu0
      %v1972 = vpop.f32.mrb[0].mxu0
      %v1973 = vadd.f32 %v1548, %v1972
      %v1974 = vpop.f32.mrb[0].mxu0
      %1975 = vmatprep.mubr.bf16.mxu0 0
      %1976 = vmatmul.mubr.bf16.gmra.mrb[0].mxu0 %v977
      %v1977 = vpop.f32.mrb[0].mxu0
      %v1978 = vadd.f32 %v1553, %v1977
      %v1979 = vpop.f32.mrb[0].mxu0
      %v1980 = vpop.f32.mrb[0].mxu0
      %v1981 = vadd.f32 %v1556, %v1980
      %v1982 = vpop.f32.mrb[0].mxu0
      %1983 = vmatprep.mubr.bf16.mxu0 0
      %1984 = vmatmul.mubr.bf16.gmra.mrb[0].mxu0 %v980
      %v1985 = vpop.f32.mrb[0].mxu0
      %v1986 = vadd.f32 %v1561, %v1985
      %v1987 = vpop.f32.mrb[0].mxu0
      %v1988 = vpop.f32.mrb[0].mxu0
      %v1989 = vadd.f32 %v1564, %v1988
      %v1990 = vpop.f32.mrb[0].mxu0
      %1991 = vmatprep.mubr.bf16.mxu0 0
      %1992 = vmatmul.mubr.bf16.gmra.mrb[0].mxu0 %v983
      %v1993 = vpop.f32.mrb[0].mxu0
      %v1994 = vadd.f32 %v1569, %v1993
      %v1995 = vpop.f32.mrb[0].mxu0
      %v1996 = vpop.f32.mrb[0].mxu0
      %v1997 = vadd.f32 %v1572, %v1996
      %v1998 = vpop.f32.mrb[0].mxu0
      %1999 = vmatprep.mubr.bf16.mxu0 0
      %2000 = vmatmul.mubr.bf16.gmra.mrb[0].mxu0 %v986
      %v2001 = vpop.f32.mrb[0].mxu0
      %v2002 = vadd.f32 %v1577, %v2001
      %v2003 = vpop.f32.mrb[0].mxu0
      %v2004 = vpop.f32.mrb[0].mxu0
      %v2005 = vadd.f32 %v1580, %v2004
      %v2006 = vpop.f32.mrb[0].mxu0
      %2007 = vmatprep.mubr.bf16.mxu0 0
      %2008 = vmatmul.mubr.bf16.gmra.mrb[0].mxu0 %v989
      %v2009 = vpop.f32.mrb[0].mxu0
      %v2010 = vadd.f32 %v1585, %v2009
      %v2011 = vpop.f32.mrb[0].mxu0
      %v2012 = vpop.f32.mrb[0].mxu0
      %v2013 = vadd.f32 %v1588, %v2012
      %v2014 = vpop.f32.mrb[0].mxu0
      %2015 = vmatprep.mubr.bf16.mxu0 0
      %2016 = vmatmul.mubr.bf16.gmra.mrb[0].mxu0 %v992
      %v2017 = vpop.f32.mrb[0].mxu0
      %v2018 = vadd.f32 %v1593, %v2017
      %v2019 = vpop.f32.mrb[0].mxu0
      %v2020 = vpop.f32.mrb[0].mxu0
      %v2021 = vadd.f32 %v1596, %v2020
      %v2022 = vpop.f32.mrb[0].mxu0
      %2023 = vmatprep.mubr.bf16.mxu0 0
      %2024 = vmatmul.mubr.bf16.gmra.mrb[0].mxu0 %v995
      %v2025 = vpop.f32.mrb[0].mxu0
      %v2026 = vadd.f32 %v1601, %v2025
      %v2027 = vpop.f32.mrb[0].mxu0
      %v2028 = vpop.f32.mrb[0].mxu0
      %v2029 = vadd.f32 %v1604, %v2028
      %v2030 = vpop.f32.mrb[0].mxu0
      %2031 = vmatprep.mubr.bf16.mxu0 0
      %2032 = vmatmul.mubr.bf16.gmra.mrb[0].mxu0 %v998
      %v2033 = vpop.f32.mrb[0].mxu0
      %v2034 = vadd.f32 %v1609, %v2033
      %v2035 = vpop.f32.mrb[0].mxu0
      %v2036 = vpop.f32.mrb[0].mxu0
      %v2037 = vadd.f32 %v1612, %v2036
      %v2038 = vpop.f32.mrb[0].mxu0
      %2039 = vmatprep.mubr.bf16.mxu0 0
      %2040 = vmatmul.mubr.bf16.gmra.mrb[0].mxu0 %v1001
      %v2041 = vpop.f32.mrb[0].mxu0
      %v2042 = vadd.f32 %v1617, %v2041
      %v2043 = vpop.f32.mrb[0].mxu0
      %v2044 = vpop.f32.mrb[0].mxu0
      %v2045 = vadd.f32 %v1620, %v2044
      %v2046 = vpop.f32.mrb[0].mxu0
      %2047 = vmatprep.mubr.bf16.mxu0 0
      %2048 = vmatmul.mubr.bf16.gmra.mrb[0].mxu0 %v1004
      %v2049 = vpop.f32.mrb[0].mxu0
      %v2050 = vadd.f32 %v1625, %v2049
      %v2051 = vpop.f32.mrb[0].mxu0
      %v2052 = vpop.f32.mrb[0].mxu0
      %v2053 = vadd.f32 %v1628, %v2052
      %v2054 = vpop.f32.mrb[0].mxu0
      %2055 = vmatprep.mubr.bf16.mxu0 0
      %2056 = vmatmul.mubr.bf16.gmra.mrb[0].mxu0 %v1007
      %v2057 = vpop.f32.mrb[0].mxu0
      %v2058 = vadd.f32 %v1633, %v2057
      %v2059 = vpop.f32.mrb[0].mxu0
      %v2060 = vpop.f32.mrb[0].mxu0
      %v2061 = vadd.f32 %v1636, %v2060
      %v2062 = vpop.f32.mrb[0].mxu0
      %2063 = vmatprep.mubr.bf16.mxu0 0
      %2064 = vmatmul.mubr.bf16.gmra.mrb[0].mxu0 %v1010
      %v2065 = vpop.f32.mrb[0].mxu0
      %v2066 = vadd.f32 %v1641, %v2065
      %v2067 = vpop.f32.mrb[0].mxu0
      %v2068 = vpop.f32.mrb[0].mxu0
      %v2069 = vadd.f32 %v1644, %v2068
      %v2070 = vpop.f32.mrb[0].mxu0
      %2071 = vmatprep.mubr.bf16.mxu0 0
      %2072 = vmatmul.mubr.bf16.gmra.mrb[0].mxu0 %v1013
      %v2073 = vpop.f32.mrb[0].mxu0
      %v2074 = vadd.f32 %v1649, %v2073
      %v2075 = vpop.f32.mrb[0].mxu0
      %v2076 = vpop.f32.mrb[0].mxu0
      %v2077 = vadd.f32 %v1652, %v2076
      %v2078 = vpop.f32.mrb[0].mxu0
      %2079 = vmatprep.mubr.bf16.mxu0 0
      %2080 = vmatmul.mubr.bf16.gmra.mrb[0].mxu0 %v1016
      %v2081 = vpop.f32.mrb[0].mxu0
      %v2082 = vadd.f32 %v1657, %v2081
      %v2083 = vpop.f32.mrb[0].mxu0
      %v2084 = vpop.f32.mrb[0].mxu0
      %v2085 = vadd.f32 %v1660, %v2084
      %v2086 = vpop.f32.mrb[0].mxu0
      %2087 = vmatprep.mubr.bf16.mxu0 0
      %2088 = vmatmul.mubr.bf16.gmra.mrb[0].mxu0 %v1019
      %v2089 = vpop.f32.mrb[0].mxu0
      %v2090 = vadd.f32 %v1665, %v2089
      %v2091 = vpop.f32.mrb[0].mxu0
      %v2092 = vpop.f32.mrb[0].mxu0
      %v2093 = vadd.f32 %v1668, %v2092
      %v2094 = vpop.f32.mrb[0].mxu0
      %2095 = vmatprep.mubr.bf16.mxu0 0
      %2096 = vmatmul.mubr.bf16.gmra.mrb[0].mxu0 %v1022
      %v2097 = vpop.f32.mrb[0].mxu0
      %v2098 = vadd.f32 %v1673, %v2097
      %v2099 = vpop.f32.mrb[0].mxu0
      %v2100 = vpop.f32.mrb[0].mxu0
      %v2101 = vadd.f32 %v1676, %v2100
      %v2102 = vpop.f32.mrb[0].mxu0
      %2103 = vmatprep.mubr.bf16.mxu0 0
      %2104 = vmatmul.mubr.bf16.gmra.mrb[0].mxu0 %v1025
      %v2105 = vpop.f32.mrb[0].mxu0
      %v2106 = vadd.f32 %v1681, %v2105
      %v2107 = vpop.f32.mrb[0].mxu0
      %v2108 = vpop.f32.mrb[0].mxu0
      %v2109 = vadd.f32 %v1684, %v2108
      %v2110 = vpop.f32.mrb[0].mxu0
      %2111 = vmatprep.mubr.bf16.mxu0 0
      %2112 = vmatmul.mubr.bf16.gmra.mrb[0].mxu0 %v1028
      %v2113 = vpop.f32.mrb[0].mxu0
      %v2114 = vadd.f32 %v1689, %v2113
      %v2115 = vpop.f32.mrb[0].mxu0
      %v2116 = vpop.f32.mrb[0].mxu0
      %v2117 = vadd.f32 %v1692, %v2116
      %v2118 = vpop.f32.mrb[0].mxu0
      %2119 = vmatprep.mubr.bf16.mxu0 0
      %2120 = vmatmul.mubr.bf16.gmra.mrb[0].mxu0 %v1031
      %v2121 = vpop.f32.mrb[0].mxu0
      %v2122 = vadd.f32 %v1697, %v2121
      %v2123 = vpop.f32.mrb[0].mxu0
      %v2124 = vpop.f32.mrb[0].mxu0
      %v2125 = vadd.f32 %v1700, %v2124
      %v2126 = vpop.f32.mrb[0].mxu0
      %2127 = vmatprep.mubr.bf16.mxu0 0
      %2128 = vmatmul.mubr.bf16.gmra.mrb[0].mxu0 %v1034
      %v2129 = vpop.f32.mrb[0].mxu0
      %v2130 = vadd.f32 %v1705, %v2129
      %v2131 = vpop.f32.mrb[0].mxu0
      %v2132 = vpop.f32.mrb[0].mxu0
      %v2133 = vadd.f32 %v1708, %v2132
      %v2134 = vpop.f32.mrb[0].mxu0
      %2135 = vmatprep.mubr.bf16.mxu0 0
      %2136 = vmatmul.mubr.bf16.gmra.mrb[0].mxu0 %v1037
      %v2137 = vpop.f32.mrb[0].mxu0
      %v2138 = vadd.f32 %v1713, %v2137
      %v2139 = vpop.f32.mrb[0].mxu0
      %v2140 = vpop.f32.mrb[0].mxu0
      %v2141 = vadd.f32 %v1716, %v2140
      %v2142 = vpop.f32.mrb[0].mxu0
      %2143 = vmatprep.mubr.bf16.mxu0 0
      %2144 = vmatmul.mubr.bf16.gmra.mrb[0].mxu0 %v1040
      %v2145 = vpop.f32.mrb[0].mxu0
      %v2146 = vadd.f32 %v1721, %v2145
      %v2147 = vpop.f32.mrb[0].mxu0
      %v2148 = vpop.f32.mrb[0].mxu0
      %v2149 = vadd.f32 %v1724, %v2148
      %v2150 = vpop.f32.mrb[0].mxu0
      %2151 = vmatprep.mubr.bf16.mxu0 0
      %2152 = vmatmul.mubr.bf16.gmra.mrb[0].mxu0 %v1043
      %v2153 = vpop.f32.mrb[0].mxu0
      %v2154 = vadd.f32 %v1729, %v2153
      %v2155 = vpop.f32.mrb[0].mxu0
      %v2156 = vpop.f32.mrb[0].mxu0
      %v2157 = vadd.f32 %v1732, %v2156
      %v2158 = vpop.f32.mrb[0].mxu0
      %2159 = vmatprep.mubr.bf16.mxu0 0
      %2160 = vmatmul.mubr.bf16.gmra.mrb[0].mxu0 %v1046
      %v2161 = vpop.f32.mrb[0].mxu0
      %v2162 = vadd.f32 %v1737, %v2161
      %v2163 = vpop.f32.mrb[0].mxu0
      %v2164 = vpop.f32.mrb[0].mxu0
      %v2165 = vadd.f32 %v1740, %v2164
      %v2166 = vpop.f32.mrb[0].mxu0
      %2167 = vmatprep.mubr.bf16.mxu0 0
      %2168 = vmatmul.mubr.bf16.gmra.mrb[0].mxu0 %v1049
      %v2169 = vpop.f32.mrb[0].mxu0
      %v2170 = vadd.f32 %v1745, %v2169
      %v2171 = vpop.f32.mrb[0].mxu0
      %v2172 = vpop.f32.mrb[0].mxu0
      %v2173 = vadd.f32 %v1748, %v2172
      %v2174 = vpop.f32.mrb[0].mxu0
      %2175 = vmatprep.mubr.bf16.mxu0 0
      %2176 = vmatmul.mubr.bf16.gmra.mrb[0].mxu0 %v1052
      %v2177 = vpop.f32.mrb[0].mxu0
      %v2178 = vadd.f32 %v1753, %v2177
      %v2179 = vpop.f32.mrb[0].mxu0
      %v2180 = vpop.f32.mrb[0].mxu0
      %v2181 = vadd.f32 %v1756, %v2180
      %v2182 = vpop.f32.mrb[0].mxu0
      %2183 = vmatprep.mubr.bf16.mxu0 0
      %2184 = vmatmul.mubr.bf16.gmra.mrb[0].mxu0 %v1055
      %v2185 = vpop.f32.mrb[0].mxu0
      %v2186 = vadd.f32 %v1761, %v2185
      %v2187 = vpop.f32.mrb[0].mxu0
      %v2188 = vpop.f32.mrb[0].mxu0
      %v2189 = vadd.f32 %v1764, %v2188
      %v2190 = vpop.f32.mrb[0].mxu0
      %2191 = vmatprep.mubr.bf16.mxu0 0
      %2192 = vmatmul.mubr.bf16.gmra.mrb[0].mxu0 %v1058
      %v2193 = vpop.f32.mrb[0].mxu0
      %v2194 = vadd.f32 %v1769, %v2193
      %v2195 = vpop.f32.mrb[0].mxu0
      %v2196 = vpop.f32.mrb[0].mxu0
      %v2197 = vadd.f32 %v1772, %v2196
      %v2198 = vpop.f32.mrb[0].mxu0
      %2199 = vdwg.mxu0
      %2200 = vrot.lane.b32.xlu0 %v1810, 64
      %v2201 = vpop.permute.xlu0 %2200
      %2202 = vrot.lane.b32.xlu0 %v1813, 64
      %v2203 = vpop.permute.xlu0 %2202
      %2204 = vrot.lane.b32.xlu0 %v1818, 64
      %v2205 = vpop.permute.xlu0 %2204
      %2206 = vrot.lane.b32.xlu0 %v1821, 64
      %v2207 = vpop.permute.xlu0 %2206
      %2208 = vrot.lane.b32.xlu0 %v1826, 64
      %v2209 = vpop.permute.xlu0 %2208
      %2210 = vrot.lane.b32.xlu0 %v1829, 64
      %v2211 = vpop.permute.xlu0 %2210
      %2212 = vrot.lane.b32.xlu0 %v1834, 64
      %v2213 = vpop.permute.xlu0 %2212
      %2214 = vrot.lane.b32.xlu0 %v1837, 64
      %v2215 = vpop.permute.xlu0 %2214
      %2216 = vrot.lane.b32.xlu0 %v1842, 64
      %v2217 = vpop.permute.xlu0 %2216
      %2218 = vrot.lane.b32.xlu0 %v1845, 64
      %v2219 = vpop.permute.xlu0 %2218
      %2220 = vrot.lane.b32.xlu0 %v1850, 64
      %v2221 = vpop.permute.xlu0 %2220
      %2222 = vrot.lane.b32.xlu0 %v1853, 64
      %v2223 = vpop.permute.xlu0 %2222
      %2224 = vrot.lane.b32.xlu0 %v1858, 64
      %v2225 = vpop.permute.xlu0 %2224
      %2226 = vrot.lane.b32.xlu0 %v1861, 64
      %v2227 = vpop.permute.xlu0 %2226
      %2228 = vrot.lane.b32.xlu0 %v1866, 64
      %v2229 = vpop.permute.xlu0 %2228
      %2230 = vrot.lane.b32.xlu0 %v1869, 64
      %v2231 = vpop.permute.xlu0 %2230
      %2232 = vrot.lane.b32.xlu0 %v1874, 64
      %v2233 = vpop.permute.xlu0 %2232
      %2234 = vrot.lane.b32.xlu0 %v1877, 64
      %v2235 = vpop.permute.xlu0 %2234
      %2236 = vrot.lane.b32.xlu0 %v1882, 64
      %v2237 = vpop.permute.xlu0 %2236
      %2238 = vrot.lane.b32.xlu0 %v1885, 64
      %v2239 = vpop.permute.xlu0 %2238
      %2240 = vrot.lane.b32.xlu0 %v1890, 64
      %v2241 = vpop.permute.xlu0 %2240
      %2242 = vrot.lane.b32.xlu0 %v1893, 64
      %v2243 = vpop.permute.xlu0 %2242
      %2244 = vrot.lane.b32.xlu0 %v1898, 64
      %v2245 = vpop.permute.xlu0 %2244
      %2246 = vrot.lane.b32.xlu0 %v1901, 64
      %v2247 = vpop.permute.xlu0 %2246
      %2248 = vrot.lane.b32.xlu0 %v1906, 64
      %v2249 = vpop.permute.xlu0 %2248
      %2250 = vrot.lane.b32.xlu0 %v1909, 64
      %v2251 = vpop.permute.xlu0 %2250
      %2252 = vrot.lane.b32.xlu0 %v1914, 64
      %v2253 = vpop.permute.xlu0 %2252
      %2254 = vrot.lane.b32.xlu0 %v1917, 64
      %v2255 = vpop.permute.xlu0 %2254
      %2256 = vrot.lane.b32.xlu0 %v1922, 64
      %v2257 = vpop.permute.xlu0 %2256
      %2258 = vrot.lane.b32.xlu0 %v1925, 64
      %v2259 = vpop.permute.xlu0 %2258
      %2260 = vrot.lane.b32.xlu0 %v1930, 64
      %v2261 = vpop.permute.xlu0 %2260
      %2262 = vrot.lane.b32.xlu0 %v1933, 64
      %v2263 = vpop.permute.xlu0 %2262
      %2264 = vrot.lane.b32.xlu0 %v1938, 64
      %v2265 = vpop.permute.xlu0 %2264
      %2266 = vrot.lane.b32.xlu0 %v1941, 64
      %v2267 = vpop.permute.xlu0 %2266
      %2268 = vrot.lane.b32.xlu0 %v1946, 64
      %v2269 = vpop.permute.xlu0 %2268
      %2270 = vrot.lane.b32.xlu0 %v1949, 64
      %v2271 = vpop.permute.xlu0 %2270
      %2272 = vrot.lane.b32.xlu0 %v1954, 64
      %v2273 = vpop.permute.xlu0 %2272
      %2274 = vrot.lane.b32.xlu0 %v1957, 64
      %v2275 = vpop.permute.xlu0 %2274
      %2276 = vrot.lane.b32.xlu0 %v1962, 64
      %v2277 = vpop.permute.xlu0 %2276
      %2278 = vrot.lane.b32.xlu0 %v1965, 64
      %v2279 = vpop.permute.xlu0 %2278
      %2280 = vrot.lane.b32.xlu0 %v1970, 64
      %v2281 = vpop.permute.xlu0 %2280
      %2282 = vrot.lane.b32.xlu0 %v1973, 64
      %v2283 = vpop.permute.xlu0 %2282
      %2284 = vrot.lane.b32.xlu0 %v1978, 64
      %v2285 = vpop.permute.xlu0 %2284
      %2286 = vrot.lane.b32.xlu0 %v1981, 64
      %v2287 = vpop.permute.xlu0 %2286
      %2288 = vrot.lane.b32.xlu0 %v1986, 64
      %v2289 = vpop.permute.xlu0 %2288
      %2290 = vrot.lane.b32.xlu0 %v1989, 64
      %v2291 = vpop.permute.xlu0 %2290
      %2292 = vrot.lane.b32.xlu0 %v1994, 64
      %v2293 = vpop.permute.xlu0 %2292
      %2294 = vrot.lane.b32.xlu0 %v1997, 64
      %v2295 = vpop.permute.xlu0 %2294
      %2296 = vrot.lane.b32.xlu0 %v2002, 64
      %v2297 = vpop.permute.xlu0 %2296
      %2298 = vrot.lane.b32.xlu0 %v2005, 64
      %v2299 = vpop.permute.xlu0 %2298
      %2300 = vrot.lane.b32.xlu0 %v2010, 64
      %v2301 = vpop.permute.xlu0 %2300
      %2302 = vrot.lane.b32.xlu0 %v2013, 64
      %v2303 = vpop.permute.xlu0 %2302
      %2304 = vrot.lane.b32.xlu0 %v2018, 64
      %v2305 = vpop.permute.xlu0 %2304
      %2306 = vrot.lane.b32.xlu0 %v2021, 64
      %v2307 = vpop.permute.xlu0 %2306
      %2308 = vrot.lane.b32.xlu0 %v2026, 64
      %v2309 = vpop.permute.xlu0 %2308
      %2310 = vrot.lane.b32.xlu0 %v2029, 64
      %v2311 = vpop.permute.xlu0 %2310
      %2312 = vrot.lane.b32.xlu0 %v2034, 64
      %v2313 = vpop.permute.xlu0 %2312
      %2314 = vrot.lane.b32.xlu0 %v2037, 64
      %v2315 = vpop.permute.xlu0 %2314
      %2316 = vrot.lane.b32.xlu0 %v2042, 64
      %v2317 = vpop.permute.xlu0 %2316
      %2318 = vrot.lane.b32.xlu0 %v2045, 64
      %v2319 = vpop.permute.xlu0 %2318
      %2320 = vrot.lane.b32.xlu0 %v2050, 64
      %v2321 = vpop.permute.xlu0 %2320
      %2322 = vrot.lane.b32.xlu0 %v2053, 64
      %v2323 = vpop.permute.xlu0 %2322
      %2324 = vrot.lane.b32.xlu0 %v2058, 64
      %v2325 = vpop.permute.xlu0 %2324
      %2326 = vrot.lane.b32.xlu0 %v2061, 64
      %v2327 = vpop.permute.xlu0 %2326
      %2328 = vrot.lane.b32.xlu0 %v2066, 64
      %v2329 = vpop.permute.xlu0 %2328
      %2330 = vrot.lane.b32.xlu0 %v2069, 64
      %v2331 = vpop.permute.xlu0 %2330
      %2332 = vrot.lane.b32.xlu0 %v2074, 64
      %v2333 = vpop.permute.xlu0 %2332
      %2334 = vrot.lane.b32.xlu0 %v2077, 64
      %v2335 = vpop.permute.xlu0 %2334
      %2336 = vrot.lane.b32.xlu0 %v2082, 64
      %v2337 = vpop.permute.xlu0 %2336
      %2338 = vrot.lane.b32.xlu0 %v2085, 64
      %v2339 = vpop.permute.xlu0 %2338
      %2340 = vrot.lane.b32.xlu0 %v2090, 64
      %v2341 = vpop.permute.xlu0 %2340
      %2342 = vrot.lane.b32.xlu0 %v2093, 64
      %v2343 = vpop.permute.xlu0 %2342
      %2344 = vrot.lane.b32.xlu0 %v2098, 64
      %v2345 = vpop.permute.xlu0 %2344
      %2346 = vrot.lane.b32.xlu0 %v2101, 64
      %v2347 = vpop.permute.xlu0 %2346
      %2348 = vrot.lane.b32.xlu0 %v2106, 64
      %v2349 = vpop.permute.xlu0 %2348
      %2350 = vrot.lane.b32.xlu0 %v2109, 64
      %v2351 = vpop.permute.xlu0 %2350
      %2352 = vrot.lane.b32.xlu0 %v2114, 64
      %v2353 = vpop.permute.xlu0 %2352
      %2354 = vrot.lane.b32.xlu0 %v2117, 64
      %v2355 = vpop.permute.xlu0 %2354
      %2356 = vrot.lane.b32.xlu0 %v2122, 64
      %v2357 = vpop.permute.xlu0 %2356
      %2358 = vrot.lane.b32.xlu0 %v2125, 64
      %v2359 = vpop.permute.xlu0 %2358
      %2360 = vrot.lane.b32.xlu0 %v2130, 64
      %v2361 = vpop.permute.xlu0 %2360
      %2362 = vrot.lane.b32.xlu0 %v2133, 64
      %v2363 = vpop.permute.xlu0 %2362
      %2364 = vrot.lane.b32.xlu0 %v2138, 64
      %v2365 = vpop.permute.xlu0 %2364
      %2366 = vrot.lane.b32.xlu0 %v2141, 64
      %v2367 = vpop.permute.xlu0 %2366
      %2368 = vrot.lane.b32.xlu0 %v2146, 64
      %v2369 = vpop.permute.xlu0 %2368
      %2370 = vrot.lane.b32.xlu0 %v2149, 64
      %v2371 = vpop.permute.xlu0 %2370
      %2372 = vrot.lane.b32.xlu0 %v2154, 64
      %v2373 = vpop.permute.xlu0 %2372
      %2374 = vrot.lane.b32.xlu0 %v2157, 64
      %v2375 = vpop.permute.xlu0 %2374
      %2376 = vrot.lane.b32.xlu0 %v2162, 64
      %v2377 = vpop.permute.xlu0 %2376
      %2378 = vrot.lane.b32.xlu0 %v2165, 64
      %v2379 = vpop.permute.xlu0 %2378
      %2380 = vrot.lane.b32.xlu0 %v2170, 64
      %v2381 = vpop.permute.xlu0 %2380
      %2382 = vrot.lane.b32.xlu0 %v2173, 64
      %v2383 = vpop.permute.xlu0 %2382
      %2384 = vrot.lane.b32.xlu0 %v2178, 64
      %v2385 = vpop.permute.xlu0 %2384
      %2386 = vrot.lane.b32.xlu0 %v2181, 64
      %v2387 = vpop.permute.xlu0 %2386
      %2388 = vrot.lane.b32.xlu0 %v2186, 64
      %v2389 = vpop.permute.xlu0 %2388
      %2390 = vrot.lane.b32.xlu0 %v2189, 64
      %v2391 = vpop.permute.xlu0 %2390
      %2392 = vrot.lane.b32.xlu0 %v2194, 64
      %v2393 = vpop.permute.xlu0 %2392
      %2394 = vrot.lane.b32.xlu0 %v2197, 64
      %v2395 = vpop.permute.xlu0 %2394
      %v2396 = vmax.f32 %v1810, %v2201
      %v2397 = vmax.f32 %v1813, %v2203
      %v2398 = vmax.f32 %v1818, %v2205
      %v2399 = vmax.f32 %v1821, %v2207
      %v2400 = vmax.f32 %v1826, %v2209
      %v2401 = vmax.f32 %v1829, %v2211
      %v2402 = vmax.f32 %v1834, %v2213
      %v2403 = vmax.f32 %v1837, %v2215
      %v2404 = vmax.f32 %v1842, %v2217
      %v2405 = vmax.f32 %v1845, %v2219
      %v2406 = vmax.f32 %v1850, %v2221
      %v2407 = vmax.f32 %v1853, %v2223
      %v2408 = vmax.f32 %v1858, %v2225
      %v2409 = vmax.f32 %v1861, %v2227
      %v2410 = vmax.f32 %v1866, %v2229
      %v2411 = vmax.f32 %v1869, %v2231
      %v2412 = vmax.f32 %v1874, %v2233
      %v2413 = vmax.f32 %v1877, %v2235
      %v2414 = vmax.f32 %v1882, %v2237
      %v2415 = vmax.f32 %v1885, %v2239
      %v2416 = vmax.f32 %v1890, %v2241
      %v2417 = vmax.f32 %v1893, %v2243
      %v2418 = vmax.f32 %v1898, %v2245
      %v2419 = vmax.f32 %v1901, %v2247
      %v2420 = vmax.f32 %v1906, %v2249
      %v2421 = vmax.f32 %v1909, %v2251
      %v2422 = vmax.f32 %v1914, %v2253
      %v2423 = vmax.f32 %v1917, %v2255
      %v2424 = vmax.f32 %v1922, %v2257
      %v2425 = vmax.f32 %v1925, %v2259
      %v2426 = vmax.f32 %v1930, %v2261
      %v2427 = vmax.f32 %v1933, %v2263
      %v2428 = vmax.f32 %v1938, %v2265
      %v2429 = vmax.f32 %v1941, %v2267
      %v2430 = vmax.f32 %v1946, %v2269
      %v2431 = vmax.f32 %v1949, %v2271
      %v2432 = vmax.f32 %v1954, %v2273
      %v2433 = vmax.f32 %v1957, %v2275
      %v2434 = vmax.f32 %v1962, %v2277
      %v2435 = vmax.f32 %v1965, %v2279
      %v2436 = vmax.f32 %v1970, %v2281
      %v2437 = vmax.f32 %v1973, %v2283
      %v2438 = vmax.f32 %v1978, %v2285
      %v2439 = vmax.f32 %v1981, %v2287
      %v2440 = vmax.f32 %v1986, %v2289
      %v2441 = vmax.f32 %v1989, %v2291
      %v2442 = vmax.f32 %v1994, %v2293
      %v2443 = vmax.f32 %v1997, %v2295
      %v2444 = vmax.f32 %v2002, %v2297
      %v2445 = vmax.f32 %v2005, %v2299
      %v2446 = vmax.f32 %v2010, %v2301
      %v2447 = vmax.f32 %v2013, %v2303
      %v2448 = vmax.f32 %v2018, %v2305
      %v2449 = vmax.f32 %v2021, %v2307
      %v2450 = vmax.f32 %v2026, %v2309
      %v2451 = vmax.f32 %v2029, %v2311
      %v2452 = vmax.f32 %v2034, %v2313
      %v2453 = vmax.f32 %v2037, %v2315
      %v2454 = vmax.f32 %v2042, %v2317
      %v2455 = vmax.f32 %v2045, %v2319
      %v2456 = vmax.f32 %v2050, %v2321
      %v2457 = vmax.f32 %v2053, %v2323
      %v2458 = vmax.f32 %v2058, %v2325
      %v2459 = vmax.f32 %v2061, %v2327
      %v2460 = vmax.f32 %v2066, %v2329
      %v2461 = vmax.f32 %v2069, %v2331
      %v2462 = vmax.f32 %v2074, %v2333
      %v2463 = vmax.f32 %v2077, %v2335
      %v2464 = vmax.f32 %v2082, %v2337
      %v2465 = vmax.f32 %v2085, %v2339
      %v2466 = vmax.f32 %v2090, %v2341
      %v2467 = vmax.f32 %v2093, %v2343
      %v2468 = vmax.f32 %v2098, %v2345
      %v2469 = vmax.f32 %v2101, %v2347
      %v2470 = vmax.f32 %v2106, %v2349
      %v2471 = vmax.f32 %v2109, %v2351
      %v2472 = vmax.f32 %v2114, %v2353
      %v2473 = vmax.f32 %v2117, %v2355
      %v2474 = vmax.f32 %v2122, %v2357
      %v2475 = vmax.f32 %v2125, %v2359
      %v2476 = vmax.f32 %v2130, %v2361
      %v2477 = vmax.f32 %v2133, %v2363
      %v2478 = vmax.f32 %v2138, %v2365
      %v2479 = vmax.f32 %v2141, %v2367
      %v2480 = vmax.f32 %v2146, %v2369
      %v2481 = vmax.f32 %v2149, %v2371
      %v2482 = vmax.f32 %v2154, %v2373
      %v2483 = vmax.f32 %v2157, %v2375
      %v2484 = vmax.f32 %v2162, %v2377
      %v2485 = vmax.f32 %v2165, %v2379
      %v2486 = vmax.f32 %v2170, %v2381
      %v2487 = vmax.f32 %v2173, %v2383
      %v2488 = vmax.f32 %v2178, %v2385
      %v2489 = vmax.f32 %v2181, %v2387
      %v2490 = vmax.f32 %v2186, %v2389
      %v2491 = vmax.f32 %v2189, %v2391
      %v2492 = vmax.f32 %v2194, %v2393
      %v2493 = vmax.f32 %v2197, %v2395
      %2494 = vrot.lane.b32.xlu0 %v2396, 32
      %v2495 = vpop.permute.xlu0 %2494
      %2496 = vrot.lane.b32.xlu0 %v2397, 32
      %v2497 = vpop.permute.xlu0 %2496
      %2498 = vrot.lane.b32.xlu0 %v2398, 32
      %v2499 = vpop.permute.xlu0 %2498
      %2500 = vrot.lane.b32.xlu0 %v2399, 32
      %v2501 = vpop.permute.xlu0 %2500
      %2502 = vrot.lane.b32.xlu0 %v2400, 32
      %v2503 = vpop.permute.xlu0 %2502
      %2504 = vrot.lane.b32.xlu0 %v2401, 32
      %v2505 = vpop.permute.xlu0 %2504
      %2506 = vrot.lane.b32.xlu0 %v2402, 32
      %v2507 = vpop.permute.xlu0 %2506
      %2508 = vrot.lane.b32.xlu0 %v2403, 32
      %v2509 = vpop.permute.xlu0 %2508
      %2510 = vrot.lane.b32.xlu0 %v2404, 32
      %v2511 = vpop.permute.xlu0 %2510
      %2512 = vrot.lane.b32.xlu0 %v2405, 32
      %v2513 = vpop.permute.xlu0 %2512
      %2514 = vrot.lane.b32.xlu0 %v2406, 32
      %v2515 = vpop.permute.xlu0 %2514
      %2516 = vrot.lane.b32.xlu0 %v2407, 32
      %v2517 = vpop.permute.xlu0 %2516
      %2518 = vrot.lane.b32.xlu0 %v2408, 32
      %v2519 = vpop.permute.xlu0 %2518
      %2520 = vrot.lane.b32.xlu0 %v2409, 32
      %v2521 = vpop.permute.xlu0 %2520
      %2522 = vrot.lane.b32.xlu0 %v2410, 32
      %v2523 = vpop.permute.xlu0 %2522
      %2524 = vrot.lane.b32.xlu0 %v2411, 32
      %v2525 = vpop.permute.xlu0 %2524
      %2526 = vrot.lane.b32.xlu0 %v2412, 32
      %v2527 = vpop.permute.xlu0 %2526
      %2528 = vrot.lane.b32.xlu0 %v2413, 32
      %v2529 = vpop.permute.xlu0 %2528
      %2530 = vrot.lane.b32.xlu0 %v2414, 32
      %v2531 = vpop.permute.xlu0 %2530
      %2532 = vrot.lane.b32.xlu0 %v2415, 32
      %v2533 = vpop.permute.xlu0 %2532
      %2534 = vrot.lane.b32.xlu0 %v2416, 32
      %v2535 = vpop.permute.xlu0 %2534
      %2536 = vrot.lane.b32.xlu0 %v2417, 32
      %v2537 = vpop.permute.xlu0 %2536
      %2538 = vrot.lane.b32.xlu0 %v2418, 32
      %v2539 = vpop.permute.xlu0 %2538
      %2540 = vrot.lane.b32.xlu0 %v2419, 32
      %v2541 = vpop.permute.xlu0 %2540
      %2542 = vrot.lane.b32.xlu0 %v2420, 32
      %v2543 = vpop.permute.xlu0 %2542
      %2544 = vrot.lane.b32.xlu0 %v2421, 32
      %v2545 = vpop.permute.xlu0 %2544
      %2546 = vrot.lane.b32.xlu0 %v2422, 32
      %v2547 = vpop.permute.xlu0 %2546
      %2548 = vrot.lane.b32.xlu0 %v2423, 32
      %v2549 = vpop.permute.xlu0 %2548
      %2550 = vrot.lane.b32.xlu0 %v2424, 32
      %v2551 = vpop.permute.xlu0 %2550
      %2552 = vrot.lane.b32.xlu0 %v2425, 32
      %v2553 = vpop.permute.xlu0 %2552
      %2554 = vrot.lane.b32.xlu0 %v2426, 32
      %v2555 = vpop.permute.xlu0 %2554
      %2556 = vrot.lane.b32.xlu0 %v2427, 32
      %v2557 = vpop.permute.xlu0 %2556
      %2558 = vrot.lane.b32.xlu0 %v2428, 32
      %v2559 = vpop.permute.xlu0 %2558
      %2560 = vrot.lane.b32.xlu0 %v2429, 32
      %v2561 = vpop.permute.xlu0 %2560
      %2562 = vrot.lane.b32.xlu0 %v2430, 32
      %v2563 = vpop.permute.xlu0 %2562
      %2564 = vrot.lane.b32.xlu0 %v2431, 32
      %v2565 = vpop.permute.xlu0 %2564
      %2566 = vrot.lane.b32.xlu0 %v2432, 32
      %v2567 = vpop.permute.xlu0 %2566
      %2568 = vrot.lane.b32.xlu0 %v2433, 32
      %v2569 = vpop.permute.xlu0 %2568
      %2570 = vrot.lane.b32.xlu0 %v2434, 32
      %v2571 = vpop.permute.xlu0 %2570
      %2572 = vrot.lane.b32.xlu0 %v2435, 32
      %v2573 = vpop.permute.xlu0 %2572
      %2574 = vrot.lane.b32.xlu0 %v2436, 32
      %v2575 = vpop.permute.xlu0 %2574
      %2576 = vrot.lane.b32.xlu0 %v2437, 32
      %v2577 = vpop.permute.xlu0 %2576
      %2578 = vrot.lane.b32.xlu0 %v2438, 32
      %v2579 = vpop.permute.xlu0 %2578
      %2580 = vrot.lane.b32.xlu0 %v2439, 32
      %v2581 = vpop.permute.xlu0 %2580
      %2582 = vrot.lane.b32.xlu0 %v2440, 32
      %v2583 = vpop.permute.xlu0 %2582
      %2584 = vrot.lane.b32.xlu0 %v2441, 32
      %v2585 = vpop.permute.xlu0 %2584
      %2586 = vrot.lane.b32.xlu0 %v2442, 32
      %v2587 = vpop.permute.xlu0 %2586
      %2588 = vrot.lane.b32.xlu0 %v2443, 32
      %v2589 = vpop.permute.xlu0 %2588
      %2590 = vrot.lane.b32.xlu0 %v2444, 32
      %v2591 = vpop.permute.xlu0 %2590
      %2592 = vrot.lane.b32.xlu0 %v2445, 32
      %v2593 = vpop.permute.xlu0 %2592
      %2594 = vrot.lane.b32.xlu0 %v2446, 32
      %v2595 = vpop.permute.xlu0 %2594
      %2596 = vrot.lane.b32.xlu0 %v2447, 32
      %v2597 = vpop.permute.xlu0 %2596
      %2598 = vrot.lane.b32.xlu0 %v2448, 32
      %v2599 = vpop.permute.xlu0 %2598
      %2600 = vrot.lane.b32.xlu0 %v2449, 32
      %v2601 = vpop.permute.xlu0 %2600
      %2602 = vrot.lane.b32.xlu0 %v2450, 32
      %v2603 = vpop.permute.xlu0 %2602
      %2604 = vrot.lane.b32.xlu0 %v2451, 32
      %v2605 = vpop.permute.xlu0 %2604
      %2606 = vrot.lane.b32.xlu0 %v2452, 32
      %v2607 = vpop.permute.xlu0 %2606
      %2608 = vrot.lane.b32.xlu0 %v2453, 32
      %v2609 = vpop.permute.xlu0 %2608
      %2610 = vrot.lane.b32.xlu0 %v2454, 32
      %v2611 = vpop.permute.xlu0 %2610
      %2612 = vrot.lane.b32.xlu0 %v2455, 32
      %v2613 = vpop.permute.xlu0 %2612
      %2614 = vrot.lane.b32.xlu0 %v2456, 32
      %v2615 = vpop.permute.xlu0 %2614
      %2616 = vrot.lane.b32.xlu0 %v2457, 32
      %v2617 = vpop.permute.xlu0 %2616
      %2618 = vrot.lane.b32.xlu0 %v2458, 32
      %v2619 = vpop.permute.xlu0 %2618
      %2620 = vrot.lane.b32.xlu0 %v2459, 32
      %v2621 = vpop.permute.xlu0 %2620
      %2622 = vrot.lane.b32.xlu0 %v2460, 32
      %v2623 = vpop.permute.xlu0 %2622
      %2624 = vrot.lane.b32.xlu0 %v2461, 32
      %v2625 = vpop.permute.xlu0 %2624
      %2626 = vrot.lane.b32.xlu0 %v2462, 32
      %v2627 = vpop.permute.xlu0 %2626
      %2628 = vrot.lane.b32.xlu0 %v2463, 32
      %v2629 = vpop.permute.xlu0 %2628
      %2630 = vrot.lane.b32.xlu0 %v2464, 32
      %v2631 = vpop.permute.xlu0 %2630
      %2632 = vrot.lane.b32.xlu0 %v2465, 32
      %v2633 = vpop.permute.xlu0 %2632
      %2634 = vrot.lane.b32.xlu0 %v2466, 32
      %v2635 = vpop.permute.xlu0 %2634
      %2636 = vrot.lane.b32.xlu0 %v2467, 32
      %v2637 = vpop.permute.xlu0 %2636
      %2638 = vrot.lane.b32.xlu0 %v2468, 32
      %v2639 = vpop.permute.xlu0 %2638
      %2640 = vrot.lane.b32.xlu0 %v2469, 32
      %v2641 = vpop.permute.xlu0 %2640
      %2642 = vrot.lane.b32.xlu0 %v2470, 32
      %v2643 = vpop.permute.xlu0 %2642
      %2644 = vrot.lane.b32.xlu0 %v2471, 32
      %v2645 = vpop.permute.xlu0 %2644
      %2646 = vrot.lane.b32.xlu0 %v2472, 32
      %v2647 = vpop.permute.xlu0 %2646
      %2648 = vrot.lane.b32.xlu0 %v2473, 32
      %v2649 = vpop.permute.xlu0 %2648
      %2650 = vrot.lane.b32.xlu0 %v2474, 32
      %v2651 = vpop.permute.xlu0 %2650
      %2652 = vrot.lane.b32.xlu0 %v2475, 32
      %v2653 = vpop.permute.xlu0 %2652
      %2654 = vrot.lane.b32.xlu0 %v2476, 32
      %v2655 = vpop.permute.xlu0 %2654
      %2656 = vrot.lane.b32.xlu0 %v2477, 32
      %v2657 = vpop.permute.xlu0 %2656
      %2658 = vrot.lane.b32.xlu0 %v2478, 32
      %v2659 = vpop.permute.xlu0 %2658
      %2660 = vrot.lane.b32.xlu0 %v2479, 32
      %v2661 = vpop.permute.xlu0 %2660
      %2662 = vrot.lane.b32.xlu0 %v2480, 32
      %v2663 = vpop.permute.xlu0 %2662
      %2664 = vrot.lane.b32.xlu0 %v2481, 32
      %v2665 = vpop.permute.xlu0 %2664
      %2666 = vrot.lane.b32.xlu0 %v2482, 32
      %v2667 = vpop.permute.xlu0 %2666
      %2668 = vrot.lane.b32.xlu0 %v2483, 32
      %v2669 = vpop.permute.xlu0 %2668
      %2670 = vrot.lane.b32.xlu0 %v2484, 32
      %v2671 = vpop.permute.xlu0 %2670
      %2672 = vrot.lane.b32.xlu0 %v2485, 32
      %v2673 = vpop.permute.xlu0 %2672
      %2674 = vrot.lane.b32.xlu0 %v2486, 32
      %v2675 = vpop.permute.xlu0 %2674
      %2676 = vrot.lane.b32.xlu0 %v2487, 32
      %v2677 = vpop.permute.xlu0 %2676
      %2678 = vrot.lane.b32.xlu0 %v2488, 32
      %v2679 = vpop.permute.xlu0 %2678
      %2680 = vrot.lane.b32.xlu0 %v2489, 32
      %v2681 = vpop.permute.xlu0 %2680
      %2682 = vrot.lane.b32.xlu0 %v2490, 32
      %v2683 = vpop.permute.xlu0 %2682
      %2684 = vrot.lane.b32.xlu0 %v2491, 32
      %v2685 = vpop.permute.xlu0 %2684
      %2686 = vrot.lane.b32.xlu0 %v2492, 32
      %v2687 = vpop.permute.xlu0 %2686
      %2688 = vrot.lane.b32.xlu0 %v2493, 32
      %v2689 = vpop.permute.xlu0 %2688
      %v2690 = vmax.f32 %v2396, %v2495
      %v2691 = vmax.f32 %v2397, %v2497
      %v2692 = vmax.f32 %v2398, %v2499
      %v2693 = vmax.f32 %v2399, %v2501
      %v2694 = vmax.f32 %v2400, %v2503
      %v2695 = vmax.f32 %v2401, %v2505
      %v2696 = vmax.f32 %v2402, %v2507
      %v2697 = vmax.f32 %v2403, %v2509
      %v2698 = vmax.f32 %v2404, %v2511
      %v2699 = vmax.f32 %v2405, %v2513
      %v2700 = vmax.f32 %v2406, %v2515
      %v2701 = vmax.f32 %v2407, %v2517
      %v2702 = vmax.f32 %v2408, %v2519
      %v2703 = vmax.f32 %v2409, %v2521
      %v2704 = vmax.f32 %v2410, %v2523
      %v2705 = vmax.f32 %v2411, %v2525
      %v2706 = vmax.f32 %v2412, %v2527
      %v2707 = vmax.f32 %v2413, %v2529
      %v2708 = vmax.f32 %v2414, %v2531
      %v2709 = vmax.f32 %v2415, %v2533
      %v2710 = vmax.f32 %v2416, %v2535
      %v2711 = vmax.f32 %v2417, %v2537
      %v2712 = vmax.f32 %v2418, %v2539
      %v2713 = vmax.f32 %v2419, %v2541
      %v2714 = vmax.f32 %v2420, %v2543
      %v2715 = vmax.f32 %v2421, %v2545
      %v2716 = vmax.f32 %v2422, %v2547
      %v2717 = vmax.f32 %v2423, %v2549
      %v2718 = vmax.f32 %v2424, %v2551
      %v2719 = vmax.f32 %v2425, %v2553
      %v2720 = vmax.f32 %v2426, %v2555
      %v2721 = vmax.f32 %v2427, %v2557
      %v2722 = vmax.f32 %v2428, %v2559
      %v2723 = vmax.f32 %v2429, %v2561
      %v2724 = vmax.f32 %v2430, %v2563
      %v2725 = vmax.f32 %v2431, %v2565
      %v2726 = vmax.f32 %v2432, %v2567
      %v2727 = vmax.f32 %v2433, %v2569
      %v2728 = vmax.f32 %v2434, %v2571
      %v2729 = vmax.f32 %v2435, %v2573
      %v2730 = vmax.f32 %v2436, %v2575
      %v2731 = vmax.f32 %v2437, %v2577
      %v2732 = vmax.f32 %v2438, %v2579
      %v2733 = vmax.f32 %v2439, %v2581
      %v2734 = vmax.f32 %v2440, %v2583
      %v2735 = vmax.f32 %v2441, %v2585
      %v2736 = vmax.f32 %v2442, %v2587
      %v2737 = vmax.f32 %v2443, %v2589
      %v2738 = vmax.f32 %v2444, %v2591
      %v2739 = vmax.f32 %v2445, %v2593
      %v2740 = vmax.f32 %v2446, %v2595
      %v2741 = vmax.f32 %v2447, %v2597
      %v2742 = vmax.f32 %v2448, %v2599
      %v2743 = vmax.f32 %v2449, %v2601
      %v2744 = vmax.f32 %v2450, %v2603
      %v2745 = vmax.f32 %v2451, %v2605
      %v2746 = vmax.f32 %v2452, %v2607
      %v2747 = vmax.f32 %v2453, %v2609
      %v2748 = vmax.f32 %v2454, %v2611
      %v2749 = vmax.f32 %v2455, %v2613
      %v2750 = vmax.f32 %v2456, %v2615
      %v2751 = vmax.f32 %v2457, %v2617
      %v2752 = vmax.f32 %v2458, %v2619
      %v2753 = vmax.f32 %v2459, %v2621
      %v2754 = vmax.f32 %v2460, %v2623
      %v2755 = vmax.f32 %v2461, %v2625
      %v2756 = vmax.f32 %v2462, %v2627
      %v2757 = vmax.f32 %v2463, %v2629
      %v2758 = vmax.f32 %v2464, %v2631
      %v2759 = vmax.f32 %v2465, %v2633
      %v2760 = vmax.f32 %v2466, %v2635
      %v2761 = vmax.f32 %v2467, %v2637
      %v2762 = vmax.f32 %v2468, %v2639
      %v2763 = vmax.f32 %v2469, %v2641
      %v2764 = vmax.f32 %v2470, %v2643
      %v2765 = vmax.f32 %v2471, %v2645
      %v2766 = vmax.f32 %v2472, %v2647
      %v2767 = vmax.f32 %v2473, %v2649
      %v2768 = vmax.f32 %v2474, %v2651
      %v2769 = vmax.f32 %v2475, %v2653
      %v2770 = vmax.f32 %v2476, %v2655
      %v2771 = vmax.f32 %v2477, %v2657
      %v2772 = vmax.f32 %v2478, %v2659
      %v2773 = vmax.f32 %v2479, %v2661
      %v2774 = vmax.f32 %v2480, %v2663
      %v2775 = vmax.f32 %v2481, %v2665
      %v2776 = vmax.f32 %v2482, %v2667
      %v2777 = vmax.f32 %v2483, %v2669
      %v2778 = vmax.f32 %v2484, %v2671
      %v2779 = vmax.f32 %v2485, %v2673
      %v2780 = vmax.f32 %v2486, %v2675
      %v2781 = vmax.f32 %v2487, %v2677
      %v2782 = vmax.f32 %v2488, %v2679
      %v2783 = vmax.f32 %v2489, %v2681
      %v2784 = vmax.f32 %v2490, %v2683
      %v2785 = vmax.f32 %v2491, %v2685
      %v2786 = vmax.f32 %v2492, %v2687
      %v2787 = vmax.f32 %v2493, %v2689
      %v2788 = vld [vmem:[%s2] sm:$0x1]
      %v2790 = vlaneseq
      %v2791 = vshrl.u32 %v2790, 7
      %v2792 = vsub.s32 0, %v2791
      %v2793 = vrot.slane %v2788, %v2792
      %v2795 = vadd.f32 %v2690, %v2793
      %v2796 = vadd.f32 %v2691, %v2793
      %v2797 = vadd.f32 %v2692, %v2793
      %v2798 = vadd.f32 %v2693, %v2793
      %v2799 = vadd.f32 %v2694, %v2793
      %v2800 = vadd.f32 %v2695, %v2793
      %v2801 = vadd.f32 %v2696, %v2793
      %v2802 = vadd.f32 %v2697, %v2793
      %v2803 = vadd.f32 %v2698, %v2793
      %v2804 = vadd.f32 %v2699, %v2793
      %v2805 = vadd.f32 %v2700, %v2793
      %v2806 = vadd.f32 %v2701, %v2793
      %v2807 = vadd.f32 %v2702, %v2793
      %v2808 = vadd.f32 %v2703, %v2793
      %v2809 = vadd.f32 %v2704, %v2793
      %v2810 = vadd.f32 %v2705, %v2793
      %v2811 = vadd.f32 %v2706, %v2793
      %v2812 = vadd.f32 %v2707, %v2793
      %v2813 = vadd.f32 %v2708, %v2793
      %v2814 = vadd.f32 %v2709, %v2793
      %v2815 = vadd.f32 %v2710, %v2793
      %v2816 = vadd.f32 %v2711, %v2793
      %v2817 = vadd.f32 %v2712, %v2793
      %v2818 = vadd.f32 %v2713, %v2793
      %v2819 = vadd.f32 %v2714, %v2793
      %v2820 = vadd.f32 %v2715, %v2793
      %v2821 = vadd.f32 %v2716, %v2793
      %v2822 = vadd.f32 %v2717, %v2793
      %v2823 = vadd.f32 %v2718, %v2793
      %v2824 = vadd.f32 %v2719, %v2793
      %v2825 = vadd.f32 %v2720, %v2793
      %v2826 = vadd.f32 %v2721, %v2793
      %v2827 = vadd.f32 %v2722, %v2793
      %v2828 = vadd.f32 %v2723, %v2793
      %v2829 = vadd.f32 %v2724, %v2793
      %v2830 = vadd.f32 %v2725, %v2793
      %v2831 = vadd.f32 %v2726, %v2793
      %v2832 = vadd.f32 %v2727, %v2793
      %v2833 = vadd.f32 %v2728, %v2793
      %v2834 = vadd.f32 %v2729, %v2793
      %v2835 = vadd.f32 %v2730, %v2793
      %v2836 = vadd.f32 %v2731, %v2793
      %v2837 = vadd.f32 %v2732, %v2793
      %v2838 = vadd.f32 %v2733, %v2793
      %v2839 = vadd.f32 %v2734, %v2793
      %v2840 = vadd.f32 %v2735, %v2793
      %v2841 = vadd.f32 %v2736, %v2793
      %v2842 = vadd.f32 %v2737, %v2793
      %v2843 = vadd.f32 %v2738, %v2793
      %v2844 = vadd.f32 %v2739, %v2793
      %v2845 = vadd.f32 %v2740, %v2793
      %v2846 = vadd.f32 %v2741, %v2793
      %v2847 = vadd.f32 %v2742, %v2793
      %v2848 = vadd.f32 %v2743, %v2793
      %v2849 = vadd.f32 %v2744, %v2793
      %v2850 = vadd.f32 %v2745, %v2793
      %v2851 = vadd.f32 %v2746, %v2793
      %v2852 = vadd.f32 %v2747, %v2793
      %v2853 = vadd.f32 %v2748, %v2793
      %v2854 = vadd.f32 %v2749, %v2793
      %v2855 = vadd.f32 %v2750, %v2793
      %v2856 = vadd.f32 %v2751, %v2793
      %v2857 = vadd.f32 %v2752, %v2793
      %v2858 = vadd.f32 %v2753, %v2793
      %v2859 = vadd.f32 %v2754, %v2793
      %v2860 = vadd.f32 %v2755, %v2793
      %v2861 = vadd.f32 %v2756, %v2793
      %v2862 = vadd.f32 %v2757, %v2793
      %v2863 = vadd.f32 %v2758, %v2793
      %v2864 = vadd.f32 %v2759, %v2793
      %v2865 = vadd.f32 %v2760, %v2793
      %v2866 = vadd.f32 %v2761, %v2793
      %v2867 = vadd.f32 %v2762, %v2793
      %v2868 = vadd.f32 %v2763, %v2793
      %v2869 = vadd.f32 %v2764, %v2793
      %v2870 = vadd.f32 %v2765, %v2793
      %v2871 = vadd.f32 %v2766, %v2793
      %v2872 = vadd.f32 %v2767, %v2793
      %v2873 = vadd.f32 %v2768, %v2793
      %v2874 = vadd.f32 %v2769, %v2793
      %v2875 = vadd.f32 %v2770, %v2793
      %v2876 = vadd.f32 %v2771, %v2793
      %v2877 = vadd.f32 %v2772, %v2793
      %v2878 = vadd.f32 %v2773, %v2793
      %v2879 = vadd.f32 %v2774, %v2793
      %v2880 = vadd.f32 %v2775, %v2793
      %v2881 = vadd.f32 %v2776, %v2793
      %v2882 = vadd.f32 %v2777, %v2793
      %v2883 = vadd.f32 %v2778, %v2793
      %v2884 = vadd.f32 %v2779, %v2793
      %v2885 = vadd.f32 %v2780, %v2793
      %v2886 = vadd.f32 %v2781, %v2793
      %v2887 = vadd.f32 %v2782, %v2793
      %v2888 = vadd.f32 %v2783, %v2793
      %v2889 = vadd.f32 %v2784, %v2793
      %v2890 = vadd.f32 %v2785, %v2793
      %v2891 = vadd.f32 %v2786, %v2793
      %v2892 = vadd.f32 %v2787, %v2793
      %v2893 = vmax.f32 %v2795, 0.0
      %v2894 = vmax.f32 %v2796, 0.0
      %v2895 = vmax.f32 %v2797, 0.0
      %v2896 = vmax.f32 %v2798, 0.0
      %v2897 = vmax.f32 %v2799, 0.0
      %v2898 = vmax.f32 %v2800, 0.0
      %v2899 = vmax.f32 %v2801, 0.0
      %v2900 = vmax.f32 %v2802, 0.0
      %v2901 = vmax.f32 %v2803, 0.0
      %v2902 = vmax.f32 %v2804, 0.0
      %v2903 = vmax.f32 %v2805, 0.0
      %v2904 = vmax.f32 %v2806, 0.0
      %v2905 = vmax.f32 %v2807, 0.0
      %v2906 = vmax.f32 %v2808, 0.0
      %v2907 = vmax.f32 %v2809, 0.0
      %v2908 = vmax.f32 %v2810, 0.0
      %v2909 = vmax.f32 %v2811, 0.0
      %v2910 = vmax.f32 %v2812, 0.0
      %v2911 = vmax.f32 %v2813, 0.0
      %v2912 = vmax.f32 %v2814, 0.0
      %v2913 = vmax.f32 %v2815, 0.0
      %v2914 = vmax.f32 %v2816, 0.0
      %v2915 = vmax.f32 %v2817, 0.0
      %v2916 = vmax.f32 %v2818, 0.0
      %v2917 = vmax.f32 %v2819, 0.0
      %v2918 = vmax.f32 %v2820, 0.0
      %v2919 = vmax.f32 %v2821, 0.0
      %v2920 = vmax.f32 %v2822, 0.0
      %v2921 = vmax.f32 %v2823, 0.0
      %v2922 = vmax.f32 %v2824, 0.0
      %v2923 = vmax.f32 %v2825, 0.0
      %v2924 = vmax.f32 %v2826, 0.0
      %v2925 = vmax.f32 %v2827, 0.0
      %v2926 = vmax.f32 %v2828, 0.0
      %v2927 = vmax.f32 %v2829, 0.0
      %v2928 = vmax.f32 %v2830, 0.0
      %v2929 = vmax.f32 %v2831, 0.0
      %v2930 = vmax.f32 %v2832, 0.0
      %v2931 = vmax.f32 %v2833, 0.0
      %v2932 = vmax.f32 %v2834, 0.0
      %v2933 = vmax.f32 %v2835, 0.0
      %v2934 = vmax.f32 %v2836, 0.0
      %v2935 = vmax.f32 %v2837, 0.0
      %v2936 = vmax.f32 %v2838, 0.0
      %v2937 = vmax.f32 %v2839, 0.0
      %v2938 = vmax.f32 %v2840, 0.0
      %v2939 = vmax.f32 %v2841, 0.0
      %v2940 = vmax.f32 %v2842, 0.0
      %v2941 = vmax.f32 %v2843, 0.0
      %v2942 = vmax.f32 %v2844, 0.0
      %v2943 = vmax.f32 %v2845, 0.0
      %v2944 = vmax.f32 %v2846, 0.0
      %v2945 = vmax.f32 %v2847, 0.0
      %v2946 = vmax.f32 %v2848, 0.0
      %v2947 = vmax.f32 %v2849, 0.0
      %v2948 = vmax.f32 %v2850, 0.0
      %v2949 = vmax.f32 %v2851, 0.0
      %v2950 = vmax.f32 %v2852, 0.0
      %v2951 = vmax.f32 %v2853, 0.0
      %v2952 = vmax.f32 %v2854, 0.0
      %v2953 = vmax.f32 %v2855, 0.0
      %v2954 = vmax.f32 %v2856, 0.0
      %v2955 = vmax.f32 %v2857, 0.0
      %v2956 = vmax.f32 %v2858, 0.0
      %v2957 = vmax.f32 %v2859, 0.0
      %v2958 = vmax.f32 %v2860, 0.0
      %v2959 = vmax.f32 %v2861, 0.0
      %v2960 = vmax.f32 %v2862, 0.0
      %v2961 = vmax.f32 %v2863, 0.0
      %v2962 = vmax.f32 %v2864, 0.0
      %v2963 = vmax.f32 %v2865, 0.0
      %v2964 = vmax.f32 %v2866, 0.0
      %v2965 = vmax.f32 %v2867, 0.0
      %v2966 = vmax.f32 %v2868, 0.0
      %v2967 = vmax.f32 %v2869, 0.0
      %v2968 = vmax.f32 %v2870, 0.0
      %v2969 = vmax.f32 %v2871, 0.0
      %v2970 = vmax.f32 %v2872, 0.0
      %v2971 = vmax.f32 %v2873, 0.0
      %v2972 = vmax.f32 %v2874, 0.0
      %v2973 = vmax.f32 %v2875, 0.0
      %v2974 = vmax.f32 %v2876, 0.0
      %v2975 = vmax.f32 %v2877, 0.0
      %v2976 = vmax.f32 %v2878, 0.0
      %v2977 = vmax.f32 %v2879, 0.0
      %v2978 = vmax.f32 %v2880, 0.0
      %v2979 = vmax.f32 %v2881, 0.0
      %v2980 = vmax.f32 %v2882, 0.0
      %v2981 = vmax.f32 %v2883, 0.0
      %v2982 = vmax.f32 %v2884, 0.0
      %v2983 = vmax.f32 %v2885, 0.0
      %v2984 = vmax.f32 %v2886, 0.0
      %v2985 = vmax.f32 %v2887, 0.0
      %v2986 = vmax.f32 %v2888, 0.0
      %v2987 = vmax.f32 %v2889, 0.0
      %v2988 = vmax.f32 %v2890, 0.0
      %v2989 = vmax.f32 %v2891, 0.0
      %v2990 = vmax.f32 %v2892, 0.0
      %v2991 = vlaneseq
      %v2992 = vand.u32 %v2991, 127
      %vm2993 = vcmp.lt.s32.totalorder %v2992, 32
      %v2994 = vsel %vm2993, %v2893, 0.0
      %v2995 = vsel %vm2993, %v2894, 0.0
      %v2996 = vsel %vm2993, %v2895, 0.0
      %v2997 = vsel %vm2993, %v2896, 0.0
      %v2998 = vsel %vm2993, %v2897, 0.0
      %v2999 = vsel %vm2993, %v2898, 0.0
      %v3000 = vsel %vm2993, %v2899, 0.0
      %v3001 = vsel %vm2993, %v2900, 0.0
      %v3002 = vsel %vm2993, %v2901, 0.0
      %v3003 = vsel %vm2993, %v2902, 0.0
      %v3004 = vsel %vm2993, %v2903, 0.0
      %v3005 = vsel %vm2993, %v2904, 0.0
      %v3006 = vsel %vm2993, %v2905, 0.0
      %v3007 = vsel %vm2993, %v2906, 0.0
      %v3008 = vsel %vm2993, %v2907, 0.0
      %v3009 = vsel %vm2993, %v2908, 0.0
      %v3010 = vsel %vm2993, %v2909, 0.0
      %v3011 = vsel %vm2993, %v2910, 0.0
      %v3012 = vsel %vm2993, %v2911, 0.0
      %v3013 = vsel %vm2993, %v2912, 0.0
      %v3014 = vsel %vm2993, %v2913, 0.0
      %v3015 = vsel %vm2993, %v2914, 0.0
      %v3016 = vsel %vm2993, %v2915, 0.0
      %v3017 = vsel %vm2993, %v2916, 0.0
      %v3018 = vsel %vm2993, %v2917, 0.0
      %v3019 = vsel %vm2993, %v2918, 0.0
      %v3020 = vsel %vm2993, %v2919, 0.0
      %v3021 = vsel %vm2993, %v2920, 0.0
      %v3022 = vsel %vm2993, %v2921, 0.0
      %v3023 = vsel %vm2993, %v2922, 0.0
      %v3024 = vsel %vm2993, %v2923, 0.0
      %v3025 = vsel %vm2993, %v2924, 0.0
      %v3026 = vsel %vm2993, %v2925, 0.0
      %v3027 = vsel %vm2993, %v2926, 0.0
      %v3028 = vsel %vm2993, %v2927, 0.0
      %v3029 = vsel %vm2993, %v2928, 0.0
      %v3030 = vsel %vm2993, %v2929, 0.0
      %v3031 = vsel %vm2993, %v2930, 0.0
      %v3032 = vsel %vm2993, %v2931, 0.0
      %v3033 = vsel %vm2993, %v2932, 0.0
      %v3034 = vsel %vm2993, %v2933, 0.0
      %v3035 = vsel %vm2993, %v2934, 0.0
      %v3036 = vsel %vm2993, %v2935, 0.0
      %v3037 = vsel %vm2993, %v2936, 0.0
      %v3038 = vsel %vm2993, %v2937, 0.0
      %v3039 = vsel %vm2993, %v2938, 0.0
      %v3040 = vsel %vm2993, %v2939, 0.0
      %v3041 = vsel %vm2993, %v2940, 0.0
      %v3042 = vsel %vm2993, %v2941, 0.0
      %v3043 = vsel %vm2993, %v2942, 0.0
      %v3044 = vsel %vm2993, %v2943, 0.0
      %v3045 = vsel %vm2993, %v2944, 0.0
      %v3046 = vsel %vm2993, %v2945, 0.0
      %v3047 = vsel %vm2993, %v2946, 0.0
      %v3048 = vsel %vm2993, %v2947, 0.0
      %v3049 = vsel %vm2993, %v2948, 0.0
      %v3050 = vsel %vm2993, %v2949, 0.0
      %v3051 = vsel %vm2993, %v2950, 0.0
      %v3052 = vsel %vm2993, %v2951, 0.0
      %v3053 = vsel %vm2993, %v2952, 0.0
      %v3054 = vsel %vm2993, %v2953, 0.0
      %v3055 = vsel %vm2993, %v2954, 0.0
      %v3056 = vsel %vm2993, %v2955, 0.0
      %v3057 = vsel %vm2993, %v2956, 0.0
      %v3058 = vsel %vm2993, %v2957, 0.0
      %v3059 = vsel %vm2993, %v2958, 0.0
      %v3060 = vsel %vm2993, %v2959, 0.0
      %v3061 = vsel %vm2993, %v2960, 0.0
      %v3062 = vsel %vm2993, %v2961, 0.0
      %v3063 = vsel %vm2993, %v2962, 0.0
      %v3064 = vsel %vm2993, %v2963, 0.0
      %v3065 = vsel %vm2993, %v2964, 0.0
      %v3066 = vsel %vm2993, %v2965, 0.0
      %v3067 = vsel %vm2993, %v2966, 0.0
      %v3068 = vsel %vm2993, %v2967, 0.0
      %v3069 = vsel %vm2993, %v2968, 0.0
      %v3070 = vsel %vm2993, %v2969, 0.0
      %v3071 = vsel %vm2993, %v2970, 0.0
      %v3072 = vsel %vm2993, %v2971, 0.0
      %v3073 = vsel %vm2993, %v2972, 0.0
      %v3074 = vsel %vm2993, %v2973, 0.0
      %v3075 = vsel %vm2993, %v2974, 0.0
      %v3076 = vsel %vm2993, %v2975, 0.0
      %v3077 = vsel %vm2993, %v2976, 0.0
      %v3078 = vsel %vm2993, %v2977, 0.0
      %v3079 = vsel %vm2993, %v2978, 0.0
      %v3080 = vsel %vm2993, %v2979, 0.0
      %v3081 = vsel %vm2993, %v2980, 0.0
      %v3082 = vsel %vm2993, %v2981, 0.0
      %v3083 = vsel %vm2993, %v2982, 0.0
      %v3084 = vsel %vm2993, %v2983, 0.0
      %v3085 = vsel %vm2993, %v2984, 0.0
      %v3086 = vsel %vm2993, %v2985, 0.0
      %v3087 = vsel %vm2993, %v2986, 0.0
      %v3088 = vsel %vm2993, %v2987, 0.0
      %v3089 = vsel %vm2993, %v2988, 0.0
      %v3090 = vsel %vm2993, %v2989, 0.0
      %v3091 = vsel %vm2993, %v2990, 0.0
      %v3092 = vpack.c.bf16 %v2995, %v2994
      %v3093 = vpack.c.bf16 %v2997, %v2996
      %v3094 = vpack.c.bf16 %v2999, %v2998
      %v3095 = vpack.c.bf16 %v3001, %v3000
      %v3096 = vpack.c.bf16 %v3003, %v3002
      %v3097 = vpack.c.bf16 %v3005, %v3004
      %v3098 = vpack.c.bf16 %v3007, %v3006
      %v3099 = vpack.c.bf16 %v3009, %v3008
      %v3100 = vpack.c.bf16 %v3011, %v3010
      %v3101 = vpack.c.bf16 %v3013, %v3012
      %v3102 = vpack.c.bf16 %v3015, %v3014
      %v3103 = vpack.c.bf16 %v3017, %v3016
      %v3104 = vpack.c.bf16 %v3019, %v3018
      %v3105 = vpack.c.bf16 %v3021, %v3020
      %v3106 = vpack.c.bf16 %v3023, %v3022
      %v3107 = vpack.c.bf16 %v3025, %v3024
      %v3108 = vpack.c.bf16 %v3027, %v3026
      %v3109 = vpack.c.bf16 %v3029, %v3028
      %v3110 = vpack.c.bf16 %v3031, %v3030
      %v3111 = vpack.c.bf16 %v3033, %v3032
      %v3112 = vpack.c.bf16 %v3035, %v3034
      %v3113 = vpack.c.bf16 %v3037, %v3036
      %v3114 = vpack.c.bf16 %v3039, %v3038
      %v3115 = vpack.c.bf16 %v3041, %v3040
      %v3116 = vpack.c.bf16 %v3043, %v3042
      %v3117 = vpack.c.bf16 %v3045, %v3044
      %v3118 = vpack.c.bf16 %v3047, %v3046
      %v3119 = vpack.c.bf16 %v3049, %v3048
      %v3120 = vpack.c.bf16 %v3051, %v3050
      %v3121 = vpack.c.bf16 %v3053, %v3052
      %v3122 = vpack.c.bf16 %v3055, %v3054
      %v3123 = vpack.c.bf16 %v3057, %v3056
      %v3124 = vpack.c.bf16 %v3059, %v3058
      %v3125 = vpack.c.bf16 %v3061, %v3060
      %v3126 = vpack.c.bf16 %v3063, %v3062
      %v3127 = vpack.c.bf16 %v3065, %v3064
      %v3128 = vpack.c.bf16 %v3067, %v3066
      %v3129 = vpack.c.bf16 %v3069, %v3068
      %v3130 = vpack.c.bf16 %v3071, %v3070
      %v3131 = vpack.c.bf16 %v3073, %v3072
      %v3132 = vpack.c.bf16 %v3075, %v3074
      %v3133 = vpack.c.bf16 %v3077, %v3076
      %v3134 = vpack.c.bf16 %v3079, %v3078
      %v3135 = vpack.c.bf16 %v3081, %v3080
      %v3136 = vpack.c.bf16 %v3083, %v3082
      %v3137 = vpack.c.bf16 %v3085, %v3084
      %v3138 = vpack.c.bf16 %v3087, %v3086
      %v3139 = vpack.c.bf16 %v3089, %v3088
      %v3140 = vpack.c.bf16 %v3091, %v3090
      %v3190 = vunpack.c.l.b16 %v3092
      %v3191 = vunpack.c.h.b16 %v3092
      %v3192 = vunpack.c.l.b16 %v3093
      %v3193 = vunpack.c.h.b16 %v3093
      %v3194 = vunpack.c.l.b16 %v3094
      %v3195 = vunpack.c.h.b16 %v3094
      %v3196 = vunpack.c.l.b16 %v3095
      %v3197 = vunpack.c.h.b16 %v3095
      %v3198 = vunpack.c.l.b16 %v3096
      %v3199 = vunpack.c.h.b16 %v3096
      %v3200 = vunpack.c.l.b16 %v3097
      %v3201 = vunpack.c.h.b16 %v3097
      %v3202 = vunpack.c.l.b16 %v3098
      %v3203 = vunpack.c.h.b16 %v3098
      %v3204 = vunpack.c.l.b16 %v3099
      %v3205 = vunpack.c.h.b16 %v3099
      %v3206 = vunpack.c.l.b16 %v3100
      %v3207 = vunpack.c.h.b16 %v3100
      %v3208 = vunpack.c.l.b16 %v3101
      %v3209 = vunpack.c.h.b16 %v3101
      %v3210 = vunpack.c.l.b16 %v3102
      %v3211 = vunpack.c.h.b16 %v3102
      %v3212 = vunpack.c.l.b16 %v3103
      %v3213 = vunpack.c.h.b16 %v3103
      %v3214 = vunpack.c.l.b16 %v3104
      %v3215 = vunpack.c.h.b16 %v3104
      %v3216 = vunpack.c.l.b16 %v3105
      %v3217 = vunpack.c.h.b16 %v3105
      %v3218 = vunpack.c.l.b16 %v3106
      %v3219 = vunpack.c.h.b16 %v3106
      %v3220 = vunpack.c.l.b16 %v3107
      %v3221 = vunpack.c.h.b16 %v3107
      %v3222 = vunpack.c.l.b16 %v3108
      %v3223 = vunpack.c.h.b16 %v3108
      %v3224 = vunpack.c.l.b16 %v3109
      %v3225 = vunpack.c.h.b16 %v3109
      %v3226 = vunpack.c.l.b16 %v3110
      %v3227 = vunpack.c.h.b16 %v3110
      %v3228 = vunpack.c.l.b16 %v3111
      %v3229 = vunpack.c.h.b16 %v3111
      %v3230 = vunpack.c.l.b16 %v3112
      %v3231 = vunpack.c.h.b16 %v3112
      %v3232 = vunpack.c.l.b16 %v3113
      %v3233 = vunpack.c.h.b16 %v3113
      %v3234 = vunpack.c.l.b16 %v3114
      %v3235 = vunpack.c.h.b16 %v3114
      %v3236 = vunpack.c.l.b16 %v3115
      %v3237 = vunpack.c.h.b16 %v3115
      %v3238 = vunpack.c.l.b16 %v3116
      %v3239 = vunpack.c.h.b16 %v3116
      %v3240 = vunpack.c.l.b16 %v3117
      %v3241 = vunpack.c.h.b16 %v3117
      %v3242 = vunpack.c.l.b16 %v3118
      %v3243 = vunpack.c.h.b16 %v3118
      %v3244 = vunpack.c.l.b16 %v3119
      %v3245 = vunpack.c.h.b16 %v3119
      %v3246 = vunpack.c.l.b16 %v3120
      %v3247 = vunpack.c.h.b16 %v3120
      %v3248 = vunpack.c.l.b16 %v3121
      %v3249 = vunpack.c.h.b16 %v3121
      %v3250 = vunpack.c.l.b16 %v3122
      %v3251 = vunpack.c.h.b16 %v3122
      %v3252 = vunpack.c.l.b16 %v3123
      %v3253 = vunpack.c.h.b16 %v3123
      %v3254 = vunpack.c.l.b16 %v3124
      %v3255 = vunpack.c.h.b16 %v3124
      %v3256 = vunpack.c.l.b16 %v3125
      %v3257 = vunpack.c.h.b16 %v3125
      %v3258 = vunpack.c.l.b16 %v3126
      %v3259 = vunpack.c.h.b16 %v3126
      %v3260 = vunpack.c.l.b16 %v3127
      %v3261 = vunpack.c.h.b16 %v3127
      %v3262 = vunpack.c.l.b16 %v3128
      %v3263 = vunpack.c.h.b16 %v3128
      %v3264 = vunpack.c.l.b16 %v3129
      %v3265 = vunpack.c.h.b16 %v3129
      %v3266 = vunpack.c.l.b16 %v3130
      %v3267 = vunpack.c.h.b16 %v3130
      %v3268 = vunpack.c.l.b16 %v3131
      %v3269 = vunpack.c.h.b16 %v3131
      %v3270 = vunpack.c.l.b16 %v3132
      %v3271 = vunpack.c.h.b16 %v3132
      %v3272 = vunpack.c.l.b16 %v3133
      %v3273 = vunpack.c.h.b16 %v3133
      %v3274 = vunpack.c.l.b16 %v3134
      %v3275 = vunpack.c.h.b16 %v3134
      %v3276 = vunpack.c.l.b16 %v3135
      %v3277 = vunpack.c.h.b16 %v3135
      %v3278 = vunpack.c.l.b16 %v3136
      %v3279 = vunpack.c.h.b16 %v3136
      %v3280 = vunpack.c.l.b16 %v3137
      %v3281 = vunpack.c.h.b16 %v3137
      %v3282 = vunpack.c.l.b16 %v3138
      %v3283 = vunpack.c.h.b16 %v3138
      %v3284 = vunpack.c.l.b16 %v3139
      %v3285 = vunpack.c.h.b16 %v3139
      %v3286 = vunpack.c.l.b16 %v3140
      %v3287 = vunpack.c.h.b16 %v3140
      %v3288 = vpack.c.b16 %v3190, %v3190
      %v3289 = vpack.c.b16 %v3191, %v3191
      %v3290 = vpack.c.b16 %v3192, %v3192
      %v3291 = vpack.c.b16 %v3193, %v3193
      %v3292 = vpack.c.b16 %v3194, %v3194
      %v3293 = vpack.c.b16 %v3195, %v3195
      %v3294 = vpack.c.b16 %v3196, %v3196
      %v3295 = vpack.c.b16 %v3197, %v3197
      %v3296 = vpack.c.b16 %v3198, %v3198
      %v3297 = vpack.c.b16 %v3199, %v3199
      %v3298 = vpack.c.b16 %v3200, %v3200
      %v3299 = vpack.c.b16 %v3201, %v3201
      %v3300 = vpack.c.b16 %v3202, %v3202
      %v3301 = vpack.c.b16 %v3203, %v3203
      %v3302 = vpack.c.b16 %v3204, %v3204
      %v3303 = vpack.c.b16 %v3205, %v3205
      %v3304 = vpack.c.b16 %v3206, %v3206
      %v3305 = vpack.c.b16 %v3207, %v3207
      %v3306 = vpack.c.b16 %v3208, %v3208
      %v3307 = vpack.c.b16 %v3209, %v3209
      %v3308 = vpack.c.b16 %v3210, %v3210
      %v3309 = vpack.c.b16 %v3211, %v3211
      %v3310 = vpack.c.b16 %v3212, %v3212
      %v3311 = vpack.c.b16 %v3213, %v3213
      %v3312 = vpack.c.b16 %v3214, %v3214
      %v3313 = vpack.c.b16 %v3215, %v3215
      %v3314 = vpack.c.b16 %v3216, %v3216
      %v3315 = vpack.c.b16 %v3217, %v3217
      %v3316 = vpack.c.b16 %v3218, %v3218
      %v3317 = vpack.c.b16 %v3219, %v3219
      %v3318 = vpack.c.b16 %v3220, %v3220
      %v3319 = vpack.c.b16 %v3221, %v3221
      %v3320 = vpack.c.b16 %v3222, %v3222
      %v3321 = vpack.c.b16 %v3223, %v3223
      %v3322 = vpack.c.b16 %v3224, %v3224
      %v3323 = vpack.c.b16 %v3225, %v3225
      %v3324 = vpack.c.b16 %v3226, %v3226
      %v3325 = vpack.c.b16 %v3227, %v3227
      %v3326 = vpack.c.b16 %v3228, %v3228
      %v3327 = vpack.c.b16 %v3229, %v3229
      %v3328 = vpack.c.b16 %v3230, %v3230
      %v3329 = vpack.c.b16 %v3231, %v3231
      %v3330 = vpack.c.b16 %v3232, %v3232
      %v3331 = vpack.c.b16 %v3233, %v3233
      %v3332 = vpack.c.b16 %v3234, %v3234
      %v3333 = vpack.c.b16 %v3235, %v3235
      %v3334 = vpack.c.b16 %v3236, %v3236
      %v3335 = vpack.c.b16 %v3237, %v3237
      %v3336 = vpack.c.b16 %v3238, %v3238
      %v3337 = vpack.c.b16 %v3239, %v3239
      %v3338 = vpack.c.b16 %v3240, %v3240
      %v3339 = vpack.c.b16 %v3241, %v3241
      %v3340 = vpack.c.b16 %v3242, %v3242
      %v3341 = vpack.c.b16 %v3243, %v3243
      %v3342 = vpack.c.b16 %v3244, %v3244
      %v3343 = vpack.c.b16 %v3245, %v3245
      %v3344 = vpack.c.b16 %v3246, %v3246
      %v3345 = vpack.c.b16 %v3247, %v3247
      %v3346 = vpack.c.b16 %v3248, %v3248
      %v3347 = vpack.c.b16 %v3249, %v3249
      %v3348 = vpack.c.b16 %v3250, %v3250
      %v3349 = vpack.c.b16 %v3251, %v3251
      %v3350 = vpack.c.b16 %v3252, %v3252
      %v3351 = vpack.c.b16 %v3253, %v3253
      %v3352 = vpack.c.b16 %v3254, %v3254
      %v3353 = vpack.c.b16 %v3255, %v3255
      %v3354 = vpack.c.b16 %v3256, %v3256
      %v3355 = vpack.c.b16 %v3257, %v3257
      %v3356 = vpack.c.b16 %v3258, %v3258
      %v3357 = vpack.c.b16 %v3259, %v3259
      %v3358 = vpack.c.b16 %v3260, %v3260
      %v3359 = vpack.c.b16 %v3261, %v3261
      %v3360 = vpack.c.b16 %v3262, %v3262
      %v3361 = vpack.c.b16 %v3263, %v3263
      %v3362 = vpack.c.b16 %v3264, %v3264
      %v3363 = vpack.c.b16 %v3265, %v3265
      %v3364 = vpack.c.b16 %v3266, %v3266
      %v3365 = vpack.c.b16 %v3267, %v3267
      %v3366 = vpack.c.b16 %v3268, %v3268
      %v3367 = vpack.c.b16 %v3269, %v3269
      %v3368 = vpack.c.b16 %v3270, %v3270
      %v3369 = vpack.c.b16 %v3271, %v3271
      %v3370 = vpack.c.b16 %v3272, %v3272
      %v3371 = vpack.c.b16 %v3273, %v3273
      %v3372 = vpack.c.b16 %v3274, %v3274
      %v3373 = vpack.c.b16 %v3275, %v3275
      %v3374 = vpack.c.b16 %v3276, %v3276
      %v3375 = vpack.c.b16 %v3277, %v3277
      %v3376 = vpack.c.b16 %v3278, %v3278
      %v3377 = vpack.c.b16 %v3279, %v3279
      %v3378 = vpack.c.b16 %v3280, %v3280
      %v3379 = vpack.c.b16 %v3281, %v3281
      %v3380 = vpack.c.b16 %v3282, %v3282
      %v3381 = vpack.c.b16 %v3283, %v3283
      %v3382 = vpack.c.b16 %v3284, %v3284
      %v3383 = vpack.c.b16 %v3285, %v3285
      %v3384 = vpack.c.b16 %v3286, %v3286
      %v3385 = vpack.c.b16 %v3287, %v3287
      %3484 = vst [vmem:[%s175] sm:$0xf] %v3288
      %3485 = vst [vmem:[%s175 + $0x4] sm:$0xf] %v3289
      %3486 = vst [vmem:[%s175 + $0x8] sm:$0xf] %v3290
      %3487 = vst [vmem:[%s175 + $0xc] sm:$0xf] %v3291
      %3488 = vst [vmem:[%s175 + $0x10] sm:$0xf] %v3292
      %3489 = vst [vmem:[%s175 + $0x14] sm:$0xf] %v3293
      %3490 = vst [vmem:[%s175 + $0x18] sm:$0xf] %v3294
      %3491 = vst [vmem:[%s175 + $0x1c] sm:$0xf] %v3295
      %3492 = vst [vmem:[%s175 + $0x20] sm:$0xf] %v3296
      %3493 = vst [vmem:[%s175 + $0x24] sm:$0xf] %v3297
      %3494 = vst [vmem:[%s175 + $0x28] sm:$0xf] %v3298
      %3495 = vst [vmem:[%s175 + $0x2c] sm:$0xf] %v3299
      %3496 = vst [vmem:[%s175 + $0x30] sm:$0xf] %v3300
      %3497 = vst [vmem:[%s175 + $0x34] sm:$0xf] %v3301
      %3498 = vst [vmem:[%s175 + $0x38] sm:$0xf] %v3302
      %3499 = vst [vmem:[%s175 + $0x3c] sm:$0xf] %v3303
      %3500 = vst [vmem:[%s175 + $0x40] sm:$0xf] %v3304
      %3501 = vst [vmem:[%s175 + $0x44] sm:$0xf] %v3305
      %3502 = vst [vmem:[%s175 + $0x48] sm:$0xf] %v3306
      %3503 = vst [vmem:[%s175 + $0x4c] sm:$0xf] %v3307
      %3504 = vst [vmem:[%s175 + $0x50] sm:$0xf] %v3308
      %3505 = vst [vmem:[%s175 + $0x54] sm:$0xf] %v3309
      %3506 = vst [vmem:[%s175 + $0x58] sm:$0xf] %v3310
      %3507 = vst [vmem:[%s175 + $0x5c] sm:$0xf] %v3311
      %3508 = vst [vmem:[%s175 + $0x60] sm:$0xf] %v3312
      %3509 = vst [vmem:[%s175 + $0x64] sm:$0xf] %v3313
      %3510 = vst [vmem:[%s175 + $0x68] sm:$0xf] %v3314
      %3511 = vst [vmem:[%s175 + $0x6c] sm:$0xf] %v3315
      %3512 = vst [vmem:[%s175 + $0x70] sm:$0xf] %v3316
      %3513 = vst [vmem:[%s175 + $0x74] sm:$0xf] %v3317
      %3514 = vst [vmem:[%s175 + $0x78] sm:$0xf] %v3318
      %3515 = vst [vmem:[%s175 + $0x7c] sm:$0xf] %v3319
      %3516 = vst [vmem:[%s175 + $0x80] sm:$0xf] %v3320
      %3517 = vst [vmem:[%s175 + $0x84] sm:$0xf] %v3321
      %3518 = vst [vmem:[%s175 + $0x88] sm:$0xf] %v3322
      %3519 = vst [vmem:[%s175 + $0x8c] sm:$0xf] %v3323
      %3520 = vst [vmem:[%s175 + $0x90] sm:$0xf] %v3324
      %3521 = vst [vmem:[%s175 + $0x94] sm:$0xf] %v3325
      %3522 = vst [vmem:[%s175 + $0x98] sm:$0xf] %v3326
      %3523 = vst [vmem:[%s175 + $0x9c] sm:$0xf] %v3327
      %3524 = vst [vmem:[%s175 + $0xa0] sm:$0xf] %v3328
      %3525 = vst [vmem:[%s175 + $0xa4] sm:$0xf] %v3329
      %3526 = vst [vmem:[%s175 + $0xa8] sm:$0xf] %v3330
      %3527 = vst [vmem:[%s175 + $0xac] sm:$0xf] %v3331
      %3528 = vst [vmem:[%s175 + $0xb0] sm:$0xf] %v3332
      %3529 = vst [vmem:[%s175 + $0xb4] sm:$0xf] %v3333
      %3530 = vst [vmem:[%s175 + $0xb8] sm:$0xf] %v3334
      %3531 = vst [vmem:[%s175 + $0xbc] sm:$0xf] %v3335
      %3532 = vst [vmem:[%s175 + $0xc0] sm:$0xf] %v3336
      %3533 = vst [vmem:[%s175 + $0xc4] sm:$0xf] %v3337
      %3534 = vst [vmem:[%s175 + $0xc8] sm:$0xf] %v3338
      %3535 = vst [vmem:[%s175 + $0xcc] sm:$0xf] %v3339
      %3536 = vst [vmem:[%s175 + $0xd0] sm:$0xf] %v3340
      %3537 = vst [vmem:[%s175 + $0xd4] sm:$0xf] %v3341
      %3538 = vst [vmem:[%s175 + $0xd8] sm:$0xf] %v3342
      %3539 = vst [vmem:[%s175 + $0xdc] sm:$0xf] %v3343
      %3540 = vst [vmem:[%s175 + $0xe0] sm:$0xf] %v3344
      %3541 = vst [vmem:[%s175 + $0xe4] sm:$0xf] %v3345
      %3542 = vst [vmem:[%s175 + $0xe8] sm:$0xf] %v3346
      %3543 = vst [vmem:[%s175 + $0xec] sm:$0xf] %v3347
      %3544 = vst [vmem:[%s175 + $0xf0] sm:$0xf] %v3348
      %3545 = vst [vmem:[%s175 + $0xf4] sm:$0xf] %v3349
      %3546 = vst [vmem:[%s175 + $0xf8] sm:$0xf] %v3350
      %3547 = vst [vmem:[%s175 + $0xfc] sm:$0xf] %v3351
      %3548 = vst [vmem:[%s175 + $0x100] sm:$0xf] %v3352
      %3549 = vst [vmem:[%s175 + $0x104] sm:$0xf] %v3353
      %3550 = vst [vmem:[%s175 + $0x108] sm:$0xf] %v3354
      %3551 = vst [vmem:[%s175 + $0x10c] sm:$0xf] %v3355
      %3552 = vst [vmem:[%s175 + $0x110] sm:$0xf] %v3356
      %3553 = vst [vmem:[%s175 + $0x114] sm:$0xf] %v3357
      %3554 = vst [vmem:[%s175 + $0x118] sm:$0xf] %v3358
      %3555 = vst [vmem:[%s175 + $0x11c] sm:$0xf] %v3359
      %3556 = vst [vmem:[%s175 + $0x120] sm:$0xf] %v3360
      %3557 = vst [vmem:[%s175 + $0x124] sm:$0xf] %v3361
      %3558 = vst [vmem:[%s175 + $0x128] sm:$0xf] %v3362
      %3559 = vst [vmem:[%s175 + $0x12c] sm:$0xf] %v3363
      %3560 = vst [vmem:[%s175 + $0x130] sm:$0xf] %v3364
      %3561 = vst [vmem:[%s175 + $0x134] sm:$0xf] %v3365
      %3562 = vst [vmem:[%s175 + $0x138] sm:$0xf] %v3366
      %3563 = vst [vmem:[%s175 + $0x13c] sm:$0xf] %v3367
      %3564 = vst [vmem:[%s175 + $0x140] sm:$0xf] %v3368
      %3565 = vst [vmem:[%s175 + $0x144] sm:$0xf] %v3369
      %3566 = vst [vmem:[%s175 + $0x148] sm:$0xf] %v3370
      %3567 = vst [vmem:[%s175 + $0x14c] sm:$0xf] %v3371
      %3568 = vst [vmem:[%s175 + $0x150] sm:$0xf] %v3372
      %3569 = vst [vmem:[%s175 + $0x154] sm:$0xf] %v3373
      %3570 = vst [vmem:[%s175 + $0x158] sm:$0xf] %v3374
      %3571 = vst [vmem:[%s175 + $0x15c] sm:$0xf] %v3375
      %3572 = vst [vmem:[%s175 + $0x160] sm:$0xf] %v3376
      %3573 = vst [vmem:[%s175 + $0x164] sm:$0xf] %v3377
      %3574 = vst [vmem:[%s175 + $0x168] sm:$0xf] %v3378
      %3575 = vst [vmem:[%s175 + $0x16c] sm:$0xf] %v3379
      %3576 = vst [vmem:[%s175 + $0x170] sm:$0xf] %v3380
      %3577 = vst [vmem:[%s175 + $0x174] sm:$0xf] %v3381
      %3578 = vst [vmem:[%s175 + $0x178] sm:$0xf] %v3382
      %3579 = vst [vmem:[%s175 + $0x17c] sm:$0xf] %v3383
      %3580 = vst [vmem:[%s175 + $0x180] sm:$0xf] %v3384
      %3581 = vst [vmem:[%s175 + $0x184] sm:$0xf] %v3385
      %s3582 = smul.u32 98, %s14
      %p3583 = scmp.lt.s32.totalorder %s3582, 195
      %s3584 = scalar_select %p3583, %s3582, 195
      %s3585 = smul.addr %s3584, 4
      %s3586 = scalar_lea.vmem %s3, %s3585
      // Predicated region
      $region33: #{net_forward.3} parent=31 // pred_check
        %p3587 = pneg %p100
      $region34: #{net_forward.3} parent=31 // pred_check_branch
        %3589 = sbr.rel (%p3587) target = $region36
      $region35: #{net_forward.3} parent=31 // pred_region
        %s3590 = smul.u32 98, %s14
      $region36: #{net_forward.3} parent=31 // pred_fallthru
        _
    $region32: #{net_forward.3} parent=5 // pred_fallthru
      _
    %p3591 = scmp.le.s32.totalorder 2, %s9
    // Predicated region
    $region37: #{net_forward.3} parent=5 // pred_check
      %p3592 = pneg %p3591
    $region38: #{net_forward.3} parent=5 // pred_check_branch
      %3594 = sbr.rel (%p3592) target = $region40
    $region39: #{net_forward.3} parent=5 // pred_region
      %s3595 = ssub.s32 %s9, 2
      // Predicated region
      $region41: #{net_forward.3} parent=39 // pred_check
        %p3596 = pneg %p106
      $region42: #{net_forward.3} parent=39 // pred_check_branch
        %3598 = sbr.rel (%p3596) target = $region44
      $region43: #{net_forward.3} parent=39 // pred_region
        %s3599 = smul.u32 98, %s15
        %p3600 = scmp.lt.s32.totalorder %s3599, 195
        %s3601 = scalar_select %p3600, %s3599, 195
        %s3602 = smul.addr %s3601, 4
        %s3603 = scalar_lea.vmem %s3, %s3602
      $region44: #{net_forward.3} parent=39 // pred_fallthru
        _
    $region40: #{net_forward.3} parent=5 // pred_fallthru
      _
  $region6: #{net_forward.3} parent=0 // loop_footer
    %s13 = sadd.s32 1, %s9
  $region7: #{net_forward.3} parent=0 // loop_footer_branch
    %8 = sbr.rel target = $region3
  $region8: #{net_forward.3} parent=0 // loop_exit
    _

// kernel: net_forward.4
$region0: #{net_forward.4}
  #allocation0 [shape = 'u32[]', space=smem, size = 0x4, offset = 0x4, fixed_abs, tag = 'smem constant byte address 0x4 - core index']
  #allocation1 [shape = 'u32[144,128]{1,0:T(1,128)}', space=vmem, size = 0x12000, scoped, tag = 'internal scratch']
  %s0 = inlined_call_operand.vmem [shape: bf16[200,640], index: 0, kind: input, shape index: {}]
  %s1 = inlined_call_operand.vmem [shape: bf16[640,128], index: 1, kind: input, shape index: {}]
  %s2 = inlined_call_operand.vmem [shape: f32[1,128], index: 2, kind: input, shape index: {}]
  %s3 = inlined_call_operand.vmem [shape: bf16[200,128], index: 3, kind: output, shape index: {}]
  %s4 = sld [smem:[#allocation0]]
  $region22: #{net_forward.4} parent=0
    _
  %s6 = ssub.s32 1, %s4
  %s7 = scalar_select 0, %s6, %s4
  // Predicated region
  $region2: #{net_forward.4} parent=0 // pred_check
    _
  $region3: #{net_forward.4} parent=0 // pred_check_branch
    %9 = sbr.rel (0) target = $region5
  $region4: #{net_forward.4} parent=0 // pred_region
    _
  $region5: #{net_forward.4} parent=0 // pred_fallthru
    _
  // Predicated region
  $region6: #{net_forward.4} parent=0 // pred_check
    _
  $region7: #{net_forward.4} parent=0 // pred_check_branch
    %11 = sbr.rel (0) target = $region9
  $region8: #{net_forward.4} parent=0 // pred_region
    _
  $region9: #{net_forward.4} parent=0 // pred_fallthru
    _
  // Predicated region
  $region10: #{net_forward.4} parent=0 // pred_check
    _
  $region11: #{net_forward.4} parent=0 // pred_check_branch
    %13 = sbr.rel (0) target = $region13
  $region12: #{net_forward.4} parent=0 // pred_region
    _
  $region13: #{net_forward.4} parent=0 // pred_fallthru
    _
  %v15 = vld [vmem:[%s0] sm:$0xff]
  %v16 = vld [vmem:[%s0 + $0x8] sm:$0xff]
  %v17 = vld [vmem:[%s0 + $0x10] sm:$0xf]
  %v18 = vld [vmem:[%s0 + $0x14] sm:$0xff]
  %v19 = vld [vmem:[%s0 + $0x1c] sm:$0xff]
  %v20 = vld [vmem:[%s0 + $0x24] sm:$0xf]
  %v21 = vld [vmem:[%s0 + $0x28] sm:$0xff]
  %v22 = vld [vmem:[%s0 + $0x30] sm:$0xff]
  %v23 = vld [vmem:[%s0 + $0x38] sm:$0xf]
  %v24 = vld [vmem:[%s0 + $0x3c] sm:$0xff]
  %v25 = vld [vmem:[%s0 + $0x44] sm:$0xff]
  %v26 = vld [vmem:[%s0 + $0x4c] sm:$0xf]
  %v27 = vld [vmem:[%s0 + $0x50] sm:$0xff]
  %v28 = vld [vmem:[%s0 + $0x58] sm:$0xff]
  %v29 = vld [vmem:[%s0 + $0x60] sm:$0xf]
  %v30 = vld [vmem:[%s0 + $0x64] sm:$0xff]
  %v31 = vld [vmem:[%s0 + $0x6c] sm:$0xff]
  %v32 = vld [vmem:[%s0 + $0x74] sm:$0xf]
  %v33 = vld [vmem:[%s0 + $0x78] sm:$0xff]
  %v34 = vld [vmem:[%s0 + $0x80] sm:$0xff]
  %v35 = vld [vmem:[%s0 + $0x88] sm:$0xf]
  %v36 = vld [vmem:[%s0 + $0x8c] sm:$0xff]
  %v37 = vld [vmem:[%s0 + $0x94] sm:$0xff]
  %v38 = vld [vmem:[%s0 + $0x9c] sm:$0xf]
  %v39 = vld [vmem:[%s0 + $0xa0] sm:$0xff]
  %v40 = vld [vmem:[%s0 + $0xa8] sm:$0xff]
  %v41 = vld [vmem:[%s0 + $0xb0] sm:$0xf]
  %v42 = vld [vmem:[%s0 + $0xb4] sm:$0xff]
  %v43 = vld [vmem:[%s0 + $0xbc] sm:$0xff]
  %v44 = vld [vmem:[%s0 + $0xc4] sm:$0xf]
  %v45 = vld [vmem:[%s0 + $0xc8] sm:$0xff]
  %v46 = vld [vmem:[%s0 + $0xd0] sm:$0xff]
  %v47 = vld [vmem:[%s0 + $0xd8] sm:$0xf]
  %v48 = vld [vmem:[%s0 + $0xdc] sm:$0xff]
  %v49 = vld [vmem:[%s0 + $0xe4] sm:$0xff]
  %v50 = vld [vmem:[%s0 + $0xec] sm:$0xf]
  %v51 = vld [vmem:[%s0 + $0xf0] sm:$0xff]
  %v52 = vld [vmem:[%s0 + $0xf8] sm:$0xff]
  %v53 = vld [vmem:[%s0 + $0x100] sm:$0xf]
  %v54 = vld [vmem:[%s0 + $0x104] sm:$0xff]
  %v55 = vld [vmem:[%s0 + $0x10c] sm:$0xff]
  %v56 = vld [vmem:[%s0 + $0x114] sm:$0xf]
  %v57 = vld [vmem:[%s0 + $0x118] sm:$0xff]
  %v58 = vld [vmem:[%s0 + $0x120] sm:$0xff]
  %v59 = vld [vmem:[%s0 + $0x128] sm:$0xf]
  %v60 = vld [vmem:[%s0 + $0x12c] sm:$0xff]
  %v61 = vld [vmem:[%s0 + $0x134] sm:$0xff]
  %v62 = vld [vmem:[%s0 + $0x13c] sm:$0xf]
  %v63 = vld [vmem:[%s0 + $0x140] sm:$0xff]
  %v64 = vld [vmem:[%s0 + $0x148] sm:$0xff]
  %v65 = vld [vmem:[%s0 + $0x150] sm:$0xf]
  %v66 = vld [vmem:[%s0 + $0x154] sm:$0xff]
  %v67 = vld [vmem:[%s0 + $0x15c] sm:$0xff]
  %v68 = vld [vmem:[%s0 + $0x164] sm:$0xf]
  %v69 = vld [vmem:[%s0 + $0x168] sm:$0xff]
  %v70 = vld [vmem:[%s0 + $0x170] sm:$0xff]
  %v71 = vld [vmem:[%s0 + $0x178] sm:$0xf]
  %v72 = vld [vmem:[%s0 + $0x17c] sm:$0xff]
  %v73 = vld [vmem:[%s0 + $0x184] sm:$0xff]
  %v74 = vld [vmem:[%s0 + $0x18c] sm:$0xf]
  %v75 = vld [vmem:[%s0 + $0x190] sm:$0xff]
  %v76 = vld [vmem:[%s0 + $0x198] sm:$0xff]
  %v77 = vld [vmem:[%s0 + $0x1a0] sm:$0xf]
  %v78 = vld [vmem:[%s0 + $0x1a4] sm:$0xff]
  %v79 = vld [vmem:[%s0 + $0x1ac] sm:$0xff]
  %v80 = vld [vmem:[%s0 + $0x1b4] sm:$0xf]
  %v81 = vld [vmem:[%s0 + $0x1b8] sm:$0xff]
  %v82 = vld [vmem:[%s0 + $0x1c0] sm:$0xff]
  %v83 = vld [vmem:[%s0 + $0x1c8] sm:$0xf]
  %v84 = vld [vmem:[%s0 + $0x1cc] sm:$0xff]
  %v85 = vld [vmem:[%s0 + $0x1d4] sm:$0xff]
  %v86 = vld [vmem:[%s0 + $0x1dc] sm:$0xf]
  %v87 = vld [vmem:[%s0 + $0x1e0] sm:$0xff]
  %v88 = vld [vmem:[%s0 + $0x1e8] sm:$0xff]
  %v89 = vld [vmem:[%s0 + $0x1f0] sm:$0xf]
  %v90 = vld [vmem:[%s1] sm:$0xf]
  %v91 = vld [vmem:[%s1 + $0x4] sm:$0xf]
  %v92 = vld [vmem:[%s1 + $0x8] sm:$0xf]
  %v93 = vld [vmem:[%s1 + $0xc] sm:$0xf]
  %v94 = vld [vmem:[%s1 + $0x10] sm:$0xf]
  %v95 = vld [vmem:[%s1 + $0x14] sm:$0xf]
  %v96 = vld [vmem:[%s1 + $0x18] sm:$0xf]
  %v97 = vld [vmem:[%s1 + $0x1c] sm:$0xf]
  %v98 = vld [vmem:[%s1 + $0x20] sm:$0xf]
  %v99 = vld [vmem:[%s1 + $0x24] sm:$0xf]
  %v100 = vld [vmem:[%s1 + $0x28] sm:$0xf]
  %v101 = vld [vmem:[%s1 + $0x2c] sm:$0xf]
  %v102 = vld [vmem:[%s1 + $0x30] sm:$0xf]
  %v103 = vld [vmem:[%s1 + $0x34] sm:$0xf]
  %v104 = vld [vmem:[%s1 + $0x38] sm:$0xf]
  %v105 = vld [vmem:[%s1 + $0x3c] sm:$0xf]
  %v106 = vld [vmem:[%s1 + $0x40] sm:$0xf]
  %v107 = vld [vmem:[%s1 + $0x44] sm:$0xf]
  %v108 = vld [vmem:[%s1 + $0x48] sm:$0xf]
  %v109 = vld [vmem:[%s1 + $0x4c] sm:$0xf]
  %v110 = vld [vmem:[%s1 + $0x50] sm:$0xf]
  %v111 = vld [vmem:[%s1 + $0x54] sm:$0xf]
  %v112 = vld [vmem:[%s1 + $0x58] sm:$0xf]
  %v113 = vld [vmem:[%s1 + $0x5c] sm:$0xf]
  %v114 = vld [vmem:[%s1 + $0x60] sm:$0xf]
  %v115 = vld [vmem:[%s1 + $0x64] sm:$0xf]
  %v116 = vld [vmem:[%s1 + $0x68] sm:$0xf]
  %v117 = vld [vmem:[%s1 + $0x6c] sm:$0xf]
  %v118 = vld [vmem:[%s1 + $0x70] sm:$0xf]
  %v119 = vld [vmem:[%s1 + $0x74] sm:$0xf]
  %v120 = vld [vmem:[%s1 + $0x78] sm:$0xf]
  %v121 = vld [vmem:[%s1 + $0x7c] sm:$0xf]
  %v122 = vld [vmem:[%s1 + $0x80] sm:$0xf]
  %v123 = vld [vmem:[%s1 + $0x84] sm:$0xf]
  %v124 = vld [vmem:[%s1 + $0x88] sm:$0xf]
  %v125 = vld [vmem:[%s1 + $0x8c] sm:$0xf]
  %v126 = vld [vmem:[%s1 + $0x90] sm:$0xf]
  %v127 = vld [vmem:[%s1 + $0x94] sm:$0xf]
  %v128 = vld [vmem:[%s1 + $0x98] sm:$0xf]
  %v129 = vld [vmem:[%s1 + $0x9c] sm:$0xf]
  %v130 = vld [vmem:[%s1 + $0xa0] sm:$0xf]
  %v131 = vld [vmem:[%s1 + $0xa4] sm:$0xf]
  %v132 = vld [vmem:[%s1 + $0xa8] sm:$0xf]
  %v133 = vld [vmem:[%s1 + $0xac] sm:$0xf]
  %v134 = vld [vmem:[%s1 + $0xb0] sm:$0xf]
  %v135 = vld [vmem:[%s1 + $0xb4] sm:$0xf]
  %v136 = vld [vmem:[%s1 + $0xb8] sm:$0xf]
  %v137 = vld [vmem:[%s1 + $0xbc] sm:$0xf]
  %v138 = vld [vmem:[%s1 + $0xc0] sm:$0xf]
  %v139 = vld [vmem:[%s1 + $0xc4] sm:$0xf]
  %v140 = vld [vmem:[%s1 + $0xc8] sm:$0xf]
  %v141 = vld [vmem:[%s1 + $0xcc] sm:$0xf]
  %v142 = vld [vmem:[%s1 + $0xd0] sm:$0xf]
  %v143 = vld [vmem:[%s1 + $0xd4] sm:$0xf]
  %v144 = vld [vmem:[%s1 + $0xd8] sm:$0xf]
  %v145 = vld [vmem:[%s1 + $0xdc] sm:$0xf]
  %v146 = vld [vmem:[%s1 + $0xe0] sm:$0xf]
  %v147 = vld [vmem:[%s1 + $0xe4] sm:$0xf]
  %v148 = vld [vmem:[%s1 + $0xe8] sm:$0xf]
  %v149 = vld [vmem:[%s1 + $0xec] sm:$0xf]
  %v150 = vld [vmem:[%s1 + $0xf0] sm:$0xf]
  %v151 = vld [vmem:[%s1 + $0xf4] sm:$0xf]
  %v152 = vld [vmem:[%s1 + $0xf8] sm:$0xf]
  %v153 = vld [vmem:[%s1 + $0xfc] sm:$0xf]
  %v154 = vld [vmem:[%s1 + $0x100] sm:$0xf]
  %v155 = vld [vmem:[%s1 + $0x104] sm:$0xf]
  %v156 = vld [vmem:[%s1 + $0x108] sm:$0xf]
  %v157 = vld [vmem:[%s1 + $0x10c] sm:$0xf]
  %v158 = vld [vmem:[%s1 + $0x110] sm:$0xf]
  %v159 = vld [vmem:[%s1 + $0x114] sm:$0xf]
  %v160 = vld [vmem:[%s1 + $0x118] sm:$0xf]
  %v161 = vld [vmem:[%s1 + $0x11c] sm:$0xf]
  %v162 = vld [vmem:[%s1 + $0x120] sm:$0xf]
  %v163 = vld [vmem:[%s1 + $0x124] sm:$0xf]
  %v164 = vld [vmem:[%s1 + $0x128] sm:$0xf]
  %v165 = vld [vmem:[%s1 + $0x12c] sm:$0xf]
  %v166 = vld [vmem:[%s1 + $0x130] sm:$0xf]
  %v167 = vld [vmem:[%s1 + $0x134] sm:$0xf]
  %v168 = vld [vmem:[%s1 + $0x138] sm:$0xf]
  %v169 = vld [vmem:[%s1 + $0x13c] sm:$0xf]
  %v245 = vunpack.c.l.b16 %v15
  %v246 = vunpack.c.h.b16 %v15
  %v247 = vunpack.c.l.b16 %v16
  %v248 = vunpack.c.h.b16 %v16
  %v249 = vunpack.c.l.b16 %v17
  %v250 = vunpack.c.l.b16 %v18
  %v251 = vunpack.c.h.b16 %v18
  %v252 = vunpack.c.l.b16 %v19
  %v253 = vunpack.c.h.b16 %v19
  %v254 = vunpack.c.l.b16 %v20
  %v255 = vunpack.c.l.b16 %v21
  %v256 = vunpack.c.h.b16 %v21
  %v257 = vunpack.c.l.b16 %v22
  %v258 = vunpack.c.h.b16 %v22
  %v259 = vunpack.c.l.b16 %v23
  %v260 = vunpack.c.l.b16 %v24
  %v261 = vunpack.c.h.b16 %v24
  %v262 = vunpack.c.l.b16 %v25
  %v263 = vunpack.c.h.b16 %v25
  %v264 = vunpack.c.l.b16 %v26
  %v265 = vunpack.c.l.b16 %v27
  %v266 = vunpack.c.h.b16 %v27
  %v267 = vunpack.c.l.b16 %v28
  %v268 = vunpack.c.h.b16 %v28
  %v269 = vunpack.c.l.b16 %v29
  %v270 = vunpack.c.l.b16 %v30
  %v271 = vunpack.c.h.b16 %v30
  %v272 = vunpack.c.l.b16 %v31
  %v273 = vunpack.c.h.b16 %v31
  %v274 = vunpack.c.l.b16 %v32
  %v275 = vunpack.c.l.b16 %v33
  %v276 = vunpack.c.h.b16 %v33
  %v277 = vunpack.c.l.b16 %v34
  %v278 = vunpack.c.h.b16 %v34
  %v279 = vunpack.c.l.b16 %v35
  %v280 = vunpack.c.l.b16 %v36
  %v281 = vunpack.c.h.b16 %v36
  %v282 = vunpack.c.l.b16 %v37
  %v283 = vunpack.c.h.b16 %v37
  %v284 = vunpack.c.l.b16 %v38
  %v285 = vunpack.c.l.b16 %v39
  %v286 = vunpack.c.h.b16 %v39
  %v287 = vunpack.c.l.b16 %v40
  %v288 = vunpack.c.h.b16 %v40
  %v289 = vunpack.c.l.b16 %v41
  %v290 = vunpack.c.l.b16 %v42
  %v291 = vunpack.c.h.b16 %v42
  %v292 = vunpack.c.l.b16 %v43
  %v293 = vunpack.c.h.b16 %v43
  %v294 = vunpack.c.l.b16 %v44
  %v295 = vunpack.c.l.b16 %v45
  %v296 = vunpack.c.h.b16 %v45
  %v297 = vunpack.c.l.b16 %v46
  %v298 = vunpack.c.h.b16 %v46
  %v299 = vunpack.c.l.b16 %v47
  %v300 = vunpack.c.l.b16 %v48
  %v301 = vunpack.c.h.b16 %v48
  %v302 = vunpack.c.l.b16 %v49
  %v303 = vunpack.c.h.b16 %v49
  %v304 = vunpack.c.l.b16 %v50
  %v305 = vunpack.c.l.b16 %v51
  %v306 = vunpack.c.h.b16 %v51
  %v307 = vunpack.c.l.b16 %v52
  %v308 = vunpack.c.h.b16 %v52
  %v309 = vunpack.c.l.b16 %v53
  %v310 = vunpack.c.l.b16 %v54
  %v311 = vunpack.c.h.b16 %v54
  %v312 = vunpack.c.l.b16 %v55
  %v313 = vunpack.c.h.b16 %v55
  %v314 = vunpack.c.l.b16 %v56
  %v315 = vunpack.c.l.b16 %v57
  %v316 = vunpack.c.h.b16 %v57
  %v317 = vunpack.c.l.b16 %v58
  %v318 = vunpack.c.h.b16 %v58
  %v319 = vunpack.c.l.b16 %v59
  %v320 = vunpack.c.l.b16 %v60
  %v321 = vunpack.c.h.b16 %v60
  %v322 = vunpack.c.l.b16 %v61
  %v323 = vunpack.c.h.b16 %v61
  %v324 = vunpack.c.l.b16 %v62
  %v325 = vunpack.c.l.b16 %v63
  %v326 = vunpack.c.h.b16 %v63
  %v327 = vunpack.c.l.b16 %v64
  %v328 = vunpack.c.h.b16 %v64
  %v329 = vunpack.c.l.b16 %v65
  %v330 = vunpack.c.l.b16 %v66
  %v331 = vunpack.c.h.b16 %v66
  %v332 = vunpack.c.l.b16 %v67
  %v333 = vunpack.c.h.b16 %v67
  %v334 = vunpack.c.l.b16 %v68
  %v335 = vunpack.c.l.b16 %v69
  %v336 = vunpack.c.h.b16 %v69
  %v337 = vunpack.c.l.b16 %v70
  %v338 = vunpack.c.h.b16 %v70
  %v339 = vunpack.c.l.b16 %v71
  %v340 = vunpack.c.l.b16 %v72
  %v341 = vunpack.c.h.b16 %v72
  %v342 = vunpack.c.l.b16 %v73
  %v343 = vunpack.c.h.b16 %v73
  %v344 = vunpack.c.l.b16 %v74
  %v345 = vunpack.c.l.b16 %v75
  %v346 = vunpack.c.h.b16 %v75
  %v347 = vunpack.c.l.b16 %v76
  %v348 = vunpack.c.h.b16 %v76
  %v349 = vunpack.c.l.b16 %v77
  %v350 = vunpack.c.l.b16 %v78
  %v351 = vunpack.c.h.b16 %v78
  %v352 = vunpack.c.l.b16 %v79
  %v353 = vunpack.c.h.b16 %v79
  %v354 = vunpack.c.l.b16 %v80
  %v355 = vunpack.c.l.b16 %v81
  %v356 = vunpack.c.h.b16 %v81
  %v357 = vunpack.c.l.b16 %v82
  %v358 = vunpack.c.h.b16 %v82
  %v359 = vunpack.c.l.b16 %v83
  %v360 = vunpack.c.l.b16 %v84
  %v361 = vunpack.c.h.b16 %v84
  %v362 = vunpack.c.l.b16 %v85
  %v363 = vunpack.c.h.b16 %v85
  %v364 = vunpack.c.l.b16 %v86
  %v365 = vunpack.c.l.b16 %v87
  %v366 = vunpack.c.h.b16 %v87
  %v367 = vunpack.c.l.b16 %v88
  %v368 = vunpack.c.h.b16 %v88
  %v369 = vunpack.c.l.b16 %v89
  %v370 = vpack.c.b16 %v250, %v245
  %v371 = vpack.c.b16 %v251, %v246
  %v372 = vpack.c.b16 %v252, %v247
  %v373 = vpack.c.b16 %v253, %v248
  %v374 = vpack.c.b16 %v254, %v249
  %v375 = vpack.c.b16 %v260, %v255
  %v376 = vpack.c.b16 %v261, %v256
  %v377 = vpack.c.b16 %v262, %v257
  %v378 = vpack.c.b16 %v263, %v258
  %v379 = vpack.c.b16 %v264, %v259
  %v380 = vpack.c.b16 %v270, %v265
  %v381 = vpack.c.b16 %v271, %v266
  %v382 = vpack.c.b16 %v272, %v267
  %v383 = vpack.c.b16 %v273, %v268
  %v384 = vpack.c.b16 %v274, %v269
  %v385 = vpack.c.b16 %v280, %v275
  %v386 = vpack.c.b16 %v281, %v276
  %v387 = vpack.c.b16 %v282, %v277
  %v388 = vpack.c.b16 %v283, %v278
  %v389 = vpack.c.b16 %v284, %v279
  %v390 = vpack.c.b16 %v290, %v285
  %v391 = vpack.c.b16 %v291, %v286
  %v392 = vpack.c.b16 %v292, %v287
  %v393 = vpack.c.b16 %v293, %v288
  %v394 = vpack.c.b16 %v294, %v289
  %v395 = vpack.c.b16 %v300, %v295
  %v396 = vpack.c.b16 %v301, %v296
  %v397 = vpack.c.b16 %v302, %v297
  %v398 = vpack.c.b16 %v303, %v298
  %v399 = vpack.c.b16 %v304, %v299
  %v400 = vpack.c.b16 %v310, %v305
  %v401 = vpack.c.b16 %v311, %v306
  %v402 = vpack.c.b16 %v312, %v307
  %v403 = vpack.c.b16 %v313, %v308
  %v404 = vpack.c.b16 %v314, %v309
  %v405 = vpack.c.b16 %v320, %v315
  %v406 = vpack.c.b16 %v321, %v316
  %v407 = vpack.c.b16 %v322, %v317
  %v408 = vpack.c.b16 %v323, %v318
  %v409 = vpack.c.b16 %v324, %v319
  %v410 = vpack.c.b16 %v330, %v325
  %v411 = vpack.c.b16 %v331, %v326
  %v412 = vpack.c.b16 %v332, %v327
  %v413 = vpack.c.b16 %v333, %v328
  %v414 = vpack.c.b16 %v334, %v329
  %v415 = vpack.c.b16 %v340, %v335
  %v416 = vpack.c.b16 %v341, %v336
  %v417 = vpack.c.b16 %v342, %v337
  %v418 = vpack.c.b16 %v343, %v338
  %v419 = vpack.c.b16 %v344, %v339
  %v420 = vpack.c.b16 %v350, %v345
  %v421 = vpack.c.b16 %v351, %v346
  %v422 = vpack.c.b16 %v352, %v347
  %v423 = vpack.c.b16 %v353, %v348
  %v424 = vpack.c.b16 %v354, %v349
  %v425 = vpack.c.b16 %v360, %v355
  %v426 = vpack.c.b16 %v361, %v356
  %v427 = vpack.c.b16 %v362, %v357
  %v428 = vpack.c.b16 %v363, %v358
  %v429 = vpack.c.b16 %v364, %v359
  %v430 = vpack.c.b16 %v365, %v365
  %v431 = vpack.c.b16 %v366, %v366
  %v432 = vpack.c.b16 %v367, %v367
  %v433 = vpack.c.b16 %v368, %v368
  %v434 = vpack.c.b16 %v369, %v369
  %v580 = vunpack.c.l.b16 %v90
  %v581 = vunpack.c.l.b16 %v91
  %v582 = vunpack.c.l.b16 %v92
  %v583 = vunpack.c.l.b16 %v93
  %v584 = vunpack.c.l.b16 %v94
  %v585 = vunpack.c.l.b16 %v95
  %v586 = vunpack.c.l.b16 %v96
  %v587 = vunpack.c.l.b16 %v97
  %v588 = vunpack.c.l.b16 %v98
  %v589 = vunpack.c.l.b16 %v99
  %v590 = vunpack.c.l.b16 %v100
  %v591 = vunpack.c.l.b16 %v101
  %v592 = vunpack.c.l.b16 %v102
  %v593 = vunpack.c.l.b16 %v103
  %v594 = vunpack.c.l.b16 %v104
  %v595 = vunpack.c.l.b16 %v105
  %v596 = vunpack.c.l.b16 %v106
  %v597 = vunpack.c.l.b16 %v107
  %v598 = vunpack.c.l.b16 %v108
  %v599 = vunpack.c.l.b16 %v109
  %v600 = vunpack.c.l.b16 %v110
  %v601 = vunpack.c.l.b16 %v111
  %v602 = vunpack.c.l.b16 %v112
  %v603 = vunpack.c.l.b16 %v113
  %v604 = vunpack.c.l.b16 %v114
  %v605 = vunpack.c.l.b16 %v115
  %v606 = vunpack.c.l.b16 %v116
  %v607 = vunpack.c.l.b16 %v117
  %v608 = vunpack.c.l.b16 %v118
  %v609 = vunpack.c.l.b16 %v119
  %v610 = vunpack.c.l.b16 %v120
  %v611 = vunpack.c.l.b16 %v121
  %v612 = vunpack.c.l.b16 %v122
  %v613 = vunpack.c.l.b16 %v123
  %v614 = vunpack.c.l.b16 %v124
  %v615 = vunpack.c.l.b16 %v125
  %v616 = vunpack.c.l.b16 %v126
  %v617 = vunpack.c.l.b16 %v127
  %v618 = vunpack.c.l.b16 %v128
  %v619 = vunpack.c.l.b16 %v129
  %v620 = vunpack.c.l.b16 %v130
  %v621 = vunpack.c.l.b16 %v131
  %v622 = vunpack.c.l.b16 %v132
  %v623 = vunpack.c.l.b16 %v133
  %v624 = vunpack.c.l.b16 %v134
  %v625 = vunpack.c.l.b16 %v135
  %v626 = vunpack.c.l.b16 %v136
  %v627 = vunpack.c.l.b16 %v137
  %v628 = vunpack.c.l.b16 %v138
  %v629 = vunpack.c.l.b16 %v139
  %v630 = vunpack.c.l.b16 %v140
  %v631 = vunpack.c.l.b16 %v141
  %v632 = vunpack.c.l.b16 %v142
  %v633 = vunpack.c.l.b16 %v143
  %v634 = vunpack.c.l.b16 %v144
  %v635 = vunpack.c.l.b16 %v145
  %v636 = vunpack.c.l.b16 %v146
  %v637 = vunpack.c.l.b16 %v147
  %v638 = vunpack.c.l.b16 %v148
  %v639 = vunpack.c.l.b16 %v149
  %v640 = vunpack.c.l.b16 %v150
  %v641 = vunpack.c.l.b16 %v151
  %v642 = vunpack.c.l.b16 %v152
  %v643 = vunpack.c.l.b16 %v153
  %v644 = vunpack.c.l.b16 %v154
  %v645 = vunpack.c.l.b16 %v155
  %v646 = vunpack.c.l.b16 %v156
  %v647 = vunpack.c.l.b16 %v157
  %v648 = vunpack.c.l.b16 %v158
  %v649 = vunpack.c.l.b16 %v159
  %v650 = vunpack.c.l.b16 %v160
  %v651 = vunpack.c.l.b16 %v161
  %v652 = vunpack.c.l.b16 %v162
  %v653 = vunpack.c.l.b16 %v163
  %v654 = vunpack.c.l.b16 %v164
  %v655 = vunpack.c.l.b16 %v165
  %v656 = vunpack.c.l.b16 %v166
  %v657 = vunpack.c.l.b16 %v167
  %v658 = vunpack.c.l.b16 %v168
  %v659 = vunpack.c.l.b16 %v169
  %v660 = vpack.c.b16 %v581, %v580
  %v661 = vpack.c.b16 %v583, %v582
  %v662 = vpack.c.b16 %v585, %v584
  %v663 = vpack.c.b16 %v587, %v586
  %v664 = vpack.c.b16 %v589, %v588
  %v665 = vpack.c.b16 %v591, %v590
  %v666 = vpack.c.b16 %v593, %v592
  %v667 = vpack.c.b16 %v595, %v594
  %v668 = vpack.c.b16 %v597, %v596
  %v669 = vpack.c.b16 %v599, %v598
  %v670 = vpack.c.b16 %v601, %v600
  %v671 = vpack.c.b16 %v603, %v602
  %v672 = vpack.c.b16 %v605, %v604
  %v673 = vpack.c.b16 %v607, %v606
  %v674 = vpack.c.b16 %v609, %v608
  %v675 = vpack.c.b16 %v611, %v610
  %v676 = vpack.c.b16 %v613, %v612
  %v677 = vpack.c.b16 %v615, %v614
  %v678 = vpack.c.b16 %v617, %v616
  %v679 = vpack.c.b16 %v619, %v618
  %v680 = vpack.c.b16 %v621, %v620
  %v681 = vpack.c.b16 %v623, %v622
  %v682 = vpack.c.b16 %v625, %v624
  %v683 = vpack.c.b16 %v627, %v626
  %v684 = vpack.c.b16 %v629, %v628
  %v685 = vpack.c.b16 %v631, %v630
  %v686 = vpack.c.b16 %v633, %v632
  %v687 = vpack.c.b16 %v635, %v634
  %v688 = vpack.c.b16 %v637, %v636
  %v689 = vpack.c.b16 %v639, %v638
  %v690 = vpack.c.b16 %v641, %v640
  %v691 = vpack.c.b16 %v643, %v642
  %v692 = vpack.c.b16 %v645, %v644
  %v693 = vpack.c.b16 %v647, %v646
  %v694 = vpack.c.b16 %v649, %v648
  %v695 = vpack.c.b16 %v651, %v650
  %v696 = vpack.c.b16 %v653, %v652
  %v697 = vpack.c.b16 %v655, %v654
  %v698 = vpack.c.b16 %v657, %v656
  %v699 = vpack.c.b16 %v659, %v658
  %740 = vmatprep.subr.bf16.mxu0 0
  %741 = vmatpush1.bf16.msra.mxu0 %v660
  %742 = vmatprep.subr.bf16.mxu0 0
  %743 = vmatpush1.bf16.msra.mxu0 %v661
  %744 = vmatprep.subr.bf16.mxu0 0
  %745 = vmatpush1.bf16.msra.mxu0 %v662
  %746 = vmatprep.subr.bf16.mxu0 0
  %747 = vmatpush1.bf16.msra.mxu0 %v663
  %748 = vmatprep.subr.bf16.mxu0 0
  %749 = vmatpush1.bf16.msra.mxu0 %v664
  %750 = vmatprep.subr.bf16.mxu0 0
  %751 = vmatpush1.bf16.msra.mxu0 %v665
  %752 = vmatprep.subr.bf16.mxu0 0
  %753 = vmatpush1.bf16.msra.mxu0 %v666
  %754 = vmatprep.subr.bf16.mxu0 0
  %755 = vmatpush1.bf16.msra.mxu0 %v667
  %756 = vmatprep.subr.bf16.mxu0 0
  %757 = vmatpush1.bf16.msra.mxu0 %v668
  %758 = vmatprep.subr.bf16.mxu0 0
  %759 = vmatpush1.bf16.msra.mxu0 %v669
  %760 = vmatprep.subr.bf16.mxu0 0
  %761 = vmatpush1.bf16.msra.mxu0 %v670
  %762 = vmatprep.subr.bf16.mxu0 0
  %763 = vmatpush1.bf16.msra.mxu0 %v671
  %764 = vmatprep.subr.bf16.mxu0 0
  %765 = vmatpush1.bf16.msra.mxu0 %v672
  %766 = vmatprep.subr.bf16.mxu0 0
  %767 = vmatpush1.bf16.msra.mxu0 %v673
  %768 = vmatprep.subr.bf16.mxu0 0
  %769 = vmatpush1.bf16.msra.mxu0 %v674
  %770 = vmatprep.subr.bf16.mxu0 0
  %771 = vmatpush1.bf16.msra.mxu0 %v675
  %772 = vmatprep.mubr.bf16.mxu0 %v371
  %773 = vmatmul.mubr.bf16.gmra.mrb[0].mxu0 %v370
  %v774 = vpop.f32.mrb[0].mxu0
  %v775 = vadd.f32 0.0, %v774
  %v776 = vpop.f32.mrb[0].mxu0
  %v777 = vpop.f32.mrb[0].mxu0
  %v778 = vadd.f32 0.0, %v777
  %v779 = vpop.f32.mrb[0].mxu0
  %780 = vmatprep.mubr.bf16.mxu0 %v376
  %781 = vmatmul.mubr.bf16.gmra.mrb[0].mxu0 %v375
  %v782 = vpop.f32.mrb[0].mxu0
  %v783 = vadd.f32 0.0, %v782
  %v784 = vpop.f32.mrb[0].mxu0
  %v785 = vpop.f32.mrb[0].mxu0
  %v786 = vadd.f32 0.0, %v785
  %v787 = vpop.f32.mrb[0].mxu0
  %788 = vmatprep.mubr.bf16.mxu0 %v381
  %789 = vmatmul.mubr.bf16.gmra.mrb[0].mxu0 %v380
  %v790 = vpop.f32.mrb[0].mxu0
  %v791 = vadd.f32 0.0, %v790
  %v792 = vpop.f32.mrb[0].mxu0
  %v793 = vpop.f32.mrb[0].mxu0
  %v794 = vadd.f32 0.0, %v793
  %v795 = vpop.f32.mrb[0].mxu0
  %796 = vmatprep.mubr.bf16.mxu0 %v386
  %797 = vmatmul.mubr.bf16.gmra.mrb[0].mxu0 %v385
  %v798 = vpop.f32.mrb[0].mxu0
  %v799 = vadd.f32 0.0, %v798
  %v800 = vpop.f32.mrb[0].mxu0
  %v801 = vpop.f32.mrb[0].mxu0
  %v802 = vadd.f32 0.0, %v801
  %v803 = vpop.f32.mrb[0].mxu0
  %804 = vmatprep.mubr.bf16.mxu0 %v391
  %805 = vmatmul.mubr.bf16.gmra.mrb[0].mxu0 %v390
  %v806 = vpop.f32.mrb[0].mxu0
  %v807 = vadd.f32 0.0, %v806
  %v808 = vpop.f32.mrb[0].mxu0
  %v809 = vpop.f32.mrb[0].mxu0
  %v810 = vadd.f32 0.0, %v809
  %v811 = vpop.f32.mrb[0].mxu0
  %812 = vmatprep.mubr.bf16.mxu0 %v396
  %813 = vmatmul.mubr.bf16.gmra.mrb[0].mxu0 %v395
  %v814 = vpop.f32.mrb[0].mxu0
  %v815 = vadd.f32 0.0, %v814
  %v816 = vpop.f32.mrb[0].mxu0
  %v817 = vpop.f32.mrb[0].mxu0
  %v818 = vadd.f32 0.0, %v817
  %v819 = vpop.f32.mrb[0].mxu0
  %820 = vmatprep.mubr.bf16.mxu0 %v401
  %821 = vmatmul.mubr.bf16.gmra.mrb[0].mxu0 %v400
  %v822 = vpop.f32.mrb[0].mxu0
  %v823 = vadd.f32 0.0, %v822
  %v824 = vpop.f32.mrb[0].mxu0
  %v825 = vpop.f32.mrb[0].mxu0
  %v826 = vadd.f32 0.0, %v825
  %v827 = vpop.f32.mrb[0].mxu0
  %828 = vmatprep.mubr.bf16.mxu0 %v406
  %829 = vmatmul.mubr.bf16.gmra.mrb[0].mxu0 %v405
  %v830 = vpop.f32.mrb[0].mxu0
  %v831 = vadd.f32 0.0, %v830
  %v832 = vpop.f32.mrb[0].mxu0
  %v833 = vpop.f32.mrb[0].mxu0
  %v834 = vadd.f32 0.0, %v833
  %v835 = vpop.f32.mrb[0].mxu0
  %836 = vmatprep.mubr.bf16.mxu0 %v411
  %837 = vmatmul.mubr.bf16.gmra.mrb[0].mxu0 %v410
  %v838 = vpop.f32.mrb[0].mxu0
  %v839 = vadd.f32 0.0, %v838
  %v840 = vpop.f32.mrb[0].mxu0
  %v841 = vpop.f32.mrb[0].mxu0
  %v842 = vadd.f32 0.0, %v841
  %v843 = vpop.f32.mrb[0].mxu0
  %844 = vmatprep.mubr.bf16.mxu0 %v416
  %845 = vmatmul.mubr.bf16.gmra.mrb[0].mxu0 %v415
  %v846 = vpop.f32.mrb[0].mxu0
  %v847 = vadd.f32 0.0, %v846
  %v848 = vpop.f32.mrb[0].mxu0
  %v849 = vpop.f32.mrb[0].mxu0
  %v850 = vadd.f32 0.0, %v849
  %v851 = vpop.f32.mrb[0].mxu0
  %852 = vmatprep.mubr.bf16.mxu0 %v421
  %853 = vmatmul.mubr.bf16.gmra.mrb[0].mxu0 %v420
  %v854 = vpop.f32.mrb[0].mxu0
  %v855 = vadd.f32 0.0, %v854
  %v856 = vpop.f32.mrb[0].mxu0
  %v857 = vpop.f32.mrb[0].mxu0
  %v858 = vadd.f32 0.0, %v857
  %v859 = vpop.f32.mrb[0].mxu0
  %860 = vmatprep.mubr.bf16.mxu0 %v426
  %861 = vmatmul.mubr.bf16.gmra.mrb[0].mxu0 %v425
  %v862 = vpop.f32.mrb[0].mxu0
  %v863 = vadd.f32 0.0, %v862
  %v864 = vpop.f32.mrb[0].mxu0
  %v865 = vpop.f32.mrb[0].mxu0
  %v866 = vadd.f32 0.0, %v865
  %v867 = vpop.f32.mrb[0].mxu0
  %868 = vmatprep.mubr.bf16.mxu0 %v431
  %869 = vmatmul.mubr.bf16.gmra.mrb[0].mxu0 %v430
  %v870 = vpop.f32.mrb[0].mxu0
  %v871 = vadd.f32 0.0, %v870
  %v872 = vpop.f32.mrb[0].mxu0
  %v873 = vpop.f32.mrb[0].mxu0
  %v874 = vpop.f32.mrb[0].mxu0
  %875 = vdwg.mxu0
  %876 = vmatprep.subr.bf16.mxu0 0
  %877 = vmatpush1.bf16.msra.mxu0 %v676
  %878 = vmatprep.subr.bf16.mxu0 0
  %879 = vmatpush1.bf16.msra.mxu0 %v677
  %880 = vmatprep.subr.bf16.mxu0 0
  %881 = vmatpush1.bf16.msra.mxu0 %v678
  %882 = vmatprep.subr.bf16.mxu0 0
  %883 = vmatpush1.bf16.msra.mxu0 %v679
  %884 = vmatprep.subr.bf16.mxu0 0
  %885 = vmatpush1.bf16.msra.mxu0 %v680
  %886 = vmatprep.subr.bf16.mxu0 0
  %887 = vmatpush1.bf16.msra.mxu0 %v681
  %888 = vmatprep.subr.bf16.mxu0 0
  %889 = vmatpush1.bf16.msra.mxu0 %v682
  %890 = vmatprep.subr.bf16.mxu0 0
  %891 = vmatpush1.bf16.msra.mxu0 %v683
  %892 = vmatprep.subr.bf16.mxu0 0
  %893 = vmatpush1.bf16.msra.mxu0 %v684
  %894 = vmatprep.subr.bf16.mxu0 0
  %895 = vmatpush1.bf16.msra.mxu0 %v685
  %896 = vmatprep.subr.bf16.mxu0 0
  %897 = vmatpush1.bf16.msra.mxu0 %v686
  %898 = vmatprep.subr.bf16.mxu0 0
  %899 = vmatpush1.bf16.msra.mxu0 %v687
  %900 = vmatprep.subr.bf16.mxu0 0
  %901 = vmatpush1.bf16.msra.mxu0 %v688
  %902 = vmatprep.subr.bf16.mxu0 0
  %903 = vmatpush1.bf16.msra.mxu0 %v689
  %904 = vmatprep.subr.bf16.mxu0 0
  %905 = vmatpush1.bf16.msra.mxu0 %v690
  %906 = vmatprep.subr.bf16.mxu0 0
  %907 = vmatpush1.bf16.msra.mxu0 %v691
  %908 = vmatprep.mubr.bf16.mxu0 %v373
  %909 = vmatmul.mubr.bf16.gmra.mrb[0].mxu0 %v372
  %v910 = vpop.f32.mrb[0].mxu0
  %v911 = vadd.f32 %v775, %v910
  %v912 = vpop.f32.mrb[0].mxu0
  %v913 = vpop.f32.mrb[0].mxu0
  %v914 = vadd.f32 %v778, %v913
  %v915 = vpop.f32.mrb[0].mxu0
  %916 = vmatprep.mubr.bf16.mxu0 %v378
  %917 = vmatmul.mubr.bf16.gmra.mrb[0].mxu0 %v377
  %v918 = vpop.f32.mrb[0].mxu0
  %v919 = vadd.f32 %v783, %v918
  %v920 = vpop.f32.mrb[0].mxu0
  %v921 = vpop.f32.mrb[0].mxu0
  %v922 = vadd.f32 %v786, %v921
  %v923 = vpop.f32.mrb[0].mxu0
  %924 = vmatprep.mubr.bf16.mxu0 %v383
  %925 = vmatmul.mubr.bf16.gmra.mrb[0].mxu0 %v382
  %v926 = vpop.f32.mrb[0].mxu0
  %v927 = vadd.f32 %v791, %v926
  %v928 = vpop.f32.mrb[0].mxu0
  %v929 = vpop.f32.mrb[0].mxu0
  %v930 = vadd.f32 %v794, %v929
  %v931 = vpop.f32.mrb[0].mxu0
  %932 = vmatprep.mubr.bf16.mxu0 %v388
  %933 = vmatmul.mubr.bf16.gmra.mrb[0].mxu0 %v387
  %v934 = vpop.f32.mrb[0].mxu0
  %v935 = vadd.f32 %v799, %v934
  %v936 = vpop.f32.mrb[0].mxu0
  %v937 = vpop.f32.mrb[0].mxu0
  %v938 = vadd.f32 %v802, %v937
  %v939 = vpop.f32.mrb[0].mxu0
  %940 = vmatprep.mubr.bf16.mxu0 %v393
  %941 = vmatmul.mubr.bf16.gmra.mrb[0].mxu0 %v392
  %v942 = vpop.f32.mrb[0].mxu0
  %v943 = vadd.f32 %v807, %v942
  %v944 = vpop.f32.mrb[0].mxu0
  %v945 = vpop.f32.mrb[0].mxu0
  %v946 = vadd.f32 %v810, %v945
  %v947 = vpop.f32.mrb[0].mxu0
  %948 = vmatprep.mubr.bf16.mxu0 %v398
  %949 = vmatmul.mubr.bf16.gmra.mrb[0].mxu0 %v397
  %v950 = vpop.f32.mrb[0].mxu0
  %v951 = vadd.f32 %v815, %v950
  %v952 = vpop.f32.mrb[0].mxu0
  %v953 = vpop.f32.mrb[0].mxu0
  %v954 = vadd.f32 %v818, %v953
  %v955 = vpop.f32.mrb[0].mxu0
  %956 = vmatprep.mubr.bf16.mxu0 %v403
  %957 = vmatmul.mubr.bf16.gmra.mrb[0].mxu0 %v402
  %v958 = vpop.f32.mrb[0].mxu0
  %v959 = vadd.f32 %v823, %v958
  %v960 = vpop.f32.mrb[0].mxu0
  %v961 = vpop.f32.mrb[0].mxu0
  %v962 = vadd.f32 %v826, %v961
  %v963 = vpop.f32.mrb[0].mxu0
  %964 = vmatprep.mubr.bf16.mxu0 %v408
  %965 = vmatmul.mubr.bf16.gmra.mrb[0].mxu0 %v407
  %v966 = vpop.f32.mrb[0].mxu0
  %v967 = vadd.f32 %v831, %v966
  %v968 = vpop.f32.mrb[0].mxu0
  %v969 = vpop.f32.mrb[0].mxu0
  %v970 = vadd.f32 %v834, %v969
  %v971 = vpop.f32.mrb[0].mxu0
  %972 = vmatprep.mubr.bf16.mxu0 %v413
  %973 = vmatmul.mubr.bf16.gmra.mrb[0].mxu0 %v412
  %v974 = vpop.f32.mrb[0].mxu0
  %v975 = vadd.f32 %v839, %v974
  %v976 = vpop.f32.mrb[0].mxu0
  %v977 = vpop.f32.mrb[0].mxu0
  %v978 = vadd.f32 %v842, %v977
  %v979 = vpop.f32.mrb[0].mxu0
  %980 = vmatprep.mubr.bf16.mxu0 %v418
  %981 = vmatmul.mubr.bf16.gmra.mrb[0].mxu0 %v417
  %v982 = vpop.f32.mrb[0].mxu0
  %v983 = vadd.f32 %v847, %v982
  %v984 = vpop.f32.mrb[0].mxu0
  %v985 = vpop.f32.mrb[0].mxu0
  %v986 = vadd.f32 %v850, %v985
  %v987 = vpop.f32.mrb[0].mxu0
  %988 = vmatprep.mubr.bf16.mxu0 %v423
  %989 = vmatmul.mubr.bf16.gmra.mrb[0].mxu0 %v422
  %v990 = vpop.f32.mrb[0].mxu0
  %v991 = vadd.f32 %v855, %v990
  %v992 = vpop.f32.mrb[0].mxu0
  %v993 = vpop.f32.mrb[0].mxu0
  %v994 = vadd.f32 %v858, %v993
  %v995 = vpop.f32.mrb[0].mxu0
  %996 = vmatprep.mubr.bf16.mxu0 %v428
  %997 = vmatmul.mubr.bf16.gmra.mrb[0].mxu0 %v427
  %v998 = vpop.f32.mrb[0].mxu0
  %v999 = vadd.f32 %v863, %v998
  %v1000 = vpop.f32.mrb[0].mxu0
  %v1001 = vpop.f32.mrb[0].mxu0
  %v1002 = vadd.f32 %v866, %v1001
  %v1003 = vpop.f32.mrb[0].mxu0
  %1004 = vmatprep.mubr.bf16.mxu0 %v433
  %1005 = vmatmul.mubr.bf16.gmra.mrb[0].mxu0 %v432
  %v1006 = vpop.f32.mrb[0].mxu0
  %v1007 = vadd.f32 %v871, %v1006
  %v1008 = vpop.f32.mrb[0].mxu0
  %v1009 = vpop.f32.mrb[0].mxu0
  %v1010 = vpop.f32.mrb[0].mxu0
  %1011 = vdwg.mxu0
  %1012 = vmatprep.subr.bf16.mxu0 0
  %1013 = vmatpush1.bf16.msra.mxu0 %v692
  %1014 = vmatprep.subr.bf16.mxu0 0
  %1015 = vmatpush1.bf16.msra.mxu0 %v693
  %1016 = vmatprep.subr.bf16.mxu0 0
  %1017 = vmatpush1.bf16.msra.mxu0 %v694
  %1018 = vmatprep.subr.bf16.mxu0 0
  %1019 = vmatpush1.bf16.msra.mxu0 %v695
  %1020 = vmatprep.subr.bf16.mxu0 0
  %1021 = vmatpush1.bf16.msra.mxu0 %v696
  %1022 = vmatprep.subr.bf16.mxu0 0
  %1023 = vmatpush1.bf16.msra.mxu0 %v697
  %1024 = vmatprep.subr.bf16.mxu0 0
  %1025 = vmatpush1.bf16.msra.mxu0 %v698
  %1026 = vmatprep.subr.bf16.mxu0 0
  %1027 = vmatpush1.bf16.msra.mxu0 %v699
  %1028 = vmatprep.subr.bf16.mxu0 0
  %1029 = vmatpush1.bf16.msra.mxu0 0
  %1030 = vmatprep.subr.bf16.mxu0 0
  %1031 = vmatpush1.bf16.msra.mxu0 0
  %1032 = vmatprep.subr.bf16.mxu0 0
  %1033 = vmatpush1.bf16.msra.mxu0 0
  %1034 = vmatprep.subr.bf16.mxu0 0
  %1035 = vmatpush1.bf16.msra.mxu0 0
  %1036 = vmatprep.subr.bf16.mxu0 0
  %1037 = vmatpush1.bf16.msra.mxu0 0
  %1038 = vmatprep.subr.bf16.mxu0 0
  %1039 = vmatpush1.bf16.msra.mxu0 0
  %1040 = vmatprep.subr.bf16.mxu0 0
  %1041 = vmatpush1.bf16.msra.mxu0 0
  %1042 = vmatprep.subr.bf16.mxu0 0
  %1043 = vmatpush1.bf16.msra.mxu0 0
  %1044 = vmatprep.mubr.bf16.mxu0 0
  %1045 = vmatmul.mubr.bf16.gmra.mrb[0].mxu0 %v374
  %v1046 = vpop.f32.mrb[0].mxu0
  %v1047 = vadd.f32 %v911, %v1046
  %v1048 = vpop.f32.mrb[0].mxu0
  %v1049 = vpop.f32.mrb[0].mxu0
  %v1050 = vadd.f32 %v914, %v1049
  %v1051 = vpop.f32.mrb[0].mxu0
  %1052 = vmatprep.mubr.bf16.mxu0 0
  %1053 = vmatmul.mubr.bf16.gmra.mrb[0].mxu0 %v379
  %v1054 = vpop.f32.mrb[0].mxu0
  %v1055 = vadd.f32 %v919, %v1054
  %v1056 = vpop.f32.mrb[0].mxu0
  %v1057 = vpop.f32.mrb[0].mxu0
  %v1058 = vadd.f32 %v922, %v1057
  %v1059 = vpop.f32.mrb[0].mxu0
  %1060 = vmatprep.mubr.bf16.mxu0 0
  %1061 = vmatmul.mubr.bf16.gmra.mrb[0].mxu0 %v384
  %v1062 = vpop.f32.mrb[0].mxu0
  %v1063 = vadd.f32 %v927, %v1062
  %v1064 = vpop.f32.mrb[0].mxu0
  %v1065 = vpop.f32.mrb[0].mxu0
  %v1066 = vadd.f32 %v930, %v1065
  %v1067 = vpop.f32.mrb[0].mxu0
  %1068 = vmatprep.mubr.bf16.mxu0 0
  %1069 = vmatmul.mubr.bf16.gmra.mrb[0].mxu0 %v389
  %v1070 = vpop.f32.mrb[0].mxu0
  %v1071 = vadd.f32 %v935, %v1070
  %v1072 = vpop.f32.mrb[0].mxu0
  %v1073 = vpop.f32.mrb[0].mxu0
  %v1074 = vadd.f32 %v938, %v1073
  %v1075 = vpop.f32.mrb[0].mxu0
  %1076 = vmatprep.mubr.bf16.mxu0 0
  %1077 = vmatmul.mubr.bf16.gmra.mrb[0].mxu0 %v394
  %v1078 = vpop.f32.mrb[0].mxu0
  %v1079 = vadd.f32 %v943, %v1078
  %v1080 = vpop.f32.mrb[0].mxu0
  %v1081 = vpop.f32.mrb[0].mxu0
  %v1082 = vadd.f32 %v946, %v1081
  %v1083 = vpop.f32.mrb[0].mxu0
  %1084 = vmatprep.mubr.bf16.mxu0 0
  %1085 = vmatmul.mubr.bf16.gmra.mrb[0].mxu0 %v399
  %v1086 = vpop.f32.mrb[0].mxu0
  %v1087 = vadd.f32 %v951, %v1086
  %v1088 = vpop.f32.mrb[0].mxu0
  %v1089 = vpop.f32.mrb[0].mxu0
  %v1090 = vadd.f32 %v954, %v1089
  %v1091 = vpop.f32.mrb[0].mxu0
  %1092 = vmatprep.mubr.bf16.mxu0 0
  %1093 = vmatmul.mubr.bf16.gmra.mrb[0].mxu0 %v404
  %v1094 = vpop.f32.mrb[0].mxu0
  %v1095 = vadd.f32 %v959, %v1094
  %v1096 = vpop.f32.mrb[0].mxu0
  %v1097 = vpop.f32.mrb[0].mxu0
  %v1098 = vadd.f32 %v962, %v1097
  %v1099 = vpop.f32.mrb[0].mxu0
  %1100 = vmatprep.mubr.bf16.mxu0 0
  %1101 = vmatmul.mubr.bf16.gmra.mrb[0].mxu0 %v409
  %v1102 = vpop.f32.mrb[0].mxu0
  %v1103 = vadd.f32 %v967, %v1102
  %v1104 = vpop.f32.mrb[0].mxu0
  %v1105 = vpop.f32.mrb[0].mxu0
  %v1106 = vadd.f32 %v970, %v1105
  %v1107 = vpop.f32.mrb[0].mxu0
  %1108 = vmatprep.mubr.bf16.mxu0 0
  %1109 = vmatmul.mubr.bf16.gmra.mrb[0].mxu0 %v414
  %v1110 = vpop.f32.mrb[0].mxu0
  %v1111 = vadd.f32 %v975, %v1110
  %v1112 = vpop.f32.mrb[0].mxu0
  %v1113 = vpop.f32.mrb[0].mxu0
  %v1114 = vadd.f32 %v978, %v1113
  %v1115 = vpop.f32.mrb[0].mxu0
  %1116 = vmatprep.mubr.bf16.mxu0 0
  %1117 = vmatmul.mubr.bf16.gmra.mrb[0].mxu0 %v419
  %v1118 = vpop.f32.mrb[0].mxu0
  %v1119 = vadd.f32 %v983, %v1118
  %v1120 = vpop.f32.mrb[0].mxu0
  %v1121 = vpop.f32.mrb[0].mxu0
  %v1122 = vadd.f32 %v986, %v1121
  %v1123 = vpop.f32.mrb[0].mxu0
  %1124 = vmatprep.mubr.bf16.mxu0 0
  %1125 = vmatmul.mubr.bf16.gmra.mrb[0].mxu0 %v424
  %v1126 = vpop.f32.mrb[0].mxu0
  %v1127 = vadd.f32 %v991, %v1126
  %v1128 = vpop.f32.mrb[0].mxu0
  %v1129 = vpop.f32.mrb[0].mxu0
  %v1130 = vadd.f32 %v994, %v1129
  %v1131 = vpop.f32.mrb[0].mxu0
  %1132 = vmatprep.mubr.bf16.mxu0 0
  %1133 = vmatmul.mubr.bf16.gmra.mrb[0].mxu0 %v429
  %v1134 = vpop.f32.mrb[0].mxu0
  %v1135 = vadd.f32 %v999, %v1134
  %v1136 = vpop.f32.mrb[0].mxu0
  %v1137 = vpop.f32.mrb[0].mxu0
  %v1138 = vadd.f32 %v1002, %v1137
  %v1139 = vpop.f32.mrb[0].mxu0
  %1140 = vmatprep.mubr.bf16.mxu0 0
  %1141 = vmatmul.mubr.bf16.gmra.mrb[0].mxu0 %v434
  %v1142 = vpop.f32.mrb[0].mxu0
  %v1143 = vadd.f32 %v1007, %v1142
  %v1144 = vpop.f32.mrb[0].mxu0
  %v1145 = vpop.f32.mrb[0].mxu0
  %v1146 = vpop.f32.mrb[0].mxu0
  %1147 = vdwg.mxu0
  %1148 = vrot.lane.b32.xlu0 %v1047, 64
  %v1149 = vpop.permute.xlu0 %1148
  %1150 = vrot.lane.b32.xlu0 %v1050, 64
  %v1151 = vpop.permute.xlu0 %1150
  %1152 = vrot.lane.b32.xlu0 %v1055, 64
  %v1153 = vpop.permute.xlu0 %1152
  %1154 = vrot.lane.b32.xlu0 %v1058, 64
  %v1155 = vpop.permute.xlu0 %1154
  %1156 = vrot.lane.b32.xlu0 %v1063, 64
  %v1157 = vpop.permute.xlu0 %1156
  %1158 = vrot.lane.b32.xlu0 %v1066, 64
  %v1159 = vpop.permute.xlu0 %1158
  %1160 = vrot.lane.b32.xlu0 %v1071, 64
  %v1161 = vpop.permute.xlu0 %1160
  %1162 = vrot.lane.b32.xlu0 %v1074, 64
  %v1163 = vpop.permute.xlu0 %1162
  %1164 = vrot.lane.b32.xlu0 %v1079, 64
  %v1165 = vpop.permute.xlu0 %1164
  %1166 = vrot.lane.b32.xlu0 %v1082, 64
  %v1167 = vpop.permute.xlu0 %1166
  %1168 = vrot.lane.b32.xlu0 %v1087, 64
  %v1169 = vpop.permute.xlu0 %1168
  %1170 = vrot.lane.b32.xlu0 %v1090, 64
  %v1171 = vpop.permute.xlu0 %1170
  %1172 = vrot.lane.b32.xlu0 %v1095, 64
  %v1173 = vpop.permute.xlu0 %1172
  %1174 = vrot.lane.b32.xlu0 %v1098, 64
  %v1175 = vpop.permute.xlu0 %1174
  %1176 = vrot.lane.b32.xlu0 %v1103, 64
  %v1177 = vpop.permute.xlu0 %1176
  %1178 = vrot.lane.b32.xlu0 %v1106, 64
  %v1179 = vpop.permute.xlu0 %1178
  %1180 = vrot.lane.b32.xlu0 %v1111, 64
  %v1181 = vpop.permute.xlu0 %1180
  %1182 = vrot.lane.b32.xlu0 %v1114, 64
  %v1183 = vpop.permute.xlu0 %1182
  %1184 = vrot.lane.b32.xlu0 %v1119, 64
  %v1185 = vpop.permute.xlu0 %1184
  %1186 = vrot.lane.b32.xlu0 %v1122, 64
  %v1187 = vpop.permute.xlu0 %1186
  %1188 = vrot.lane.b32.xlu0 %v1127, 64
  %v1189 = vpop.permute.xlu0 %1188
  %1190 = vrot.lane.b32.xlu0 %v1130, 64
  %v1191 = vpop.permute.xlu0 %1190
  %1192 = vrot.lane.b32.xlu0 %v1135, 64
  %v1193 = vpop.permute.xlu0 %1192
  %1194 = vrot.lane.b32.xlu0 %v1138, 64
  %v1195 = vpop.permute.xlu0 %1194
  %1196 = vrot.lane.b32.xlu0 %v1143, 64
  %v1197 = vpop.permute.xlu0 %1196
  %v1198 = vmax.f32 %v1047, %v1149
  %v1199 = vmax.f32 %v1050, %v1151
  %v1200 = vmax.f32 %v1055, %v1153
  %v1201 = vmax.f32 %v1058, %v1155
  %v1202 = vmax.f32 %v1063, %v1157
  %v1203 = vmax.f32 %v1066, %v1159
  %v1204 = vmax.f32 %v1071, %v1161
  %v1205 = vmax.f32 %v1074, %v1163
  %v1206 = vmax.f32 %v1079, %v1165
  %v1207 = vmax.f32 %v1082, %v1167
  %v1208 = vmax.f32 %v1087, %v1169
  %v1209 = vmax.f32 %v1090, %v1171
  %v1210 = vmax.f32 %v1095, %v1173
  %v1211 = vmax.f32 %v1098, %v1175
  %v1212 = vmax.f32 %v1103, %v1177
  %v1213 = vmax.f32 %v1106, %v1179
  %v1214 = vmax.f32 %v1111, %v1181
  %v1215 = vmax.f32 %v1114, %v1183
  %v1216 = vmax.f32 %v1119, %v1185
  %v1217 = vmax.f32 %v1122, %v1187
  %v1218 = vmax.f32 %v1127, %v1189
  %v1219 = vmax.f32 %v1130, %v1191
  %v1220 = vmax.f32 %v1135, %v1193
  %v1221 = vmax.f32 %v1138, %v1195
  %v1222 = vmax.f32 %v1143, %v1197
  %1223 = vrot.lane.b32.xlu0 %v1198, 32
  %v1224 = vpop.permute.xlu0 %1223
  %1225 = vrot.lane.b32.xlu0 %v1199, 32
  %v1226 = vpop.permute.xlu0 %1225
  %1227 = vrot.lane.b32.xlu0 %v1200, 32
  %v1228 = vpop.permute.xlu0 %1227
  %1229 = vrot.lane.b32.xlu0 %v1201, 32
  %v1230 = vpop.permute.xlu0 %1229
  %1231 = vrot.lane.b32.xlu0 %v1202, 32
  %v1232 = vpop.permute.xlu0 %1231
  %1233 = vrot.lane.b32.xlu0 %v1203, 32
  %v1234 = vpop.permute.xlu0 %1233
  %1235 = vrot.lane.b32.xlu0 %v1204, 32
  %v1236 = vpop.permute.xlu0 %1235
  %1237 = vrot.lane.b32.xlu0 %v1205, 32
  %v1238 = vpop.permute.xlu0 %1237
  %1239 = vrot.lane.b32.xlu0 %v1206, 32
  %v1240 = vpop.permute.xlu0 %1239
  %1241 = vrot.lane.b32.xlu0 %v1207, 32
  %v1242 = vpop.permute.xlu0 %1241
  %1243 = vrot.lane.b32.xlu0 %v1208, 32
  %v1244 = vpop.permute.xlu0 %1243
  %1245 = vrot.lane.b32.xlu0 %v1209, 32
  %v1246 = vpop.permute.xlu0 %1245
  %1247 = vrot.lane.b32.xlu0 %v1210, 32
  %v1248 = vpop.permute.xlu0 %1247
  %1249 = vrot.lane.b32.xlu0 %v1211, 32
  %v1250 = vpop.permute.xlu0 %1249
  %1251 = vrot.lane.b32.xlu0 %v1212, 32
  %v1252 = vpop.permute.xlu0 %1251
  %1253 = vrot.lane.b32.xlu0 %v1213, 32
  %v1254 = vpop.permute.xlu0 %1253
  %1255 = vrot.lane.b32.xlu0 %v1214, 32
  %v1256 = vpop.permute.xlu0 %1255
  %1257 = vrot.lane.b32.xlu0 %v1215, 32
  %v1258 = vpop.permute.xlu0 %1257
  %1259 = vrot.lane.b32.xlu0 %v1216, 32
  %v1260 = vpop.permute.xlu0 %1259
  %1261 = vrot.lane.b32.xlu0 %v1217, 32
  %v1262 = vpop.permute.xlu0 %1261
  %1263 = vrot.lane.b32.xlu0 %v1218, 32
  %v1264 = vpop.permute.xlu0 %1263
  %1265 = vrot.lane.b32.xlu0 %v1219, 32
  %v1266 = vpop.permute.xlu0 %1265
  %1267 = vrot.lane.b32.xlu0 %v1220, 32
  %v1268 = vpop.permute.xlu0 %1267
  %1269 = vrot.lane.b32.xlu0 %v1221, 32
  %v1270 = vpop.permute.xlu0 %1269
  %1271 = vrot.lane.b32.xlu0 %v1222, 32
  %v1272 = vpop.permute.xlu0 %1271
  %v1273 = vmax.f32 %v1198, %v1224
  %v1274 = vmax.f32 %v1199, %v1226
  %v1275 = vmax.f32 %v1200, %v1228
  %v1276 = vmax.f32 %v1201, %v1230
  %v1277 = vmax.f32 %v1202, %v1232
  %v1278 = vmax.f32 %v1203, %v1234
  %v1279 = vmax.f32 %v1204, %v1236
  %v1280 = vmax.f32 %v1205, %v1238
  %v1281 = vmax.f32 %v1206, %v1240
  %v1282 = vmax.f32 %v1207, %v1242
  %v1283 = vmax.f32 %v1208, %v1244
  %v1284 = vmax.f32 %v1209, %v1246
  %v1285 = vmax.f32 %v1210, %v1248
  %v1286 = vmax.f32 %v1211, %v1250
  %v1287 = vmax.f32 %v1212, %v1252
  %v1288 = vmax.f32 %v1213, %v1254
  %v1289 = vmax.f32 %v1214, %v1256
  %v1290 = vmax.f32 %v1215, %v1258
  %v1291 = vmax.f32 %v1216, %v1260
  %v1292 = vmax.f32 %v1217, %v1262
  %v1293 = vmax.f32 %v1218, %v1264
  %v1294 = vmax.f32 %v1219, %v1266
  %v1295 = vmax.f32 %v1220, %v1268
  %v1296 = vmax.f32 %v1221, %v1270
  %v1297 = vmax.f32 %v1222, %v1272
  %v1298 = vld [vmem:[%s2] sm:$0x1]
  %v1300 = vlaneseq
  %v1301 = vshrl.u32 %v1300, 7
  %v1302 = vsub.s32 0, %v1301
  %v1303 = vrot.slane %v1298, %v1302
  %v1305 = vadd.f32 %v1273, %v1303
  %v1306 = vadd.f32 %v1274, %v1303
  %v1307 = vadd.f32 %v1275, %v1303
  %v1308 = vadd.f32 %v1276, %v1303
  %v1309 = vadd.f32 %v1277, %v1303
  %v1310 = vadd.f32 %v1278, %v1303
  %v1311 = vadd.f32 %v1279, %v1303
  %v1312 = vadd.f32 %v1280, %v1303
  %v1313 = vadd.f32 %v1281, %v1303
  %v1314 = vadd.f32 %v1282, %v1303
  %v1315 = vadd.f32 %v1283, %v1303
  %v1316 = vadd.f32 %v1284, %v1303
  %v1317 = vadd.f32 %v1285, %v1303
  %v1318 = vadd.f32 %v1286, %v1303
  %v1319 = vadd.f32 %v1287, %v1303
  %v1320 = vadd.f32 %v1288, %v1303
  %v1321 = vadd.f32 %v1289, %v1303
  %v1322 = vadd.f32 %v1290, %v1303
  %v1323 = vadd.f32 %v1291, %v1303
  %v1324 = vadd.f32 %v1292, %v1303
  %v1325 = vadd.f32 %v1293, %v1303
  %v1326 = vadd.f32 %v1294, %v1303
  %v1327 = vadd.f32 %v1295, %v1303
  %v1328 = vadd.f32 %v1296, %v1303
  %v1329 = vadd.f32 %v1297, %v1303
  %v1330 = vmax.f32 %v1305, 0.0
  %v1331 = vmax.f32 %v1306, 0.0
  %v1332 = vmax.f32 %v1307, 0.0
  %v1333 = vmax.f32 %v1308, 0.0
  %v1334 = vmax.f32 %v1309, 0.0
  %v1335 = vmax.f32 %v1310, 0.0
  %v1336 = vmax.f32 %v1311, 0.0
  %v1337 = vmax.f32 %v1312, 0.0
  %v1338 = vmax.f32 %v1313, 0.0
  %v1339 = vmax.f32 %v1314, 0.0
  %v1340 = vmax.f32 %v1315, 0.0
  %v1341 = vmax.f32 %v1316, 0.0
  %v1342 = vmax.f32 %v1317, 0.0
  %v1343 = vmax.f32 %v1318, 0.0
  %v1344 = vmax.f32 %v1319, 0.0
  %v1345 = vmax.f32 %v1320, 0.0
  %v1346 = vmax.f32 %v1321, 0.0
  %v1347 = vmax.f32 %v1322, 0.0
  %v1348 = vmax.f32 %v1323, 0.0
  %v1349 = vmax.f32 %v1324, 0.0
  %v1350 = vmax.f32 %v1325, 0.0
  %v1351 = vmax.f32 %v1326, 0.0
  %v1352 = vmax.f32 %v1327, 0.0
  %v1353 = vmax.f32 %v1328, 0.0
  %v1354 = vmax.f32 %v1329, 0.0
  %v1355 = vlaneseq
  %v1356 = vand.u32 %v1355, 127
  %vm1357 = vcmp.lt.s32.totalorder %v1356, 32
  %v1358 = vsel %vm1357, %v1330, 0.0
  %v1359 = vsel %vm1357, %v1331, 0.0
  %v1360 = vsel %vm1357, %v1332, 0.0
  %v1361 = vsel %vm1357, %v1333, 0.0
  %v1362 = vsel %vm1357, %v1334, 0.0
  %v1363 = vsel %vm1357, %v1335, 0.0
  %v1364 = vsel %vm1357, %v1336, 0.0
  %v1365 = vsel %vm1357, %v1337, 0.0
  %v1366 = vsel %vm1357, %v1338, 0.0
  %v1367 = vsel %vm1357, %v1339, 0.0
  %v1368 = vsel %vm1357, %v1340, 0.0
  %v1369 = vsel %vm1357, %v1341, 0.0
  %v1370 = vsel %vm1357, %v1342, 0.0
  %v1371 = vsel %vm1357, %v1343, 0.0
  %v1372 = vsel %vm1357, %v1344, 0.0
  %v1373 = vsel %vm1357, %v1345, 0.0
  %v1374 = vsel %vm1357, %v1346, 0.0
  %v1375 = vsel %vm1357, %v1347, 0.0
  %v1376 = vsel %vm1357, %v1348, 0.0
  %v1377 = vsel %vm1357, %v1349, 0.0
  %v1378 = vsel %vm1357, %v1350, 0.0
  %v1379 = vsel %vm1357, %v1351, 0.0
  %v1380 = vsel %vm1357, %v1352, 0.0
  %v1381 = vsel %vm1357, %v1353, 0.0
  %v1382 = vsel %vm1357, %v1354, 0.0
  %v1383 = vpack.c.bf16 %v1359, %v1358
  %v1384 = vpack.c.bf16 %v1361, %v1360
  %v1385 = vpack.c.bf16 %v1363, %v1362
  %v1386 = vpack.c.bf16 %v1365, %v1364
  %v1387 = vpack.c.bf16 %v1367, %v1366
  %v1388 = vpack.c.bf16 %v1369, %v1368
  %v1389 = vpack.c.bf16 %v1371, %v1370
  %v1390 = vpack.c.bf16 %v1373, %v1372
  %v1391 = vpack.c.bf16 %v1375, %v1374
  %v1392 = vpack.c.bf16 %v1377, %v1376
  %v1393 = vpack.c.bf16 %v1379, %v1378
  %v1394 = vpack.c.bf16 %v1381, %v1380
  %v1395 = vpack.c.bf16 %v1382, %v1382
  %v1409 = vunpack.c.l.b16 %v1383
  %v1410 = vunpack.c.h.b16 %v1383
  %v1411 = vunpack.c.l.b16 %v1384
  %v1412 = vunpack.c.h.b16 %v1384
  %v1413 = vunpack.c.l.b16 %v1385
  %v1414 = vunpack.c.h.b16 %v1385
  %v1415 = vunpack.c.l.b16 %v1386
  %v1416 = vunpack.c.h.b16 %v1386
  %v1417 = vunpack.c.l.b16 %v1387
  %v1418 = vunpack.c.h.b16 %v1387
  %v1419 = vunpack.c.l.b16 %v1388
  %v1420 = vunpack.c.h.b16 %v1388
  %v1421 = vunpack.c.l.b16 %v1389
  %v1422 = vunpack.c.h.b16 %v1389
  %v1423 = vunpack.c.l.b16 %v1390
  %v1424 = vunpack.c.h.b16 %v1390
  %v1425 = vunpack.c.l.b16 %v1391
  %v1426 = vunpack.c.h.b16 %v1391
  %v1427 = vunpack.c.l.b16 %v1392
  %v1428 = vunpack.c.h.b16 %v1392
  %v1429 = vunpack.c.l.b16 %v1393
  %v1430 = vunpack.c.h.b16 %v1393
  %v1431 = vunpack.c.l.b16 %v1394
  %v1432 = vunpack.c.h.b16 %v1394
  %v1433 = vunpack.c.l.b16 %v1395
  %v1434 = vpack.c.b16 %v1409, %v1409
  %v1435 = vpack.c.b16 %v1410, %v1410
  %v1436 = vpack.c.b16 %v1411, %v1411
  %v1437 = vpack.c.b16 %v1412, %v1412
  %v1438 = vpack.c.b16 %v1413, %v1413
  %v1439 = vpack.c.b16 %v1414, %v1414
  %v1440 = vpack.c.b16 %v1415, %v1415
  %v1441 = vpack.c.b16 %v1416, %v1416
  %v1442 = vpack.c.b16 %v1417, %v1417
  %v1443 = vpack.c.b16 %v1418, %v1418
  %v1444 = vpack.c.b16 %v1419, %v1419
  %v1445 = vpack.c.b16 %v1420, %v1420
  %v1446 = vpack.c.b16 %v1421, %v1421
  %v1447 = vpack.c.b16 %v1422, %v1422
  %v1448 = vpack.c.b16 %v1423, %v1423
  %v1449 = vpack.c.b16 %v1424, %v1424
  %v1450 = vpack.c.b16 %v1425, %v1425
  %v1451 = vpack.c.b16 %v1426, %v1426
  %v1452 = vpack.c.b16 %v1427, %v1427
  %v1453 = vpack.c.b16 %v1428, %v1428
  %v1454 = vpack.c.b16 %v1429, %v1429
  %v1455 = vpack.c.b16 %v1430, %v1430
  %v1456 = vpack.c.b16 %v1431, %v1431
  %v1457 = vpack.c.b16 %v1432, %v1432
  %v1458 = vpack.c.b16 %v1433, %v1433
  %1484 = vst [vmem:[%s3] sm:$0xf] %v1434
  %1485 = vst [vmem:[%s3 + $0x4] sm:$0xf] %v1435
  %1486 = vst [vmem:[%s3 + $0x8] sm:$0xf] %v1436
  %1487 = vst [vmem:[%s3 + $0xc] sm:$0xf] %v1437
  %1488 = vst [vmem:[%s3 + $0x10] sm:$0xf] %v1438
  %1489 = vst [vmem:[%s3 + $0x14] sm:$0xf] %v1439
  %1490 = vst [vmem:[%s3 + $0x18] sm:$0xf] %v1440
  %1491 = vst [vmem:[%s3 + $0x1c] sm:$0xf] %v1441
  %1492 = vst [vmem:[%s3 + $0x20] sm:$0xf] %v1442
  %1493 = vst [vmem:[%s3 + $0x24] sm:$0xf] %v1443
  %1494 = vst [vmem:[%s3 + $0x28] sm:$0xf] %v1444
  %1495 = vst [vmem:[%s3 + $0x2c] sm:$0xf] %v1445
  %1496 = vst [vmem:[%s3 + $0x30] sm:$0xf] %v1446
  %1497 = vst [vmem:[%s3 + $0x34] sm:$0xf] %v1447
  %1498 = vst [vmem:[%s3 + $0x38] sm:$0xf] %v1448
  %1499 = vst [vmem:[%s3 + $0x3c] sm:$0xf] %v1449
  %1500 = vst [vmem:[%s3 + $0x40] sm:$0xf] %v1450
  %1501 = vst [vmem:[%s3 + $0x44] sm:$0xf] %v1451
  %1502 = vst [vmem:[%s3 + $0x48] sm:$0xf] %v1452
  %1503 = vst [vmem:[%s3 + $0x4c] sm:$0xf] %v1453
  %1504 = vst [vmem:[%s3 + $0x50] sm:$0xf] %v1454
  %1505 = vst [vmem:[%s3 + $0x54] sm:$0xf] %v1455
  %1506 = vst [vmem:[%s3 + $0x58] sm:$0xf] %v1456
  %1507 = vst [vmem:[%s3 + $0x5c] sm:$0xf] %v1457
  %1508 = vst [vmem:[%s3 + $0x60] sm:$0xf] %v1458
  // Predicated region
  $region14: #{net_forward.4} parent=0 // pred_check
    _
  $region15: #{net_forward.4} parent=0 // pred_check_branch
    %1510 = sbr.rel (0) target = $region17
  $region16: #{net_forward.4} parent=0 // pred_region
    _
  $region17: #{net_forward.4} parent=0 // pred_fallthru
    _
  // Predicated region
  $region18: #{net_forward.4} parent=0 // pred_check
    _
  $region19: #{net_forward.4} parent=0 // pred_check_branch
    %1512 = sbr.rel (0) target = $region21
  $region20: #{net_forward.4} parent=0 // pred_region
    _
  $region21: #{net_forward.4} parent=0 // pred_fallthru
    _

// kernel: net_forward.5
$region0: #{net_forward.5}
  #allocation0 [shape = 'u32[]', space=smem, size = 0x4, offset = 0x4, fixed_abs, tag = 'smem constant byte address 0x4 - core index']
  #allocation1 [shape = 'u32[144,128]{1,0:T(1,128)}', space=vmem, size = 0x12000, scoped, tag = 'internal scratch']
  %s0 = inlined_call_operand.vmem [shape: bf16[8,3200], index: 0, kind: input, shape index: {}]
  %s1 = inlined_call_operand.vmem [shape: bf16[3200,128], index: 1, kind: input, shape index: {}]
  %s2 = inlined_call_operand.vmem [shape: f32[1,128], index: 2, kind: input, shape index: {}]
  %s3 = inlined_call_operand.vmem [shape: bf16[128,128], index: 3, kind: input, shape index: {}]
  %s4 = inlined_call_operand.vmem [shape: f32[1,128], index: 4, kind: input, shape index: {}]
  %s5 = inlined_call_operand.vmem [shape: bf16[128,128], index: 5, kind: input, shape index: {}]
  %s6 = inlined_call_operand.vmem [shape: f32[1,128], index: 6, kind: input, shape index: {}]
  %s7 = inlined_call_operand.hbm [shape: f32[8,128], index: 7, kind: output, shape index: {}]
  %s8 = sld [smem:[#allocation0]]
  $region38: #{net_forward.5} parent=0
    _
  %s10 = ssub.s32 1, %s8
  %s11 = scalar_select 0, %s10, %s8
  $region1: #{net_forward.5} parent=0
    #allocation2 [shape = 'u8[4096]{0}', space=vmem, size = 0x1000, scoped, tag = 'output window, operand 0, single buffered']
    #allocation3 [shape = 's32[1]{0}', space=sflag, size = 0x4, scoped, tag = 'scoped memory for net_forward.5']
    %12 = vsyncpa [#allocation3], 0
    // Predicated region
    $region2: #{net_forward.5} parent=1 // pred_check
      _
    $region3: #{net_forward.5} parent=1 // pred_check_branch
      %14 = sbr.rel (0) target = $region5
    $region4: #{net_forward.5} parent=1 // pred_region
      _
    $region5: #{net_forward.5} parent=1 // pred_fallthru
      _
    // Predicated region
    $region6: #{net_forward.5} parent=1 // pred_check
      _
    $region7: #{net_forward.5} parent=1 // pred_check_branch
      %16 = sbr.rel (0) target = $region9
    $region8: #{net_forward.5} parent=1 // pred_region
      _
    $region9: #{net_forward.5} parent=1 // pred_fallthru
      _
    // Predicated region
    $region10: #{net_forward.5} parent=1 // pred_check
      _
    $region11: #{net_forward.5} parent=1 // pred_check_branch
      %18 = sbr.rel (0) target = $region13
    $region12: #{net_forward.5} parent=1 // pred_region
      _
    $region13: #{net_forward.5} parent=1 // pred_fallthru
      _
    // Predicated region
    $region14: #{net_forward.5} parent=1 // pred_check
      _
    $region15: #{net_forward.5} parent=1 // pred_check_branch
      %20 = sbr.rel (0) target = $region17
    $region16: #{net_forward.5} parent=1 // pred_region
      _
    $region17: #{net_forward.5} parent=1 // pred_fallthru
      _
    // Predicated region
    $region18: #{net_forward.5} parent=1 // pred_check
      _
    $region19: #{net_forward.5} parent=1 // pred_check_branch
      %22 = sbr.rel (0) target = $region21
    $region20: #{net_forward.5} parent=1 // pred_region
      _
    $region21: #{net_forward.5} parent=1 // pred_fallthru
      _
    // Predicated region
    $region22: #{net_forward.5} parent=1 // pred_check
      _
    $region23: #{net_forward.5} parent=1 // pred_check_branch
      %24 = sbr.rel (0) target = $region25
    $region24: #{net_forward.5} parent=1 // pred_region
      _
    $region25: #{net_forward.5} parent=1 // pred_fallthru
      _
    // Predicated region
    $region26: #{net_forward.5} parent=1 // pred_check
      _
    $region27: #{net_forward.5} parent=1 // pred_check_branch
      %26 = sbr.rel (0) target = $region29
    $region28: #{net_forward.5} parent=1 // pred_region
      _
    $region29: #{net_forward.5} parent=1 // pred_fallthru
      _
    %v28 = vld [vmem:[%s0] sm:$0xff]
    %v29 = vld [vmem:[%s0 + $0x8] sm:$0xff]
    %v30 = vld [vmem:[%s0 + $0x10] sm:$0xff]
    %v31 = vld [vmem:[%s0 + $0x18] sm:$0xff]
    %v32 = vld [vmem:[%s0 + $0x20] sm:$0xff]
    %v33 = vld [vmem:[%s0 + $0x28] sm:$0xff]
    %v34 = vld [vmem:[%s0 + $0x30] sm:$0xff]
    %v35 = vld [vmem:[%s0 + $0x38] sm:$0xff]
    %v36 = vld [vmem:[%s0 + $0x40] sm:$0xff]
    %v37 = vld [vmem:[%s0 + $0x48] sm:$0xff]
    %v38 = vld [vmem:[%s0 + $0x50] sm:$0xff]
    %v39 = vld [vmem:[%s0 + $0x58] sm:$0xff]
    %v40 = vld [vmem:[%s0 + $0x60] sm:$0xf]
    %v41 = vld [vmem:[%s1] sm:$0xf]
    %v42 = vld [vmem:[%s1 + $0x4] sm:$0xf]
    %v43 = vld [vmem:[%s1 + $0x8] sm:$0xf]
    %v44 = vld [vmem:[%s1 + $0xc] sm:$0xf]
    %v45 = vld [vmem:[%s1 + $0x10] sm:$0xf]
    %v46 = vld [vmem:[%s1 + $0x14] sm:$0xf]
    %v47 = vld [vmem:[%s1 + $0x18] sm:$0xf]
    %v48 = vld [vmem:[%s1 + $0x1c] sm:$0xf]
    %v49 = vld [vmem:[%s1 + $0x20] sm:$0xf]
    %v50 = vld [vmem:[%s1 + $0x24] sm:$0xf]
    %v51 = vld [vmem:[%s1 + $0x28] sm:$0xf]
    %v52 = vld [vmem:[%s1 + $0x2c] sm:$0xf]
    %v53 = vld [vmem:[%s1 + $0x30] sm:$0xf]
    %v54 = vld [vmem:[%s1 + $0x34] sm:$0xf]
    %v55 = vld [vmem:[%s1 + $0x38] sm:$0xf]
    %v56 = vld [vmem:[%s1 + $0x3c] sm:$0xf]
    %v57 = vld [vmem:[%s1 + $0x40] sm:$0xf]
    %v58 = vld [vmem:[%s1 + $0x44] sm:$0xf]
    %v59 = vld [vmem:[%s1 + $0x48] sm:$0xf]
    %v60 = vld [vmem:[%s1 + $0x4c] sm:$0xf]
    %v61 = vld [vmem:[%s1 + $0x50] sm:$0xf]
    %v62 = vld [vmem:[%s1 + $0x54] sm:$0xf]
    %v63 = vld [vmem:[%s1 + $0x58] sm:$0xf]
    %v64 = vld [vmem:[%s1 + $0x5c] sm:$0xf]
    %v65 = vld [vmem:[%s1 + $0x60] sm:$0xf]
    %v66 = vld [vmem:[%s1 + $0x64] sm:$0xf]
    %v67 = vld [vmem:[%s1 + $0x68] sm:$0xf]
    %v68 = vld [vmem:[%s1 + $0x6c] sm:$0xf]
    %v69 = vld [vmem:[%s1 + $0x70] sm:$0xf]
    %v70 = vld [vmem:[%s1 + $0x74] sm:$0xf]
    %v71 = vld [vmem:[%s1 + $0x78] sm:$0xf]
    %v72 = vld [vmem:[%s1 + $0x7c] sm:$0xf]
    %v73 = vld [vmem:[%s1 + $0x80] sm:$0xf]
    %v74 = vld [vmem:[%s1 + $0x84] sm:$0xf]
    %v75 = vld [vmem:[%s1 + $0x88] sm:$0xf]
    %v76 = vld [vmem:[%s1 + $0x8c] sm:$0xf]
    %v77 = vld [vmem:[%s1 + $0x90] sm:$0xf]
    %v78 = vld [vmem:[%s1 + $0x94] sm:$0xf]
    %v79 = vld [vmem:[%s1 + $0x98] sm:$0xf]
    %v80 = vld [vmem:[%s1 + $0x9c] sm:$0xf]
    %v81 = vld [vmem:[%s1 + $0xa0] sm:$0xf]
    %v82 = vld [vmem:[%s1 + $0xa4] sm:$0xf]
    %v83 = vld [vmem:[%s1 + $0xa8] sm:$0xf]
    %v84 = vld [vmem:[%s1 + $0xac] sm:$0xf]
    %v85 = vld [vmem:[%s1 + $0xb0] sm:$0xf]
    %v86 = vld [vmem:[%s1 + $0xb4] sm:$0xf]
    %v87 = vld [vmem:[%s1 + $0xb8] sm:$0xf]
    %v88 = vld [vmem:[%s1 + $0xbc] sm:$0xf]
    %v89 = vld [vmem:[%s1 + $0xc0] sm:$0xf]
    %v90 = vld [vmem:[%s1 + $0xc4] sm:$0xf]
    %v91 = vld [vmem:[%s1 + $0xc8] sm:$0xf]
    %v92 = vld [vmem:[%s1 + $0xcc] sm:$0xf]
    %v93 = vld [vmem:[%s1 + $0xd0] sm:$0xf]
    %v94 = vld [vmem:[%s1 + $0xd4] sm:$0xf]
    %v95 = vld [vmem:[%s1 + $0xd8] sm:$0xf]
    %v96 = vld [vmem:[%s1 + $0xdc] sm:$0xf]
    %v97 = vld [vmem:[%s1 + $0xe0] sm:$0xf]
    %v98 = vld [vmem:[%s1 + $0xe4] sm:$0xf]
    %v99 = vld [vmem:[%s1 + $0xe8] sm:$0xf]
    %v100 = vld [vmem:[%s1 + $0xec] sm:$0xf]
    %v101 = vld [vmem:[%s1 + $0xf0] sm:$0xf]
    %v102 = vld [vmem:[%s1 + $0xf4] sm:$0xf]
    %v103 = vld [vmem:[%s1 + $0xf8] sm:$0xf]
    %v104 = vld [vmem:[%s1 + $0xfc] sm:$0xf]
    %v105 = vld [vmem:[%s1 + $0x100] sm:$0xf]
    %v106 = vld [vmem:[%s1 + $0x104] sm:$0xf]
    %v107 = vld [vmem:[%s1 + $0x108] sm:$0xf]
    %v108 = vld [vmem:[%s1 + $0x10c] sm:$0xf]
    %v109 = vld [vmem:[%s1 + $0x110] sm:$0xf]
    %v110 = vld [vmem:[%s1 + $0x114] sm:$0xf]
    %v111 = vld [vmem:[%s1 + $0x118] sm:$0xf]
    %v112 = vld [vmem:[%s1 + $0x11c] sm:$0xf]
    %v113 = vld [vmem:[%s1 + $0x120] sm:$0xf]
    %v114 = vld [vmem:[%s1 + $0x124] sm:$0xf]
    %v115 = vld [vmem:[%s1 + $0x128] sm:$0xf]
    %v116 = vld [vmem:[%s1 + $0x12c] sm:$0xf]
    %v117 = vld [vmem:[%s1 + $0x130] sm:$0xf]
    %v118 = vld [vmem:[%s1 + $0x134] sm:$0xf]
    %v119 = vld [vmem:[%s1 + $0x138] sm:$0xf]
    %v120 = vld [vmem:[%s1 + $0x13c] sm:$0xf]
    %v121 = vld [vmem:[%s1 + $0x140] sm:$0xf]
    %v122 = vld [vmem:[%s1 + $0x144] sm:$0xf]
    %v123 = vld [vmem:[%s1 + $0x148] sm:$0xf]
    %v124 = vld [vmem:[%s1 + $0x14c] sm:$0xf]
    %v125 = vld [vmem:[%s1 + $0x150] sm:$0xf]
    %v126 = vld [vmem:[%s1 + $0x154] sm:$0xf]
    %v127 = vld [vmem:[%s1 + $0x158] sm:$0xf]
    %v128 = vld [vmem:[%s1 + $0x15c] sm:$0xf]
    %v129 = vld [vmem:[%s1 + $0x160] sm:$0xf]
    %v130 = vld [vmem:[%s1 + $0x164] sm:$0xf]
    %v131 = vld [vmem:[%s1 + $0x168] sm:$0xf]
    %v132 = vld [vmem:[%s1 + $0x16c] sm:$0xf]
    %v133 = vld [vmem:[%s1 + $0x170] sm:$0xf]
    %v134 = vld [vmem:[%s1 + $0x174] sm:$0xf]
    %v135 = vld [vmem:[%s1 + $0x178] sm:$0xf]
    %v136 = vld [vmem:[%s1 + $0x17c] sm:$0xf]
    %v137 = vld [vmem:[%s1 + $0x180] sm:$0xf]
    %v138 = vld [vmem:[%s1 + $0x184] sm:$0xf]
    %v139 = vld [vmem:[%s1 + $0x188] sm:$0xf]
    %v140 = vld [vmem:[%s1 + $0x18c] sm:$0xf]
    %v141 = vld [vmem:[%s1 + $0x190] sm:$0xf]
    %v142 = vld [vmem:[%s1 + $0x194] sm:$0xf]
    %v143 = vld [vmem:[%s1 + $0x198] sm:$0xf]
    %v144 = vld [vmem:[%s1 + $0x19c] sm:$0xf]
    %v145 = vld [vmem:[%s1 + $0x1a0] sm:$0xf]
    %v146 = vld [vmem:[%s1 + $0x1a4] sm:$0xf]
    %v147 = vld [vmem:[%s1 + $0x1a8] sm:$0xf]
    %v148 = vld [vmem:[%s1 + $0x1ac] sm:$0xf]
    %v149 = vld [vmem:[%s1 + $0x1b0] sm:$0xf]
    %v150 = vld [vmem:[%s1 + $0x1b4] sm:$0xf]
    %v151 = vld [vmem:[%s1 + $0x1b8] sm:$0xf]
    %v152 = vld [vmem:[%s1 + $0x1bc] sm:$0xf]
    %v153 = vld [vmem:[%s1 + $0x1c0] sm:$0xf]
    %v154 = vld [vmem:[%s1 + $0x1c4] sm:$0xf]
    %v155 = vld [vmem:[%s1 + $0x1c8] sm:$0xf]
    %v156 = vld [vmem:[%s1 + $0x1cc] sm:$0xf]
    %v157 = vld [vmem:[%s1 + $0x1d0] sm:$0xf]
    %v158 = vld [vmem:[%s1 + $0x1d4] sm:$0xf]
    %v159 = vld [vmem:[%s1 + $0x1d8] sm:$0xf]
    %v160 = vld [vmem:[%s1 + $0x1dc] sm:$0xf]
    %v161 = vld [vmem:[%s1 + $0x1e0] sm:$0xf]
    %v162 = vld [vmem:[%s1 + $0x1e4] sm:$0xf]
    %v163 = vld [vmem:[%s1 + $0x1e8] sm:$0xf]
    %v164 = vld [vmem:[%s1 + $0x1ec] sm:$0xf]
    %v165 = vld [vmem:[%s1 + $0x1f0] sm:$0xf]
    %v166 = vld [vmem:[%s1 + $0x1f4] sm:$0xf]
    %v167 = vld [vmem:[%s1 + $0x1f8] sm:$0xf]
    %v168 = vld [vmem:[%s1 + $0x1fc] sm:$0xf]
    %v169 = vld [vmem:[%s1 + $0x200] sm:$0xf]
    %v170 = vld [vmem:[%s1 + $0x204] sm:$0xf]
    %v171 = vld [vmem:[%s1 + $0x208] sm:$0xf]
    %v172 = vld [vmem:[%s1 + $0x20c] sm:$0xf]
    %v173 = vld [vmem:[%s1 + $0x210] sm:$0xf]
    %v174 = vld [vmem:[%s1 + $0x214] sm:$0xf]
    %v175 = vld [vmem:[%s1 + $0x218] sm:$0xf]
    %v176 = vld [vmem:[%s1 + $0x21c] sm:$0xf]
    %v177 = vld [vmem:[%s1 + $0x220] sm:$0xf]
    %v178 = vld [vmem:[%s1 + $0x224] sm:$0xf]
    %v179 = vld [vmem:[%s1 + $0x228] sm:$0xf]
    %v180 = vld [vmem:[%s1 + $0x22c] sm:$0xf]
    %v181 = vld [vmem:[%s1 + $0x230] sm:$0xf]
    %v182 = vld [vmem:[%s1 + $0x234] sm:$0xf]
    %v183 = vld [vmem:[%s1 + $0x238] sm:$0xf]
    %v184 = vld [vmem:[%s1 + $0x23c] sm:$0xf]
    %v185 = vld [vmem:[%s1 + $0x240] sm:$0xf]
    %v186 = vld [vmem:[%s1 + $0x244] sm:$0xf]
    %v187 = vld [vmem:[%s1 + $0x248] sm:$0xf]
    %v188 = vld [vmem:[%s1 + $0x24c] sm:$0xf]
    %v189 = vld [vmem:[%s1 + $0x250] sm:$0xf]
    %v190 = vld [vmem:[%s1 + $0x254] sm:$0xf]
    %v191 = vld [vmem:[%s1 + $0x258] sm:$0xf]
    %v192 = vld [vmem:[%s1 + $0x25c] sm:$0xf]
    %v193 = vld [vmem:[%s1 + $0x260] sm:$0xf]
    %v194 = vld [vmem:[%s1 + $0x264] sm:$0xf]
    %v195 = vld [vmem:[%s1 + $0x268] sm:$0xf]
    %v196 = vld [vmem:[%s1 + $0x26c] sm:$0xf]
    %v197 = vld [vmem:[%s1 + $0x270] sm:$0xf]
    %v198 = vld [vmem:[%s1 + $0x274] sm:$0xf]
    %v199 = vld [vmem:[%s1 + $0x278] sm:$0xf]
    %v200 = vld [vmem:[%s1 + $0x27c] sm:$0xf]
    %v201 = vld [vmem:[%s1 + $0x280] sm:$0xf]
    %v202 = vld [vmem:[%s1 + $0x284] sm:$0xf]
    %v203 = vld [vmem:[%s1 + $0x288] sm:$0xf]
    %v204 = vld [vmem:[%s1 + $0x28c] sm:$0xf]
    %v205 = vld [vmem:[%s1 + $0x290] sm:$0xf]
    %v206 = vld [vmem:[%s1 + $0x294] sm:$0xf]
    %v207 = vld [vmem:[%s1 + $0x298] sm:$0xf]
    %v208 = vld [vmem:[%s1 + $0x29c] sm:$0xf]
    %v209 = vld [vmem:[%s1 + $0x2a0] sm:$0xf]
    %v210 = vld [vmem:[%s1 + $0x2a4] sm:$0xf]
    %v211 = vld [vmem:[%s1 + $0x2a8] sm:$0xf]
    %v212 = vld [vmem:[%s1 + $0x2ac] sm:$0xf]
    %v213 = vld [vmem:[%s1 + $0x2b0] sm:$0xf]
    %v214 = vld [vmem:[%s1 + $0x2b4] sm:$0xf]
    %v215 = vld [vmem:[%s1 + $0x2b8] sm:$0xf]
    %v216 = vld [vmem:[%s1 + $0x2bc] sm:$0xf]
    %v217 = vld [vmem:[%s1 + $0x2c0] sm:$0xf]
    %v218 = vld [vmem:[%s1 + $0x2c4] sm:$0xf]
    %v219 = vld [vmem:[%s1 + $0x2c8] sm:$0xf]
    %v220 = vld [vmem:[%s1 + $0x2cc] sm:$0xf]
    %v221 = vld [vmem:[%s1 + $0x2d0] sm:$0xf]
    %v222 = vld [vmem:[%s1 + $0x2d4] sm:$0xf]
    %v223 = vld [vmem:[%s1 + $0x2d8] sm:$0xf]
    %v224 = vld [vmem:[%s1 + $0x2dc] sm:$0xf]
    %v225 = vld [vmem:[%s1 + $0x2e0] sm:$0xf]
    %v226 = vld [vmem:[%s1 + $0x2e4] sm:$0xf]
    %v227 = vld [vmem:[%s1 + $0x2e8] sm:$0xf]
    %v228 = vld [vmem:[%s1 + $0x2ec] sm:$0xf]
    %v229 = vld [vmem:[%s1 + $0x2f0] sm:$0xf]
    %v230 = vld [vmem:[%s1 + $0x2f4] sm:$0xf]
    %v231 = vld [vmem:[%s1 + $0x2f8] sm:$0xf]
    %v232 = vld [vmem:[%s1 + $0x2fc] sm:$0xf]
    %v233 = vld [vmem:[%s1 + $0x300] sm:$0xf]
    %v234 = vld [vmem:[%s1 + $0x304] sm:$0xf]
    %v235 = vld [vmem:[%s1 + $0x308] sm:$0xf]
    %v236 = vld [vmem:[%s1 + $0x30c] sm:$0xf]
    %v237 = vld [vmem:[%s1 + $0x310] sm:$0xf]
    %v238 = vld [vmem:[%s1 + $0x314] sm:$0xf]
    %v239 = vld [vmem:[%s1 + $0x318] sm:$0xf]
    %v240 = vld [vmem:[%s1 + $0x31c] sm:$0xf]
    %v241 = vld [vmem:[%s1 + $0x320] sm:$0xf]
    %v242 = vld [vmem:[%s1 + $0x324] sm:$0xf]
    %v243 = vld [vmem:[%s1 + $0x328] sm:$0xf]
    %v244 = vld [vmem:[%s1 + $0x32c] sm:$0xf]
    %v245 = vld [vmem:[%s1 + $0x330] sm:$0xf]
    %v246 = vld [vmem:[%s1 + $0x334] sm:$0xf]
    %v247 = vld [vmem:[%s1 + $0x338] sm:$0xf]
    %v248 = vld [vmem:[%s1 + $0x33c] sm:$0xf]
    %v249 = vld [vmem:[%s1 + $0x340] sm:$0xf]
    %v250 = vld [vmem:[%s1 + $0x344] sm:$0xf]
    %v251 = vld [vmem:[%s1 + $0x348] sm:$0xf]
    %v252 = vld [vmem:[%s1 + $0x34c] sm:$0xf]
    %v253 = vld [vmem:[%s1 + $0x350] sm:$0xf]
    %v254 = vld [vmem:[%s1 + $0x354] sm:$0xf]
    %v255 = vld [vmem:[%s1 + $0x358] sm:$0xf]
    %v256 = vld [vmem:[%s1 + $0x35c] sm:$0xf]
    %v257 = vld [vmem:[%s1 + $0x360] sm:$0xf]
    %v258 = vld [vmem:[%s1 + $0x364] sm:$0xf]
    %v259 = vld [vmem:[%s1 + $0x368] sm:$0xf]
    %v260 = vld [vmem:[%s1 + $0x36c] sm:$0xf]
    %v261 = vld [vmem:[%s1 + $0x370] sm:$0xf]
    %v262 = vld [vmem:[%s1 + $0x374] sm:$0xf]
    %v263 = vld [vmem:[%s1 + $0x378] sm:$0xf]
    %v264 = vld [vmem:[%s1 + $0x37c] sm:$0xf]
    %v265 = vld [vmem:[%s1 + $0x380] sm:$0xf]
    %v266 = vld [vmem:[%s1 + $0x384] sm:$0xf]
    %v267 = vld [vmem:[%s1 + $0x388] sm:$0xf]
    %v268 = vld [vmem:[%s1 + $0x38c] sm:$0xf]
    %v269 = vld [vmem:[%s1 + $0x390] sm:$0xf]
    %v270 = vld [vmem:[%s1 + $0x394] sm:$0xf]
    %v271 = vld [vmem:[%s1 + $0x398] sm:$0xf]
    %v272 = vld [vmem:[%s1 + $0x39c] sm:$0xf]
    %v273 = vld [vmem:[%s1 + $0x3a0] sm:$0xf]
    %v274 = vld [vmem:[%s1 + $0x3a4] sm:$0xf]
    %v275 = vld [vmem:[%s1 + $0x3a8] sm:$0xf]
    %v276 = vld [vmem:[%s1 + $0x3ac] sm:$0xf]
    %v277 = vld [vmem:[%s1 + $0x3b0] sm:$0xf]
    %v278 = vld [vmem:[%s1 + $0x3b4] sm:$0xf]
    %v279 = vld [vmem:[%s1 + $0x3b8] sm:$0xf]
    %v280 = vld [vmem:[%s1 + $0x3bc] sm:$0xf]
    %v281 = vld [vmem:[%s1 + $0x3c0] sm:$0xf]
    %v282 = vld [vmem:[%s1 + $0x3c4] sm:$0xf]
    %v283 = vld [vmem:[%s1 + $0x3c8] sm:$0xf]
    %v284 = vld [vmem:[%s1 + $0x3cc] sm:$0xf]
    %v285 = vld [vmem:[%s1 + $0x3d0] sm:$0xf]
    %v286 = vld [vmem:[%s1 + $0x3d4] sm:$0xf]
    %v287 = vld [vmem:[%s1 + $0x3d8] sm:$0xf]
    %v288 = vld [vmem:[%s1 + $0x3dc] sm:$0xf]
    %v289 = vld [vmem:[%s1 + $0x3e0] sm:$0xf]
    %v290 = vld [vmem:[%s1 + $0x3e4] sm:$0xf]
    %v291 = vld [vmem:[%s1 + $0x3e8] sm:$0xf]
    %v292 = vld [vmem:[%s1 + $0x3ec] sm:$0xf]
    %v293 = vld [vmem:[%s1 + $0x3f0] sm:$0xf]
    %v294 = vld [vmem:[%s1 + $0x3f4] sm:$0xf]
    %v295 = vld [vmem:[%s1 + $0x3f8] sm:$0xf]
    %v296 = vld [vmem:[%s1 + $0x3fc] sm:$0xf]
    %v297 = vld [vmem:[%s1 + $0x400] sm:$0xf]
    %v298 = vld [vmem:[%s1 + $0x404] sm:$0xf]
    %v299 = vld [vmem:[%s1 + $0x408] sm:$0xf]
    %v300 = vld [vmem:[%s1 + $0x40c] sm:$0xf]
    %v301 = vld [vmem:[%s1 + $0x410] sm:$0xf]
    %v302 = vld [vmem:[%s1 + $0x414] sm:$0xf]
    %v303 = vld [vmem:[%s1 + $0x418] sm:$0xf]
    %v304 = vld [vmem:[%s1 + $0x41c] sm:$0xf]
    %v305 = vld [vmem:[%s1 + $0x420] sm:$0xf]
    %v306 = vld [vmem:[%s1 + $0x424] sm:$0xf]
    %v307 = vld [vmem:[%s1 + $0x428] sm:$0xf]
    %v308 = vld [vmem:[%s1 + $0x42c] sm:$0xf]
    %v309 = vld [vmem:[%s1 + $0x430] sm:$0xf]
    %v310 = vld [vmem:[%s1 + $0x434] sm:$0xf]
    %v311 = vld [vmem:[%s1 + $0x438] sm:$0xf]
    %v312 = vld [vmem:[%s1 + $0x43c] sm:$0xf]
    %v313 = vld [vmem:[%s1 + $0x440] sm:$0xf]
    %v314 = vld [vmem:[%s1 + $0x444] sm:$0xf]
    %v315 = vld [vmem:[%s1 + $0x448] sm:$0xf]
    %v316 = vld [vmem:[%s1 + $0x44c] sm:$0xf]
    %v317 = vld [vmem:[%s1 + $0x450] sm:$0xf]
    %v318 = vld [vmem:[%s1 + $0x454] sm:$0xf]
    %v319 = vld [vmem:[%s1 + $0x458] sm:$0xf]
    %v320 = vld [vmem:[%s1 + $0x45c] sm:$0xf]
    %v321 = vld [vmem:[%s1 + $0x460] sm:$0xf]
    %v322 = vld [vmem:[%s1 + $0x464] sm:$0xf]
    %v323 = vld [vmem:[%s1 + $0x468] sm:$0xf]
    %v324 = vld [vmem:[%s1 + $0x46c] sm:$0xf]
    %v325 = vld [vmem:[%s1 + $0x470] sm:$0xf]
    %v326 = vld [vmem:[%s1 + $0x474] sm:$0xf]
    %v327 = vld [vmem:[%s1 + $0x478] sm:$0xf]
    %v328 = vld [vmem:[%s1 + $0x47c] sm:$0xf]
    %v329 = vld [vmem:[%s1 + $0x480] sm:$0xf]
    %v330 = vld [vmem:[%s1 + $0x484] sm:$0xf]
    %v331 = vld [vmem:[%s1 + $0x488] sm:$0xf]
    %v332 = vld [vmem:[%s1 + $0x48c] sm:$0xf]
    %v333 = vld [vmem:[%s1 + $0x490] sm:$0xf]
    %v334 = vld [vmem:[%s1 + $0x494] sm:$0xf]
    %v335 = vld [vmem:[%s1 + $0x498] sm:$0xf]
    %v336 = vld [vmem:[%s1 + $0x49c] sm:$0xf]
    %v337 = vld [vmem:[%s1 + $0x4a0] sm:$0xf]
    %v338 = vld [vmem:[%s1 + $0x4a4] sm:$0xf]
    %v339 = vld [vmem:[%s1 + $0x4a8] sm:$0xf]
    %v340 = vld [vmem:[%s1 + $0x4ac] sm:$0xf]
    %v341 = vld [vmem:[%s1 + $0x4b0] sm:$0xf]
    %v342 = vld [vmem:[%s1 + $0x4b4] sm:$0xf]
    %v343 = vld [vmem:[%s1 + $0x4b8] sm:$0xf]
    %v344 = vld [vmem:[%s1 + $0x4bc] sm:$0xf]
    %v345 = vld [vmem:[%s1 + $0x4c0] sm:$0xf]
    %v346 = vld [vmem:[%s1 + $0x4c4] sm:$0xf]
    %v347 = vld [vmem:[%s1 + $0x4c8] sm:$0xf]
    %v348 = vld [vmem:[%s1 + $0x4cc] sm:$0xf]
    %v349 = vld [vmem:[%s1 + $0x4d0] sm:$0xf]
    %v350 = vld [vmem:[%s1 + $0x4d4] sm:$0xf]
    %v351 = vld [vmem:[%s1 + $0x4d8] sm:$0xf]
    %v352 = vld [vmem:[%s1 + $0x4dc] sm:$0xf]
    %v353 = vld [vmem:[%s1 + $0x4e0] sm:$0xf]
    %v354 = vld [vmem:[%s1 + $0x4e4] sm:$0xf]
    %v355 = vld [vmem:[%s1 + $0x4e8] sm:$0xf]
    %v356 = vld [vmem:[%s1 + $0x4ec] sm:$0xf]
    %v357 = vld [vmem:[%s1 + $0x4f0] sm:$0xf]
    %v358 = vld [vmem:[%s1 + $0x4f4] sm:$0xf]
    %v359 = vld [vmem:[%s1 + $0x4f8] sm:$0xf]
    %v360 = vld [vmem:[%s1 + $0x4fc] sm:$0xf]
    %v361 = vld [vmem:[%s1 + $0x500] sm:$0xf]
    %v362 = vld [vmem:[%s1 + $0x504] sm:$0xf]
    %v363 = vld [vmem:[%s1 + $0x508] sm:$0xf]
    %v364 = vld [vmem:[%s1 + $0x50c] sm:$0xf]
    %v365 = vld [vmem:[%s1 + $0x510] sm:$0xf]
    %v366 = vld [vmem:[%s1 + $0x514] sm:$0xf]
    %v367 = vld [vmem:[%s1 + $0x518] sm:$0xf]
    %v368 = vld [vmem:[%s1 + $0x51c] sm:$0xf]
    %v369 = vld [vmem:[%s1 + $0x520] sm:$0xf]
    %v370 = vld [vmem:[%s1 + $0x524] sm:$0xf]
    %v371 = vld [vmem:[%s1 + $0x528] sm:$0xf]
    %v372 = vld [vmem:[%s1 + $0x52c] sm:$0xf]
    %v373 = vld [vmem:[%s1 + $0x530] sm:$0xf]
    %v374 = vld [vmem:[%s1 + $0x534] sm:$0xf]
    %v375 = vld [vmem:[%s1 + $0x538] sm:$0xf]
    %v376 = vld [vmem:[%s1 + $0x53c] sm:$0xf]
    %v377 = vld [vmem:[%s1 + $0x540] sm:$0xf]
    %v378 = vld [vmem:[%s1 + $0x544] sm:$0xf]
    %v379 = vld [vmem:[%s1 + $0x548] sm:$0xf]
    %v380 = vld [vmem:[%s1 + $0x54c] sm:$0xf]
    %v381 = vld [vmem:[%s1 + $0x550] sm:$0xf]
    %v382 = vld [vmem:[%s1 + $0x554] sm:$0xf]
    %v383 = vld [vmem:[%s1 + $0x558] sm:$0xf]
    %v384 = vld [vmem:[%s1 + $0x55c] sm:$0xf]
    %v385 = vld [vmem:[%s1 + $0x560] sm:$0xf]
    %v386 = vld [vmem:[%s1 + $0x564] sm:$0xf]
    %v387 = vld [vmem:[%s1 + $0x568] sm:$0xf]
    %v388 = vld [vmem:[%s1 + $0x56c] sm:$0xf]
    %v389 = vld [vmem:[%s1 + $0x570] sm:$0xf]
    %v390 = vld [vmem:[%s1 + $0x574] sm:$0xf]
    %v391 = vld [vmem:[%s1 + $0x578] sm:$0xf]
    %v392 = vld [vmem:[%s1 + $0x57c] sm:$0xf]
    %v393 = vld [vmem:[%s1 + $0x580] sm:$0xf]
    %v394 = vld [vmem:[%s1 + $0x584] sm:$0xf]
    %v395 = vld [vmem:[%s1 + $0x588] sm:$0xf]
    %v396 = vld [vmem:[%s1 + $0x58c] sm:$0xf]
    %v397 = vld [vmem:[%s1 + $0x590] sm:$0xf]
    %v398 = vld [vmem:[%s1 + $0x594] sm:$0xf]
    %v399 = vld [vmem:[%s1 + $0x598] sm:$0xf]
    %v400 = vld [vmem:[%s1 + $0x59c] sm:$0xf]
    %v401 = vld [vmem:[%s1 + $0x5a0] sm:$0xf]
    %v402 = vld [vmem:[%s1 + $0x5a4] sm:$0xf]
    %v403 = vld [vmem:[%s1 + $0x5a8] sm:$0xf]
    %v404 = vld [vmem:[%s1 + $0x5ac] sm:$0xf]
    %v405 = vld [vmem:[%s1 + $0x5b0] sm:$0xf]
    %v406 = vld [vmem:[%s1 + $0x5b4] sm:$0xf]
    %v407 = vld [vmem:[%s1 + $0x5b8] sm:$0xf]
    %v408 = vld [vmem:[%s1 + $0x5bc] sm:$0xf]
    %v409 = vld [vmem:[%s1 + $0x5c0] sm:$0xf]
    %v410 = vld [vmem:[%s1 + $0x5c4] sm:$0xf]
    %v411 = vld [vmem:[%s1 + $0x5c8] sm:$0xf]
    %v412 = vld [vmem:[%s1 + $0x5cc] sm:$0xf]
    %v413 = vld [vmem:[%s1 + $0x5d0] sm:$0xf]
    %v414 = vld [vmem:[%s1 + $0x5d4] sm:$0xf]
    %v415 = vld [vmem:[%s1 + $0x5d8] sm:$0xf]
    %v416 = vld [vmem:[%s1 + $0x5dc] sm:$0xf]
    %v417 = vld [vmem:[%s1 + $0x5e0] sm:$0xf]
    %v418 = vld [vmem:[%s1 + $0x5e4] sm:$0xf]
    %v419 = vld [vmem:[%s1 + $0x5e8] sm:$0xf]
    %v420 = vld [vmem:[%s1 + $0x5ec] sm:$0xf]
    %v421 = vld [vmem:[%s1 + $0x5f0] sm:$0xf]
    %v422 = vld [vmem:[%s1 + $0x5f4] sm:$0xf]
    %v423 = vld [vmem:[%s1 + $0x5f8] sm:$0xf]
    %v424 = vld [vmem:[%s1 + $0x5fc] sm:$0xf]
    %v425 = vld [vmem:[%s1 + $0x600] sm:$0xf]
    %v426 = vld [vmem:[%s1 + $0x604] sm:$0xf]
    %v427 = vld [vmem:[%s1 + $0x608] sm:$0xf]
    %v428 = vld [vmem:[%s1 + $0x60c] sm:$0xf]
    %v429 = vld [vmem:[%s1 + $0x610] sm:$0xf]
    %v430 = vld [vmem:[%s1 + $0x614] sm:$0xf]
    %v431 = vld [vmem:[%s1 + $0x618] sm:$0xf]
    %v432 = vld [vmem:[%s1 + $0x61c] sm:$0xf]
    %v433 = vld [vmem:[%s1 + $0x620] sm:$0xf]
    %v434 = vld [vmem:[%s1 + $0x624] sm:$0xf]
    %v435 = vld [vmem:[%s1 + $0x628] sm:$0xf]
    %v436 = vld [vmem:[%s1 + $0x62c] sm:$0xf]
    %v437 = vld [vmem:[%s1 + $0x630] sm:$0xf]
    %v438 = vld [vmem:[%s1 + $0x634] sm:$0xf]
    %v439 = vld [vmem:[%s1 + $0x638] sm:$0xf]
    %v440 = vld [vmem:[%s1 + $0x63c] sm:$0xf]
    %v441 = vld [vmem:[%s2] sm:$0x1]
    %v443 = vlaneseq
    %v444 = vshrl.u32 %v443, 7
    %v445 = vsub.s32 0, %v444
    %v446 = vrot.slane %v441, %v445
    %v461 = vunpack.c.l.b16 %v28
    %v462 = vunpack.c.h.b16 %v28
    %v463 = vunpack.c.l.b16 %v29
    %v464 = vunpack.c.h.b16 %v29
    %v465 = vunpack.c.l.b16 %v30
    %v466 = vunpack.c.h.b16 %v30
    %v467 = vunpack.c.l.b16 %v31
    %v468 = vunpack.c.h.b16 %v31
    %v469 = vunpack.c.l.b16 %v32
    %v470 = vunpack.c.h.b16 %v32
    %v471 = vunpack.c.l.b16 %v33
    %v472 = vunpack.c.h.b16 %v33
    %v473 = vunpack.c.l.b16 %v34
    %v474 = vunpack.c.h.b16 %v34
    %v475 = vunpack.c.l.b16 %v35
    %v476 = vunpack.c.h.b16 %v35
    %v477 = vunpack.c.l.b16 %v36
    %v478 = vunpack.c.h.b16 %v36
    %v479 = vunpack.c.l.b16 %v37
    %v480 = vunpack.c.h.b16 %v37
    %v481 = vunpack.c.l.b16 %v38
    %v482 = vunpack.c.h.b16 %v38
    %v483 = vunpack.c.l.b16 %v39
    %v484 = vunpack.c.h.b16 %v39
    %v485 = vunpack.c.l.b16 %v40
    %v486 = vpack.c.b16 %v461, %v461
    %v487 = vpack.c.b16 %v462, %v462
    %v488 = vpack.c.b16 %v463, %v463
    %v489 = vpack.c.b16 %v464, %v464
    %v490 = vpack.c.b16 %v465, %v465
    %v491 = vpack.c.b16 %v466, %v466
    %v492 = vpack.c.b16 %v467, %v467
    %v493 = vpack.c.b16 %v468, %v468
    %v494 = vpack.c.b16 %v469, %v469
    %v495 = vpack.c.b16 %v470, %v470
    %v496 = vpack.c.b16 %v471, %v471
    %v497 = vpack.c.b16 %v472, %v472
    %v498 = vpack.c.b16 %v473, %v473
    %v499 = vpack.c.b16 %v474, %v474
    %v500 = vpack.c.b16 %v475, %v475
    %v501 = vpack.c.b16 %v476, %v476
    %v502 = vpack.c.b16 %v477, %v477
    %v503 = vpack.c.b16 %v478, %v478
    %v504 = vpack.c.b16 %v479, %v479
    %v505 = vpack.c.b16 %v480, %v480
    %v506 = vpack.c.b16 %v481, %v481
    %v507 = vpack.c.b16 %v482, %v482
    %v508 = vpack.c.b16 %v483, %v483
    %v509 = vpack.c.b16 %v484, %v484
    %v510 = vpack.c.b16 %v485, %v485
    %v936 = vunpack.c.l.b16 %v41
    %v937 = vunpack.c.l.b16 %v42
    %v938 = vunpack.c.l.b16 %v43
    %v939 = vunpack.c.l.b16 %v44
    %v940 = vunpack.c.l.b16 %v45
    %v941 = vunpack.c.l.b16 %v46
    %v942 = vunpack.c.l.b16 %v47
    %v943 = vunpack.c.l.b16 %v48
    %v944 = vunpack.c.l.b16 %v49
    %v945 = vunpack.c.l.b16 %v50
    %v946 = vunpack.c.l.b16 %v51
    %v947 = vunpack.c.l.b16 %v52
    %v948 = vunpack.c.l.b16 %v53
    %v949 = vunpack.c.l.b16 %v54
    %v950 = vunpack.c.l.b16 %v55
    %v951 = vunpack.c.l.b16 %v56
    %v952 = vunpack.c.l.b16 %v57
    %v953 = vunpack.c.l.b16 %v58
    %v954 = vunpack.c.l.b16 %v59
    %v955 = vunpack.c.l.b16 %v60
    %v956 = vunpack.c.l.b16 %v61
    %v957 = vunpack.c.l.b16 %v62
    %v958 = vunpack.c.l.b16 %v63
    %v959 = vunpack.c.l.b16 %v64
    %v960 = vunpack.c.l.b16 %v65
    %v961 = vunpack.c.l.b16 %v66
    %v962 = vunpack.c.l.b16 %v67
    %v963 = vunpack.c.l.b16 %v68
    %v964 = vunpack.c.l.b16 %v69
    %v965 = vunpack.c.l.b16 %v70
    %v966 = vunpack.c.l.b16 %v71
    %v967 = vunpack.c.l.b16 %v72
    %v968 = vunpack.c.l.b16 %v73
    %v969 = vunpack.c.l.b16 %v74
    %v970 = vunpack.c.l.b16 %v75
    %v971 = vunpack.c.l.b16 %v76
    %v972 = vunpack.c.l.b16 %v77
    %v973 = vunpack.c.l.b16 %v78
    %v974 = vunpack.c.l.b16 %v79
    %v975 = vunpack.c.l.b16 %v80
    %v976 = vunpack.c.l.b16 %v81
    %v977 = vunpack.c.l.b16 %v82
    %v978 = vunpack.c.l.b16 %v83
    %v979 = vunpack.c.l.b16 %v84
    %v980 = vunpack.c.l.b16 %v85
    %v981 = vunpack.c.l.b16 %v86
    %v982 = vunpack.c.l.b16 %v87
    %v983 = vunpack.c.l.b16 %v88
    %v984 = vunpack.c.l.b16 %v89
    %v985 = vunpack.c.l.b16 %v90
    %v986 = vunpack.c.l.b16 %v91
    %v987 = vunpack.c.l.b16 %v92
    %v988 = vunpack.c.l.b16 %v93
    %v989 = vunpack.c.l.b16 %v94
    %v990 = vunpack.c.l.b16 %v95
    %v991 = vunpack.c.l.b16 %v96
    %v992 = vunpack.c.l.b16 %v97
    %v993 = vunpack.c.l.b16 %v98
    %v994 = vunpack.c.l.b16 %v99
    %v995 = vunpack.c.l.b16 %v100
    %v996 = vunpack.c.l.b16 %v101
    %v997 = vunpack.c.l.b16 %v102
    %v998 = vunpack.c.l.b16 %v103
    %v999 = vunpack.c.l.b16 %v104
    %v1000 = vunpack.c.l.b16 %v105
    %v1001 = vunpack.c.l.b16 %v106
    %v1002 = vunpack.c.l.b16 %v107
    %v1003 = vunpack.c.l.b16 %v108
    %v1004 = vunpack.c.l.b16 %v109
    %v1005 = vunpack.c.l.b16 %v110
    %v1006 = vunpack.c.l.b16 %v111
    %v1007 = vunpack.c.l.b16 %v112
    %v1008 = vunpack.c.l.b16 %v113
    %v1009 = vunpack.c.l.b16 %v114
    %v1010 = vunpack.c.l.b16 %v115
    %v1011 = vunpack.c.l.b16 %v116
    %v1012 = vunpack.c.l.b16 %v117
    %v1013 = vunpack.c.l.b16 %v118
    %v1014 = vunpack.c.l.b16 %v119
    %v1015 = vunpack.c.l.b16 %v120
    %v1016 = vunpack.c.l.b16 %v121
    %v1017 = vunpack.c.l.b16 %v122
    %v1018 = vunpack.c.l.b16 %v123
    %v1019 = vunpack.c.l.b16 %v124
    %v1020 = vunpack.c.l.b16 %v125
    %v1021 = vunpack.c.l.b16 %v126
    %v1022 = vunpack.c.l.b16 %v127
    %v1023 = vunpack.c.l.b16 %v128
    %v1024 = vunpack.c.l.b16 %v129
    %v1025 = vunpack.c.l.b16 %v130
    %v1026 = vunpack.c.l.b16 %v131
    %v1027 = vunpack.c.l.b16 %v132
    %v1028 = vunpack.c.l.b16 %v133
    %v1029 = vunpack.c.l.b16 %v134
    %v1030 = vunpack.c.l.b16 %v135
    %v1031 = vunpack.c.l.b16 %v136
    %v1032 = vunpack.c.l.b16 %v137
    %v1033 = vunpack.c.l.b16 %v138
    %v1034 = vunpack.c.l.b16 %v139
    %v1035 = vunpack.c.l.b16 %v140
    %v1036 = vunpack.c.l.b16 %v141
    %v1037 = vunpack.c.l.b16 %v142
    %v1038 = vunpack.c.l.b16 %v143
    %v1039 = vunpack.c.l.b16 %v144
    %v1040 = vunpack.c.l.b16 %v145
    %v1041 = vunpack.c.l.b16 %v146
    %v1042 = vunpack.c.l.b16 %v147
    %v1043 = vunpack.c.l.b16 %v148
    %v1044 = vunpack.c.l.b16 %v149
    %v1045 = vunpack.c.l.b16 %v150
    %v1046 = vunpack.c.l.b16 %v151
    %v1047 = vunpack.c.l.b16 %v152
    %v1048 = vunpack.c.l.b16 %v153
    %v1049 = vunpack.c.l.b16 %v154
    %v1050 = vunpack.c.l.b16 %v155
    %v1051 = vunpack.c.l.b16 %v156
    %v1052 = vunpack.c.l.b16 %v157
    %v1053 = vunpack.c.l.b16 %v158
    %v1054 = vunpack.c.l.b16 %v159
    %v1055 = vunpack.c.l.b16 %v160
    %v1056 = vunpack.c.l.b16 %v161
    %v1057 = vunpack.c.l.b16 %v162
    %v1058 = vunpack.c.l.b16 %v163
    %v1059 = vunpack.c.l.b16 %v164
    %v1060 = vunpack.c.l.b16 %v165
    %v1061 = vunpack.c.l.b16 %v166
    %v1062 = vunpack.c.l.b16 %v167
    %v1063 = vunpack.c.l.b16 %v168
    %v1064 = vunpack.c.l.b16 %v169
    %v1065 = vunpack.c.l.b16 %v170
    %v1066 = vunpack.c.l.b16 %v171
    %v1067 = vunpack.c.l.b16 %v172
    %v1068 = vunpack.c.l.b16 %v173
    %v1069 = vunpack.c.l.b16 %v174
    %v1070 = vunpack.c.l.b16 %v175
    %v1071 = vunpack.c.l.b16 %v176
    %v1072 = vunpack.c.l.b16 %v177
    %v1073 = vunpack.c.l.b16 %v178
    %v1074 = vunpack.c.l.b16 %v179
    %v1075 = vunpack.c.l.b16 %v180
    %v1076 = vunpack.c.l.b16 %v181
    %v1077 = vunpack.c.l.b16 %v182
    %v1078 = vunpack.c.l.b16 %v183
    %v1079 = vunpack.c.l.b16 %v184
    %v1080 = vunpack.c.l.b16 %v185
    %v1081 = vunpack.c.l.b16 %v186
    %v1082 = vunpack.c.l.b16 %v187
    %v1083 = vunpack.c.l.b16 %v188
    %v1084 = vunpack.c.l.b16 %v189
    %v1085 = vunpack.c.l.b16 %v190
    %v1086 = vunpack.c.l.b16 %v191
    %v1087 = vunpack.c.l.b16 %v192
    %v1088 = vunpack.c.l.b16 %v193
    %v1089 = vunpack.c.l.b16 %v194
    %v1090 = vunpack.c.l.b16 %v195
    %v1091 = vunpack.c.l.b16 %v196
    %v1092 = vunpack.c.l.b16 %v197
    %v1093 = vunpack.c.l.b16 %v198
    %v1094 = vunpack.c.l.b16 %v199
    %v1095 = vunpack.c.l.b16 %v200
    %v1096 = vunpack.c.l.b16 %v201
    %v1097 = vunpack.c.l.b16 %v202
    %v1098 = vunpack.c.l.b16 %v203
    %v1099 = vunpack.c.l.b16 %v204
    %v1100 = vunpack.c.l.b16 %v205
    %v1101 = vunpack.c.l.b16 %v206
    %v1102 = vunpack.c.l.b16 %v207
    %v1103 = vunpack.c.l.b16 %v208
    %v1104 = vunpack.c.l.b16 %v209
    %v1105 = vunpack.c.l.b16 %v210
    %v1106 = vunpack.c.l.b16 %v211
    %v1107 = vunpack.c.l.b16 %v212
    %v1108 = vunpack.c.l.b16 %v213
    %v1109 = vunpack.c.l.b16 %v214
    %v1110 = vunpack.c.l.b16 %v215
    %v1111 = vunpack.c.l.b16 %v216
    %v1112 = vunpack.c.l.b16 %v217
    %v1113 = vunpack.c.l.b16 %v218
    %v1114 = vunpack.c.l.b16 %v219
    %v1115 = vunpack.c.l.b16 %v220
    %v1116 = vunpack.c.l.b16 %v221
    %v1117 = vunpack.c.l.b16 %v222
    %v1118 = vunpack.c.l.b16 %v223
    %v1119 = vunpack.c.l.b16 %v224
    %v1120 = vunpack.c.l.b16 %v225
    %v1121 = vunpack.c.l.b16 %v226
    %v1122 = vunpack.c.l.b16 %v227
    %v1123 = vunpack.c.l.b16 %v228
    %v1124 = vunpack.c.l.b16 %v229
    %v1125 = vunpack.c.l.b16 %v230
    %v1126 = vunpack.c.l.b16 %v231
    %v1127 = vunpack.c.l.b16 %v232
    %v1128 = vunpack.c.l.b16 %v233
    %v1129 = vunpack.c.l.b16 %v234
    %v1130 = vunpack.c.l.b16 %v235
    %v1131 = vunpack.c.l.b16 %v236
    %v1132 = vunpack.c.l.b16 %v237
    %v1133 = vunpack.c.l.b16 %v238
    %v1134 = vunpack.c.l.b16 %v239
    %v1135 = vunpack.c.l.b16 %v240
    %v1136 = vunpack.c.l.b16 %v241
    %v1137 = vunpack.c.l.b16 %v242
    %v1138 = vunpack.c.l.b16 %v243
    %v1139 = vunpack.c.l.b16 %v244
    %v1140 = vunpack.c.l.b16 %v245
    %v1141 = vunpack.c.l.b16 %v246
    %v1142 = vunpack.c.l.b16 %v247
    %v1143 = vunpack.c.l.b16 %v248
    %v1144 = vunpack.c.l.b16 %v249
    %v1145 = vunpack.c.l.b16 %v250
    %v1146 = vunpack.c.l.b16 %v251
    %v1147 = vunpack.c.l.b16 %v252
    %v1148 = vunpack.c.l.b16 %v253
    %v1149 = vunpack.c.l.b16 %v254
    %v1150 = vunpack.c.l.b16 %v255
    %v1151 = vunpack.c.l.b16 %v256
    %v1152 = vunpack.c.l.b16 %v257
    %v1153 = vunpack.c.l.b16 %v258
    %v1154 = vunpack.c.l.b16 %v259
    %v1155 = vunpack.c.l.b16 %v260
    %v1156 = vunpack.c.l.b16 %v261
    %v1157 = vunpack.c.l.b16 %v262
    %v1158 = vunpack.c.l.b16 %v263
    %v1159 = vunpack.c.l.b16 %v264
    %v1160 = vunpack.c.l.b16 %v265
    %v1161 = vunpack.c.l.b16 %v266
    %v1162 = vunpack.c.l.b16 %v267
    %v1163 = vunpack.c.l.b16 %v268
    %v1164 = vunpack.c.l.b16 %v269
    %v1165 = vunpack.c.l.b16 %v270
    %v1166 = vunpack.c.l.b16 %v271
    %v1167 = vunpack.c.l.b16 %v272
    %v1168 = vunpack.c.l.b16 %v273
    %v1169 = vunpack.c.l.b16 %v274
    %v1170 = vunpack.c.l.b16 %v275
    %v1171 = vunpack.c.l.b16 %v276
    %v1172 = vunpack.c.l.b16 %v277
    %v1173 = vunpack.c.l.b16 %v278
    %v1174 = vunpack.c.l.b16 %v279
    %v1175 = vunpack.c.l.b16 %v280
    %v1176 = vunpack.c.l.b16 %v281
    %v1177 = vunpack.c.l.b16 %v282
    %v1178 = vunpack.c.l.b16 %v283
    %v1179 = vunpack.c.l.b16 %v284
    %v1180 = vunpack.c.l.b16 %v285
    %v1181 = vunpack.c.l.b16 %v286
    %v1182 = vunpack.c.l.b16 %v287
    %v1183 = vunpack.c.l.b16 %v288
    %v1184 = vunpack.c.l.b16 %v289
    %v1185 = vunpack.c.l.b16 %v290
    %v1186 = vunpack.c.l.b16 %v291
    %v1187 = vunpack.c.l.b16 %v292
    %v1188 = vunpack.c.l.b16 %v293
    %v1189 = vunpack.c.l.b16 %v294
    %v1190 = vunpack.c.l.b16 %v295
    %v1191 = vunpack.c.l.b16 %v296
    %v1192 = vunpack.c.l.b16 %v297
    %v1193 = vunpack.c.l.b16 %v298
    %v1194 = vunpack.c.l.b16 %v299
    %v1195 = vunpack.c.l.b16 %v300
    %v1196 = vunpack.c.l.b16 %v301
    %v1197 = vunpack.c.l.b16 %v302
    %v1198 = vunpack.c.l.b16 %v303
    %v1199 = vunpack.c.l.b16 %v304
    %v1200 = vunpack.c.l.b16 %v305
    %v1201 = vunpack.c.l.b16 %v306
    %v1202 = vunpack.c.l.b16 %v307
    %v1203 = vunpack.c.l.b16 %v308
    %v1204 = vunpack.c.l.b16 %v309
    %v1205 = vunpack.c.l.b16 %v310
    %v1206 = vunpack.c.l.b16 %v311
    %v1207 = vunpack.c.l.b16 %v312
    %v1208 = vunpack.c.l.b16 %v313
    %v1209 = vunpack.c.l.b16 %v314
    %v1210 = vunpack.c.l.b16 %v315
    %v1211 = vunpack.c.l.b16 %v316
    %v1212 = vunpack.c.l.b16 %v317
    %v1213 = vunpack.c.l.b16 %v318
    %v1214 = vunpack.c.l.b16 %v319
    %v1215 = vunpack.c.l.b16 %v320
    %v1216 = vunpack.c.l.b16 %v321
    %v1217 = vunpack.c.l.b16 %v322
    %v1218 = vunpack.c.l.b16 %v323
    %v1219 = vunpack.c.l.b16 %v324
    %v1220 = vunpack.c.l.b16 %v325
    %v1221 = vunpack.c.l.b16 %v326
    %v1222 = vunpack.c.l.b16 %v327
    %v1223 = vunpack.c.l.b16 %v328
    %v1224 = vunpack.c.l.b16 %v329
    %v1225 = vunpack.c.l.b16 %v330
    %v1226 = vunpack.c.l.b16 %v331
    %v1227 = vunpack.c.l.b16 %v332
    %v1228 = vunpack.c.l.b16 %v333
    %v1229 = vunpack.c.l.b16 %v334
    %v1230 = vunpack.c.l.b16 %v335
    %v1231 = vunpack.c.l.b16 %v336
    %v1232 = vunpack.c.l.b16 %v337
    %v1233 = vunpack.c.l.b16 %v338
    %v1234 = vunpack.c.l.b16 %v339
    %v1235 = vunpack.c.l.b16 %v340
    %v1236 = vunpack.c.l.b16 %v341
    %v1237 = vunpack.c.l.b16 %v342
    %v1238 = vunpack.c.l.b16 %v343
    %v1239 = vunpack.c.l.b16 %v344
    %v1240 = vunpack.c.l.b16 %v345
    %v1241 = vunpack.c.l.b16 %v346
    %v1242 = vunpack.c.l.b16 %v347
    %v1243 = vunpack.c.l.b16 %v348
    %v1244 = vunpack.c.l.b16 %v349
    %v1245 = vunpack.c.l.b16 %v350
    %v1246 = vunpack.c.l.b16 %v351
    %v1247 = vunpack.c.l.b16 %v352
    %v1248 = vunpack.c.l.b16 %v353
    %v1249 = vunpack.c.l.b16 %v354
    %v1250 = vunpack.c.l.b16 %v355
    %v1251 = vunpack.c.l.b16 %v356
    %v1252 = vunpack.c.l.b16 %v357
    %v1253 = vunpack.c.l.b16 %v358
    %v1254 = vunpack.c.l.b16 %v359
    %v1255 = vunpack.c.l.b16 %v360
    %v1256 = vunpack.c.l.b16 %v361
    %v1257 = vunpack.c.l.b16 %v362
    %v1258 = vunpack.c.l.b16 %v363
    %v1259 = vunpack.c.l.b16 %v364
    %v1260 = vunpack.c.l.b16 %v365
    %v1261 = vunpack.c.l.b16 %v366
    %v1262 = vunpack.c.l.b16 %v367
    %v1263 = vunpack.c.l.b16 %v368
    %v1264 = vunpack.c.l.b16 %v369
    %v1265 = vunpack.c.l.b16 %v370
    %v1266 = vunpack.c.l.b16 %v371
    %v1267 = vunpack.c.l.b16 %v372
    %v1268 = vunpack.c.l.b16 %v373
    %v1269 = vunpack.c.l.b16 %v374
    %v1270 = vunpack.c.l.b16 %v375
    %v1271 = vunpack.c.l.b16 %v376
    %v1272 = vunpack.c.l.b16 %v377
    %v1273 = vunpack.c.l.b16 %v378
    %v1274 = vunpack.c.l.b16 %v379
    %v1275 = vunpack.c.l.b16 %v380
    %v1276 = vunpack.c.l.b16 %v381
    %v1277 = vunpack.c.l.b16 %v382
    %v1278 = vunpack.c.l.b16 %v383
    %v1279 = vunpack.c.l.b16 %v384
    %v1280 = vunpack.c.l.b16 %v385
    %v1281 = vunpack.c.l.b16 %v386
    %v1282 = vunpack.c.l.b16 %v387
    %v1283 = vunpack.c.l.b16 %v388
    %v1284 = vunpack.c.l.b16 %v389
    %v1285 = vunpack.c.l.b16 %v390
    %v1286 = vunpack.c.l.b16 %v391
    %v1287 = vunpack.c.l.b16 %v392
    %v1288 = vunpack.c.l.b16 %v393
    %v1289 = vunpack.c.l.b16 %v394
    %v1290 = vunpack.c.l.b16 %v395
    %v1291 = vunpack.c.l.b16 %v396
    %v1292 = vunpack.c.l.b16 %v397
    %v1293 = vunpack.c.l.b16 %v398
    %v1294 = vunpack.c.l.b16 %v399
    %v1295 = vunpack.c.l.b16 %v400
    %v1296 = vunpack.c.l.b16 %v401
    %v1297 = vunpack.c.l.b16 %v402
    %v1298 = vunpack.c.l.b16 %v403
    %v1299 = vunpack.c.l.b16 %v404
    %v1300 = vunpack.c.l.b16 %v405
    %v1301 = vunpack.c.l.b16 %v406
    %v1302 = vunpack.c.l.b16 %v407
    %v1303 = vunpack.c.l.b16 %v408
    %v1304 = vunpack.c.l.b16 %v409
    %v1305 = vunpack.c.l.b16 %v410
    %v1306 = vunpack.c.l.b16 %v411
    %v1307 = vunpack.c.l.b16 %v412
    %v1308 = vunpack.c.l.b16 %v413
    %v1309 = vunpack.c.l.b16 %v414
    %v1310 = vunpack.c.l.b16 %v415
    %v1311 = vunpack.c.l.b16 %v416
    %v1312 = vunpack.c.l.b16 %v417
    %v1313 = vunpack.c.l.b16 %v418
    %v1314 = vunpack.c.l.b16 %v419
    %v1315 = vunpack.c.l.b16 %v420
    %v1316 = vunpack.c.l.b16 %v421
    %v1317 = vunpack.c.l.b16 %v422
    %v1318 = vunpack.c.l.b16 %v423
    %v1319 = vunpack.c.l.b16 %v424
    %v1320 = vunpack.c.l.b16 %v425
    %v1321 = vunpack.c.l.b16 %v426
    %v1322 = vunpack.c.l.b16 %v427
    %v1323 = vunpack.c.l.b16 %v428
    %v1324 = vunpack.c.l.b16 %v429
    %v1325 = vunpack.c.l.b16 %v430
    %v1326 = vunpack.c.l.b16 %v431
    %v1327 = vunpack.c.l.b16 %v432
    %v1328 = vunpack.c.l.b16 %v433
    %v1329 = vunpack.c.l.b16 %v434
    %v1330 = vunpack.c.l.b16 %v435
    %v1331 = vunpack.c.l.b16 %v436
    %v1332 = vunpack.c.l.b16 %v437
    %v1333 = vunpack.c.l.b16 %v438
    %v1334 = vunpack.c.l.b16 %v439
    %v1335 = vunpack.c.l.b16 %v440
    %v1336 = vpack.c.b16 %v937, %v936
    %v1337 = vpack.c.b16 %v939, %v938
    %v1338 = vpack.c.b16 %v941, %v940
    %v1339 = vpack.c.b16 %v943, %v942
    %v1340 = vpack.c.b16 %v945, %v944
    %v1341 = vpack.c.b16 %v947, %v946
    %v1342 = vpack.c.b16 %v949, %v948
    %v1343 = vpack.c.b16 %v951, %v950
    %v1344 = vpack.c.b16 %v953, %v952
    %v1345 = vpack.c.b16 %v955, %v954
    %v1346 = vpack.c.b16 %v957, %v956
    %v1347 = vpack.c.b16 %v959, %v958
    %v1348 = vpack.c.b16 %v961, %v960
    %v1349 = vpack.c.b16 %v963, %v962
    %v1350 = vpack.c.b16 %v965, %v964
    %v1351 = vpack.c.b16 %v967, %v966
    %v1352 = vpack.c.b16 %v969, %v968
    %v1353 = vpack.c.b16 %v971, %v970
    %v1354 = vpack.c.b16 %v973, %v972
    %v1355 = vpack.c.b16 %v975, %v974
    %v1356 = vpack.c.b16 %v977, %v976
    %v1357 = vpack.c.b16 %v979, %v978
    %v1358 = vpack.c.b16 %v981, %v980
    %v1359 = vpack.c.b16 %v983, %v982
    %v1360 = vpack.c.b16 %v985, %v984
    %v1361 = vpack.c.b16 %v987, %v986
    %v1362 = vpack.c.b16 %v989, %v988
    %v1363 = vpack.c.b16 %v991, %v990
    %v1364 = vpack.c.b16 %v993, %v992
    %v1365 = vpack.c.b16 %v995, %v994
    %v1366 = vpack.c.b16 %v997, %v996
    %v1367 = vpack.c.b16 %v999, %v998
    %v1368 = vpack.c.b16 %v1001, %v1000
    %v1369 = vpack.c.b16 %v1003, %v1002
    %v1370 = vpack.c.b16 %v1005, %v1004
    %v1371 = vpack.c.b16 %v1007, %v1006
    %v1372 = vpack.c.b16 %v1009, %v1008
    %v1373 = vpack.c.b16 %v1011, %v1010
    %v1374 = vpack.c.b16 %v1013, %v1012
    %v1375 = vpack.c.b16 %v1015, %v1014
    %v1376 = vpack.c.b16 %v1017, %v1016
    %v1377 = vpack.c.b16 %v1019, %v1018
    %v1378 = vpack.c.b16 %v1021, %v1020
    %v1379 = vpack.c.b16 %v1023, %v1022
    %v1380 = vpack.c.b16 %v1025, %v1024
    %v1381 = vpack.c.b16 %v1027, %v1026
    %v1382 = vpack.c.b16 %v1029, %v1028
    %v1383 = vpack.c.b16 %v1031, %v1030
    %v1384 = vpack.c.b16 %v1033, %v1032
    %v1385 = vpack.c.b16 %v1035, %v1034
    %v1386 = vpack.c.b16 %v1037, %v1036
    %v1387 = vpack.c.b16 %v1039, %v1038
    %v1388 = vpack.c.b16 %v1041, %v1040
    %v1389 = vpack.c.b16 %v1043, %v1042
    %v1390 = vpack.c.b16 %v1045, %v1044
    %v1391 = vpack.c.b16 %v1047, %v1046
    %v1392 = vpack.c.b16 %v1049, %v1048
    %v1393 = vpack.c.b16 %v1051, %v1050
    %v1394 = vpack.c.b16 %v1053, %v1052
    %v1395 = vpack.c.b16 %v1055, %v1054
    %v1396 = vpack.c.b16 %v1057, %v1056
    %v1397 = vpack.c.b16 %v1059, %v1058
    %v1398 = vpack.c.b16 %v1061, %v1060
    %v1399 = vpack.c.b16 %v1063, %v1062
    %v1400 = vpack.c.b16 %v1065, %v1064
    %v1401 = vpack.c.b16 %v1067, %v1066
    %v1402 = vpack.c.b16 %v1069, %v1068
    %v1403 = vpack.c.b16 %v1071, %v1070
    %v1404 = vpack.c.b16 %v1073, %v1072
    %v1405 = vpack.c.b16 %v1075, %v1074
    %v1406 = vpack.c.b16 %v1077, %v1076
    %v1407 = vpack.c.b16 %v1079, %v1078
    %v1408 = vpack.c.b16 %v1081, %v1080
    %v1409 = vpack.c.b16 %v1083, %v1082
    %v1410 = vpack.c.b16 %v1085, %v1084
    %v1411 = vpack.c.b16 %v1087, %v1086
    %v1412 = vpack.c.b16 %v1089, %v1088
    %v1413 = vpack.c.b16 %v1091, %v1090
    %v1414 = vpack.c.b16 %v1093, %v1092
    %v1415 = vpack.c.b16 %v1095, %v1094
    %v1416 = vpack.c.b16 %v1097, %v1096
    %v1417 = vpack.c.b16 %v1099, %v1098
    %v1418 = vpack.c.b16 %v1101, %v1100
    %v1419 = vpack.c.b16 %v1103, %v1102
    %v1420 = vpack.c.b16 %v1105, %v1104
    %v1421 = vpack.c.b16 %v1107, %v1106
    %v1422 = vpack.c.b16 %v1109, %v1108
    %v1423 = vpack.c.b16 %v1111, %v1110
    %v1424 = vpack.c.b16 %v1113, %v1112
    %v1425 = vpack.c.b16 %v1115, %v1114
    %v1426 = vpack.c.b16 %v1117, %v1116
    %v1427 = vpack.c.b16 %v1119, %v1118
    %v1428 = vpack.c.b16 %v1121, %v1120
    %v1429 = vpack.c.b16 %v1123, %v1122
    %v1430 = vpack.c.b16 %v1125, %v1124
    %v1431 = vpack.c.b16 %v1127, %v1126
    %v1432 = vpack.c.b16 %v1129, %v1128
    %v1433 = vpack.c.b16 %v1131, %v1130
    %v1434 = vpack.c.b16 %v1133, %v1132
    %v1435 = vpack.c.b16 %v1135, %v1134
    %v1436 = vpack.c.b16 %v1137, %v1136
    %v1437 = vpack.c.b16 %v1139, %v1138
    %v1438 = vpack.c.b16 %v1141, %v1140
    %v1439 = vpack.c.b16 %v1143, %v1142
    %v1440 = vpack.c.b16 %v1145, %v1144
    %v1441 = vpack.c.b16 %v1147, %v1146
    %v1442 = vpack.c.b16 %v1149, %v1148
    %v1443 = vpack.c.b16 %v1151, %v1150
    %v1444 = vpack.c.b16 %v1153, %v1152
    %v1445 = vpack.c.b16 %v1155, %v1154
    %v1446 = vpack.c.b16 %v1157, %v1156
    %v1447 = vpack.c.b16 %v1159, %v1158
    %v1448 = vpack.c.b16 %v1161, %v1160
    %v1449 = vpack.c.b16 %v1163, %v1162
    %v1450 = vpack.c.b16 %v1165, %v1164
    %v1451 = vpack.c.b16 %v1167, %v1166
    %v1452 = vpack.c.b16 %v1169, %v1168
    %v1453 = vpack.c.b16 %v1171, %v1170
    %v1454 = vpack.c.b16 %v1173, %v1172
    %v1455 = vpack.c.b16 %v1175, %v1174
    %v1456 = vpack.c.b16 %v1177, %v1176
    %v1457 = vpack.c.b16 %v1179, %v1178
    %v1458 = vpack.c.b16 %v1181, %v1180
    %v1459 = vpack.c.b16 %v1183, %v1182
    %v1460 = vpack.c.b16 %v1185, %v1184
    %v1461 = vpack.c.b16 %v1187, %v1186
    %v1462 = vpack.c.b16 %v1189, %v1188
    %v1463 = vpack.c.b16 %v1191, %v1190
    %v1464 = vpack.c.b16 %v1193, %v1192
    %v1465 = vpack.c.b16 %v1195, %v1194
    %v1466 = vpack.c.b16 %v1197, %v1196
    %v1467 = vpack.c.b16 %v1199, %v1198
    %v1468 = vpack.c.b16 %v1201, %v1200
    %v1469 = vpack.c.b16 %v1203, %v1202
    %v1470 = vpack.c.b16 %v1205, %v1204
    %v1471 = vpack.c.b16 %v1207, %v1206
    %v1472 = vpack.c.b16 %v1209, %v1208
    %v1473 = vpack.c.b16 %v1211, %v1210
    %v1474 = vpack.c.b16 %v1213, %v1212
    %v1475 = vpack.c.b16 %v1215, %v1214
    %v1476 = vpack.c.b16 %v1217, %v1216
    %v1477 = vpack.c.b16 %v1219, %v1218
    %v1478 = vpack.c.b16 %v1221, %v1220
    %v1479 = vpack.c.b16 %v1223, %v1222
    %v1480 = vpack.c.b16 %v1225, %v1224
    %v1481 = vpack.c.b16 %v1227, %v1226
    %v1482 = vpack.c.b16 %v1229, %v1228
    %v1483 = vpack.c.b16 %v1231, %v1230
    %v1484 = vpack.c.b16 %v1233, %v1232
    %v1485 = vpack.c.b16 %v1235, %v1234
    %v1486 = vpack.c.b16 %v1237, %v1236
    %v1487 = vpack.c.b16 %v1239, %v1238
    %v1488 = vpack.c.b16 %v1241, %v1240
    %v1489 = vpack.c.b16 %v1243, %v1242
    %v1490 = vpack.c.b16 %v1245, %v1244
    %v1491 = vpack.c.b16 %v1247, %v1246
    %v1492 = vpack.c.b16 %v1249, %v1248
    %v1493 = vpack.c.b16 %v1251, %v1250
    %v1494 = vpack.c.b16 %v1253, %v1252
    %v1495 = vpack.c.b16 %v1255, %v1254
    %v1496 = vpack.c.b16 %v1257, %v1256
    %v1497 = vpack.c.b16 %v1259, %v1258
    %v1498 = vpack.c.b16 %v1261, %v1260
    %v1499 = vpack.c.b16 %v1263, %v1262
    %v1500 = vpack.c.b16 %v1265, %v1264
    %v1501 = vpack.c.b16 %v1267, %v1266
    %v1502 = vpack.c.b16 %v1269, %v1268
    %v1503 = vpack.c.b16 %v1271, %v1270
    %v1504 = vpack.c.b16 %v1273, %v1272
    %v1505 = vpack.c.b16 %v1275, %v1274
    %v1506 = vpack.c.b16 %v1277, %v1276
    %v1507 = vpack.c.b16 %v1279, %v1278
    %v1508 = vpack.c.b16 %v1281, %v1280
    %v1509 = vpack.c.b16 %v1283, %v1282
    %v1510 = vpack.c.b16 %v1285, %v1284
    %v1511 = vpack.c.b16 %v1287, %v1286
    %v1512 = vpack.c.b16 %v1289, %v1288
    %v1513 = vpack.c.b16 %v1291, %v1290
    %v1514 = vpack.c.b16 %v1293, %v1292
    %v1515 = vpack.c.b16 %v1295, %v1294
    %v1516 = vpack.c.b16 %v1297, %v1296
    %v1517 = vpack.c.b16 %v1299, %v1298
    %v1518 = vpack.c.b16 %v1301, %v1300
    %v1519 = vpack.c.b16 %v1303, %v1302
    %v1520 = vpack.c.b16 %v1305, %v1304
    %v1521 = vpack.c.b16 %v1307, %v1306
    %v1522 = vpack.c.b16 %v1309, %v1308
    %v1523 = vpack.c.b16 %v1311, %v1310
    %v1524 = vpack.c.b16 %v1313, %v1312
    %v1525 = vpack.c.b16 %v1315, %v1314
    %v1526 = vpack.c.b16 %v1317, %v1316
    %v1527 = vpack.c.b16 %v1319, %v1318
    %v1528 = vpack.c.b16 %v1321, %v1320
    %v1529 = vpack.c.b16 %v1323, %v1322
    %v1530 = vpack.c.b16 %v1325, %v1324
    %v1531 = vpack.c.b16 %v1327, %v1326
    %v1532 = vpack.c.b16 %v1329, %v1328
    %v1533 = vpack.c.b16 %v1331, %v1330
    %v1534 = vpack.c.b16 %v1333, %v1332
    %v1535 = vpack.c.b16 %v1335, %v1334
    %1736 = vmatprep.subr.bf16.mxu0 0
    %1737 = vmatpush1.bf16.msra.mxu0 %v1336
    %1738 = vmatprep.subr.bf16.mxu0 0
    %1739 = vmatpush1.bf16.msra.mxu0 %v1337
    %1740 = vmatprep.subr.bf16.mxu0 0
    %1741 = vmatpush1.bf16.msra.mxu0 %v1338
    %1742 = vmatprep.subr.bf16.mxu0 0
    %1743 = vmatpush1.bf16.msra.mxu0 %v1339
    %1744 = vmatprep.subr.bf16.mxu0 0
    %1745 = vmatpush1.bf16.msra.mxu0 %v1340
    %1746 = vmatprep.subr.bf16.mxu0 0
    %1747 = vmatpush1.bf16.msra.mxu0 %v1341
    %1748 = vmatprep.subr.bf16.mxu0 0
    %1749 = vmatpush1.bf16.msra.mxu0 %v1342
    %1750 = vmatprep.subr.bf16.mxu0 0
    %1751 = vmatpush1.bf16.msra.mxu0 %v1343
    %1752 = vmatprep.subr.bf16.mxu0 0
    %1753 = vmatpush1.bf16.msra.mxu0 %v1344
    %1754 = vmatprep.subr.bf16.mxu0 0
    %1755 = vmatpush1.bf16.msra.mxu0 %v1345
    %1756 = vmatprep.subr.bf16.mxu0 0
    %1757 = vmatpush1.bf16.msra.mxu0 %v1346
    %1758 = vmatprep.subr.bf16.mxu0 0
    %1759 = vmatpush1.bf16.msra.mxu0 %v1347
    %1760 = vmatprep.subr.bf16.mxu0 0
    %1761 = vmatpush1.bf16.msra.mxu0 %v1348
    %1762 = vmatprep.subr.bf16.mxu0 0
    %1763 = vmatpush1.bf16.msra.mxu0 %v1349
    %1764 = vmatprep.subr.bf16.mxu0 0
    %1765 = vmatpush1.bf16.msra.mxu0 %v1350
    %1766 = vmatprep.subr.bf16.mxu0 0
    %1767 = vmatpush1.bf16.msra.mxu0 %v1351
    %1768 = vmatprep.mubr.bf16.mxu0 %v487
    %1769 = vmatmul.mubr.bf16.gmra.mrb[0].mxu0 %v486
    %v1770 = vpop.f32.mrb[0].mxu0
    %v1771 = vadd.f32 %v446, %v1770
    %v1772 = vpop.f32.mrb[0].mxu0
    %v1773 = vpop.f32.mrb[0].mxu0
    %v1774 = vpop.f32.mrb[0].mxu0
    %1775 = vdwg.mxu0
    %1776 = vmatprep.subr.bf16.mxu0 0
    %1777 = vmatpush1.bf16.msra.mxu0 %v1352
    %1778 = vmatprep.subr.bf16.mxu0 0
    %1779 = vmatpush1.bf16.msra.mxu0 %v1353
    %1780 = vmatprep.subr.bf16.mxu0 0
    %1781 = vmatpush1.bf16.msra.mxu0 %v1354
    %1782 = vmatprep.subr.bf16.mxu0 0
    %1783 = vmatpush1.bf16.msra.mxu0 %v1355
    %1784 = vmatprep.subr.bf16.mxu0 0
    %1785 = vmatpush1.bf16.msra.mxu0 %v1356
    %1786 = vmatprep.subr.bf16.mxu0 0
    %1787 = vmatpush1.bf16.msra.mxu0 %v1357
    %1788 = vmatprep.subr.bf16.mxu0 0
    %1789 = vmatpush1.bf16.msra.mxu0 %v1358
    %1790 = vmatprep.subr.bf16.mxu0 0
    %1791 = vmatpush1.bf16.msra.mxu0 %v1359
    %1792 = vmatprep.subr.bf16.mxu0 0
    %1793 = vmatpush1.bf16.msra.mxu0 %v1360
    %1794 = vmatprep.subr.bf16.mxu0 0
    %1795 = vmatpush1.bf16.msra.mxu0 %v1361
    %1796 = vmatprep.subr.bf16.mxu0 0
    %1797 = vmatpush1.bf16.msra.mxu0 %v1362
    %1798 = vmatprep.subr.bf16.mxu0 0
    %1799 = vmatpush1.bf16.msra.mxu0 %v1363
    %1800 = vmatprep.subr.bf16.mxu0 0
    %1801 = vmatpush1.bf16.msra.mxu0 %v1364
    %1802 = vmatprep.subr.bf16.mxu0 0
    %1803 = vmatpush1.bf16.msra.mxu0 %v1365
    %1804 = vmatprep.subr.bf16.mxu0 0
    %1805 = vmatpush1.bf16.msra.mxu0 %v1366
    %1806 = vmatprep.subr.bf16.mxu0 0
    %1807 = vmatpush1.bf16.msra.mxu0 %v1367
    %1808 = vmatprep.mubr.bf16.mxu0 %v489
    %1809 = vmatmul.mubr.bf16.gmra.mrb[0].mxu0 %v488
    %v1810 = vpop.f32.mrb[0].mxu0
    %v1811 = vadd.f32 %v1771, %v1810
    %v1812 = vpop.f32.mrb[0].mxu0
    %v1813 = vpop.f32.mrb[0].mxu0
    %v1814 = vpop.f32.mrb[0].mxu0
    %1815 = vdwg.mxu0
    %1816 = vmatprep.subr.bf16.mxu0 0
    %1817 = vmatpush1.bf16.msra.mxu0 %v1368
    %1818 = vmatprep.subr.bf16.mxu0 0
    %1819 = vmatpush1.bf16.msra.mxu0 %v1369
    %1820 = vmatprep.subr.bf16.mxu0 0
    %1821 = vmatpush1.bf16.msra.mxu0 %v1370
    %1822 = vmatprep.subr.bf16.mxu0 0
    %1823 = vmatpush1.bf16.msra.mxu0 %v1371
    %1824 = vmatprep.subr.bf16.mxu0 0
    %1825 = vmatpush1.bf16.msra.mxu0 %v1372
    %1826 = vmatprep.subr.bf16.mxu0 0
    %1827 = vmatpush1.bf16.msra.mxu0 %v1373
    %1828 = vmatprep.subr.bf16.mxu0 0
    %1829 = vmatpush1.bf16.msra.mxu0 %v1374
    %1830 = vmatprep.subr.bf16.mxu0 0
    %1831 = vmatpush1.bf16.msra.mxu0 %v1375
    %1832 = vmatprep.subr.bf16.mxu0 0
    %1833 = vmatpush1.bf16.msra.mxu0 %v1376
    %1834 = vmatprep.subr.bf16.mxu0 0
    %1835 = vmatpush1.bf16.msra.mxu0 %v1377
    %1836 = vmatprep.subr.bf16.mxu0 0
    %1837 = vmatpush1.bf16.msra.mxu0 %v1378
    %1838 = vmatprep.subr.bf16.mxu0 0
    %1839 = vmatpush1.bf16.msra.mxu0 %v1379
    %1840 = vmatprep.subr.bf16.mxu0 0
    %1841 = vmatpush1.bf16.msra.mxu0 %v1380
    %1842 = vmatprep.subr.bf16.mxu0 0
    %1843 = vmatpush1.bf16.msra.mxu0 %v1381
    %1844 = vmatprep.subr.bf16.mxu0 0
    %1845 = vmatpush1.bf16.msra.mxu0 %v1382
    %1846 = vmatprep.subr.bf16.mxu0 0
    %1847 = vmatpush1.bf16.msra.mxu0 %v1383
    %1848 = vmatprep.mubr.bf16.mxu0 %v491
    %1849 = vmatmul.mubr.bf16.gmra.mrb[0].mxu0 %v490
    %v1850 = vpop.f32.mrb[0].mxu0
    %v1851 = vadd.f32 %v1811, %v1850
    %v1852 = vpop.f32.mrb[0].mxu0
    %v1853 = vpop.f32.mrb[0].mxu0
    %v1854 = vpop.f32.mrb[0].mxu0
    %1855 = vdwg.mxu0
    %1856 = vmatprep.subr.bf16.mxu0 0
    %1857 = vmatpush1.bf16.msra.mxu0 %v1384
    %1858 = vmatprep.subr.bf16.mxu0 0
    %1859 = vmatpush1.bf16.msra.mxu0 %v1385
    %1860 = vmatprep.subr.bf16.mxu0 0
    %1861 = vmatpush1.bf16.msra.mxu0 %v1386
    %1862 = vmatprep.subr.bf16.mxu0 0
    %1863 = vmatpush1.bf16.msra.mxu0 %v1387
    %1864 = vmatprep.subr.bf16.mxu0 0
    %1865 = vmatpush1.bf16.msra.mxu0 %v1388
    %1866 = vmatprep.subr.bf16.mxu0 0
    %1867 = vmatpush1.bf16.msra.mxu0 %v1389
    %1868 = vmatprep.subr.bf16.mxu0 0
    %1869 = vmatpush1.bf16.msra.mxu0 %v1390
    %1870 = vmatprep.subr.bf16.mxu0 0
    %1871 = vmatpush1.bf16.msra.mxu0 %v1391
    %1872 = vmatprep.subr.bf16.mxu0 0
    %1873 = vmatpush1.bf16.msra.mxu0 %v1392
    %1874 = vmatprep.subr.bf16.mxu0 0
    %1875 = vmatpush1.bf16.msra.mxu0 %v1393
    %1876 = vmatprep.subr.bf16.mxu0 0
    %1877 = vmatpush1.bf16.msra.mxu0 %v1394
    %1878 = vmatprep.subr.bf16.mxu0 0
    %1879 = vmatpush1.bf16.msra.mxu0 %v1395
    %1880 = vmatprep.subr.bf16.mxu0 0
    %1881 = vmatpush1.bf16.msra.mxu0 %v1396
    %1882 = vmatprep.subr.bf16.mxu0 0
    %1883 = vmatpush1.bf16.msra.mxu0 %v1397
    %1884 = vmatprep.subr.bf16.mxu0 0
    %1885 = vmatpush1.bf16.msra.mxu0 %v1398
    %1886 = vmatprep.subr.bf16.mxu0 0
    %1887 = vmatpush1.bf16.msra.mxu0 %v1399
    %1888 = vmatprep.mubr.bf16.mxu0 %v493
    %1889 = vmatmul.mubr.bf16.gmra.mrb[0].mxu0 %v492
    %v1890 = vpop.f32.mrb[0].mxu0
    %v1891 = vadd.f32 %v1851, %v1890
    %v1892 = vpop.f32.mrb[0].mxu0
    %v1893 = vpop.f32.mrb[0].mxu0
    %v1894 = vpop.f32.mrb[0].mxu0
    %1895 = vdwg.mxu0
    %1896 = vmatprep.subr.bf16.mxu0 0
    %1897 = vmatpush1.bf16.msra.mxu0 %v1400
    %1898 = vmatprep.subr.bf16.mxu0 0
    %1899 = vmatpush1.bf16.msra.mxu0 %v1401
    %1900 = vmatprep.subr.bf16.mxu0 0
    %1901 = vmatpush1.bf16.msra.mxu0 %v1402
    %1902 = vmatprep.subr.bf16.mxu0 0
    %1903 = vmatpush1.bf16.msra.mxu0 %v1403
    %1904 = vmatprep.subr.bf16.mxu0 0
    %1905 = vmatpush1.bf16.msra.mxu0 %v1404
    %1906 = vmatprep.subr.bf16.mxu0 0
    %1907 = vmatpush1.bf16.msra.mxu0 %v1405
    %1908 = vmatprep.subr.bf16.mxu0 0
    %1909 = vmatpush1.bf16.msra.mxu0 %v1406
    %1910 = vmatprep.subr.bf16.mxu0 0
    %1911 = vmatpush1.bf16.msra.mxu0 %v1407
    %1912 = vmatprep.subr.bf16.mxu0 0
    %1913 = vmatpush1.bf16.msra.mxu0 %v1408
    %1914 = vmatprep.subr.bf16.mxu0 0
    %1915 = vmatpush1.bf16.msra.mxu0 %v1409
    %1916 = vmatprep.subr.bf16.mxu0 0
    %1917 = vmatpush1.bf16.msra.mxu0 %v1410
    %1918 = vmatprep.subr.bf16.mxu0 0
    %1919 = vmatpush1.bf16.msra.mxu0 %v1411
    %1920 = vmatprep.subr.bf16.mxu0 0
    %1921 = vmatpush1.bf16.msra.mxu0 %v1412
    %1922 = vmatprep.subr.bf16.mxu0 0
    %1923 = vmatpush1.bf16.msra.mxu0 %v1413
    %1924 = vmatprep.subr.bf16.mxu0 0
    %1925 = vmatpush1.bf16.msra.mxu0 %v1414
    %1926 = vmatprep.subr.bf16.mxu0 0
    %1927 = vmatpush1.bf16.msra.mxu0 %v1415
    %1928 = vmatprep.mubr.bf16.mxu0 %v495
    %1929 = vmatmul.mubr.bf16.gmra.mrb[0].mxu0 %v494
    %v1930 = vpop.f32.mrb[0].mxu0
    %v1931 = vadd.f32 %v1891, %v1930
    %v1932 = vpop.f32.mrb[0].mxu0
    %v1933 = vpop.f32.mrb[0].mxu0
    %v1934 = vpop.f32.mrb[0].mxu0
    %1935 = vdwg.mxu0
    %1936 = vmatprep.subr.bf16.mxu0 0
    %1937 = vmatpush1.bf16.msra.mxu0 %v1416
    %1938 = vmatprep.subr.bf16.mxu0 0
    %1939 = vmatpush1.bf16.msra.mxu0 %v1417
    %1940 = vmatprep.subr.bf16.mxu0 0
    %1941 = vmatpush1.bf16.msra.mxu0 %v1418
    %1942 = vmatprep.subr.bf16.mxu0 0
    %1943 = vmatpush1.bf16.msra.mxu0 %v1419
    %1944 = vmatprep.subr.bf16.mxu0 0
    %1945 = vmatpush1.bf16.msra.mxu0 %v1420
    %1946 = vmatprep.subr.bf16.mxu0 0
    %1947 = vmatpush1.bf16.msra.mxu0 %v1421
    %1948 = vmatprep.subr.bf16.mxu0 0
    %1949 = vmatpush1.bf16.msra.mxu0 %v1422
    %1950 = vmatprep.subr.bf16.mxu0 0
    %1951 = vmatpush1.bf16.msra.mxu0 %v1423
    %1952 = vmatprep.subr.bf16.mxu0 0
    %1953 = vmatpush1.bf16.msra.mxu0 %v1424
    %1954 = vmatprep.subr.bf16.mxu0 0
    %1955 = vmatpush1.bf16.msra.mxu0 %v1425
    %1956 = vmatprep.subr.bf16.mxu0 0
    %1957 = vmatpush1.bf16.msra.mxu0 %v1426
    %1958 = vmatprep.subr.bf16.mxu0 0
    %1959 = vmatpush1.bf16.msra.mxu0 %v1427
    %1960 = vmatprep.subr.bf16.mxu0 0
    %1961 = vmatpush1.bf16.msra.mxu0 %v1428
    %1962 = vmatprep.subr.bf16.mxu0 0
    %1963 = vmatpush1.bf16.msra.mxu0 %v1429
    %1964 = vmatprep.subr.bf16.mxu0 0
    %1965 = vmatpush1.bf16.msra.mxu0 %v1430
    %1966 = vmatprep.subr.bf16.mxu0 0
    %1967 = vmatpush1.bf16.msra.mxu0 %v1431
    %1968 = vmatprep.mubr.bf16.mxu0 %v497
    %1969 = vmatmul.mubr.bf16.gmra.mrb[0].mxu0 %v496
    %v1970 = vpop.f32.mrb[0].mxu0
    %v1971 = vadd.f32 %v1931, %v1970
    %v1972 = vpop.f32.mrb[0].mxu0
    %v1973 = vpop.f32.mrb[0].mxu0
    %v1974 = vpop.f32.mrb[0].mxu0
    %1975 = vdwg.mxu0
    %1976 = vmatprep.subr.bf16.mxu0 0
    %1977 = vmatpush1.bf16.msra.mxu0 %v1432
    %1978 = vmatprep.subr.bf16.mxu0 0
    %1979 = vmatpush1.bf16.msra.mxu0 %v1433
    %1980 = vmatprep.subr.bf16.mxu0 0
    %1981 = vmatpush1.bf16.msra.mxu0 %v1434
    %1982 = vmatprep.subr.bf16.mxu0 0
    %1983 = vmatpush1.bf16.msra.mxu0 %v1435
    %1984 = vmatprep.subr.bf16.mxu0 0
    %1985 = vmatpush1.bf16.msra.mxu0 %v1436
    %1986 = vmatprep.subr.bf16.mxu0 0
    %1987 = vmatpush1.bf16.msra.mxu0 %v1437
    %1988 = vmatprep.subr.bf16.mxu0 0
    %1989 = vmatpush1.bf16.msra.mxu0 %v1438
    %1990 = vmatprep.subr.bf16.mxu0 0
    %1991 = vmatpush1.bf16.msra.mxu0 %v1439
    %1992 = vmatprep.subr.bf16.mxu0 0
    %1993 = vmatpush1.bf16.msra.mxu0 %v1440
    %1994 = vmatprep.subr.bf16.mxu0 0
    %1995 = vmatpush1.bf16.msra.mxu0 %v1441
    %1996 = vmatprep.subr.bf16.mxu0 0
    %1997 = vmatpush1.bf16.msra.mxu0 %v1442
    %1998 = vmatprep.subr.bf16.mxu0 0
    %1999 = vmatpush1.bf16.msra.mxu0 %v1443
    %2000 = vmatprep.subr.bf16.mxu0 0
    %2001 = vmatpush1.bf16.msra.mxu0 %v1444
    %2002 = vmatprep.subr.bf16.mxu0 0
    %2003 = vmatpush1.bf16.msra.mxu0 %v1445
    %2004 = vmatprep.subr.bf16.mxu0 0
    %2005 = vmatpush1.bf16.msra.mxu0 %v1446
    %2006 = vmatprep.subr.bf16.mxu0 0
    %2007 = vmatpush1.bf16.msra.mxu0 %v1447
    %2008 = vmatprep.mubr.bf16.mxu0 %v499
    %2009 = vmatmul.mubr.bf16.gmra.mrb[0].mxu0 %v498
    %v2010 = vpop.f32.mrb[0].mxu0
    %v2011 = vadd.f32 %v1971, %v2010
    %v2012 = vpop.f32.mrb[0].mxu0
    %v2013 = vpop.f32.mrb[0].mxu0
    %v2014 = vpop.f32.mrb[0].mxu0
    %2015 = vdwg.mxu0
    %2016 = vmatprep.subr.bf16.mxu0 0
    %2017 = vmatpush1.bf16.msra.mxu0 %v1448
    %2018 = vmatprep.subr.bf16.mxu0 0
    %2019 = vmatpush1.bf16.msra.mxu0 %v1449
    %2020 = vmatprep.subr.bf16.mxu0 0
    %2021 = vmatpush1.bf16.msra.mxu0 %v1450
    %2022 = vmatprep.subr.bf16.mxu0 0
    %2023 = vmatpush1.bf16.msra.mxu0 %v1451
    %2024 = vmatprep.subr.bf16.mxu0 0
    %2025 = vmatpush1.bf16.msra.mxu0 %v1452
    %2026 = vmatprep.subr.bf16.mxu0 0
    %2027 = vmatpush1.bf16.msra.mxu0 %v1453
    %2028 = vmatprep.subr.bf16.mxu0 0
    %2029 = vmatpush1.bf16.msra.mxu0 %v1454
    %2030 = vmatprep.subr.bf16.mxu0 0
    %2031 = vmatpush1.bf16.msra.mxu0 %v1455
    %2032 = vmatprep.subr.bf16.mxu0 0
    %2033 = vmatpush1.bf16.msra.mxu0 %v1456
    %2034 = vmatprep.subr.bf16.mxu0 0
    %2035 = vmatpush1.bf16.msra.mxu0 %v1457
    %2036 = vmatprep.subr.bf16.mxu0 0
    %2037 = vmatpush1.bf16.msra.mxu0 %v1458
    %2038 = vmatprep.subr.bf16.mxu0 0
    %2039 = vmatpush1.bf16.msra.mxu0 %v1459
    %2040 = vmatprep.subr.bf16.mxu0 0
    %2041 = vmatpush1.bf16.msra.mxu0 %v1460
    %2042 = vmatprep.subr.bf16.mxu0 0
    %2043 = vmatpush1.bf16.msra.mxu0 %v1461
    %2044 = vmatprep.subr.bf16.mxu0 0
    %2045 = vmatpush1.bf16.msra.mxu0 %v1462
    %2046 = vmatprep.subr.bf16.mxu0 0
    %2047 = vmatpush1.bf16.msra.mxu0 %v1463
    %2048 = vmatprep.mubr.bf16.mxu0 %v501
    %2049 = vmatmul.mubr.bf16.gmra.mrb[0].mxu0 %v500
    %v2050 = vpop.f32.mrb[0].mxu0
    %v2051 = vadd.f32 %v2011, %v2050
    %v2052 = vpop.f32.mrb[0].mxu0
    %v2053 = vpop.f32.mrb[0].mxu0
    %v2054 = vpop.f32.mrb[0].mxu0
    %2055 = vdwg.mxu0
    %2056 = vmatprep.subr.bf16.mxu0 0
    %2057 = vmatpush1.bf16.msra.mxu0 %v1464
    %2058 = vmatprep.subr.bf16.mxu0 0
    %2059 = vmatpush1.bf16.msra.mxu0 %v1465
    %2060 = vmatprep.subr.bf16.mxu0 0
    %2061 = vmatpush1.bf16.msra.mxu0 %v1466
    %2062 = vmatprep.subr.bf16.mxu0 0
    %2063 = vmatpush1.bf16.msra.mxu0 %v1467
    %2064 = vmatprep.subr.bf16.mxu0 0
    %2065 = vmatpush1.bf16.msra.mxu0 %v1468
    %2066 = vmatprep.subr.bf16.mxu0 0
    %2067 = vmatpush1.bf16.msra.mxu0 %v1469
    %2068 = vmatprep.subr.bf16.mxu0 0
    %2069 = vmatpush1.bf16.msra.mxu0 %v1470
    %2070 = vmatprep.subr.bf16.mxu0 0
    %2071 = vmatpush1.bf16.msra.mxu0 %v1471
    %2072 = vmatprep.subr.bf16.mxu0 0
    %2073 = vmatpush1.bf16.msra.mxu0 %v1472
    %2074 = vmatprep.subr.bf16.mxu0 0
    %2075 = vmatpush1.bf16.msra.mxu0 %v1473
    %2076 = vmatprep.subr.bf16.mxu0 0
    %2077 = vmatpush1.bf16.msra.mxu0 %v1474
    %2078 = vmatprep.subr.bf16.mxu0 0
    %2079 = vmatpush1.bf16.msra.mxu0 %v1475
    %2080 = vmatprep.subr.bf16.mxu0 0
    %2081 = vmatpush1.bf16.msra.mxu0 %v1476
    %2082 = vmatprep.subr.bf16.mxu0 0
    %2083 = vmatpush1.bf16.msra.mxu0 %v1477
    %2084 = vmatprep.subr.bf16.mxu0 0
    %2085 = vmatpush1.bf16.msra.mxu0 %v1478
    %2086 = vmatprep.subr.bf16.mxu0 0
    %2087 = vmatpush1.bf16.msra.mxu0 %v1479
    %2088 = vmatprep.mubr.bf16.mxu0 %v503
    %2089 = vmatmul.mubr.bf16.gmra.mrb[0].mxu0 %v502
    %v2090 = vpop.f32.mrb[0].mxu0
    %v2091 = vadd.f32 %v2051, %v2090
    %v2092 = vpop.f32.mrb[0].mxu0
    %v2093 = vpop.f32.mrb[0].mxu0
    %v2094 = vpop.f32.mrb[0].mxu0
    %2095 = vdwg.mxu0
    %2096 = vmatprep.subr.bf16.mxu0 0
    %2097 = vmatpush1.bf16.msra.mxu0 %v1480
    %2098 = vmatprep.subr.bf16.mxu0 0
    %2099 = vmatpush1.bf16.msra.mxu0 %v1481
    %2100 = vmatprep.subr.bf16.mxu0 0
    %2101 = vmatpush1.bf16.msra.mxu0 %v1482
    %2102 = vmatprep.subr.bf16.mxu0 0
    %2103 = vmatpush1.bf16.msra.mxu0 %v1483
    %2104 = vmatprep.subr.bf16.mxu0 0
    %2105 = vmatpush1.bf16.msra.mxu0 %v1484
    %2106 = vmatprep.subr.bf16.mxu0 0
    %2107 = vmatpush1.bf16.msra.mxu0 %v1485
    %2108 = vmatprep.subr.bf16.mxu0 0
    %2109 = vmatpush1.bf16.msra.mxu0 %v1486
    %2110 = vmatprep.subr.bf16.mxu0 0
    %2111 = vmatpush1.bf16.msra.mxu0 %v1487
    %2112 = vmatprep.subr.bf16.mxu0 0
    %2113 = vmatpush1.bf16.msra.mxu0 %v1488
    %2114 = vmatprep.subr.bf16.mxu0 0
    %2115 = vmatpush1.bf16.msra.mxu0 %v1489
    %2116 = vmatprep.subr.bf16.mxu0 0
    %2117 = vmatpush1.bf16.msra.mxu0 %v1490
    %2118 = vmatprep.subr.bf16.mxu0 0
    %2119 = vmatpush1.bf16.msra.mxu0 %v1491
    %2120 = vmatprep.subr.bf16.mxu0 0
    %2121 = vmatpush1.bf16.msra.mxu0 %v1492
    %2122 = vmatprep.subr.bf16.mxu0 0
    %2123 = vmatpush1.bf16.msra.mxu0 %v1493
    %2124 = vmatprep.subr.bf16.mxu0 0
    %2125 = vmatpush1.bf16.msra.mxu0 %v1494
    %2126 = vmatprep.subr.bf16.mxu0 0
    %2127 = vmatpush1.bf16.msra.mxu0 %v1495
    %2128 = vmatprep.mubr.bf16.mxu0 %v505
    %2129 = vmatmul.mubr.bf16.gmra.mrb[0].mxu0 %v504
    %v2130 = vpop.f32.mrb[0].mxu0
    %v2131 = vadd.f32 %v2091, %v2130
    %v2132 = vpop.f32.mrb[0].mxu0
    %v2133 = vpop.f32.mrb[0].mxu0
    %v2134 = vpop.f32.mrb[0].mxu0
    %2135 = vdwg.mxu0
    %2136 = vmatprep.subr.bf16.mxu0 0
    %2137 = vmatpush1.bf16.msra.mxu0 %v1496
    %2138 = vmatprep.subr.bf16.mxu0 0
    %2139 = vmatpush1.bf16.msra.mxu0 %v1497
    %2140 = vmatprep.subr.bf16.mxu0 0
    %2141 = vmatpush1.bf16.msra.mxu0 %v1498
    %2142 = vmatprep.subr.bf16.mxu0 0
    %2143 = vmatpush1.bf16.msra.mxu0 %v1499
    %2144 = vmatprep.subr.bf16.mxu0 0
    %2145 = vmatpush1.bf16.msra.mxu0 %v1500
    %2146 = vmatprep.subr.bf16.mxu0 0
    %2147 = vmatpush1.bf16.msra.mxu0 %v1501
    %2148 = vmatprep.subr.bf16.mxu0 0
    %2149 = vmatpush1.bf16.msra.mxu0 %v1502
    %2150 = vmatprep.subr.bf16.mxu0 0
    %2151 = vmatpush1.bf16.msra.mxu0 %v1503
    %2152 = vmatprep.subr.bf16.mxu0 0
    %2153 = vmatpush1.bf16.msra.mxu0 %v1504
    %2154 = vmatprep.subr.bf16.mxu0 0
    %2155 = vmatpush1.bf16.msra.mxu0 %v1505
    %2156 = vmatprep.subr.bf16.mxu0 0
    %2157 = vmatpush1.bf16.msra.mxu0 %v1506
    %2158 = vmatprep.subr.bf16.mxu0 0
    %2159 = vmatpush1.bf16.msra.mxu0 %v1507
    %2160 = vmatprep.subr.bf16.mxu0 0
    %2161 = vmatpush1.bf16.msra.mxu0 %v1508
    %2162 = vmatprep.subr.bf16.mxu0 0
    %2163 = vmatpush1.bf16.msra.mxu0 %v1509
    %2164 = vmatprep.subr.bf16.mxu0 0
    %2165 = vmatpush1.bf16.msra.mxu0 %v1510
    %2166 = vmatprep.subr.bf16.mxu0 0
    %2167 = vmatpush1.bf16.msra.mxu0 %v1511
    %2168 = vmatprep.mubr.bf16.mxu0 %v507
    %2169 = vmatmul.mubr.bf16.gmra.mrb[0].mxu0 %v506
    %v2170 = vpop.f32.mrb[0].mxu0
    %v2171 = vadd.f32 %v2131, %v2170
    %v2172 = vpop.f32.mrb[0].mxu0
    %v2173 = vpop.f32.mrb[0].mxu0
    %v2174 = vpop.f32.mrb[0].mxu0
    %2175 = vdwg.mxu0
    %2176 = vmatprep.subr.bf16.mxu0 0
    %2177 = vmatpush1.bf16.msra.mxu0 %v1512
    %2178 = vmatprep.subr.bf16.mxu0 0
    %2179 = vmatpush1.bf16.msra.mxu0 %v1513
    %2180 = vmatprep.subr.bf16.mxu0 0
    %2181 = vmatpush1.bf16.msra.mxu0 %v1514
    %2182 = vmatprep.subr.bf16.mxu0 0
    %2183 = vmatpush1.bf16.msra.mxu0 %v1515
    %2184 = vmatprep.subr.bf16.mxu0 0
    %2185 = vmatpush1.bf16.msra.mxu0 %v1516
    %2186 = vmatprep.subr.bf16.mxu0 0
    %2187 = vmatpush1.bf16.msra.mxu0 %v1517
    %2188 = vmatprep.subr.bf16.mxu0 0
    %2189 = vmatpush1.bf16.msra.mxu0 %v1518
    %2190 = vmatprep.subr.bf16.mxu0 0
    %2191 = vmatpush1.bf16.msra.mxu0 %v1519
    %2192 = vmatprep.subr.bf16.mxu0 0
    %2193 = vmatpush1.bf16.msra.mxu0 %v1520
    %2194 = vmatprep.subr.bf16.mxu0 0
    %2195 = vmatpush1.bf16.msra.mxu0 %v1521
    %2196 = vmatprep.subr.bf16.mxu0 0
    %2197 = vmatpush1.bf16.msra.mxu0 %v1522
    %2198 = vmatprep.subr.bf16.mxu0 0
    %2199 = vmatpush1.bf16.msra.mxu0 %v1523
    %2200 = vmatprep.subr.bf16.mxu0 0
    %2201 = vmatpush1.bf16.msra.mxu0 %v1524
    %2202 = vmatprep.subr.bf16.mxu0 0
    %2203 = vmatpush1.bf16.msra.mxu0 %v1525
    %2204 = vmatprep.subr.bf16.mxu0 0
    %2205 = vmatpush1.bf16.msra.mxu0 %v1526
    %2206 = vmatprep.subr.bf16.mxu0 0
    %2207 = vmatpush1.bf16.msra.mxu0 %v1527
    %2208 = vmatprep.mubr.bf16.mxu0 %v509
    %2209 = vmatmul.mubr.bf16.gmra.mrb[0].mxu0 %v508
    %v2210 = vpop.f32.mrb[0].mxu0
    %v2211 = vadd.f32 %v2171, %v2210
    %v2212 = vpop.f32.mrb[0].mxu0
    %v2213 = vpop.f32.mrb[0].mxu0
    %v2214 = vpop.f32.mrb[0].mxu0
    %2215 = vdwg.mxu0
    %2216 = vmatprep.subr.bf16.mxu0 0
    %2217 = vmatpush1.bf16.msra.mxu0 %v1528
    %2218 = vmatprep.subr.bf16.mxu0 0
    %2219 = vmatpush1.bf16.msra.mxu0 %v1529
    %2220 = vmatprep.subr.bf16.mxu0 0
    %2221 = vmatpush1.bf16.msra.mxu0 %v1530
    %2222 = vmatprep.subr.bf16.mxu0 0
    %2223 = vmatpush1.bf16.msra.mxu0 %v1531
    %2224 = vmatprep.subr.bf16.mxu0 0
    %2225 = vmatpush1.bf16.msra.mxu0 %v1532
    %2226 = vmatprep.subr.bf16.mxu0 0
    %2227 = vmatpush1.bf16.msra.mxu0 %v1533
    %2228 = vmatprep.subr.bf16.mxu0 0
    %2229 = vmatpush1.bf16.msra.mxu0 %v1534
    %2230 = vmatprep.subr.bf16.mxu0 0
    %2231 = vmatpush1.bf16.msra.mxu0 %v1535
    %2232 = vmatprep.subr.bf16.mxu0 0
    %2233 = vmatpush1.bf16.msra.mxu0 0
    %2234 = vmatprep.subr.bf16.mxu0 0
    %2235 = vmatpush1.bf16.msra.mxu0 0
    %2236 = vmatprep.subr.bf16.mxu0 0
    %2237 = vmatpush1.bf16.msra.mxu0 0
    %2238 = vmatprep.subr.bf16.mxu0 0
    %2239 = vmatpush1.bf16.msra.mxu0 0
    %2240 = vmatprep.subr.bf16.mxu0 0
    %2241 = vmatpush1.bf16.msra.mxu0 0
    %2242 = vmatprep.subr.bf16.mxu0 0
    %2243 = vmatpush1.bf16.msra.mxu0 0
    %2244 = vmatprep.subr.bf16.mxu0 0
    %2245 = vmatpush1.bf16.msra.mxu0 0
    %2246 = vmatprep.subr.bf16.mxu0 0
    %2247 = vmatpush1.bf16.msra.mxu0 0
    %2248 = vmatprep.mubr.bf16.mxu0 0
    %2249 = vmatmul.mubr.bf16.gmra.mrb[0].mxu0 %v510
    %v2250 = vpop.f32.mrb[0].mxu0
    %v2251 = vadd.f32 %v2211, %v2250
    %v2252 = vpop.f32.mrb[0].mxu0
    %v2253 = vpop.f32.mrb[0].mxu0
    %v2254 = vpop.f32.mrb[0].mxu0
    %2255 = vdwg.mxu0
    %v2256 = vmax.f32 %v2251, 0.0
    %v2257 = vpack.c.bf16 %v2256, %v2256
    %v2258 = vld [vmem:[%s3] sm:$0xf]
    %v2259 = vld [vmem:[%s3 + $0x4] sm:$0xf]
    %v2260 = vld [vmem:[%s3 + $0x8] sm:$0xf]
    %v2261 = vld [vmem:[%s3 + $0xc] sm:$0xf]
    %v2262 = vld [vmem:[%s3 + $0x10] sm:$0xf]
    %v2263 = vld [vmem:[%s3 + $0x14] sm:$0xf]
    %v2264 = vld [vmem:[%s3 + $0x18] sm:$0xf]
    %v2265 = vld [vmem:[%s3 + $0x1c] sm:$0xf]
    %v2266 = vld [vmem:[%s3 + $0x20] sm:$0xf]
    %v2267 = vld [vmem:[%s3 + $0x24] sm:$0xf]
    %v2268 = vld [vmem:[%s3 + $0x28] sm:$0xf]
    %v2269 = vld [vmem:[%s3 + $0x2c] sm:$0xf]
    %v2270 = vld [vmem:[%s3 + $0x30] sm:$0xf]
    %v2271 = vld [vmem:[%s3 + $0x34] sm:$0xf]
    %v2272 = vld [vmem:[%s3 + $0x38] sm:$0xf]
    %v2273 = vld [vmem:[%s3 + $0x3c] sm:$0xf]
    %v2274 = vld [vmem:[%s4] sm:$0x1]
    %v2276 = vlaneseq
    %v2277 = vshrl.u32 %v2276, 7
    %v2278 = vsub.s32 0, %v2277
    %v2279 = vrot.slane %v2274, %v2278
    %v2297 = vunpack.c.l.b16 %v2258
    %v2298 = vunpack.c.l.b16 %v2259
    %v2299 = vunpack.c.l.b16 %v2260
    %v2300 = vunpack.c.l.b16 %v2261
    %v2301 = vunpack.c.l.b16 %v2262
    %v2302 = vunpack.c.l.b16 %v2263
    %v2303 = vunpack.c.l.b16 %v2264
    %v2304 = vunpack.c.l.b16 %v2265
    %v2305 = vunpack.c.l.b16 %v2266
    %v2306 = vunpack.c.l.b16 %v2267
    %v2307 = vunpack.c.l.b16 %v2268
    %v2308 = vunpack.c.l.b16 %v2269
    %v2309 = vunpack.c.l.b16 %v2270
    %v2310 = vunpack.c.l.b16 %v2271
    %v2311 = vunpack.c.l.b16 %v2272
    %v2312 = vunpack.c.l.b16 %v2273
    %v2313 = vpack.c.b16 %v2298, %v2297
    %v2314 = vpack.c.b16 %v2300, %v2299
    %v2315 = vpack.c.b16 %v2302, %v2301
    %v2316 = vpack.c.b16 %v2304, %v2303
    %v2317 = vpack.c.b16 %v2306, %v2305
    %v2318 = vpack.c.b16 %v2308, %v2307
    %v2319 = vpack.c.b16 %v2310, %v2309
    %v2320 = vpack.c.b16 %v2312, %v2311
    %2329 = vmatprep.subr.bf16.mxu0 0
    %2330 = vmatpush1.bf16.msra.mxu0 %v2313
    %2331 = vmatprep.subr.bf16.mxu0 0
    %2332 = vmatpush1.bf16.msra.mxu0 %v2314
    %2333 = vmatprep.subr.bf16.mxu0 0
    %2334 = vmatpush1.bf16.msra.mxu0 %v2315
    %2335 = vmatprep.subr.bf16.mxu0 0
    %2336 = vmatpush1.bf16.msra.mxu0 %v2316
    %2337 = vmatprep.subr.bf16.mxu0 0
    %2338 = vmatpush1.bf16.msra.mxu0 %v2317
    %2339 = vmatprep.subr.bf16.mxu0 0
    %2340 = vmatpush1.bf16.msra.mxu0 %v2318
    %2341 = vmatprep.subr.bf16.mxu0 0
    %2342 = vmatpush1.bf16.msra.mxu0 %v2319
    %2343 = vmatprep.subr.bf16.mxu0 0
    %2344 = vmatpush1.bf16.msra.mxu0 %v2320
    %2345 = vmatprep.subr.bf16.mxu0 0
    %2346 = vmatpush1.bf16.msra.mxu0 0
    %2347 = vmatprep.subr.bf16.mxu0 0
    %2348 = vmatpush1.bf16.msra.mxu0 0
    %2349 = vmatprep.subr.bf16.mxu0 0
    %2350 = vmatpush1.bf16.msra.mxu0 0
    %2351 = vmatprep.subr.bf16.mxu0 0
    %2352 = vmatpush1.bf16.msra.mxu0 0
    %2353 = vmatprep.subr.bf16.mxu0 0
    %2354 = vmatpush1.bf16.msra.mxu0 0
    %2355 = vmatprep.subr.bf16.mxu0 0
    %2356 = vmatpush1.bf16.msra.mxu0 0
    %2357 = vmatprep.subr.bf16.mxu0 0
    %2358 = vmatpush1.bf16.msra.mxu0 0
    %2359 = vmatprep.subr.bf16.mxu0 0
    %2360 = vmatpush1.bf16.msra.mxu0 0
    %2361 = vmatprep.mubr.bf16.mxu0 0
    %2362 = vmatmul.mubr.bf16.gmra.mrb[0].mxu0 %v2257
    %v2363 = vpop.f32.mrb[0].mxu0
    %v2364 = vadd.f32 %v2279, %v2363
    %v2365 = vpop.f32.mrb[0].mxu0
    %v2366 = vpop.f32.mrb[0].mxu0
    %v2367 = vpop.f32.mrb[0].mxu0
    %2368 = vdwg.mxu0
    %v2369 = vmax.f32 %v2364, 0.0
    %v2370 = vpack.c.bf16 %v2369, %v2369
    %v2371 = vld [vmem:[%s5] sm:$0xf]
    %v2372 = vld [vmem:[%s5 + $0x4] sm:$0xf]
    %v2373 = vld [vmem:[%s5 + $0x8] sm:$0xf]
    %v2374 = vld [vmem:[%s5 + $0xc] sm:$0xf]
    %v2375 = vld [vmem:[%s5 + $0x10] sm:$0xf]
    %v2376 = vld [vmem:[%s5 + $0x14] sm:$0xf]
    %v2377 = vld [vmem:[%s5 + $0x18] sm:$0xf]
    %v2378 = vld [vmem:[%s5 + $0x1c] sm:$0xf]
    %v2379 = vld [vmem:[%s5 + $0x20] sm:$0xf]
    %v2380 = vld [vmem:[%s5 + $0x24] sm:$0xf]
    %v2381 = vld [vmem:[%s5 + $0x28] sm:$0xf]
    %v2382 = vld [vmem:[%s5 + $0x2c] sm:$0xf]
    %v2383 = vld [vmem:[%s5 + $0x30] sm:$0xf]
    %v2384 = vld [vmem:[%s5 + $0x34] sm:$0xf]
    %v2385 = vld [vmem:[%s5 + $0x38] sm:$0xf]
    %v2386 = vld [vmem:[%s5 + $0x3c] sm:$0xf]
    %v2387 = vld [vmem:[%s6] sm:$0x1]
    %v2389 = vlaneseq
    %v2390 = vshrl.u32 %v2389, 7
    %v2391 = vsub.s32 0, %v2390
    %v2392 = vrot.slane %v2387, %v2391
    %v2410 = vunpack.c.l.b16 %v2371
    %v2411 = vunpack.c.l.b16 %v2372
    %v2412 = vunpack.c.l.b16 %v2373
    %v2413 = vunpack.c.l.b16 %v2374
    %v2414 = vunpack.c.l.b16 %v2375
    %v2415 = vunpack.c.l.b16 %v2376
    %v2416 = vunpack.c.l.b16 %v2377
    %v2417 = vunpack.c.l.b16 %v2378
    %v2418 = vunpack.c.l.b16 %v2379
    %v2419 = vunpack.c.l.b16 %v2380
    %v2420 = vunpack.c.l.b16 %v2381
    %v2421 = vunpack.c.l.b16 %v2382
    %v2422 = vunpack.c.l.b16 %v2383
    %v2423 = vunpack.c.l.b16 %v2384
    %v2424 = vunpack.c.l.b16 %v2385
    %v2425 = vunpack.c.l.b16 %v2386
    %v2426 = vpack.c.b16 %v2411, %v2410
    %v2427 = vpack.c.b16 %v2413, %v2412
    %v2428 = vpack.c.b16 %v2415, %v2414
    %v2429 = vpack.c.b16 %v2417, %v2416
    %v2430 = vpack.c.b16 %v2419, %v2418
    %v2431 = vpack.c.b16 %v2421, %v2420
    %v2432 = vpack.c.b16 %v2423, %v2422
    %v2433 = vpack.c.b16 %v2425, %v2424
    %2442 = vmatprep.subr.bf16.mxu0 0
    %2443 = vmatpush1.bf16.msra.mxu0 %v2426
    %2444 = vmatprep.subr.bf16.mxu0 0
    %2445 = vmatpush1.bf16.msra.mxu0 %v2427
    %2446 = vmatprep.subr.bf16.mxu0 0
    %2447 = vmatpush1.bf16.msra.mxu0 %v2428
    %2448 = vmatprep.subr.bf16.mxu0 0
    %2449 = vmatpush1.bf16.msra.mxu0 %v2429
    %2450 = vmatprep.subr.bf16.mxu0 0
    %2451 = vmatpush1.bf16.msra.mxu0 %v2430
    %2452 = vmatprep.subr.bf16.mxu0 0
    %2453 = vmatpush1.bf16.msra.mxu0 %v2431
    %2454 = vmatprep.subr.bf16.mxu0 0
    %2455 = vmatpush1.bf16.msra.mxu0 %v2432
    %2456 = vmatprep.subr.bf16.mxu0 0
    %2457 = vmatpush1.bf16.msra.mxu0 %v2433
    %2458 = vmatprep.subr.bf16.mxu0 0
    %2459 = vmatpush1.bf16.msra.mxu0 0
    %2460 = vmatprep.subr.bf16.mxu0 0
    %2461 = vmatpush1.bf16.msra.mxu0 0
    %2462 = vmatprep.subr.bf16.mxu0 0
    %2463 = vmatpush1.bf16.msra.mxu0 0
    %2464 = vmatprep.subr.bf16.mxu0 0
    %2465 = vmatpush1.bf16.msra.mxu0 0
    %2466 = vmatprep.subr.bf16.mxu0 0
    %2467 = vmatpush1.bf16.msra.mxu0 0
    %2468 = vmatprep.subr.bf16.mxu0 0
    %2469 = vmatpush1.bf16.msra.mxu0 0
    %2470 = vmatprep.subr.bf16.mxu0 0
    %2471 = vmatpush1.bf16.msra.mxu0 0
    %2472 = vmatprep.subr.bf16.mxu0 0
    %2473 = vmatpush1.bf16.msra.mxu0 0
    %2474 = vmatprep.mubr.bf16.mxu0 0
    %2475 = vmatmul.mubr.bf16.gmra.mrb[0].mxu0 %v2370
    %v2476 = vpop.f32.mrb[0].mxu0
    %v2477 = vadd.f32 %v2392, %v2476
    %v2478 = vpop.f32.mrb[0].mxu0
    %v2479 = vpop.f32.mrb[0].mxu0
    %v2480 = vpop.f32.mrb[0].mxu0
    %2481 = vdwg.mxu0
    %2482 = vst [vmem:[#allocation2] sm:$0xff] %v2477
    // Predicated region
    $region30: #{net_forward.5} parent=1 // pred_check
      _
    $region31: #{net_forward.5} parent=1 // pred_check_branch
      %2484 = sbr.rel (0) target = $region33
    $region32: #{net_forward.5} parent=1 // pred_region
      %s2486 = ssub.s32 128, 128
      %2487 = vsyncadd [#allocation3], %s2486
      %s2489 = sshll.u32 [#allocation2], 4
      %s2490 = int_to_ptr.vmem [resolvable:$true] %s2489
      %2492 = dma.vmem_to_hbm [thread:$0]  %s2490, 128, %s7, [#allocation3]
    $region33: #{net_forward.5} parent=1 // pred_fallthru
      _
    // Predicated region
    $region34: #{net_forward.5} parent=1 // pred_check
      _
    $region35: #{net_forward.5} parent=1 // pred_check_branch
      %2494 = sbr.rel (0) target = $region37
    $region36: #{net_forward.5} parent=1 // pred_region
      %2495 = dma.done [#allocation3], 128
    $region37: #{net_forward.5} parent=1 // pred_fallthru
      _
    %2496 = vsyncpa [#allocation3], 1

</llo_original>
